<compile_context>
chip_gen: v7x
topology: tpu7x:2x2x1
jax: 0.10.0
libtpu: 0.0.40
codegen_flags: <defaults>
</compile_context>

<pallas_src>
import math

import jax
import jax.numpy as jnp
from jax.experimental import pallas as pl
from jax.experimental.pallas import tpu as pltpu

IMAGENET_MEAN = jnp.array([0.485, 0.456, 0.406], jnp.float32).reshape(1, 1, 1, 3)
IMAGENET_STD = jnp.array([0.229, 0.224, 0.225], jnp.float32).reshape(1, 1, 1, 3)

_VMEM_LIMIT = 32 * 1024 * 1024


def _round_up(x, m):
    return ((x + m - 1) // m) * m


def _pad_rows(x, mult):
    """Zero-pad the leading (row) dim up to a multiple of `mult`."""
    m = x.shape[0]
    mp = _round_up(m, mult)
    if mp != m:
        x = jnp.pad(x, ((0, mp - m),) + ((0, 0),) * (x.ndim - 1))
    return x, mp


# ----------------------------------------------------------------------------
# Pallas kernel 1: tiled matmul + bias + ReLU  (conv1_1 on stacked pred+target)
# ----------------------------------------------------------------------------
def matmul_bias_relu(x, w, b, out_dtype=jnp.bfloat16, tm_cap=512):
    """out = relu(x @ w + b).  x:(M,K), w:(K,N), b:(1,N)  -> (M,N) out_dtype."""
    M, K = x.shape
    N = w.shape[1]
    TM = min(tm_cap, _round_up(M, 16))
    xp, Mp = _pad_rows(x, TM)

    def kernel(x_ref, w_ref, b_ref, o_ref):
        acc = jnp.dot(x_ref[...], w_ref[...], preferred_element_type=jnp.float32)
        o_ref[...] = jnp.maximum(acc + b_ref[...], 0.0).astype(o_ref.dtype)

    bytes_accessed = (xp.size * xp.dtype.itemsize
                      + w.size * w.dtype.itemsize
                      + Mp * N * jnp.dtype(out_dtype).itemsize)
    out = pl.pallas_call(
        kernel,
        out_shape=jax.ShapeDtypeStruct((Mp, N), out_dtype),
        grid=(Mp // TM,),
        in_specs=[
            pl.BlockSpec((TM, K), lambda i: (i, 0)),
            pl.BlockSpec((K, N), lambda i: (0, 0)),
            pl.BlockSpec((1, N), lambda i: (0, 0)),
        ],
        out_specs=pl.BlockSpec((TM, N), lambda i: (i, 0)),
        compiler_params=pltpu.CompilerParams(
            dimension_semantics=("parallel",),
            vmem_limit_bytes=_VMEM_LIMIT,
        ),
        cost_estimate=pl.CostEstimate(
            flops=2 * Mp * K * N,
            transcendentals=0,
            bytes_accessed=int(bytes_accessed),
        ),
    )(xp, w, b)
    return out[:M]


# ----------------------------------------------------------------------------
# Pallas kernel 2: fused conv1_2 + ReLU + LPIPS normalize/diff/weight/reduce
#   Inputs are im2col patches of the conv1_1 output for pred and target.
#   Features stay in VMEM; each grid block writes a (1, 64) partial sum row
#   ("parallel" grid => megacore-shardable on v7x).
# ----------------------------------------------------------------------------
def conv2_lpips_partial(p_patch, t_patch, w2, b2, w_lin, tm_cap=1024):
    """Returns  sum_{rows, c}  w_lin[c] * (norm(pf) - norm(tf))[.,c]^2 ."""
    M, K = p_patch.shape
    N = w2.shape[1]
    TM = min(tm_cap, _round_up(M, 16))
    pp, Mp = _pad_rows(p_patch, TM)   # padded rows are identical for pred/target
    tp, _ = _pad_rows(t_patch, TM)    # -> their diff is exactly 0 (no masking)
    G = Mp // TM

    def kernel(p_ref, t_ref, w_ref, b_ref, wl_ref, o_ref):
        pf = jnp.maximum(
            jnp.dot(p_ref[...], w_ref[...], preferred_element_type=jnp.float32)
            + b_ref[...], 0.0)
        tf = jnp.maximum(
            jnp.dot(t_ref[...], w_ref[...], preferred_element_type=jnp.float32)
            + b_ref[...], 0.0)
        # channel-wise L2 normalize; eps placement matches torch: x/(||x||+1e-10)
        p_inv = pl.reciprocal(
            jnp.sqrt(jnp.sum(pf * pf, axis=-1, keepdims=True)) + 1e-10,
            approx=True)
        t_inv = pl.reciprocal(
            jnp.sqrt(jnp.sum(tf * tf, axis=-1, keepdims=True)) + 1e-10,
            approx=True)
        d = (pf * p_inv - tf * t_inv) ** 2
        wd = jnp.sum(d * wl_ref[...], axis=0, keepdims=True)   # (1, N)
        o_ref[...] = wd[None]                                   # (1, 1, N)

    bytes_accessed = (pp.size * pp.dtype.itemsize + tp.size * tp.dtype.itemsize
                      + w2.size * w2.dtype.itemsize + G * N * 4)
    partial = pl.pallas_call(
        kernel,
        out_shape=jax.ShapeDtypeStruct((G, 1, N), jnp.float32),
        grid=(G,),
        in_specs=[
            pl.BlockSpec((TM, K), lambda i: (i, 0)),
            pl.BlockSpec((TM, K), lambda i: (i, 0)),
            pl.BlockSpec((K, N), lambda i: (0, 0)),
            pl.BlockSpec((1, N), lambda i: (0, 0)),
            pl.BlockSpec((1, N), lambda i: (0, 0)),
        ],
        out_specs=pl.BlockSpec((1, 1, N), lambda i: (i, 0, 0)),
        compiler_params=pltpu.CompilerParams(
            dimension_semantics=("parallel",),
            vmem_limit_bytes=_VMEM_LIMIT,
        ),
        cost_estimate=pl.CostEstimate(
            flops=4 * Mp * K * N,
            transcendentals=4 * Mp,
            bytes_accessed=int(bytes_accessed),
        ),
    )(pp, tp, w2, b2, w_lin)
    return jnp.sum(partial)


# ----------------------------------------------------------------------------
# Glue: im2col for 3x3 / pad=1 conv, NHWC (data rearrangement only)
# ----------------------------------------------------------------------------
def _im2col_3x3(x):
    """x:(B,H,W,C) -> (B*H*W, 9*C); tap order (dy, dx, c)."""
    B, H, W, C = x.shape
    xp = jnp.pad(x, ((0, 0), (1, 1), (1, 1), (0, 0)))
    patches = jnp.concatenate(
        [xp[:, dy:dy + H, dx:dx + W, :] for dy in range(3) for dx in range(3)],
        axis=-1)
    return patches.reshape(B * H * W, 9 * C)


# ----------------------------------------------------------------------------
# Glue: bilinear resize, align_corners=False (matches F.interpolate), NHWC
# ----------------------------------------------------------------------------
def bilinear_resize_nhwc(x, out_h, out_w):
    B, H, W, C = x.shape

    def coords(out_size, in_size):
        scale = in_size / out_size
        d = jnp.arange(out_size, dtype=jnp.float32)
        src = scale * (d + 0.5) - 0.5
        src = jnp.maximum(src, 0.0)
        i0 = jnp.minimum(jnp.floor(src).astype(jnp.int32), in_size - 1)
        i1 = jnp.minimum(i0 + 1, in_size - 1)
        f = src - i0.astype(jnp.float32)
        return i0, i1, f

    y0, y1, fy = coords(out_h, H)
    x0, x1, fx = coords(out_w, W)
    top = (x[:, y0, :, :] * (1.0 - fy)[None, :, None, None]
           + x[:, y1, :, :] * fy[None, :, None, None])
    out = (top[:, :, x0, :] * (1.0 - fx)[None, None, :, None]
           + top[:, :, x1, :] * fx[None, None, :, None])
    return out


# ----------------------------------------------------------------------------
# LPIPS (single scale) and MultiScaleLPIPS forward
# ----------------------------------------------------------------------------
def lpips_forward(pred_nhwc, target_nhwc, params):
    p = jnp.clip(pred_nhwc, 0.0, 1.0)
    t = jnp.clip(target_nhwc, 0.0, 1.0)
    if p.shape[-1] == 1:  # grayscale -> RGB (static shape check)
        p = jnp.tile(p, (1, 1, 1, 3))
        t = jnp.tile(t, (1, 1, 1, 3))
    p = (p - IMAGENET_MEAN) / IMAGENET_STD
    t = (t - IMAGENET_MEAN) / IMAGENET_STD

    B, H, W, _ = p.shape
    # conv1_1 (3 -> 64): pred+target stacked along rows, ONE pallas_call.
    # TODO(synk): conv1_1 (K=27) could be done as 9 scaled adds on the VPU on
    # v5e instead of the MXU; left on the shared matmul path (tiny FLOP share).
    x = jnp.concatenate([p, t], axis=0)                           # (2B,H,W,3)
    patches1 = _im2col_3x3(x)                                     # (2B*H*W, 27) f32
    h1 = matmul_bias_relu(patches1, params["w1"], params["b1"])   # (2B*H*W, 64) bf16
    h1 = h1.reshape(2 * B, H, W, 64)

    # conv1_2 im2col in bf16; conv1_2 itself is fused with the LPIPS reduction,
    # so the 64-ch features never round-trip through HBM.
    patches2 = _im2col_3x3(h1)                                    # (2B*H*W, 576) bf16
    Mh = B * H * W
    total = conv2_lpips_partial(
        patches2[:Mh], patches2[Mh:], params["w2"], params["b2"], params["w_lin"])
    # per-sample spatial mean, then batch mean  ==  mean over all rows
    return total / jnp.float32(B * H * W)


def multiscale_lpips(pred_nchw, target_nchw, params,
                     scales=(1.0, 0.5, 0.25), weights=(1.0, 1.0, 1.0)):
    pred = jnp.transpose(pred_nchw.astype(jnp.float32), (0, 2, 3, 1))   # NHWC
    target = jnp.transpose(target_nchw.astype(jnp.float32), (0, 2, 3, 1))
    B, H, W, C = pred.shape
    total = jnp.float32(0.0)
    for scale, wt in zip(scales, weights):
        if scale != 1.0:
            oh, ow = int(math.floor(H * scale)), int(math.floor(W * scale))
            ps = bilinear_resize_nhwc(pred, oh, ow)
            ts = bilinear_resize_nhwc(target, oh, ow)
        else:
            ps, ts = pred, target
        total = total + wt * lpips_forward(ps, ts, params)
    return total


# ----------------------------------------------------------------------------
# Deterministic parameter construction (synthetic VGG conv1_1/conv1_2 + lins)
# Weight prep (im2col layout + bf16 cast) is done ONCE here, outside the
# per-scale loop, so all three scales reuse the same staged weights.
# ----------------------------------------------------------------------------
def make_params(key):
    k1, k2, k3, k4 = jax.random.split(key, 4)
    # PyTorch conv weight layout (Cout, Cin, KH, KW)
    w1_t = jax.random.normal(k1, (64, 3, 3, 3), jnp.float32) * 0.1
    b1 = jax.random.normal(k2, (64,), jnp.float32) * 0.01
    w2_t = jax.random.normal(k3, (64, 64, 3, 3), jnp.float32) * 0.05
    b2 = jax.random.normal(k4, (64,), jnp.float32) * 0.01
    # im2col matmul layout: row index (dy*3+dx)*Cin + cin  ->  (KH,KW,Cin,Cout)
    w1 = jnp.transpose(w1_t, (2, 3, 1, 0)).reshape(9 * 3, 64)              # f32
    w2 = jnp.transpose(w2_t, (2, 3, 1, 0)).reshape(9 * 64, 64).astype(jnp.bfloat16)
    # LPIPS 1x1 conv weight: filled with 1.0 / in_channels (reference init)
    w_lin = jnp.full((1, 64), 1.0 / 64.0, jnp.float32)
    # NOTE: all three per-scale LPIPS modules share these weights (as in the
    # "pretrained" path of the reference).
    return {
        "w1": w1, "b1": b1.reshape(1, 64),
        "w2": w2, "b2": b2.reshape(1, 64),
        "w_lin": w_lin,
    }


if __name__ == "__main__":
    key = jax.random.PRNGKey(0)
    kparam, kp, kt = jax.random.split(key, 3)
    params = make_params(kparam)

    pred = jax.random.uniform(kp, (2, 3, 16, 16), jnp.float32)    # NCHW
    target = jax.random.uniform(kt, (2, 3, 16, 16), jnp.float32)  # NCHW

    loss_fn = jax.jit(lambda p, t: multiscale_lpips(p, t, params))
    loss = loss_fn(pred, target)
    loss = jax.block_until_ready(loss)
    assert loss.shape == () and bool(jnp.isfinite(loss))
    print("KERNEL_OK")
</pallas_src>

<mosaic_0001>
module attributes {stable_mosaic.version = 11 : i64} {
  func.func @kernel(%arg0: i32, %arg1: memref<512x27xf32, #tpu.memory_space<vmem>>, %arg2: memref<27x64xf32, #tpu.memory_space<vmem>>, %arg3: memref<1x64xf32, #tpu.memory_space<vmem>>, %arg4: memref<512x64xbf16, #tpu.memory_space<vmem>>) attributes {dimension_semantics = [#tpu.dimension_semantics<parallel>], iteration_bounds = array<i64: 2>, scalar_prefetch = 0 : i64, scratch_operands = 0 : i64, tpu.core_type = #tpu.core_type<tc>, window_params = [{transform_indices = @transform_0, window_bounds = array<i64: 512, 27>}, {pipeline_mode = #tpu.pipeline_mode<synchronous>, transform_indices = @transform_1, window_bounds = array<i64: 27, 64>}, {pipeline_mode = #tpu.pipeline_mode<synchronous>, transform_indices = @transform_2, window_bounds = array<i64: 1, 64>}, {transform_indices = @transform_3, window_bounds = array<i64: 512, 64>}]} {
    %c0 = arith.constant 0 : index
    %c0_0 = arith.constant 0 : index
    %0 = vector.load %arg1[%c0, %c0_0] : memref<512x27xf32, #tpu.memory_space<vmem>>, vector<512x27xf32>
    %c0_1 = arith.constant 0 : index
    %c0_2 = arith.constant 0 : index
    %1 = vector.load %arg2[%c0_1, %c0_2] : memref<27x64xf32, #tpu.memory_space<vmem>>, vector<27x64xf32>
    %cst = arith.constant dense<0.000000e+00> : vector<512x64xf32>
    %2 = tpu.matmul %0, %1, %cst {dimension_numbers = #tpu.dot_dimension_numbers<[1], [0], [0], [1], [0, 0, 1, 1], [], []>} : vector<512x27xf32>, vector<27x64xf32>, vector<512x64xf32> -> vector<512x64xf32>
    %c0_3 = arith.constant 0 : index
    %c0_4 = arith.constant 0 : index
    %3 = vector.load %arg3[%c0_3, %c0_4] : memref<1x64xf32, #tpu.memory_space<vmem>>, vector<1x64xf32>
    %4 = vector.broadcast %3 : vector<1x64xf32> to vector<512x64xf32>
    %5 = arith.addf %2, %4 : vector<512x64xf32>
    %cst_5 = arith.constant 0.000000e+00 : f32
    %6 = vector.broadcast %cst_5 : f32 to vector<512x64xf32>
    %7 = arith.maximumf %5, %6 : vector<512x64xf32>
    %8 = arith.truncf %7 : vector<512x64xf32> to vector<512x64xbf16>
    %c0_6 = arith.constant 0 : index
    %c0_7 = arith.constant 0 : index
    %9 = vector.load %arg4[%c0_6, %c0_7] : memref<512x64xbf16, #tpu.memory_space<vmem>>, vector<512x64xbf16>
    tpu.vector_store %arg4[%c0_6, %c0_7], %8 {strides = array<i32>} : memref<512x64xbf16, #tpu.memory_space<vmem>>, vector<512x64xbf16>,
    return
  }
  func.func @transform_0(%arg0: i32) -> (i32, i32) {
    %c0_i32 = arith.constant 0 : i32
    %c0_i32_0 = arith.constant 0 : i32
    return %arg0, %c0_i32 : i32, i32
  }
  func.func @transform_1(%arg0: i32) -> (i32, i32) {
    %c0_i32 = arith.constant 0 : i32
    %c0_i32_0 = arith.constant 0 : i32
    %c0_i32_1 = arith.constant 0 : i32
    return %c0_i32, %c0_i32_0 : i32, i32
  }
  func.func @transform_2(%arg0: i32) -> (i32, i32) {
    %c0_i32 = arith.constant 0 : i32
    %c0_i32_0 = arith.constant 0 : i32
    %c0_i32_1 = arith.constant 0 : i32
    return %c0_i32, %c0_i32_0 : i32, i32
  }
  func.func @transform_3(%arg0: i32) -> (i32, i32) {
    %c0_i32 = arith.constant 0 : i32
    %c0_i32_0 = arith.constant 0 : i32
    return %arg0, %c0_i32 : i32, i32
  }
}

module attributes {stable_mosaic.version = 11 : i64} {
  func.func @kernel(%arg0: i32, %arg1: memref<512x576xbf16, #tpu.memory_space<vmem>>, %arg2: memref<512x576xbf16, #tpu.memory_space<vmem>>, %arg3: memref<576x64xbf16, #tpu.memory_space<vmem>>, %arg4: memref<1x64xf32, #tpu.memory_space<vmem>>, %arg5: memref<1x64xf32, #tpu.memory_space<vmem>>, %arg6: memref<1x1x64xf32, #tpu.memory_space<vmem>>) attributes {dimension_semantics = [#tpu.dimension_semantics<parallel>], iteration_bounds = array<i64: 1>, scalar_prefetch = 0 : i64, scratch_operands = 0 : i64, tpu.core_type = #tpu.core_type<tc>, window_params = [{transform_indices = @transform_0, window_bounds = array<i64: 512, 576>}, {transform_indices = @transform_1, window_bounds = array<i64: 512, 576>}, {pipeline_mode = #tpu.pipeline_mode<synchronous>, transform_indices = @transform_2, window_bounds = array<i64: 576, 64>}, {pipeline_mode = #tpu.pipeline_mode<synchronous>, transform_indices = @transform_3, window_bounds = array<i64: 1, 64>}, {pipeline_mode = #tpu.pipeline_mode<synchronous>, transform_indices = @transform_4, window_bounds = array<i64: 1, 64>}, {transform_indices = @transform_5, window_bounds = array<i64: 1, 1, 64>}]} {
    %c0 = arith.constant 0 : index
    %c0_0 = arith.constant 0 : index
    %0 = vector.load %arg1[%c0, %c0_0] : memref<512x576xbf16, #tpu.memory_space<vmem>>, vector<512x576xbf16>
    %c0_1 = arith.constant 0 : index
    %c0_2 = arith.constant 0 : index
    %1 = vector.load %arg3[%c0_1, %c0_2] : memref<576x64xbf16, #tpu.memory_space<vmem>>, vector<576x64xbf16>
    %cst = arith.constant dense<0.000000e+00> : vector<512x64xf32>
    %2 = tpu.matmul %0, %1, %cst {dimension_numbers = #tpu.dot_dimension_numbers<[1], [0], [0], [1], [0, 0, 1, 1], [], []>} : vector<512x576xbf16>, vector<576x64xbf16>, vector<512x64xf32> -> vector<512x64xf32>
    %c0_3 = arith.constant 0 : index
    %c0_4 = arith.constant 0 : index
    %3 = vector.load %arg4[%c0_3, %c0_4] : memref<1x64xf32, #tpu.memory_space<vmem>>, vector<1x64xf32>
    %4 = vector.broadcast %3 : vector<1x64xf32> to vector<512x64xf32>
    %5 = arith.addf %2, %4 : vector<512x64xf32>
    %cst_5 = arith.constant 0.000000e+00 : f32
    %6 = vector.broadcast %cst_5 : f32 to vector<512x64xf32>
    %7 = arith.maximumf %5, %6 : vector<512x64xf32>
    %c0_6 = arith.constant 0 : index
    %c0_7 = arith.constant 0 : index
    %8 = vector.load %arg2[%c0_6, %c0_7] : memref<512x576xbf16, #tpu.memory_space<vmem>>, vector<512x576xbf16>
    %c0_8 = arith.constant 0 : index
    %c0_9 = arith.constant 0 : index
    %9 = vector.load %arg3[%c0_8, %c0_9] : memref<576x64xbf16, #tpu.memory_space<vmem>>, vector<576x64xbf16>
    %cst_10 = arith.constant dense<0.000000e+00> : vector<512x64xf32>
    %10 = tpu.matmul %8, %9, %cst_10 {dimension_numbers = #tpu.dot_dimension_numbers<[1], [0], [0], [1], [0, 0, 1, 1], [], []>} : vector<512x576xbf16>, vector<576x64xbf16>, vector<512x64xf32> -> vector<512x64xf32>
    %c0_11 = arith.constant 0 : index
    %c0_12 = arith.constant 0 : index
    %11 = vector.load %arg4[%c0_11, %c0_12] : memref<1x64xf32, #tpu.memory_space<vmem>>, vector<1x64xf32>
    %12 = vector.broadcast %11 : vector<1x64xf32> to vector<512x64xf32>
    %13 = arith.addf %10, %12 : vector<512x64xf32>
    %cst_13 = arith.constant 0.000000e+00 : f32
    %14 = vector.broadcast %cst_13 : f32 to vector<512x64xf32>
    %15 = arith.maximumf %13, %14 : vector<512x64xf32>
    %16 = arith.mulf %7, %7 : vector<512x64xf32>
    %cst_14 = arith.constant dense<0.000000e+00> : vector<512xf32>
    %17 = vector.multi_reduction <add>, %16, %cst_14 [1] : vector<512x64xf32> to vector<512xf32>
    %18 = vector.shape_cast %17 : vector<512xf32> to vector<512x1xf32>
    %19 = math.sqrt %18 : vector<512x1xf32>
    %cst_15 = arith.constant 1.000000e-10 : f32
    %20 = vector.broadcast %cst_15 : f32 to vector<512x1xf32>
    %21 = arith.addf %19, %20 : vector<512x1xf32>
    %22 = tpu.reciprocal %21 {approx = true} : vector<512x1xf32> -> vector<512x1xf32>
    %23 = arith.mulf %15, %15 : vector<512x64xf32>
    %cst_16 = arith.constant dense<0.000000e+00> : vector<512xf32>
    %24 = vector.multi_reduction <add>, %23, %cst_16 [1] : vector<512x64xf32> to vector<512xf32>
    %25 = vector.shape_cast %24 : vector<512xf32> to vector<512x1xf32>
    %26 = math.sqrt %25 : vector<512x1xf32>
    %cst_17 = arith.constant 1.000000e-10 : f32
    %27 = vector.broadcast %cst_17 : f32 to vector<512x1xf32>
    %28 = arith.addf %26, %27 : vector<512x1xf32>
    %29 = tpu.reciprocal %28 {approx = true} : vector<512x1xf32> -> vector<512x1xf32>
    %30 = vector.broadcast %22 : vector<512x1xf32> to vector<512x64xf32>
    %31 = arith.mulf %7, %30 : vector<512x64xf32>
    %32 = vector.broadcast %29 : vector<512x1xf32> to vector<512x64xf32>
    %33 = arith.mulf %15, %32 : vector<512x64xf32>
    %34 = arith.subf %31, %33 : vector<512x64xf32>
    %35 = arith.mulf %34, %34 : vector<512x64xf32>
    %c0_18 = arith.constant 0 : index
    %c0_19 = arith.constant 0 : index
    %36 = vector.load %arg5[%c0_18, %c0_19] : memref<1x64xf32, #tpu.memory_space<vmem>>, vector<1x64xf32>
    %37 = vector.broadcast %36 : vector<1x64xf32> to vector<512x64xf32>
    %38 = arith.mulf %35, %37 : vector<512x64xf32>
    %cst_20 = arith.constant dense<0.000000e+00> : vector<64xf32>
    %39 = vector.multi_reduction <add>, %38, %cst_20 [0] : vector<512x64xf32> to vector<64xf32>
    %40 = vector.shape_cast %39 : vector<64xf32> to vector<1x64xf32>
    %41 = vector.shape_cast %40 : vector<1x64xf32> to vector<1x1x64xf32>
    %c0_21 = arith.constant 0 : index
    %c0_22 = arith.constant 0 : index
    %c0_23 = arith.constant 0 : index
    %42 = vector.load %arg6[%c0_21, %c0_22, %c0_23] : memref<1x1x64xf32, #tpu.memory_space<vmem>>, vector<1x1x64xf32>
    tpu.vector_store %arg6[%c0_21, %c0_22, %c0_23], %41 {strides = array<i32>} : memref<1x1x64xf32, #tpu.memory_space<vmem>>, vector<1x1x64xf32>,
    return
  }
  func.func @transform_0(%arg0: i32) -> (i32, i32) {
    %c0_i32 = arith.constant 0 : i32
    %c0_i32_0 = arith.constant 0 : i32
    return %arg0, %c0_i32 : i32, i32
  }
  func.func @transform_1(%arg0: i32) -> (i32, i32) {
    %c0_i32 = arith.constant 0 : i32
    %c0_i32_0 = arith.constant 0 : i32
    return %arg0, %c0_i32 : i32, i32
  }
  func.func @transform_2(%arg0: i32) -> (i32, i32) {
    %c0_i32 = arith.constant 0 : i32
    %c0_i32_0 = arith.constant 0 : i32
    %c0_i32_1 = arith.constant 0 : i32
    return %c0_i32, %c0_i32_0 : i32, i32
  }
  func.func @transform_3(%arg0: i32) -> (i32, i32) {
    %c0_i32 = arith.constant 0 : i32
    %c0_i32_0 = arith.constant 0 : i32
    %c0_i32_1 = arith.constant 0 : i32
    return %c0_i32, %c0_i32_0 : i32, i32
  }
  func.func @transform_4(%arg0: i32) -> (i32, i32) {
    %c0_i32 = arith.constant 0 : i32
    %c0_i32_0 = arith.constant 0 : i32
    %c0_i32_1 = arith.constant 0 : i32
    return %c0_i32, %c0_i32_0 : i32, i32
  }
  func.func @transform_5(%arg0: i32) -> (i32, i32, i32) {
    %c0_i32 = arith.constant 0 : i32
    %c0_i32_0 = arith.constant 0 : i32
    %c0_i32_1 = arith.constant 0 : i32
    return %arg0, %c0_i32, %c0_i32_0 : i32, i32, i32
  }
}

module attributes {stable_mosaic.version = 11 : i64} {
  func.func @kernel(%arg0: i32, %arg1: memref<256x27xf32, #tpu.memory_space<vmem>>, %arg2: memref<27x64xf32, #tpu.memory_space<vmem>>, %arg3: memref<1x64xf32, #tpu.memory_space<vmem>>, %arg4: memref<256x64xbf16, #tpu.memory_space<vmem>>) attributes {dimension_semantics = [#tpu.dimension_semantics<parallel>], iteration_bounds = array<i64: 1>, scalar_prefetch = 0 : i64, scratch_operands = 0 : i64, tpu.core_type = #tpu.core_type<tc>, window_params = [{transform_indices = @transform_0, window_bounds = array<i64: 256, 27>}, {pipeline_mode = #tpu.pipeline_mode<synchronous>, transform_indices = @transform_1, window_bounds = array<i64: 27, 64>}, {pipeline_mode = #tpu.pipeline_mode<synchronous>, transform_indices = @transform_2, window_bounds = array<i64: 1, 64>}, {transform_indices = @transform_3, window_bounds = array<i64: 256, 64>}]} {
    %c0 = arith.constant 0 : index
    %c0_0 = arith.constant 0 : index
    %0 = vector.load %arg1[%c0, %c0_0] : memref<256x27xf32, #tpu.memory_space<vmem>>, vector<256x27xf32>
    %c0_1 = arith.constant 0 : index
    %c0_2 = arith.constant 0 : index
    %1 = vector.load %arg2[%c0_1, %c0_2] : memref<27x64xf32, #tpu.memory_space<vmem>>, vector<27x64xf32>
    %cst = arith.constant dense<0.000000e+00> : vector<256x64xf32>
    %2 = tpu.matmul %0, %1, %cst {dimension_numbers = #tpu.dot_dimension_numbers<[1], [0], [0], [1], [0, 0, 1, 1], [], []>} : vector<256x27xf32>, vector<27x64xf32>, vector<256x64xf32> -> vector<256x64xf32>
    %c0_3 = arith.constant 0 : index
    %c0_4 = arith.constant 0 : index
    %3 = vector.load %arg3[%c0_3, %c0_4] : memref<1x64xf32, #tpu.memory_space<vmem>>, vector<1x64xf32>
    %4 = vector.broadcast %3 : vector<1x64xf32> to vector<256x64xf32>
    %5 = arith.addf %2, %4 : vector<256x64xf32>
    %cst_5 = arith.constant 0.000000e+00 : f32
    %6 = vector.broadcast %cst_5 : f32 to vector<256x64xf32>
    %7 = arith.maximumf %5, %6 : vector<256x64xf32>
    %8 = arith.truncf %7 : vector<256x64xf32> to vector<256x64xbf16>
    %c0_6 = arith.constant 0 : index
    %c0_7 = arith.constant 0 : index
    %9 = vector.load %arg4[%c0_6, %c0_7] : memref<256x64xbf16, #tpu.memory_space<vmem>>, vector<256x64xbf16>
    tpu.vector_store %arg4[%c0_6, %c0_7], %8 {strides = array<i32>} : memref<256x64xbf16, #tpu.memory_space<vmem>>, vector<256x64xbf16>,
    return
  }
  func.func @transform_0(%arg0: i32) -> (i32, i32) {
    %c0_i32 = arith.constant 0 : i32
    %c0_i32_0 = arith.constant 0 : i32
    return %arg0, %c0_i32 : i32, i32
  }
  func.func @transform_1(%arg0: i32) -> (i32, i32) {
    %c0_i32 = arith.constant 0 : i32
    %c0_i32_0 = arith.constant 0 : i32
    %c0_i32_1 = arith.constant 0 : i32
    return %c0_i32, %c0_i32_0 : i32, i32
  }
  func.func @transform_2(%arg0: i32) -> (i32, i32) {
    %c0_i32 = arith.constant 0 : i32
    %c0_i32_0 = arith.constant 0 : i32
    %c0_i32_1 = arith.constant 0 : i32
    return %c0_i32, %c0_i32_0 : i32, i32
  }
  func.func @transform_3(%arg0: i32) -> (i32, i32) {
    %c0_i32 = arith.constant 0 : i32
    %c0_i32_0 = arith.constant 0 : i32
    return %arg0, %c0_i32 : i32, i32
  }
}

module attributes {stable_mosaic.version = 11 : i64} {
  func.func @kernel(%arg0: i32, %arg1: memref<128x576xbf16, #tpu.memory_space<vmem>>, %arg2: memref<128x576xbf16, #tpu.memory_space<vmem>>, %arg3: memref<576x64xbf16, #tpu.memory_space<vmem>>, %arg4: memref<1x64xf32, #tpu.memory_space<vmem>>, %arg5: memref<1x64xf32, #tpu.memory_space<vmem>>, %arg6: memref<1x1x64xf32, #tpu.memory_space<vmem>>) attributes {dimension_semantics = [#tpu.dimension_semantics<parallel>], iteration_bounds = array<i64: 1>, scalar_prefetch = 0 : i64, scratch_operands = 0 : i64, tpu.core_type = #tpu.core_type<tc>, window_params = [{transform_indices = @transform_0, window_bounds = array<i64: 128, 576>}, {transform_indices = @transform_1, window_bounds = array<i64: 128, 576>}, {pipeline_mode = #tpu.pipeline_mode<synchronous>, transform_indices = @transform_2, window_bounds = array<i64: 576, 64>}, {pipeline_mode = #tpu.pipeline_mode<synchronous>, transform_indices = @transform_3, window_bounds = array<i64: 1, 64>}, {pipeline_mode = #tpu.pipeline_mode<synchronous>, transform_indices = @transform_4, window_bounds = array<i64: 1, 64>}, {transform_indices = @transform_5, window_bounds = array<i64: 1, 1, 64>}]} {
    %c0 = arith.constant 0 : index
    %c0_0 = arith.constant 0 : index
    %0 = vector.load %arg1[%c0, %c0_0] : memref<128x576xbf16, #tpu.memory_space<vmem>>, vector<128x576xbf16>
    %c0_1 = arith.constant 0 : index
    %c0_2 = arith.constant 0 : index
    %1 = vector.load %arg3[%c0_1, %c0_2] : memref<576x64xbf16, #tpu.memory_space<vmem>>, vector<576x64xbf16>
    %cst = arith.constant dense<0.000000e+00> : vector<128x64xf32>
    %2 = tpu.matmul %0, %1, %cst {dimension_numbers = #tpu.dot_dimension_numbers<[1], [0], [0], [1], [0, 0, 1, 1], [], []>} : vector<128x576xbf16>, vector<576x64xbf16>, vector<128x64xf32> -> vector<128x64xf32>
    %c0_3 = arith.constant 0 : index
    %c0_4 = arith.constant 0 : index
    %3 = vector.load %arg4[%c0_3, %c0_4] : memref<1x64xf32, #tpu.memory_space<vmem>>, vector<1x64xf32>
    %4 = vector.broadcast %3 : vector<1x64xf32> to vector<128x64xf32>
    %5 = arith.addf %2, %4 : vector<128x64xf32>
    %cst_5 = arith.constant 0.000000e+00 : f32
    %6 = vector.broadcast %cst_5 : f32 to vector<128x64xf32>
    %7 = arith.maximumf %5, %6 : vector<128x64xf32>
    %c0_6 = arith.constant 0 : index
    %c0_7 = arith.constant 0 : index
    %8 = vector.load %arg2[%c0_6, %c0_7] : memref<128x576xbf16, #tpu.memory_space<vmem>>, vector<128x576xbf16>
    %c0_8 = arith.constant 0 : index
    %c0_9 = arith.constant 0 : index
    %9 = vector.load %arg3[%c0_8, %c0_9] : memref<576x64xbf16, #tpu.memory_space<vmem>>, vector<576x64xbf16>
    %cst_10 = arith.constant dense<0.000000e+00> : vector<128x64xf32>
    %10 = tpu.matmul %8, %9, %cst_10 {dimension_numbers = #tpu.dot_dimension_numbers<[1], [0], [0], [1], [0, 0, 1, 1], [], []>} : vector<128x576xbf16>, vector<576x64xbf16>, vector<128x64xf32> -> vector<128x64xf32>
    %c0_11 = arith.constant 0 : index
    %c0_12 = arith.constant 0 : index
    %11 = vector.load %arg4[%c0_11, %c0_12] : memref<1x64xf32, #tpu.memory_space<vmem>>, vector<1x64xf32>
    %12 = vector.broadcast %11 : vector<1x64xf32> to vector<128x64xf32>
    %13 = arith.addf %10, %12 : vector<128x64xf32>
    %cst_13 = arith.constant 0.000000e+00 : f32
    %14 = vector.broadcast %cst_13 : f32 to vector<128x64xf32>
    %15 = arith.maximumf %13, %14 : vector<128x64xf32>
    %16 = arith.mulf %7, %7 : vector<128x64xf32>
    %cst_14 = arith.constant dense<0.000000e+00> : vector<128xf32>
    %17 = vector.multi_reduction <add>, %16, %cst_14 [1] : vector<128x64xf32> to vector<128xf32>
    %18 = vector.shape_cast %17 : vector<128xf32> to vector<128x1xf32>
    %19 = math.sqrt %18 : vector<128x1xf32>
    %cst_15 = arith.constant 1.000000e-10 : f32
    %20 = vector.broadcast %cst_15 : f32 to vector<128x1xf32>
    %21 = arith.addf %19, %20 : vector<128x1xf32>
    %22 = tpu.reciprocal %21 {approx = true} : vector<128x1xf32> -> vector<128x1xf32>
    %23 = arith.mulf %15, %15 : vector<128x64xf32>
    %cst_16 = arith.constant dense<0.000000e+00> : vector<128xf32>
    %24 = vector.multi_reduction <add>, %23, %cst_16 [1] : vector<128x64xf32> to vector<128xf32>
    %25 = vector.shape_cast %24 : vector<128xf32> to vector<128x1xf32>
    %26 = math.sqrt %25 : vector<128x1xf32>
    %cst_17 = arith.constant 1.000000e-10 : f32
    %27 = vector.broadcast %cst_17 : f32 to vector<128x1xf32>
    %28 = arith.addf %26, %27 : vector<128x1xf32>
    %29 = tpu.reciprocal %28 {approx = true} : vector<128x1xf32> -> vector<128x1xf32>
    %30 = vector.broadcast %22 : vector<128x1xf32> to vector<128x64xf32>
    %31 = arith.mulf %7, %30 : vector<128x64xf32>
    %32 = vector.broadcast %29 : vector<128x1xf32> to vector<128x64xf32>
    %33 = arith.mulf %15, %32 : vector<128x64xf32>
    %34 = arith.subf %31, %33 : vector<128x64xf32>
    %35 = arith.mulf %34, %34 : vector<128x64xf32>
    %c0_18 = arith.constant 0 : index
    %c0_19 = arith.constant 0 : index
    %36 = vector.load %arg5[%c0_18, %c0_19] : memref<1x64xf32, #tpu.memory_space<vmem>>, vector<1x64xf32>
    %37 = vector.broadcast %36 : vector<1x64xf32> to vector<128x64xf32>
    %38 = arith.mulf %35, %37 : vector<128x64xf32>
    %cst_20 = arith.constant dense<0.000000e+00> : vector<64xf32>
    %39 = vector.multi_reduction <add>, %38, %cst_20 [0] : vector<128x64xf32> to vector<64xf32>
    %40 = vector.shape_cast %39 : vector<64xf32> to vector<1x64xf32>
    %41 = vector.shape_cast %40 : vector<1x64xf32> to vector<1x1x64xf32>
    %c0_21 = arith.constant 0 : index
    %c0_22 = arith.constant 0 : index
    %c0_23 = arith.constant 0 : index
    %42 = vector.load %arg6[%c0_21, %c0_22, %c0_23] : memref<1x1x64xf32, #tpu.memory_space<vmem>>, vector<1x1x64xf32>
    tpu.vector_store %arg6[%c0_21, %c0_22, %c0_23], %41 {strides = array<i32>} : memref<1x1x64xf32, #tpu.memory_space<vmem>>, vector<1x1x64xf32>,
    return
  }
  func.func @transform_0(%arg0: i32) -> (i32, i32) {
    %c0_i32 = arith.constant 0 : i32
    %c0_i32_0 = arith.constant 0 : i32
    return %arg0, %c0_i32 : i32, i32
  }
  func.func @transform_1(%arg0: i32) -> (i32, i32) {
    %c0_i32 = arith.constant 0 : i32
    %c0_i32_0 = arith.constant 0 : i32
    return %arg0, %c0_i32 : i32, i32
  }
  func.func @transform_2(%arg0: i32) -> (i32, i32) {
    %c0_i32 = arith.constant 0 : i32
    %c0_i32_0 = arith.constant 0 : i32
    %c0_i32_1 = arith.constant 0 : i32
    return %c0_i32, %c0_i32_0 : i32, i32
  }
  func.func @transform_3(%arg0: i32) -> (i32, i32) {
    %c0_i32 = arith.constant 0 : i32
    %c0_i32_0 = arith.constant 0 : i32
    %c0_i32_1 = arith.constant 0 : i32
    return %c0_i32, %c0_i32_0 : i32, i32
  }
  func.func @transform_4(%arg0: i32) -> (i32, i32) {
    %c0_i32 = arith.constant 0 : i32
    %c0_i32_0 = arith.constant 0 : i32
    %c0_i32_1 = arith.constant 0 : i32
    return %c0_i32, %c0_i32_0 : i32, i32
  }
  func.func @transform_5(%arg0: i32) -> (i32, i32, i32) {
    %c0_i32 = arith.constant 0 : i32
    %c0_i32_0 = arith.constant 0 : i32
    %c0_i32_1 = arith.constant 0 : i32
    return %arg0, %c0_i32, %c0_i32_0 : i32, i32, i32
  }
}

module attributes {stable_mosaic.version = 11 : i64} {
  func.func @kernel(%arg0: i32, %arg1: memref<64x27xf32, #tpu.memory_space<vmem>>, %arg2: memref<27x64xf32, #tpu.memory_space<vmem>>, %arg3: memref<1x64xf32, #tpu.memory_space<vmem>>, %arg4: memref<64x64xbf16, #tpu.memory_space<vmem>>) attributes {dimension_semantics = [#tpu.dimension_semantics<parallel>], iteration_bounds = array<i64: 1>, scalar_prefetch = 0 : i64, scratch_operands = 0 : i64, tpu.core_type = #tpu.core_type<tc>, window_params = [{transform_indices = @transform_0, window_bounds = array<i64: 64, 27>}, {pipeline_mode = #tpu.pipeline_mode<synchronous>, transform_indices = @transform_1, window_bounds = array<i64: 27, 64>}, {pipeline_mode = #tpu.pipeline_mode<synchronous>, transform_indices = @transform_2, window_bounds = array<i64: 1, 64>}, {transform_indices = @transform_3, window_bounds = array<i64: 64, 64>}]} {
    %c0 = arith.constant 0 : index
    %c0_0 = arith.constant 0 : index
    %0 = vector.load %arg1[%c0, %c0_0] : memref<64x27xf32, #tpu.memory_space<vmem>>, vector<64x27xf32>
    %c0_1 = arith.constant 0 : index
    %c0_2 = arith.constant 0 : index
    %1 = vector.load %arg2[%c0_1, %c0_2] : memref<27x64xf32, #tpu.memory_space<vmem>>, vector<27x64xf32>
    %cst = arith.constant dense<0.000000e+00> : vector<64x64xf32>
    %2 = tpu.matmul %0, %1, %cst {dimension_numbers = #tpu.dot_dimension_numbers<[1], [0], [0], [1], [0, 0, 1, 1], [], []>} : vector<64x27xf32>, vector<27x64xf32>, vector<64x64xf32> -> vector<64x64xf32>
    %c0_3 = arith.constant 0 : index
    %c0_4 = arith.constant 0 : index
    %3 = vector.load %arg3[%c0_3, %c0_4] : memref<1x64xf32, #tpu.memory_space<vmem>>, vector<1x64xf32>
    %4 = vector.broadcast %3 : vector<1x64xf32> to vector<64x64xf32>
    %5 = arith.addf %2, %4 : vector<64x64xf32>
    %cst_5 = arith.constant 0.000000e+00 : f32
    %6 = vector.broadcast %cst_5 : f32 to vector<64x64xf32>
    %7 = arith.maximumf %5, %6 : vector<64x64xf32>
    %8 = arith.truncf %7 : vector<64x64xf32> to vector<64x64xbf16>
    %c0_6 = arith.constant 0 : index
    %c0_7 = arith.constant 0 : index
    %9 = vector.load %arg4[%c0_6, %c0_7] : memref<64x64xbf16, #tpu.memory_space<vmem>>, vector<64x64xbf16>
    tpu.vector_store %arg4[%c0_6, %c0_7], %8 {strides = array<i32>} : memref<64x64xbf16, #tpu.memory_space<vmem>>, vector<64x64xbf16>,
    return
  }
  func.func @transform_0(%arg0: i32) -> (i32, i32) {
    %c0_i32 = arith.constant 0 : i32
    %c0_i32_0 = arith.constant 0 : i32
    return %arg0, %c0_i32 : i32, i32
  }
  func.func @transform_1(%arg0: i32) -> (i32, i32) {
    %c0_i32 = arith.constant 0 : i32
    %c0_i32_0 = arith.constant 0 : i32
    %c0_i32_1 = arith.constant 0 : i32
    return %c0_i32, %c0_i32_0 : i32, i32
  }
  func.func @transform_2(%arg0: i32) -> (i32, i32) {
    %c0_i32 = arith.constant 0 : i32
    %c0_i32_0 = arith.constant 0 : i32
    %c0_i32_1 = arith.constant 0 : i32
    return %c0_i32, %c0_i32_0 : i32, i32
  }
  func.func @transform_3(%arg0: i32) -> (i32, i32) {
    %c0_i32 = arith.constant 0 : i32
    %c0_i32_0 = arith.constant 0 : i32
    return %arg0, %c0_i32 : i32, i32
  }
}

module attributes {stable_mosaic.version = 11 : i64} {
  func.func @kernel(%arg0: i32, %arg1: memref<32x576xbf16, #tpu.memory_space<vmem>>, %arg2: memref<32x576xbf16, #tpu.memory_space<vmem>>, %arg3: memref<576x64xbf16, #tpu.memory_space<vmem>>, %arg4: memref<1x64xf32, #tpu.memory_space<vmem>>, %arg5: memref<1x64xf32, #tpu.memory_space<vmem>>, %arg6: memref<1x1x64xf32, #tpu.memory_space<vmem>>) attributes {dimension_semantics = [#tpu.dimension_semantics<parallel>], iteration_bounds = array<i64: 1>, scalar_prefetch = 0 : i64, scratch_operands = 0 : i64, tpu.core_type = #tpu.core_type<tc>, window_params = [{transform_indices = @transform_0, window_bounds = array<i64: 32, 576>}, {transform_indices = @transform_1, window_bounds = array<i64: 32, 576>}, {pipeline_mode = #tpu.pipeline_mode<synchronous>, transform_indices = @transform_2, window_bounds = array<i64: 576, 64>}, {pipeline_mode = #tpu.pipeline_mode<synchronous>, transform_indices = @transform_3, window_bounds = array<i64: 1, 64>}, {pipeline_mode = #tpu.pipeline_mode<synchronous>, transform_indices = @transform_4, window_bounds = array<i64: 1, 64>}, {transform_indices = @transform_5, window_bounds = array<i64: 1, 1, 64>}]} {
    %c0 = arith.constant 0 : index
    %c0_0 = arith.constant 0 : index
    %0 = vector.load %arg1[%c0, %c0_0] : memref<32x576xbf16, #tpu.memory_space<vmem>>, vector<32x576xbf16>
    %c0_1 = arith.constant 0 : index
    %c0_2 = arith.constant 0 : index
    %1 = vector.load %arg3[%c0_1, %c0_2] : memref<576x64xbf16, #tpu.memory_space<vmem>>, vector<576x64xbf16>
    %cst = arith.constant dense<0.000000e+00> : vector<32x64xf32>
    %2 = tpu.matmul %0, %1, %cst {dimension_numbers = #tpu.dot_dimension_numbers<[1], [0], [0], [1], [0, 0, 1, 1], [], []>} : vector<32x576xbf16>, vector<576x64xbf16>, vector<32x64xf32> -> vector<32x64xf32>
    %c0_3 = arith.constant 0 : index
    %c0_4 = arith.constant 0 : index
    %3 = vector.load %arg4[%c0_3, %c0_4] : memref<1x64xf32, #tpu.memory_space<vmem>>, vector<1x64xf32>
    %4 = vector.broadcast %3 : vector<1x64xf32> to vector<32x64xf32>
    %5 = arith.addf %2, %4 : vector<32x64xf32>
    %cst_5 = arith.constant 0.000000e+00 : f32
    %6 = vector.broadcast %cst_5 : f32 to vector<32x64xf32>
    %7 = arith.maximumf %5, %6 : vector<32x64xf32>
    %c0_6 = arith.constant 0 : index
    %c0_7 = arith.constant 0 : index
    %8 = vector.load %arg2[%c0_6, %c0_7] : memref<32x576xbf16, #tpu.memory_space<vmem>>, vector<32x576xbf16>
    %c0_8 = arith.constant 0 : index
    %c0_9 = arith.constant 0 : index
    %9 = vector.load %arg3[%c0_8, %c0_9] : memref<576x64xbf16, #tpu.memory_space<vmem>>, vector<576x64xbf16>
    %cst_10 = arith.constant dense<0.000000e+00> : vector<32x64xf32>
    %10 = tpu.matmul %8, %9, %cst_10 {dimension_numbers = #tpu.dot_dimension_numbers<[1], [0], [0], [1], [0, 0, 1, 1], [], []>} : vector<32x576xbf16>, vector<576x64xbf16>, vector<32x64xf32> -> vector<32x64xf32>
    %c0_11 = arith.constant 0 : index
    %c0_12 = arith.constant 0 : index
    %11 = vector.load %arg4[%c0_11, %c0_12] : memref<1x64xf32, #tpu.memory_space<vmem>>, vector<1x64xf32>
    %12 = vector.broadcast %11 : vector<1x64xf32> to vector<32x64xf32>
    %13 = arith.addf %10, %12 : vector<32x64xf32>
    %cst_13 = arith.constant 0.000000e+00 : f32
    %14 = vector.broadcast %cst_13 : f32 to vector<32x64xf32>
    %15 = arith.maximumf %13, %14 : vector<32x64xf32>
    %16 = arith.mulf %7, %7 : vector<32x64xf32>
    %cst_14 = arith.constant dense<0.000000e+00> : vector<32xf32>
    %17 = vector.multi_reduction <add>, %16, %cst_14 [1] : vector<32x64xf32> to vector<32xf32>
    %18 = vector.shape_cast %17 : vector<32xf32> to vector<32x1xf32>
    %19 = math.sqrt %18 : vector<32x1xf32>
    %cst_15 = arith.constant 1.000000e-10 : f32
    %20 = vector.broadcast %cst_15 : f32 to vector<32x1xf32>
    %21 = arith.addf %19, %20 : vector<32x1xf32>
    %22 = tpu.reciprocal %21 {approx = true} : vector<32x1xf32> -> vector<32x1xf32>
    %23 = arith.mulf %15, %15 : vector<32x64xf32>
    %cst_16 = arith.constant dense<0.000000e+00> : vector<32xf32>
    %24 = vector.multi_reduction <add>, %23, %cst_16 [1] : vector<32x64xf32> to vector<32xf32>
    %25 = vector.shape_cast %24 : vector<32xf32> to vector<32x1xf32>
    %26 = math.sqrt %25 : vector<32x1xf32>
    %cst_17 = arith.constant 1.000000e-10 : f32
    %27 = vector.broadcast %cst_17 : f32 to vector<32x1xf32>
    %28 = arith.addf %26, %27 : vector<32x1xf32>
    %29 = tpu.reciprocal %28 {approx = true} : vector<32x1xf32> -> vector<32x1xf32>
    %30 = vector.broadcast %22 : vector<32x1xf32> to vector<32x64xf32>
    %31 = arith.mulf %7, %30 : vector<32x64xf32>
    %32 = vector.broadcast %29 : vector<32x1xf32> to vector<32x64xf32>
    %33 = arith.mulf %15, %32 : vector<32x64xf32>
    %34 = arith.subf %31, %33 : vector<32x64xf32>
    %35 = arith.mulf %34, %34 : vector<32x64xf32>
    %c0_18 = arith.constant 0 : index
    %c0_19 = arith.constant 0 : index
    %36 = vector.load %arg5[%c0_18, %c0_19] : memref<1x64xf32, #tpu.memory_space<vmem>>, vector<1x64xf32>
    %37 = vector.broadcast %36 : vector<1x64xf32> to vector<32x64xf32>
    %38 = arith.mulf %35, %37 : vector<32x64xf32>
    %cst_20 = arith.constant dense<0.000000e+00> : vector<64xf32>
    %39 = vector.multi_reduction <add>, %38, %cst_20 [0] : vector<32x64xf32> to vector<64xf32>
    %40 = vector.shape_cast %39 : vector<64xf32> to vector<1x64xf32>
    %41 = vector.shape_cast %40 : vector<1x64xf32> to vector<1x1x64xf32>
    %c0_21 = arith.constant 0 : index
    %c0_22 = arith.constant 0 : index
    %c0_23 = arith.constant 0 : index
    %42 = vector.load %arg6[%c0_21, %c0_22, %c0_23] : memref<1x1x64xf32, #tpu.memory_space<vmem>>, vector<1x1x64xf32>
    tpu.vector_store %arg6[%c0_21, %c0_22, %c0_23], %41 {strides = array<i32>} : memref<1x1x64xf32, #tpu.memory_space<vmem>>, vector<1x1x64xf32>,
    return
  }
  func.func @transform_0(%arg0: i32) -> (i32, i32) {
    %c0_i32 = arith.constant 0 : i32
    %c0_i32_0 = arith.constant 0 : i32
    return %arg0, %c0_i32 : i32, i32
  }
  func.func @transform_1(%arg0: i32) -> (i32, i32) {
    %c0_i32 = arith.constant 0 : i32
    %c0_i32_0 = arith.constant 0 : i32
    return %arg0, %c0_i32 : i32, i32
  }
  func.func @transform_2(%arg0: i32) -> (i32, i32) {
    %c0_i32 = arith.constant 0 : i32
    %c0_i32_0 = arith.constant 0 : i32
    %c0_i32_1 = arith.constant 0 : i32
    return %c0_i32, %c0_i32_0 : i32, i32
  }
  func.func @transform_3(%arg0: i32) -> (i32, i32) {
    %c0_i32 = arith.constant 0 : i32
    %c0_i32_0 = arith.constant 0 : i32
    %c0_i32_1 = arith.constant 0 : i32
    return %c0_i32, %c0_i32_0 : i32, i32
  }
  func.func @transform_4(%arg0: i32) -> (i32, i32) {
    %c0_i32 = arith.constant 0 : i32
    %c0_i32_0 = arith.constant 0 : i32
    %c0_i32_1 = arith.constant 0 : i32
    return %c0_i32, %c0_i32_0 : i32, i32
  }
  func.func @transform_5(%arg0: i32) -> (i32, i32, i32) {
    %c0_i32 = arith.constant 0 : i32
    %c0_i32_0 = arith.constant 0 : i32
    %c0_i32_1 = arith.constant 0 : i32
    return %arg0, %c0_i32, %c0_i32_0 : i32, i32, i32
  }
}

</mosaic_0001>

<llo_original>
// kernel: _lambda_.6
$region0: #{_lambda_.6}
  #allocation0 [shape = 'u32[]', space=smem, size = 0x4, offset = 0x4, fixed_abs, tag = 'smem constant byte address 0x4 - core index']
  #allocation1 [shape = 'u32[144,128]{1,0:T(1,128)}', space=vmem, size = 0x12000, scoped, tag = 'internal scratch']
  %s0 = inlined_call_operand.vmem [shape: f32[1024,27], index: 0, kind: input, shape index: {}]
  %s1 = inlined_call_operand.vmem [shape: f32[27,64], index: 1, kind: input, shape index: {}]
  %s2 = inlined_call_operand.vmem [shape: f32[1,64], index: 2, kind: input, shape index: {}]
  %s3 = inlined_call_operand.vmem [shape: bf16[1024,64], index: 3, kind: output, shape index: {}]
  %s4 = sld [smem:[#allocation0]]
  $region45: #{_lambda_.6} parent=0
    _
  %s6 = ssub.s32 1, %s4
  %s7 = scalar_select 0, %s6, %s4
  loop: start=0, step=1, limit=4
  $region2: #{_lambda_.6} parent=0 // loop_pre_header
    _
  $region3: #{_lambda_.6} parent=0 // loop_header
    %s9 = sphi 0, %s13
    %p10 = scmp.ge.s32.totalorder %s9, 4
    %s19 = sphi 0, %s21
    %s22 = sphi 0, %s19
    %s23 = sphi 0, %s22
    %s39 = sphi 0, %s23
    %s43 = sphi 0, %s43
    %s45 = sphi 0, %s43
    %s46 = sphi 0, %s45
    %s60 = sphi 0, %s46
    %s64 = sphi 0, %s64
    %s66 = sphi 0, %s64
    %s67 = sphi 0, %s66
    %s81 = sphi 0, %s67
    %s87 = sphi 0, %s89
    %s90 = sphi 0, %s87
    %s91 = sphi 0, %s90
    %s107 = sphi 0, %s91
  $region4: #{_lambda_.6} parent=0 // loop_header_branch
    %12 = sbr.rel (%p10) target = $region8
  $region5: #{_lambda_.6} parent=0 // loop_body
    %s14 = ssub.s32 %s9, 1
    %s15 = ssub.s32 %s9, 2
    %s16 = sadd.s32 %s9, 1
    %s17 = ssub.s32 %s9, %s16
    %p18 = scmp.eq.s32.totalorder %s17, 0
    %s20 = sadd.s32 %s19, 1
    %s21 = scalar_select %p18, %s19, %s20
    %p24 = pneg %p18
    %p25 = scmp.eq.s32.totalorder %s9, 1
    %p26 = por %p24, %p25
    %p27 = scmp.ne.s32.totalorder %s19, %s22
    %p28 = scmp.eq.s32.totalorder %s9, 0
    %p29 = por %p27, %p28
    %p30 = scmp.ne.s32.totalorder %s19, %s22
    %p31 = scmp.eq.s32.totalorder %s14, 1
    %p32 = por %p30, %p31
    %p33 = scmp.ne.s32.totalorder %s22, %s23
    %p34 = scmp.eq.s32.totalorder %s14, 0
    %p35 = por %p33, %p34
    %p36 = scmp.ne.s32.totalorder %s22, %s23
    %p37 = scmp.eq.s32.totalorder %s15, 1
    %p38 = por %p36, %p37
    %p40 = scmp.ne.s32.totalorder %s23, %s39
    %p41 = scmp.eq.s32.totalorder %s15, 0
    %p42 = por %p40, %p41
    %s44 = sadd.s32 %s43, 1
    %p47 = scmp.eq.s32.totalorder %s9, 1
    %p48 = scmp.ne.s32.totalorder %s43, %s45
    %p49 = scmp.eq.s32.totalorder %s9, 0
    %p50 = por %p48, %p49
    %p51 = scmp.ne.s32.totalorder %s43, %s45
    %p52 = scmp.eq.s32.totalorder %s14, 1
    %p53 = por %p51, %p52
    %p54 = scmp.ne.s32.totalorder %s45, %s46
    %p55 = scmp.eq.s32.totalorder %s14, 0
    %p56 = por %p54, %p55
    %p57 = scmp.ne.s32.totalorder %s45, %s46
    %p58 = scmp.eq.s32.totalorder %s15, 1
    %p59 = por %p57, %p58
    %p61 = scmp.ne.s32.totalorder %s46, %s60
    %p62 = scmp.eq.s32.totalorder %s15, 0
    %p63 = por %p61, %p62
    %s65 = sadd.s32 %s64, 1
    %p68 = scmp.eq.s32.totalorder %s9, 1
    %p69 = scmp.ne.s32.totalorder %s64, %s66
    %p70 = scmp.eq.s32.totalorder %s9, 0
    %p71 = por %p69, %p70
    %p72 = scmp.ne.s32.totalorder %s64, %s66
    %p73 = scmp.eq.s32.totalorder %s14, 1
    %p74 = por %p72, %p73
    %p75 = scmp.ne.s32.totalorder %s66, %s67
    %p76 = scmp.eq.s32.totalorder %s14, 0
    %p77 = por %p75, %p76
    %p78 = scmp.ne.s32.totalorder %s66, %s67
    %p79 = scmp.eq.s32.totalorder %s15, 1
    %p80 = por %p78, %p79
    %p82 = scmp.ne.s32.totalorder %s67, %s81
    %p83 = scmp.eq.s32.totalorder %s15, 0
    %p84 = por %p82, %p83
    %s85 = ssub.s32 %s9, %s16
    %p86 = scmp.eq.s32.totalorder %s85, 0
    %s88 = sadd.s32 %s87, 1
    %s89 = scalar_select %p86, %s87, %s88
    %p92 = pneg %p86
    %p93 = scmp.eq.s32.totalorder %s9, 1
    %p94 = por %p92, %p93
    %p95 = scmp.ne.s32.totalorder %s87, %s90
    %p96 = scmp.eq.s32.totalorder %s9, 0
    %p97 = por %p95, %p96
    %p98 = scmp.ne.s32.totalorder %s87, %s90
    %p99 = scmp.eq.s32.totalorder %s14, 1
    %p100 = por %p98, %p99
    %p101 = scmp.ne.s32.totalorder %s90, %s91
    %p102 = scmp.eq.s32.totalorder %s14, 0
    %p103 = por %p101, %p102
    %p104 = scmp.ne.s32.totalorder %s90, %s91
    %p105 = scmp.eq.s32.totalorder %s15, 1
    %p106 = por %p104, %p105
    %p108 = scmp.ne.s32.totalorder %s91, %s107
    %p109 = scmp.eq.s32.totalorder %s15, 0
    %p110 = por %p108, %p109
    %p111 = scmp.le.s32.totalorder 1, %s9
    %p112 = scmp.lt.s32.totalorder %s9, 3
    %p113 = pnand %p111, %p112
    %p114 = pneg %p113
    // Predicated region
    $region9: #{_lambda_.6} parent=5 // pred_check
      _
    $region10: #{_lambda_.6} parent=5 // pred_check_branch
      %116 = sbr.rel (%p113) target = $region12
    $region11: #{_lambda_.6} parent=5 // pred_region
      %s117 = ssub.s32 %s9, 1
      // Predicated region
      $region13: #{_lambda_.6} parent=11 // pred_check
        %p118 = pneg %p56
      $region14: #{_lambda_.6} parent=11 // pred_check_branch
        %120 = sbr.rel (%p118) target = $region16
      $region15: #{_lambda_.6} parent=11 // pred_region
        _
      $region16: #{_lambda_.6} parent=11 // pred_fallthru
        _
      // Predicated region
      $region17: #{_lambda_.6} parent=11 // pred_check
        %p121 = pneg %p77
      $region18: #{_lambda_.6} parent=11 // pred_check_branch
        %123 = sbr.rel (%p121) target = $region20
      $region19: #{_lambda_.6} parent=11 // pred_region
        _
      $region20: #{_lambda_.6} parent=11 // pred_fallthru
        _
    $region12: #{_lambda_.6} parent=5 // pred_fallthru
      _
    %p124 = scmp.lt.s32.totalorder %s9, 2
    // Predicated region
    $region21: #{_lambda_.6} parent=5 // pred_check
      %p125 = pneg %p124
    $region22: #{_lambda_.6} parent=5 // pred_check_branch
      %127 = sbr.rel (%p125) target = $region24
    $region23: #{_lambda_.6} parent=5 // pred_region
      // Predicated region
      $region25: #{_lambda_.6} parent=23 // pred_check
        %p128 = pneg %p29
      $region26: #{_lambda_.6} parent=23 // pred_check_branch
        %130 = sbr.rel (%p128) target = $region28
      $region27: #{_lambda_.6} parent=23 // pred_region
        %s131 = smul.u32 64, %s9
        %p132 = scmp.lt.s32.totalorder %s131, 127
        %s133 = scalar_select %p132, %s131, 127
        %s134 = smul.addr %s133, 8
        %s135 = scalar_lea.vmem %s0, %s134
        %s136 = smul.u32 64, %s9
      $region28: #{_lambda_.6} parent=23 // pred_fallthru
        _
    $region24: #{_lambda_.6} parent=5 // pred_fallthru
      _
    %p137 = scmp.le.s32.totalorder 1, %s9
    %p138 = scmp.lt.s32.totalorder %s9, 3
    %p139 = pnand %p137, %p138
    %p140 = pneg %p139
    // Predicated region
    $region29: #{_lambda_.6} parent=5 // pred_check
      _
    $region30: #{_lambda_.6} parent=5 // pred_check_branch
      %142 = sbr.rel (%p139) target = $region32
    $region31: #{_lambda_.6} parent=5 // pred_region
      %s143 = ssub.s32 %s9, 1
      %s144 = smul.u32 64, %s14
      %p145 = scmp.lt.s32.totalorder %s144, 127
      %s146 = scalar_select %p145, %s144, 127
      %s147 = smul.addr %s146, 8
      %s148 = scalar_lea.vmem %s0, %s147
      %p149 = pneg %p35
      %p150 = pneg %p32
      %p151 = pneg %p56
      %p152 = pneg %p53
      %p153 = pneg %p77
      %p154 = pneg %p74
      %p155 = pneg %p103
      %p156 = pneg %p100
      %s157 = smul.u32 64, %s14
      %p158 = scmp.lt.s32.totalorder %s157, 127
      %s159 = scalar_select %p158, %s157, 127
      %s160 = smul.addr %s159, 4
      %s161 = scalar_lea.vmem %s3, %s160
      %s162 = smul.u32 64, %s14
      %p163 = scmp.lt.s32.totalorder %s162, 127
      %s164 = scalar_select %p163, %s162, 127
      %s165 = smul.addr %s164, 8
      %s166 = scalar_lea.vmem %s0, %s165
      %s167 = smul.u32 64, %s14
      %s168 = smul.u32 64, %s14
      %p169 = scmp.lt.s32.totalorder %s168, 127
      %s170 = scalar_select %p169, %s168, 127
      %s171 = smul.addr %s170, 4
      %s172 = scalar_lea.vmem %s3, %s171
      %s173 = smul.u32 64, %s14
      %v174 = vld [vmem:[%s166] sm:$0xff]
      %v175 = vld [vmem:[%s166 + $0x8] sm:$0xff]
      %v176 = vld [vmem:[%s166 + $0x10] sm:$0xff]
      %v177 = vld [vmem:[%s166 + $0x18] sm:$0xff]
      %v178 = vld [vmem:[%s166 + $0x20] sm:$0xff]
      %v179 = vld [vmem:[%s166 + $0x28] sm:$0xff]
      %v180 = vld [vmem:[%s166 + $0x30] sm:$0xff]
      %v181 = vld [vmem:[%s166 + $0x38] sm:$0xff]
      %v182 = vld [vmem:[%s166 + $0x40] sm:$0xff]
      %v183 = vld [vmem:[%s166 + $0x48] sm:$0xff]
      %v184 = vld [vmem:[%s166 + $0x50] sm:$0xff]
      %v185 = vld [vmem:[%s166 + $0x58] sm:$0xff]
      %v186 = vld [vmem:[%s166 + $0x60] sm:$0xff]
      %v187 = vld [vmem:[%s166 + $0x68] sm:$0xff]
      %v188 = vld [vmem:[%s166 + $0x70] sm:$0xff]
      %v189 = vld [vmem:[%s166 + $0x78] sm:$0xff]
      %v190 = vld [vmem:[%s166 + $0x80] sm:$0xff]
      %v191 = vld [vmem:[%s166 + $0x88] sm:$0xff]
      %v192 = vld [vmem:[%s166 + $0x90] sm:$0xff]
      %v193 = vld [vmem:[%s166 + $0x98] sm:$0xff]
      %v194 = vld [vmem:[%s166 + $0xa0] sm:$0xff]
      %v195 = vld [vmem:[%s166 + $0xa8] sm:$0xff]
      %v196 = vld [vmem:[%s166 + $0xb0] sm:$0xff]
      %v197 = vld [vmem:[%s166 + $0xb8] sm:$0xff]
      %v198 = vld [vmem:[%s166 + $0xc0] sm:$0xff]
      %v199 = vld [vmem:[%s166 + $0xc8] sm:$0xff]
      %v200 = vld [vmem:[%s166 + $0xd0] sm:$0xff]
      %v201 = vld [vmem:[%s166 + $0xd8] sm:$0xff]
      %v202 = vld [vmem:[%s166 + $0xe0] sm:$0xff]
      %v203 = vld [vmem:[%s166 + $0xe8] sm:$0xff]
      %v204 = vld [vmem:[%s166 + $0xf0] sm:$0xff]
      %v205 = vld [vmem:[%s166 + $0xf8] sm:$0xff]
      %v206 = vld [vmem:[%s166 + $0x100] sm:$0xff]
      %v207 = vld [vmem:[%s166 + $0x108] sm:$0xff]
      %v208 = vld [vmem:[%s166 + $0x110] sm:$0xff]
      %v209 = vld [vmem:[%s166 + $0x118] sm:$0xff]
      %v210 = vld [vmem:[%s166 + $0x120] sm:$0xff]
      %v211 = vld [vmem:[%s166 + $0x128] sm:$0xff]
      %v212 = vld [vmem:[%s166 + $0x130] sm:$0xff]
      %v213 = vld [vmem:[%s166 + $0x138] sm:$0xff]
      %v214 = vld [vmem:[%s166 + $0x140] sm:$0xff]
      %v215 = vld [vmem:[%s166 + $0x148] sm:$0xff]
      %v216 = vld [vmem:[%s166 + $0x150] sm:$0xff]
      %v217 = vld [vmem:[%s166 + $0x158] sm:$0xff]
      %v218 = vld [vmem:[%s166 + $0x160] sm:$0xff]
      %v219 = vld [vmem:[%s166 + $0x168] sm:$0xff]
      %v220 = vld [vmem:[%s166 + $0x170] sm:$0xff]
      %v221 = vld [vmem:[%s166 + $0x178] sm:$0xff]
      %v222 = vld [vmem:[%s166 + $0x180] sm:$0xff]
      %v223 = vld [vmem:[%s166 + $0x188] sm:$0xff]
      %v224 = vld [vmem:[%s166 + $0x190] sm:$0xff]
      %v225 = vld [vmem:[%s166 + $0x198] sm:$0xff]
      %v226 = vld [vmem:[%s166 + $0x1a0] sm:$0xff]
      %v227 = vld [vmem:[%s166 + $0x1a8] sm:$0xff]
      %v228 = vld [vmem:[%s166 + $0x1b0] sm:$0xff]
      %v229 = vld [vmem:[%s166 + $0x1b8] sm:$0xff]
      %v230 = vld [vmem:[%s166 + $0x1c0] sm:$0xff]
      %v231 = vld [vmem:[%s166 + $0x1c8] sm:$0xff]
      %v232 = vld [vmem:[%s166 + $0x1d0] sm:$0xff]
      %v233 = vld [vmem:[%s166 + $0x1d8] sm:$0xff]
      %v234 = vld [vmem:[%s166 + $0x1e0] sm:$0xff]
      %v235 = vld [vmem:[%s166 + $0x1e8] sm:$0xff]
      %v236 = vld [vmem:[%s166 + $0x1f0] sm:$0xff]
      %v237 = vld [vmem:[%s166 + $0x1f8] sm:$0xff]
      %v238 = vld [vmem:[%s1] sm:$0xff]
      %v239 = vld [vmem:[%s1 + $0x8] sm:$0xff]
      %v240 = vld [vmem:[%s1 + $0x10] sm:$0xff]
      %v241 = vld [vmem:[%s1 + $0x18] sm:$0x7]
      %v242 = vld [vmem:[%s2] sm:$0x1]
      %v244 = vlaneseq
      %v245 = vshrl.u32 %v244, 7
      %v246 = vsub.s32 0, %v245
      %v247 = vrot.slane %v242, %v246
      %vm249 = vcmask 220160
      %v251 = vsel %vm249, %v174, 0
      %v254 = vsel %vm249, %v175, 0
      %v257 = vsel %vm249, %v176, 0
      %v260 = vsel %vm249, %v177, 0
      %v263 = vsel %vm249, %v178, 0
      %v266 = vsel %vm249, %v179, 0
      %v269 = vsel %vm249, %v180, 0
      %v272 = vsel %vm249, %v181, 0
      %v275 = vsel %vm249, %v182, 0
      %v278 = vsel %vm249, %v183, 0
      %v281 = vsel %vm249, %v184, 0
      %v284 = vsel %vm249, %v185, 0
      %v287 = vsel %vm249, %v186, 0
      %v290 = vsel %vm249, %v187, 0
      %v293 = vsel %vm249, %v188, 0
      %v296 = vsel %vm249, %v189, 0
      %v299 = vsel %vm249, %v190, 0
      %v302 = vsel %vm249, %v191, 0
      %v305 = vsel %vm249, %v192, 0
      %v308 = vsel %vm249, %v193, 0
      %v311 = vsel %vm249, %v194, 0
      %v314 = vsel %vm249, %v195, 0
      %v317 = vsel %vm249, %v196, 0
      %v320 = vsel %vm249, %v197, 0
      %v323 = vsel %vm249, %v198, 0
      %v326 = vsel %vm249, %v199, 0
      %v329 = vsel %vm249, %v200, 0
      %v332 = vsel %vm249, %v201, 0
      %v335 = vsel %vm249, %v202, 0
      %v338 = vsel %vm249, %v203, 0
      %v341 = vsel %vm249, %v204, 0
      %v344 = vsel %vm249, %v205, 0
      %v347 = vsel %vm249, %v206, 0
      %v350 = vsel %vm249, %v207, 0
      %v353 = vsel %vm249, %v208, 0
      %v356 = vsel %vm249, %v209, 0
      %v359 = vsel %vm249, %v210, 0
      %v362 = vsel %vm249, %v211, 0
      %v365 = vsel %vm249, %v212, 0
      %v368 = vsel %vm249, %v213, 0
      %v371 = vsel %vm249, %v214, 0
      %v374 = vsel %vm249, %v215, 0
      %v377 = vsel %vm249, %v216, 0
      %v380 = vsel %vm249, %v217, 0
      %v383 = vsel %vm249, %v218, 0
      %v386 = vsel %vm249, %v219, 0
      %v389 = vsel %vm249, %v220, 0
      %v392 = vsel %vm249, %v221, 0
      %v395 = vsel %vm249, %v222, 0
      %v398 = vsel %vm249, %v223, 0
      %v401 = vsel %vm249, %v224, 0
      %v404 = vsel %vm249, %v225, 0
      %v407 = vsel %vm249, %v226, 0
      %v410 = vsel %vm249, %v227, 0
      %v413 = vsel %vm249, %v228, 0
      %v416 = vsel %vm249, %v229, 0
      %v419 = vsel %vm249, %v230, 0
      %v422 = vsel %vm249, %v231, 0
      %v425 = vsel %vm249, %v232, 0
      %v428 = vsel %vm249, %v233, 0
      %v431 = vsel %vm249, %v234, 0
      %v434 = vsel %vm249, %v235, 0
      %v437 = vsel %vm249, %v236, 0
      %v440 = vsel %vm249, %v237, 0
      %vm442 = vcmask 1042432
      %v444 = vsel %vm442, %v241, 0
      %446 = vmatprep.subr.mxu0 0.0
      %447 = vmatpush1.msra.mxu0 %v238
      %448 = vmatprep.subr.mxu0 0.0
      %449 = vmatpush1.msra.mxu0 %v239
      %450 = vmatprep.subr.mxu0 0.0
      %451 = vmatpush1.msra.mxu0 %v240
      %452 = vmatprep.subr.mxu0 0.0
      %453 = vmatpush1.msra.mxu0 %v444
      %454 = vmatprep.subr.mxu0 0.0
      %455 = vmatpush1.msra.mxu0 0.0
      %456 = vmatprep.subr.mxu0 0.0
      %457 = vmatpush1.msra.mxu0 0.0
      %458 = vmatprep.subr.mxu0 0.0
      %459 = vmatpush1.msra.mxu0 0.0
      %460 = vmatprep.subr.mxu0 0.0
      %461 = vmatpush1.msra.mxu0 0.0
      %462 = vmatprep.subr.mxu0 0.0
      %463 = vmatpush1.msra.mxu0 0.0
      %464 = vmatprep.subr.mxu0 0.0
      %465 = vmatpush1.msra.mxu0 0.0
      %466 = vmatprep.subr.mxu0 0.0
      %467 = vmatpush1.msra.mxu0 0.0
      %468 = vmatprep.subr.mxu0 0.0
      %469 = vmatpush1.msra.mxu0 0.0
      %470 = vmatprep.subr.mxu0 0.0
      %471 = vmatpush1.msra.mxu0 0.0
      %472 = vmatprep.subr.mxu0 0.0
      %473 = vmatpush1.msra.mxu0 0.0
      %474 = vmatprep.subr.mxu0 0.0
      %475 = vmatpush1.msra.mxu0 0.0
      %476 = vmatprep.subr.mxu0 0.0
      %477 = vmatpush1.msra.mxu0 0.0
      %478 = vmatprep.subr.mxu0 0.0
      %479 = vmatpush1.msra.mxu0 0.0
      %480 = vmatprep.subr.mxu0 0.0
      %481 = vmatpush1.msra.mxu0 0.0
      %482 = vmatprep.subr.mxu0 0.0
      %483 = vmatpush1.msra.mxu0 0.0
      %484 = vmatprep.subr.mxu0 0.0
      %485 = vmatpush1.msra.mxu0 0.0
      %486 = vmatprep.subr.mxu0 0.0
      %487 = vmatpush1.msra.mxu0 0.0
      %488 = vmatprep.subr.mxu0 0.0
      %489 = vmatpush1.msra.mxu0 0.0
      %490 = vmatprep.subr.mxu0 0.0
      %491 = vmatpush1.msra.mxu0 0.0
      %492 = vmatprep.subr.mxu0 0.0
      %493 = vmatpush1.msra.mxu0 0.0
      %494 = vmatprep.subr.mxu0 0.0
      %495 = vmatpush1.msra.mxu0 0.0
      %496 = vmatprep.subr.mxu0 0.0
      %497 = vmatpush1.msra.mxu0 0.0
      %498 = vmatprep.subr.mxu0 0.0
      %499 = vmatpush1.msra.mxu0 0.0
      %500 = vmatprep.subr.mxu0 0.0
      %501 = vmatpush1.msra.mxu0 0.0
      %502 = vmatprep.subr.mxu0 0.0
      %503 = vmatpush1.msra.mxu0 0.0
      %504 = vmatprep.subr.mxu0 0.0
      %505 = vmatpush1.msra.mxu0 0.0
      %506 = vmatprep.subr.mxu0 0.0
      %507 = vmatpush1.msra.mxu0 0.0
      %508 = vmatprep.subr.mxu0 0.0
      %509 = vmatpush1.msra.mxu0 0.0
      %510 = vmatprep.mubr.f32.mxu0 0.0
      %511 = vmatmul.mubr.f32.gmra.mrb[0].mxu0 %v251
      %v512 = vpop.f32.mrb[0].mxu0
      %v513 = vadd.f32 %v247, %v512
      %v514 = vpop.f32.mrb[0].mxu0
      %515 = vmatprep.mubr.f32.mxu0 0.0
      %516 = vmatmul.mubr.f32.gmra.mrb[0].mxu0 %v254
      %v517 = vpop.f32.mrb[0].mxu0
      %v518 = vadd.f32 %v247, %v517
      %v519 = vpop.f32.mrb[0].mxu0
      %520 = vmatprep.mubr.f32.mxu0 0.0
      %521 = vmatmul.mubr.f32.gmra.mrb[0].mxu0 %v257
      %v522 = vpop.f32.mrb[0].mxu0
      %v523 = vadd.f32 %v247, %v522
      %v524 = vpop.f32.mrb[0].mxu0
      %525 = vmatprep.mubr.f32.mxu0 0.0
      %526 = vmatmul.mubr.f32.gmra.mrb[0].mxu0 %v260
      %v527 = vpop.f32.mrb[0].mxu0
      %v528 = vadd.f32 %v247, %v527
      %v529 = vpop.f32.mrb[0].mxu0
      %530 = vmatprep.mubr.f32.mxu0 0.0
      %531 = vmatmul.mubr.f32.gmra.mrb[0].mxu0 %v263
      %v532 = vpop.f32.mrb[0].mxu0
      %v533 = vadd.f32 %v247, %v532
      %v534 = vpop.f32.mrb[0].mxu0
      %535 = vmatprep.mubr.f32.mxu0 0.0
      %536 = vmatmul.mubr.f32.gmra.mrb[0].mxu0 %v266
      %v537 = vpop.f32.mrb[0].mxu0
      %v538 = vadd.f32 %v247, %v537
      %v539 = vpop.f32.mrb[0].mxu0
      %540 = vmatprep.mubr.f32.mxu0 0.0
      %541 = vmatmul.mubr.f32.gmra.mrb[0].mxu0 %v269
      %v542 = vpop.f32.mrb[0].mxu0
      %v543 = vadd.f32 %v247, %v542
      %v544 = vpop.f32.mrb[0].mxu0
      %545 = vmatprep.mubr.f32.mxu0 0.0
      %546 = vmatmul.mubr.f32.gmra.mrb[0].mxu0 %v272
      %v547 = vpop.f32.mrb[0].mxu0
      %v548 = vadd.f32 %v247, %v547
      %v549 = vpop.f32.mrb[0].mxu0
      %550 = vmatprep.mubr.f32.mxu0 0.0
      %551 = vmatmul.mubr.f32.gmra.mrb[0].mxu0 %v275
      %v552 = vpop.f32.mrb[0].mxu0
      %v553 = vadd.f32 %v247, %v552
      %v554 = vpop.f32.mrb[0].mxu0
      %555 = vmatprep.mubr.f32.mxu0 0.0
      %556 = vmatmul.mubr.f32.gmra.mrb[0].mxu0 %v278
      %v557 = vpop.f32.mrb[0].mxu0
      %v558 = vadd.f32 %v247, %v557
      %v559 = vpop.f32.mrb[0].mxu0
      %560 = vmatprep.mubr.f32.mxu0 0.0
      %561 = vmatmul.mubr.f32.gmra.mrb[0].mxu0 %v281
      %v562 = vpop.f32.mrb[0].mxu0
      %v563 = vadd.f32 %v247, %v562
      %v564 = vpop.f32.mrb[0].mxu0
      %565 = vmatprep.mubr.f32.mxu0 0.0
      %566 = vmatmul.mubr.f32.gmra.mrb[0].mxu0 %v284
      %v567 = vpop.f32.mrb[0].mxu0
      %v568 = vadd.f32 %v247, %v567
      %v569 = vpop.f32.mrb[0].mxu0
      %570 = vmatprep.mubr.f32.mxu0 0.0
      %571 = vmatmul.mubr.f32.gmra.mrb[0].mxu0 %v287
      %v572 = vpop.f32.mrb[0].mxu0
      %v573 = vadd.f32 %v247, %v572
      %v574 = vpop.f32.mrb[0].mxu0
      %575 = vmatprep.mubr.f32.mxu0 0.0
      %576 = vmatmul.mubr.f32.gmra.mrb[0].mxu0 %v290
      %v577 = vpop.f32.mrb[0].mxu0
      %v578 = vadd.f32 %v247, %v577
      %v579 = vpop.f32.mrb[0].mxu0
      %580 = vmatprep.mubr.f32.mxu0 0.0
      %581 = vmatmul.mubr.f32.gmra.mrb[0].mxu0 %v293
      %v582 = vpop.f32.mrb[0].mxu0
      %v583 = vadd.f32 %v247, %v582
      %v584 = vpop.f32.mrb[0].mxu0
      %585 = vmatprep.mubr.f32.mxu0 0.0
      %586 = vmatmul.mubr.f32.gmra.mrb[0].mxu0 %v296
      %v587 = vpop.f32.mrb[0].mxu0
      %v588 = vadd.f32 %v247, %v587
      %v589 = vpop.f32.mrb[0].mxu0
      %590 = vmatprep.mubr.f32.mxu0 0.0
      %591 = vmatmul.mubr.f32.gmra.mrb[0].mxu0 %v299
      %v592 = vpop.f32.mrb[0].mxu0
      %v593 = vadd.f32 %v247, %v592
      %v594 = vpop.f32.mrb[0].mxu0
      %595 = vmatprep.mubr.f32.mxu0 0.0
      %596 = vmatmul.mubr.f32.gmra.mrb[0].mxu0 %v302
      %v597 = vpop.f32.mrb[0].mxu0
      %v598 = vadd.f32 %v247, %v597
      %v599 = vpop.f32.mrb[0].mxu0
      %600 = vmatprep.mubr.f32.mxu0 0.0
      %601 = vmatmul.mubr.f32.gmra.mrb[0].mxu0 %v305
      %v602 = vpop.f32.mrb[0].mxu0
      %v603 = vadd.f32 %v247, %v602
      %v604 = vpop.f32.mrb[0].mxu0
      %605 = vmatprep.mubr.f32.mxu0 0.0
      %606 = vmatmul.mubr.f32.gmra.mrb[0].mxu0 %v308
      %v607 = vpop.f32.mrb[0].mxu0
      %v608 = vadd.f32 %v247, %v607
      %v609 = vpop.f32.mrb[0].mxu0
      %610 = vmatprep.mubr.f32.mxu0 0.0
      %611 = vmatmul.mubr.f32.gmra.mrb[0].mxu0 %v311
      %v612 = vpop.f32.mrb[0].mxu0
      %v613 = vadd.f32 %v247, %v612
      %v614 = vpop.f32.mrb[0].mxu0
      %615 = vmatprep.mubr.f32.mxu0 0.0
      %616 = vmatmul.mubr.f32.gmra.mrb[0].mxu0 %v314
      %v617 = vpop.f32.mrb[0].mxu0
      %v618 = vadd.f32 %v247, %v617
      %v619 = vpop.f32.mrb[0].mxu0
      %620 = vmatprep.mubr.f32.mxu0 0.0
      %621 = vmatmul.mubr.f32.gmra.mrb[0].mxu0 %v317
      %v622 = vpop.f32.mrb[0].mxu0
      %v623 = vadd.f32 %v247, %v622
      %v624 = vpop.f32.mrb[0].mxu0
      %625 = vmatprep.mubr.f32.mxu0 0.0
      %626 = vmatmul.mubr.f32.gmra.mrb[0].mxu0 %v320
      %v627 = vpop.f32.mrb[0].mxu0
      %v628 = vadd.f32 %v247, %v627
      %v629 = vpop.f32.mrb[0].mxu0
      %630 = vmatprep.mubr.f32.mxu0 0.0
      %631 = vmatmul.mubr.f32.gmra.mrb[0].mxu0 %v323
      %v632 = vpop.f32.mrb[0].mxu0
      %v633 = vadd.f32 %v247, %v632
      %v634 = vpop.f32.mrb[0].mxu0
      %635 = vmatprep.mubr.f32.mxu0 0.0
      %636 = vmatmul.mubr.f32.gmra.mrb[0].mxu0 %v326
      %v637 = vpop.f32.mrb[0].mxu0
      %v638 = vadd.f32 %v247, %v637
      %v639 = vpop.f32.mrb[0].mxu0
      %640 = vmatprep.mubr.f32.mxu0 0.0
      %641 = vmatmul.mubr.f32.gmra.mrb[0].mxu0 %v329
      %v642 = vpop.f32.mrb[0].mxu0
      %v643 = vadd.f32 %v247, %v642
      %v644 = vpop.f32.mrb[0].mxu0
      %645 = vmatprep.mubr.f32.mxu0 0.0
      %646 = vmatmul.mubr.f32.gmra.mrb[0].mxu0 %v332
      %v647 = vpop.f32.mrb[0].mxu0
      %v648 = vadd.f32 %v247, %v647
      %v649 = vpop.f32.mrb[0].mxu0
      %650 = vmatprep.mubr.f32.mxu0 0.0
      %651 = vmatmul.mubr.f32.gmra.mrb[0].mxu0 %v335
      %v652 = vpop.f32.mrb[0].mxu0
      %v653 = vadd.f32 %v247, %v652
      %v654 = vpop.f32.mrb[0].mxu0
      %655 = vmatprep.mubr.f32.mxu0 0.0
      %656 = vmatmul.mubr.f32.gmra.mrb[0].mxu0 %v338
      %v657 = vpop.f32.mrb[0].mxu0
      %v658 = vadd.f32 %v247, %v657
      %v659 = vpop.f32.mrb[0].mxu0
      %660 = vmatprep.mubr.f32.mxu0 0.0
      %661 = vmatmul.mubr.f32.gmra.mrb[0].mxu0 %v341
      %v662 = vpop.f32.mrb[0].mxu0
      %v663 = vadd.f32 %v247, %v662
      %v664 = vpop.f32.mrb[0].mxu0
      %665 = vmatprep.mubr.f32.mxu0 0.0
      %666 = vmatmul.mubr.f32.gmra.mrb[0].mxu0 %v344
      %v667 = vpop.f32.mrb[0].mxu0
      %v668 = vadd.f32 %v247, %v667
      %v669 = vpop.f32.mrb[0].mxu0
      %670 = vmatprep.mubr.f32.mxu0 0.0
      %671 = vmatmul.mubr.f32.gmra.mrb[0].mxu0 %v347
      %v672 = vpop.f32.mrb[0].mxu0
      %v673 = vadd.f32 %v247, %v672
      %v674 = vpop.f32.mrb[0].mxu0
      %675 = vmatprep.mubr.f32.mxu0 0.0
      %676 = vmatmul.mubr.f32.gmra.mrb[0].mxu0 %v350
      %v677 = vpop.f32.mrb[0].mxu0
      %v678 = vadd.f32 %v247, %v677
      %v679 = vpop.f32.mrb[0].mxu0
      %680 = vmatprep.mubr.f32.mxu0 0.0
      %681 = vmatmul.mubr.f32.gmra.mrb[0].mxu0 %v353
      %v682 = vpop.f32.mrb[0].mxu0
      %v683 = vadd.f32 %v247, %v682
      %v684 = vpop.f32.mrb[0].mxu0
      %685 = vmatprep.mubr.f32.mxu0 0.0
      %686 = vmatmul.mubr.f32.gmra.mrb[0].mxu0 %v356
      %v687 = vpop.f32.mrb[0].mxu0
      %v688 = vadd.f32 %v247, %v687
      %v689 = vpop.f32.mrb[0].mxu0
      %690 = vmatprep.mubr.f32.mxu0 0.0
      %691 = vmatmul.mubr.f32.gmra.mrb[0].mxu0 %v359
      %v692 = vpop.f32.mrb[0].mxu0
      %v693 = vadd.f32 %v247, %v692
      %v694 = vpop.f32.mrb[0].mxu0
      %695 = vmatprep.mubr.f32.mxu0 0.0
      %696 = vmatmul.mubr.f32.gmra.mrb[0].mxu0 %v362
      %v697 = vpop.f32.mrb[0].mxu0
      %v698 = vadd.f32 %v247, %v697
      %v699 = vpop.f32.mrb[0].mxu0
      %700 = vmatprep.mubr.f32.mxu0 0.0
      %701 = vmatmul.mubr.f32.gmra.mrb[0].mxu0 %v365
      %v702 = vpop.f32.mrb[0].mxu0
      %v703 = vadd.f32 %v247, %v702
      %v704 = vpop.f32.mrb[0].mxu0
      %705 = vmatprep.mubr.f32.mxu0 0.0
      %706 = vmatmul.mubr.f32.gmra.mrb[0].mxu0 %v368
      %v707 = vpop.f32.mrb[0].mxu0
      %v708 = vadd.f32 %v247, %v707
      %v709 = vpop.f32.mrb[0].mxu0
      %710 = vmatprep.mubr.f32.mxu0 0.0
      %711 = vmatmul.mubr.f32.gmra.mrb[0].mxu0 %v371
      %v712 = vpop.f32.mrb[0].mxu0
      %v713 = vadd.f32 %v247, %v712
      %v714 = vpop.f32.mrb[0].mxu0
      %715 = vmatprep.mubr.f32.mxu0 0.0
      %716 = vmatmul.mubr.f32.gmra.mrb[0].mxu0 %v374
      %v717 = vpop.f32.mrb[0].mxu0
      %v718 = vadd.f32 %v247, %v717
      %v719 = vpop.f32.mrb[0].mxu0
      %720 = vmatprep.mubr.f32.mxu0 0.0
      %721 = vmatmul.mubr.f32.gmra.mrb[0].mxu0 %v377
      %v722 = vpop.f32.mrb[0].mxu0
      %v723 = vadd.f32 %v247, %v722
      %v724 = vpop.f32.mrb[0].mxu0
      %725 = vmatprep.mubr.f32.mxu0 0.0
      %726 = vmatmul.mubr.f32.gmra.mrb[0].mxu0 %v380
      %v727 = vpop.f32.mrb[0].mxu0
      %v728 = vadd.f32 %v247, %v727
      %v729 = vpop.f32.mrb[0].mxu0
      %730 = vmatprep.mubr.f32.mxu0 0.0
      %731 = vmatmul.mubr.f32.gmra.mrb[0].mxu0 %v383
      %v732 = vpop.f32.mrb[0].mxu0
      %v733 = vadd.f32 %v247, %v732
      %v734 = vpop.f32.mrb[0].mxu0
      %735 = vmatprep.mubr.f32.mxu0 0.0
      %736 = vmatmul.mubr.f32.gmra.mrb[0].mxu0 %v386
      %v737 = vpop.f32.mrb[0].mxu0
      %v738 = vadd.f32 %v247, %v737
      %v739 = vpop.f32.mrb[0].mxu0
      %740 = vmatprep.mubr.f32.mxu0 0.0
      %741 = vmatmul.mubr.f32.gmra.mrb[0].mxu0 %v389
      %v742 = vpop.f32.mrb[0].mxu0
      %v743 = vadd.f32 %v247, %v742
      %v744 = vpop.f32.mrb[0].mxu0
      %745 = vmatprep.mubr.f32.mxu0 0.0
      %746 = vmatmul.mubr.f32.gmra.mrb[0].mxu0 %v392
      %v747 = vpop.f32.mrb[0].mxu0
      %v748 = vadd.f32 %v247, %v747
      %v749 = vpop.f32.mrb[0].mxu0
      %750 = vmatprep.mubr.f32.mxu0 0.0
      %751 = vmatmul.mubr.f32.gmra.mrb[0].mxu0 %v395
      %v752 = vpop.f32.mrb[0].mxu0
      %v753 = vadd.f32 %v247, %v752
      %v754 = vpop.f32.mrb[0].mxu0
      %755 = vmatprep.mubr.f32.mxu0 0.0
      %756 = vmatmul.mubr.f32.gmra.mrb[0].mxu0 %v398
      %v757 = vpop.f32.mrb[0].mxu0
      %v758 = vadd.f32 %v247, %v757
      %v759 = vpop.f32.mrb[0].mxu0
      %760 = vmatprep.mubr.f32.mxu0 0.0
      %761 = vmatmul.mubr.f32.gmra.mrb[0].mxu0 %v401
      %v762 = vpop.f32.mrb[0].mxu0
      %v763 = vadd.f32 %v247, %v762
      %v764 = vpop.f32.mrb[0].mxu0
      %765 = vmatprep.mubr.f32.mxu0 0.0
      %766 = vmatmul.mubr.f32.gmra.mrb[0].mxu0 %v404
      %v767 = vpop.f32.mrb[0].mxu0
      %v768 = vadd.f32 %v247, %v767
      %v769 = vpop.f32.mrb[0].mxu0
      %770 = vmatprep.mubr.f32.mxu0 0.0
      %771 = vmatmul.mubr.f32.gmra.mrb[0].mxu0 %v407
      %v772 = vpop.f32.mrb[0].mxu0
      %v773 = vadd.f32 %v247, %v772
      %v774 = vpop.f32.mrb[0].mxu0
      %775 = vmatprep.mubr.f32.mxu0 0.0
      %776 = vmatmul.mubr.f32.gmra.mrb[0].mxu0 %v410
      %v777 = vpop.f32.mrb[0].mxu0
      %v778 = vadd.f32 %v247, %v777
      %v779 = vpop.f32.mrb[0].mxu0
      %780 = vmatprep.mubr.f32.mxu0 0.0
      %781 = vmatmul.mubr.f32.gmra.mrb[0].mxu0 %v413
      %v782 = vpop.f32.mrb[0].mxu0
      %v783 = vadd.f32 %v247, %v782
      %v784 = vpop.f32.mrb[0].mxu0
      %785 = vmatprep.mubr.f32.mxu0 0.0
      %786 = vmatmul.mubr.f32.gmra.mrb[0].mxu0 %v416
      %v787 = vpop.f32.mrb[0].mxu0
      %v788 = vadd.f32 %v247, %v787
      %v789 = vpop.f32.mrb[0].mxu0
      %790 = vmatprep.mubr.f32.mxu0 0.0
      %791 = vmatmul.mubr.f32.gmra.mrb[0].mxu0 %v419
      %v792 = vpop.f32.mrb[0].mxu0
      %v793 = vadd.f32 %v247, %v792
      %v794 = vpop.f32.mrb[0].mxu0
      %795 = vmatprep.mubr.f32.mxu0 0.0
      %796 = vmatmul.mubr.f32.gmra.mrb[0].mxu0 %v422
      %v797 = vpop.f32.mrb[0].mxu0
      %v798 = vadd.f32 %v247, %v797
      %v799 = vpop.f32.mrb[0].mxu0
      %800 = vmatprep.mubr.f32.mxu0 0.0
      %801 = vmatmul.mubr.f32.gmra.mrb[0].mxu0 %v425
      %v802 = vpop.f32.mrb[0].mxu0
      %v803 = vadd.f32 %v247, %v802
      %v804 = vpop.f32.mrb[0].mxu0
      %805 = vmatprep.mubr.f32.mxu0 0.0
      %806 = vmatmul.mubr.f32.gmra.mrb[0].mxu0 %v428
      %v807 = vpop.f32.mrb[0].mxu0
      %v808 = vadd.f32 %v247, %v807
      %v809 = vpop.f32.mrb[0].mxu0
      %810 = vmatprep.mubr.f32.mxu0 0.0
      %811 = vmatmul.mubr.f32.gmra.mrb[0].mxu0 %v431
      %v812 = vpop.f32.mrb[0].mxu0
      %v813 = vadd.f32 %v247, %v812
      %v814 = vpop.f32.mrb[0].mxu0
      %815 = vmatprep.mubr.f32.mxu0 0.0
      %816 = vmatmul.mubr.f32.gmra.mrb[0].mxu0 %v434
      %v817 = vpop.f32.mrb[0].mxu0
      %v818 = vadd.f32 %v247, %v817
      %v819 = vpop.f32.mrb[0].mxu0
      %820 = vmatprep.mubr.f32.mxu0 0.0
      %821 = vmatmul.mubr.f32.gmra.mrb[0].mxu0 %v437
      %v822 = vpop.f32.mrb[0].mxu0
      %v823 = vadd.f32 %v247, %v822
      %v824 = vpop.f32.mrb[0].mxu0
      %825 = vmatprep.mubr.f32.mxu0 0.0
      %826 = vmatmul.mubr.f32.gmra.mrb[0].mxu0 %v440
      %v827 = vpop.f32.mrb[0].mxu0
      %v828 = vadd.f32 %v247, %v827
      %v829 = vpop.f32.mrb[0].mxu0
      %830 = vdwg.mxu0
      %v831 = vmax.f32 %v513, 0.0
      %v832 = vmax.f32 %v518, 0.0
      %v833 = vmax.f32 %v523, 0.0
      %v834 = vmax.f32 %v528, 0.0
      %v835 = vmax.f32 %v533, 0.0
      %v836 = vmax.f32 %v538, 0.0
      %v837 = vmax.f32 %v543, 0.0
      %v838 = vmax.f32 %v548, 0.0
      %v839 = vmax.f32 %v553, 0.0
      %v840 = vmax.f32 %v558, 0.0
      %v841 = vmax.f32 %v563, 0.0
      %v842 = vmax.f32 %v568, 0.0
      %v843 = vmax.f32 %v573, 0.0
      %v844 = vmax.f32 %v578, 0.0
      %v845 = vmax.f32 %v583, 0.0
      %v846 = vmax.f32 %v588, 0.0
      %v847 = vmax.f32 %v593, 0.0
      %v848 = vmax.f32 %v598, 0.0
      %v849 = vmax.f32 %v603, 0.0
      %v850 = vmax.f32 %v608, 0.0
      %v851 = vmax.f32 %v613, 0.0
      %v852 = vmax.f32 %v618, 0.0
      %v853 = vmax.f32 %v623, 0.0
      %v854 = vmax.f32 %v628, 0.0
      %v855 = vmax.f32 %v633, 0.0
      %v856 = vmax.f32 %v638, 0.0
      %v857 = vmax.f32 %v643, 0.0
      %v858 = vmax.f32 %v648, 0.0
      %v859 = vmax.f32 %v653, 0.0
      %v860 = vmax.f32 %v658, 0.0
      %v861 = vmax.f32 %v663, 0.0
      %v862 = vmax.f32 %v668, 0.0
      %v863 = vmax.f32 %v673, 0.0
      %v864 = vmax.f32 %v678, 0.0
      %v865 = vmax.f32 %v683, 0.0
      %v866 = vmax.f32 %v688, 0.0
      %v867 = vmax.f32 %v693, 0.0
      %v868 = vmax.f32 %v698, 0.0
      %v869 = vmax.f32 %v703, 0.0
      %v870 = vmax.f32 %v708, 0.0
      %v871 = vmax.f32 %v713, 0.0
      %v872 = vmax.f32 %v718, 0.0
      %v873 = vmax.f32 %v723, 0.0
      %v874 = vmax.f32 %v728, 0.0
      %v875 = vmax.f32 %v733, 0.0
      %v876 = vmax.f32 %v738, 0.0
      %v877 = vmax.f32 %v743, 0.0
      %v878 = vmax.f32 %v748, 0.0
      %v879 = vmax.f32 %v753, 0.0
      %v880 = vmax.f32 %v758, 0.0
      %v881 = vmax.f32 %v763, 0.0
      %v882 = vmax.f32 %v768, 0.0
      %v883 = vmax.f32 %v773, 0.0
      %v884 = vmax.f32 %v778, 0.0
      %v885 = vmax.f32 %v783, 0.0
      %v886 = vmax.f32 %v788, 0.0
      %v887 = vmax.f32 %v793, 0.0
      %v888 = vmax.f32 %v798, 0.0
      %v889 = vmax.f32 %v803, 0.0
      %v890 = vmax.f32 %v808, 0.0
      %v891 = vmax.f32 %v813, 0.0
      %v892 = vmax.f32 %v818, 0.0
      %v893 = vmax.f32 %v823, 0.0
      %v894 = vmax.f32 %v828, 0.0
      %v895 = vpack.c.bf16 %v832, %v831
      %v896 = vpack.c.bf16 %v834, %v833
      %v897 = vpack.c.bf16 %v836, %v835
      %v898 = vpack.c.bf16 %v838, %v837
      %v899 = vpack.c.bf16 %v840, %v839
      %v900 = vpack.c.bf16 %v842, %v841
      %v901 = vpack.c.bf16 %v844, %v843
      %v902 = vpack.c.bf16 %v846, %v845
      %v903 = vpack.c.bf16 %v848, %v847
      %v904 = vpack.c.bf16 %v850, %v849
      %v905 = vpack.c.bf16 %v852, %v851
      %v906 = vpack.c.bf16 %v854, %v853
      %v907 = vpack.c.bf16 %v856, %v855
      %v908 = vpack.c.bf16 %v858, %v857
      %v909 = vpack.c.bf16 %v860, %v859
      %v910 = vpack.c.bf16 %v862, %v861
      %v911 = vpack.c.bf16 %v864, %v863
      %v912 = vpack.c.bf16 %v866, %v865
      %v913 = vpack.c.bf16 %v868, %v867
      %v914 = vpack.c.bf16 %v870, %v869
      %v915 = vpack.c.bf16 %v872, %v871
      %v916 = vpack.c.bf16 %v874, %v873
      %v917 = vpack.c.bf16 %v876, %v875
      %v918 = vpack.c.bf16 %v878, %v877
      %v919 = vpack.c.bf16 %v880, %v879
      %v920 = vpack.c.bf16 %v882, %v881
      %v921 = vpack.c.bf16 %v884, %v883
      %v922 = vpack.c.bf16 %v886, %v885
      %v923 = vpack.c.bf16 %v888, %v887
      %v924 = vpack.c.bf16 %v890, %v889
      %v925 = vpack.c.bf16 %v892, %v891
      %v926 = vpack.c.bf16 %v894, %v893
      %v959 = vunpack.c.l.b16 %v895
      %v960 = vunpack.c.h.b16 %v895
      %v961 = vunpack.c.l.b16 %v896
      %v962 = vunpack.c.h.b16 %v896
      %v963 = vunpack.c.l.b16 %v897
      %v964 = vunpack.c.h.b16 %v897
      %v965 = vunpack.c.l.b16 %v898
      %v966 = vunpack.c.h.b16 %v898
      %v967 = vunpack.c.l.b16 %v899
      %v968 = vunpack.c.h.b16 %v899
      %v969 = vunpack.c.l.b16 %v900
      %v970 = vunpack.c.h.b16 %v900
      %v971 = vunpack.c.l.b16 %v901
      %v972 = vunpack.c.h.b16 %v901
      %v973 = vunpack.c.l.b16 %v902
      %v974 = vunpack.c.h.b16 %v902
      %v975 = vunpack.c.l.b16 %v903
      %v976 = vunpack.c.h.b16 %v903
      %v977 = vunpack.c.l.b16 %v904
      %v978 = vunpack.c.h.b16 %v904
      %v979 = vunpack.c.l.b16 %v905
      %v980 = vunpack.c.h.b16 %v905
      %v981 = vunpack.c.l.b16 %v906
      %v982 = vunpack.c.h.b16 %v906
      %v983 = vunpack.c.l.b16 %v907
      %v984 = vunpack.c.h.b16 %v907
      %v985 = vunpack.c.l.b16 %v908
      %v986 = vunpack.c.h.b16 %v908
      %v987 = vunpack.c.l.b16 %v909
      %v988 = vunpack.c.h.b16 %v909
      %v989 = vunpack.c.l.b16 %v910
      %v990 = vunpack.c.h.b16 %v910
      %v991 = vunpack.c.l.b16 %v911
      %v992 = vunpack.c.h.b16 %v911
      %v993 = vunpack.c.l.b16 %v912
      %v994 = vunpack.c.h.b16 %v912
      %v995 = vunpack.c.l.b16 %v913
      %v996 = vunpack.c.h.b16 %v913
      %v997 = vunpack.c.l.b16 %v914
      %v998 = vunpack.c.h.b16 %v914
      %v999 = vunpack.c.l.b16 %v915
      %v1000 = vunpack.c.h.b16 %v915
      %v1001 = vunpack.c.l.b16 %v916
      %v1002 = vunpack.c.h.b16 %v916
      %v1003 = vunpack.c.l.b16 %v917
      %v1004 = vunpack.c.h.b16 %v917
      %v1005 = vunpack.c.l.b16 %v918
      %v1006 = vunpack.c.h.b16 %v918
      %v1007 = vunpack.c.l.b16 %v919
      %v1008 = vunpack.c.h.b16 %v919
      %v1009 = vunpack.c.l.b16 %v920
      %v1010 = vunpack.c.h.b16 %v920
      %v1011 = vunpack.c.l.b16 %v921
      %v1012 = vunpack.c.h.b16 %v921
      %v1013 = vunpack.c.l.b16 %v922
      %v1014 = vunpack.c.h.b16 %v922
      %v1015 = vunpack.c.l.b16 %v923
      %v1016 = vunpack.c.h.b16 %v923
      %v1017 = vunpack.c.l.b16 %v924
      %v1018 = vunpack.c.h.b16 %v924
      %v1019 = vunpack.c.l.b16 %v925
      %v1020 = vunpack.c.h.b16 %v925
      %v1021 = vunpack.c.l.b16 %v926
      %v1022 = vunpack.c.h.b16 %v926
      %v1023 = vpack.c.b16 %v959, %v959
      %v1024 = vpack.c.b16 %v960, %v960
      %v1025 = vpack.c.b16 %v961, %v961
      %v1026 = vpack.c.b16 %v962, %v962
      %v1027 = vpack.c.b16 %v963, %v963
      %v1028 = vpack.c.b16 %v964, %v964
      %v1029 = vpack.c.b16 %v965, %v965
      %v1030 = vpack.c.b16 %v966, %v966
      %v1031 = vpack.c.b16 %v967, %v967
      %v1032 = vpack.c.b16 %v968, %v968
      %v1033 = vpack.c.b16 %v969, %v969
      %v1034 = vpack.c.b16 %v970, %v970
      %v1035 = vpack.c.b16 %v971, %v971
      %v1036 = vpack.c.b16 %v972, %v972
      %v1037 = vpack.c.b16 %v973, %v973
      %v1038 = vpack.c.b16 %v974, %v974
      %v1039 = vpack.c.b16 %v975, %v975
      %v1040 = vpack.c.b16 %v976, %v976
      %v1041 = vpack.c.b16 %v977, %v977
      %v1042 = vpack.c.b16 %v978, %v978
      %v1043 = vpack.c.b16 %v979, %v979
      %v1044 = vpack.c.b16 %v980, %v980
      %v1045 = vpack.c.b16 %v981, %v981
      %v1046 = vpack.c.b16 %v982, %v982
      %v1047 = vpack.c.b16 %v983, %v983
      %v1048 = vpack.c.b16 %v984, %v984
      %v1049 = vpack.c.b16 %v985, %v985
      %v1050 = vpack.c.b16 %v986, %v986
      %v1051 = vpack.c.b16 %v987, %v987
      %v1052 = vpack.c.b16 %v988, %v988
      %v1053 = vpack.c.b16 %v989, %v989
      %v1054 = vpack.c.b16 %v990, %v990
      %v1055 = vpack.c.b16 %v991, %v991
      %v1056 = vpack.c.b16 %v992, %v992
      %v1057 = vpack.c.b16 %v993, %v993
      %v1058 = vpack.c.b16 %v994, %v994
      %v1059 = vpack.c.b16 %v995, %v995
      %v1060 = vpack.c.b16 %v996, %v996
      %v1061 = vpack.c.b16 %v997, %v997
      %v1062 = vpack.c.b16 %v998, %v998
      %v1063 = vpack.c.b16 %v999, %v999
      %v1064 = vpack.c.b16 %v1000, %v1000
      %v1065 = vpack.c.b16 %v1001, %v1001
      %v1066 = vpack.c.b16 %v1002, %v1002
      %v1067 = vpack.c.b16 %v1003, %v1003
      %v1068 = vpack.c.b16 %v1004, %v1004
      %v1069 = vpack.c.b16 %v1005, %v1005
      %v1070 = vpack.c.b16 %v1006, %v1006
      %v1071 = vpack.c.b16 %v1007, %v1007
      %v1072 = vpack.c.b16 %v1008, %v1008
      %v1073 = vpack.c.b16 %v1009, %v1009
      %v1074 = vpack.c.b16 %v1010, %v1010
      %v1075 = vpack.c.b16 %v1011, %v1011
      %v1076 = vpack.c.b16 %v1012, %v1012
      %v1077 = vpack.c.b16 %v1013, %v1013
      %v1078 = vpack.c.b16 %v1014, %v1014
      %v1079 = vpack.c.b16 %v1015, %v1015
      %v1080 = vpack.c.b16 %v1016, %v1016
      %v1081 = vpack.c.b16 %v1017, %v1017
      %v1082 = vpack.c.b16 %v1018, %v1018
      %v1083 = vpack.c.b16 %v1019, %v1019
      %v1084 = vpack.c.b16 %v1020, %v1020
      %v1085 = vpack.c.b16 %v1021, %v1021
      %v1086 = vpack.c.b16 %v1022, %v1022
      %vm1151 = vcmask 519168
      %1152 = vst.msk [vmem:[%s172] sm:$0xf] %vm1151, %v1023
      %1153 = vst.msk [vmem:[%s172 + $0x4] sm:$0xf] %vm1151, %v1024
      %1154 = vst.msk [vmem:[%s172 + $0x8] sm:$0xf] %vm1151, %v1025
      %1155 = vst.msk [vmem:[%s172 + $0xc] sm:$0xf] %vm1151, %v1026
      %1156 = vst.msk [vmem:[%s172 + $0x10] sm:$0xf] %vm1151, %v1027
      %1157 = vst.msk [vmem:[%s172 + $0x14] sm:$0xf] %vm1151, %v1028
      %1158 = vst.msk [vmem:[%s172 + $0x18] sm:$0xf] %vm1151, %v1029
      %1159 = vst.msk [vmem:[%s172 + $0x1c] sm:$0xf] %vm1151, %v1030
      %1160 = vst.msk [vmem:[%s172 + $0x20] sm:$0xf] %vm1151, %v1031
      %1161 = vst.msk [vmem:[%s172 + $0x24] sm:$0xf] %vm1151, %v1032
      %1162 = vst.msk [vmem:[%s172 + $0x28] sm:$0xf] %vm1151, %v1033
      %1163 = vst.msk [vmem:[%s172 + $0x2c] sm:$0xf] %vm1151, %v1034
      %1164 = vst.msk [vmem:[%s172 + $0x30] sm:$0xf] %vm1151, %v1035
      %1165 = vst.msk [vmem:[%s172 + $0x34] sm:$0xf] %vm1151, %v1036
      %1166 = vst.msk [vmem:[%s172 + $0x38] sm:$0xf] %vm1151, %v1037
      %1167 = vst.msk [vmem:[%s172 + $0x3c] sm:$0xf] %vm1151, %v1038
      %1168 = vst.msk [vmem:[%s172 + $0x40] sm:$0xf] %vm1151, %v1039
      %1169 = vst.msk [vmem:[%s172 + $0x44] sm:$0xf] %vm1151, %v1040
      %1170 = vst.msk [vmem:[%s172 + $0x48] sm:$0xf] %vm1151, %v1041
      %1171 = vst.msk [vmem:[%s172 + $0x4c] sm:$0xf] %vm1151, %v1042
      %1172 = vst.msk [vmem:[%s172 + $0x50] sm:$0xf] %vm1151, %v1043
      %1173 = vst.msk [vmem:[%s172 + $0x54] sm:$0xf] %vm1151, %v1044
      %1174 = vst.msk [vmem:[%s172 + $0x58] sm:$0xf] %vm1151, %v1045
      %1175 = vst.msk [vmem:[%s172 + $0x5c] sm:$0xf] %vm1151, %v1046
      %1176 = vst.msk [vmem:[%s172 + $0x60] sm:$0xf] %vm1151, %v1047
      %1177 = vst.msk [vmem:[%s172 + $0x64] sm:$0xf] %vm1151, %v1048
      %1178 = vst.msk [vmem:[%s172 + $0x68] sm:$0xf] %vm1151, %v1049
      %1179 = vst.msk [vmem:[%s172 + $0x6c] sm:$0xf] %vm1151, %v1050
      %1180 = vst.msk [vmem:[%s172 + $0x70] sm:$0xf] %vm1151, %v1051
      %1181 = vst.msk [vmem:[%s172 + $0x74] sm:$0xf] %vm1151, %v1052
      %1182 = vst.msk [vmem:[%s172 + $0x78] sm:$0xf] %vm1151, %v1053
      %1183 = vst.msk [vmem:[%s172 + $0x7c] sm:$0xf] %vm1151, %v1054
      %1184 = vst.msk [vmem:[%s172 + $0x80] sm:$0xf] %vm1151, %v1055
      %1185 = vst.msk [vmem:[%s172 + $0x84] sm:$0xf] %vm1151, %v1056
      %1186 = vst.msk [vmem:[%s172 + $0x88] sm:$0xf] %vm1151, %v1057
      %1187 = vst.msk [vmem:[%s172 + $0x8c] sm:$0xf] %vm1151, %v1058
      %1188 = vst.msk [vmem:[%s172 + $0x90] sm:$0xf] %vm1151, %v1059
      %1189 = vst.msk [vmem:[%s172 + $0x94] sm:$0xf] %vm1151, %v1060
      %1190 = vst.msk [vmem:[%s172 + $0x98] sm:$0xf] %vm1151, %v1061
      %1191 = vst.msk [vmem:[%s172 + $0x9c] sm:$0xf] %vm1151, %v1062
      %1192 = vst.msk [vmem:[%s172 + $0xa0] sm:$0xf] %vm1151, %v1063
      %1193 = vst.msk [vmem:[%s172 + $0xa4] sm:$0xf] %vm1151, %v1064
      %1194 = vst.msk [vmem:[%s172 + $0xa8] sm:$0xf] %vm1151, %v1065
      %1195 = vst.msk [vmem:[%s172 + $0xac] sm:$0xf] %vm1151, %v1066
      %1196 = vst.msk [vmem:[%s172 + $0xb0] sm:$0xf] %vm1151, %v1067
      %1197 = vst.msk [vmem:[%s172 + $0xb4] sm:$0xf] %vm1151, %v1068
      %1198 = vst.msk [vmem:[%s172 + $0xb8] sm:$0xf] %vm1151, %v1069
      %1199 = vst.msk [vmem:[%s172 + $0xbc] sm:$0xf] %vm1151, %v1070
      %1200 = vst.msk [vmem:[%s172 + $0xc0] sm:$0xf] %vm1151, %v1071
      %1201 = vst.msk [vmem:[%s172 + $0xc4] sm:$0xf] %vm1151, %v1072
      %1202 = vst.msk [vmem:[%s172 + $0xc8] sm:$0xf] %vm1151, %v1073
      %1203 = vst.msk [vmem:[%s172 + $0xcc] sm:$0xf] %vm1151, %v1074
      %1204 = vst.msk [vmem:[%s172 + $0xd0] sm:$0xf] %vm1151, %v1075
      %1205 = vst.msk [vmem:[%s172 + $0xd4] sm:$0xf] %vm1151, %v1076
      %1206 = vst.msk [vmem:[%s172 + $0xd8] sm:$0xf] %vm1151, %v1077
      %1207 = vst.msk [vmem:[%s172 + $0xdc] sm:$0xf] %vm1151, %v1078
      %1208 = vst.msk [vmem:[%s172 + $0xe0] sm:$0xf] %vm1151, %v1079
      %1209 = vst.msk [vmem:[%s172 + $0xe4] sm:$0xf] %vm1151, %v1080
      %1210 = vst.msk [vmem:[%s172 + $0xe8] sm:$0xf] %vm1151, %v1081
      %1211 = vst.msk [vmem:[%s172 + $0xec] sm:$0xf] %vm1151, %v1082
      %1212 = vst.msk [vmem:[%s172 + $0xf0] sm:$0xf] %vm1151, %v1083
      %1213 = vst.msk [vmem:[%s172 + $0xf4] sm:$0xf] %vm1151, %v1084
      %1214 = vst.msk [vmem:[%s172 + $0xf8] sm:$0xf] %vm1151, %v1085
      %1215 = vst.msk [vmem:[%s172 + $0xfc] sm:$0xf] %vm1151, %v1086
      %s1216 = smul.u32 64, %s14
      %p1217 = scmp.lt.s32.totalorder %s1216, 127
      %s1218 = scalar_select %p1217, %s1216, 127
      %s1219 = smul.addr %s1218, 4
      %s1220 = scalar_lea.vmem %s3, %s1219
      // Predicated region
      $region33: #{_lambda_.6} parent=31 // pred_check
        %p1221 = pneg %p100
      $region34: #{_lambda_.6} parent=31 // pred_check_branch
        %1223 = sbr.rel (%p1221) target = $region36
      $region35: #{_lambda_.6} parent=31 // pred_region
        %s1224 = smul.u32 64, %s14
      $region36: #{_lambda_.6} parent=31 // pred_fallthru
        _
    $region32: #{_lambda_.6} parent=5 // pred_fallthru
      _
    %p1225 = scmp.le.s32.totalorder 2, %s9
    // Predicated region
    $region37: #{_lambda_.6} parent=5 // pred_check
      %p1226 = pneg %p1225
    $region38: #{_lambda_.6} parent=5 // pred_check_branch
      %1228 = sbr.rel (%p1226) target = $region40
    $region39: #{_lambda_.6} parent=5 // pred_region
      %s1229 = ssub.s32 %s9, 2
      // Predicated region
      $region41: #{_lambda_.6} parent=39 // pred_check
        %p1230 = pneg %p106
      $region42: #{_lambda_.6} parent=39 // pred_check_branch
        %1232 = sbr.rel (%p1230) target = $region44
      $region43: #{_lambda_.6} parent=39 // pred_region
        %s1233 = smul.u32 64, %s15
        %p1234 = scmp.lt.s32.totalorder %s1233, 127
        %s1235 = scalar_select %p1234, %s1233, 127
        %s1236 = smul.addr %s1235, 4
        %s1237 = scalar_lea.vmem %s3, %s1236
      $region44: #{_lambda_.6} parent=39 // pred_fallthru
        _
    $region40: #{_lambda_.6} parent=5 // pred_fallthru
      _
  $region6: #{_lambda_.6} parent=0 // loop_footer
    %s13 = sadd.s32 1, %s9
  $region7: #{_lambda_.6} parent=0 // loop_footer_branch
    %8 = sbr.rel target = $region3
  $region8: #{_lambda_.6} parent=0 // loop_exit
    _

// kernel: _lambda_.8
$region0: #{_lambda_.8}
  #allocation0 [shape = 'u32[]', space=smem, size = 0x4, offset = 0x4, fixed_abs, tag = 'smem constant byte address 0x4 - core index']
  #allocation1 [shape = 'u32[144,128]{1,0:T(1,128)}', space=vmem, size = 0x12000, scoped, tag = 'internal scratch']
  %s0 = inlined_call_operand.vmem [shape: f32[256,27], index: 0, kind: input, shape index: {}]
  %s1 = inlined_call_operand.vmem [shape: f32[27,64], index: 1, kind: input, shape index: {}]
  %s2 = inlined_call_operand.vmem [shape: f32[1,64], index: 2, kind: input, shape index: {}]
  %s3 = inlined_call_operand.vmem [shape: bf16[256,64], index: 3, kind: output, shape index: {}]
  %s4 = sld [smem:[#allocation0]]
  $region22: #{_lambda_.8} parent=0
    _
  %s6 = ssub.s32 1, %s4
  %s7 = scalar_select 0, %s6, %s4
  // Predicated region
  $region2: #{_lambda_.8} parent=0 // pred_check
    _
  $region3: #{_lambda_.8} parent=0 // pred_check_branch
    %9 = sbr.rel (0) target = $region5
  $region4: #{_lambda_.8} parent=0 // pred_region
    _
  $region5: #{_lambda_.8} parent=0 // pred_fallthru
    _
  // Predicated region
  $region6: #{_lambda_.8} parent=0 // pred_check
    _
  $region7: #{_lambda_.8} parent=0 // pred_check_branch
    %11 = sbr.rel (0) target = $region9
  $region8: #{_lambda_.8} parent=0 // pred_region
    _
  $region9: #{_lambda_.8} parent=0 // pred_fallthru
    _
  // Predicated region
  $region10: #{_lambda_.8} parent=0 // pred_check
    _
  $region11: #{_lambda_.8} parent=0 // pred_check_branch
    %13 = sbr.rel (0) target = $region13
  $region12: #{_lambda_.8} parent=0 // pred_region
    _
  $region13: #{_lambda_.8} parent=0 // pred_fallthru
    _
  %v14 = vld [vmem:[%s0] sm:$0xff]
  %v15 = vld [vmem:[%s0 + $0x8] sm:$0xff]
  %v16 = vld [vmem:[%s0 + $0x10] sm:$0xff]
  %v17 = vld [vmem:[%s0 + $0x18] sm:$0xff]
  %v18 = vld [vmem:[%s0 + $0x20] sm:$0xff]
  %v19 = vld [vmem:[%s0 + $0x28] sm:$0xff]
  %v20 = vld [vmem:[%s0 + $0x30] sm:$0xff]
  %v21 = vld [vmem:[%s0 + $0x38] sm:$0xff]
  %v22 = vld [vmem:[%s0 + $0x40] sm:$0xff]
  %v23 = vld [vmem:[%s0 + $0x48] sm:$0xff]
  %v24 = vld [vmem:[%s0 + $0x50] sm:$0xff]
  %v25 = vld [vmem:[%s0 + $0x58] sm:$0xff]
  %v26 = vld [vmem:[%s0 + $0x60] sm:$0xff]
  %v27 = vld [vmem:[%s0 + $0x68] sm:$0xff]
  %v28 = vld [vmem:[%s0 + $0x70] sm:$0xff]
  %v29 = vld [vmem:[%s0 + $0x78] sm:$0xff]
  %v30 = vld [vmem:[%s0 + $0x80] sm:$0xff]
  %v31 = vld [vmem:[%s0 + $0x88] sm:$0xff]
  %v32 = vld [vmem:[%s0 + $0x90] sm:$0xff]
  %v33 = vld [vmem:[%s0 + $0x98] sm:$0xff]
  %v34 = vld [vmem:[%s0 + $0xa0] sm:$0xff]
  %v35 = vld [vmem:[%s0 + $0xa8] sm:$0xff]
  %v36 = vld [vmem:[%s0 + $0xb0] sm:$0xff]
  %v37 = vld [vmem:[%s0 + $0xb8] sm:$0xff]
  %v38 = vld [vmem:[%s0 + $0xc0] sm:$0xff]
  %v39 = vld [vmem:[%s0 + $0xc8] sm:$0xff]
  %v40 = vld [vmem:[%s0 + $0xd0] sm:$0xff]
  %v41 = vld [vmem:[%s0 + $0xd8] sm:$0xff]
  %v42 = vld [vmem:[%s0 + $0xe0] sm:$0xff]
  %v43 = vld [vmem:[%s0 + $0xe8] sm:$0xff]
  %v44 = vld [vmem:[%s0 + $0xf0] sm:$0xff]
  %v45 = vld [vmem:[%s0 + $0xf8] sm:$0xff]
  %v46 = vld [vmem:[%s1] sm:$0xff]
  %v47 = vld [vmem:[%s1 + $0x8] sm:$0xff]
  %v48 = vld [vmem:[%s1 + $0x10] sm:$0xff]
  %v49 = vld [vmem:[%s1 + $0x18] sm:$0x7]
  %v50 = vld [vmem:[%s2] sm:$0x1]
  %v52 = vlaneseq
  %v53 = vshrl.u32 %v52, 7
  %v54 = vsub.s32 0, %v53
  %v55 = vrot.slane %v50, %v54
  %vm57 = vcmask 220160
  %v59 = vsel %vm57, %v14, 0
  %v62 = vsel %vm57, %v15, 0
  %v65 = vsel %vm57, %v16, 0
  %v68 = vsel %vm57, %v17, 0
  %v71 = vsel %vm57, %v18, 0
  %v74 = vsel %vm57, %v19, 0
  %v77 = vsel %vm57, %v20, 0
  %v80 = vsel %vm57, %v21, 0
  %v83 = vsel %vm57, %v22, 0
  %v86 = vsel %vm57, %v23, 0
  %v89 = vsel %vm57, %v24, 0
  %v92 = vsel %vm57, %v25, 0
  %v95 = vsel %vm57, %v26, 0
  %v98 = vsel %vm57, %v27, 0
  %v101 = vsel %vm57, %v28, 0
  %v104 = vsel %vm57, %v29, 0
  %v107 = vsel %vm57, %v30, 0
  %v110 = vsel %vm57, %v31, 0
  %v113 = vsel %vm57, %v32, 0
  %v116 = vsel %vm57, %v33, 0
  %v119 = vsel %vm57, %v34, 0
  %v122 = vsel %vm57, %v35, 0
  %v125 = vsel %vm57, %v36, 0
  %v128 = vsel %vm57, %v37, 0
  %v131 = vsel %vm57, %v38, 0
  %v134 = vsel %vm57, %v39, 0
  %v137 = vsel %vm57, %v40, 0
  %v140 = vsel %vm57, %v41, 0
  %v143 = vsel %vm57, %v42, 0
  %v146 = vsel %vm57, %v43, 0
  %v149 = vsel %vm57, %v44, 0
  %v152 = vsel %vm57, %v45, 0
  %vm154 = vcmask 1042432
  %v156 = vsel %vm154, %v49, 0
  %158 = vmatprep.subr.mxu0 0.0
  %159 = vmatpush1.msra.mxu0 %v46
  %160 = vmatprep.subr.mxu0 0.0
  %161 = vmatpush1.msra.mxu0 %v47
  %162 = vmatprep.subr.mxu0 0.0
  %163 = vmatpush1.msra.mxu0 %v48
  %164 = vmatprep.subr.mxu0 0.0
  %165 = vmatpush1.msra.mxu0 %v156
  %166 = vmatprep.subr.mxu0 0.0
  %167 = vmatpush1.msra.mxu0 0.0
  %168 = vmatprep.subr.mxu0 0.0
  %169 = vmatpush1.msra.mxu0 0.0
  %170 = vmatprep.subr.mxu0 0.0
  %171 = vmatpush1.msra.mxu0 0.0
  %172 = vmatprep.subr.mxu0 0.0
  %173 = vmatpush1.msra.mxu0 0.0
  %174 = vmatprep.subr.mxu0 0.0
  %175 = vmatpush1.msra.mxu0 0.0
  %176 = vmatprep.subr.mxu0 0.0
  %177 = vmatpush1.msra.mxu0 0.0
  %178 = vmatprep.subr.mxu0 0.0
  %179 = vmatpush1.msra.mxu0 0.0
  %180 = vmatprep.subr.mxu0 0.0
  %181 = vmatpush1.msra.mxu0 0.0
  %182 = vmatprep.subr.mxu0 0.0
  %183 = vmatpush1.msra.mxu0 0.0
  %184 = vmatprep.subr.mxu0 0.0
  %185 = vmatpush1.msra.mxu0 0.0
  %186 = vmatprep.subr.mxu0 0.0
  %187 = vmatpush1.msra.mxu0 0.0
  %188 = vmatprep.subr.mxu0 0.0
  %189 = vmatpush1.msra.mxu0 0.0
  %190 = vmatprep.subr.mxu0 0.0
  %191 = vmatpush1.msra.mxu0 0.0
  %192 = vmatprep.subr.mxu0 0.0
  %193 = vmatpush1.msra.mxu0 0.0
  %194 = vmatprep.subr.mxu0 0.0
  %195 = vmatpush1.msra.mxu0 0.0
  %196 = vmatprep.subr.mxu0 0.0
  %197 = vmatpush1.msra.mxu0 0.0
  %198 = vmatprep.subr.mxu0 0.0
  %199 = vmatpush1.msra.mxu0 0.0
  %200 = vmatprep.subr.mxu0 0.0
  %201 = vmatpush1.msra.mxu0 0.0
  %202 = vmatprep.subr.mxu0 0.0
  %203 = vmatpush1.msra.mxu0 0.0
  %204 = vmatprep.subr.mxu0 0.0
  %205 = vmatpush1.msra.mxu0 0.0
  %206 = vmatprep.subr.mxu0 0.0
  %207 = vmatpush1.msra.mxu0 0.0
  %208 = vmatprep.subr.mxu0 0.0
  %209 = vmatpush1.msra.mxu0 0.0
  %210 = vmatprep.subr.mxu0 0.0
  %211 = vmatpush1.msra.mxu0 0.0
  %212 = vmatprep.subr.mxu0 0.0
  %213 = vmatpush1.msra.mxu0 0.0
  %214 = vmatprep.subr.mxu0 0.0
  %215 = vmatpush1.msra.mxu0 0.0
  %216 = vmatprep.subr.mxu0 0.0
  %217 = vmatpush1.msra.mxu0 0.0
  %218 = vmatprep.subr.mxu0 0.0
  %219 = vmatpush1.msra.mxu0 0.0
  %220 = vmatprep.subr.mxu0 0.0
  %221 = vmatpush1.msra.mxu0 0.0
  %222 = vmatprep.mubr.f32.mxu0 0.0
  %223 = vmatmul.mubr.f32.gmra.mrb[0].mxu0 %v59
  %v224 = vpop.f32.mrb[0].mxu0
  %v225 = vadd.f32 %v55, %v224
  %v226 = vpop.f32.mrb[0].mxu0
  %227 = vmatprep.mubr.f32.mxu0 0.0
  %228 = vmatmul.mubr.f32.gmra.mrb[0].mxu0 %v62
  %v229 = vpop.f32.mrb[0].mxu0
  %v230 = vadd.f32 %v55, %v229
  %v231 = vpop.f32.mrb[0].mxu0
  %232 = vmatprep.mubr.f32.mxu0 0.0
  %233 = vmatmul.mubr.f32.gmra.mrb[0].mxu0 %v65
  %v234 = vpop.f32.mrb[0].mxu0
  %v235 = vadd.f32 %v55, %v234
  %v236 = vpop.f32.mrb[0].mxu0
  %237 = vmatprep.mubr.f32.mxu0 0.0
  %238 = vmatmul.mubr.f32.gmra.mrb[0].mxu0 %v68
  %v239 = vpop.f32.mrb[0].mxu0
  %v240 = vadd.f32 %v55, %v239
  %v241 = vpop.f32.mrb[0].mxu0
  %242 = vmatprep.mubr.f32.mxu0 0.0
  %243 = vmatmul.mubr.f32.gmra.mrb[0].mxu0 %v71
  %v244 = vpop.f32.mrb[0].mxu0
  %v245 = vadd.f32 %v55, %v244
  %v246 = vpop.f32.mrb[0].mxu0
  %247 = vmatprep.mubr.f32.mxu0 0.0
  %248 = vmatmul.mubr.f32.gmra.mrb[0].mxu0 %v74
  %v249 = vpop.f32.mrb[0].mxu0
  %v250 = vadd.f32 %v55, %v249
  %v251 = vpop.f32.mrb[0].mxu0
  %252 = vmatprep.mubr.f32.mxu0 0.0
  %253 = vmatmul.mubr.f32.gmra.mrb[0].mxu0 %v77
  %v254 = vpop.f32.mrb[0].mxu0
  %v255 = vadd.f32 %v55, %v254
  %v256 = vpop.f32.mrb[0].mxu0
  %257 = vmatprep.mubr.f32.mxu0 0.0
  %258 = vmatmul.mubr.f32.gmra.mrb[0].mxu0 %v80
  %v259 = vpop.f32.mrb[0].mxu0
  %v260 = vadd.f32 %v55, %v259
  %v261 = vpop.f32.mrb[0].mxu0
  %262 = vmatprep.mubr.f32.mxu0 0.0
  %263 = vmatmul.mubr.f32.gmra.mrb[0].mxu0 %v83
  %v264 = vpop.f32.mrb[0].mxu0
  %v265 = vadd.f32 %v55, %v264
  %v266 = vpop.f32.mrb[0].mxu0
  %267 = vmatprep.mubr.f32.mxu0 0.0
  %268 = vmatmul.mubr.f32.gmra.mrb[0].mxu0 %v86
  %v269 = vpop.f32.mrb[0].mxu0
  %v270 = vadd.f32 %v55, %v269
  %v271 = vpop.f32.mrb[0].mxu0
  %272 = vmatprep.mubr.f32.mxu0 0.0
  %273 = vmatmul.mubr.f32.gmra.mrb[0].mxu0 %v89
  %v274 = vpop.f32.mrb[0].mxu0
  %v275 = vadd.f32 %v55, %v274
  %v276 = vpop.f32.mrb[0].mxu0
  %277 = vmatprep.mubr.f32.mxu0 0.0
  %278 = vmatmul.mubr.f32.gmra.mrb[0].mxu0 %v92
  %v279 = vpop.f32.mrb[0].mxu0
  %v280 = vadd.f32 %v55, %v279
  %v281 = vpop.f32.mrb[0].mxu0
  %282 = vmatprep.mubr.f32.mxu0 0.0
  %283 = vmatmul.mubr.f32.gmra.mrb[0].mxu0 %v95
  %v284 = vpop.f32.mrb[0].mxu0
  %v285 = vadd.f32 %v55, %v284
  %v286 = vpop.f32.mrb[0].mxu0
  %287 = vmatprep.mubr.f32.mxu0 0.0
  %288 = vmatmul.mubr.f32.gmra.mrb[0].mxu0 %v98
  %v289 = vpop.f32.mrb[0].mxu0
  %v290 = vadd.f32 %v55, %v289
  %v291 = vpop.f32.mrb[0].mxu0
  %292 = vmatprep.mubr.f32.mxu0 0.0
  %293 = vmatmul.mubr.f32.gmra.mrb[0].mxu0 %v101
  %v294 = vpop.f32.mrb[0].mxu0
  %v295 = vadd.f32 %v55, %v294
  %v296 = vpop.f32.mrb[0].mxu0
  %297 = vmatprep.mubr.f32.mxu0 0.0
  %298 = vmatmul.mubr.f32.gmra.mrb[0].mxu0 %v104
  %v299 = vpop.f32.mrb[0].mxu0
  %v300 = vadd.f32 %v55, %v299
  %v301 = vpop.f32.mrb[0].mxu0
  %302 = vmatprep.mubr.f32.mxu0 0.0
  %303 = vmatmul.mubr.f32.gmra.mrb[0].mxu0 %v107
  %v304 = vpop.f32.mrb[0].mxu0
  %v305 = vadd.f32 %v55, %v304
  %v306 = vpop.f32.mrb[0].mxu0
  %307 = vmatprep.mubr.f32.mxu0 0.0
  %308 = vmatmul.mubr.f32.gmra.mrb[0].mxu0 %v110
  %v309 = vpop.f32.mrb[0].mxu0
  %v310 = vadd.f32 %v55, %v309
  %v311 = vpop.f32.mrb[0].mxu0
  %312 = vmatprep.mubr.f32.mxu0 0.0
  %313 = vmatmul.mubr.f32.gmra.mrb[0].mxu0 %v113
  %v314 = vpop.f32.mrb[0].mxu0
  %v315 = vadd.f32 %v55, %v314
  %v316 = vpop.f32.mrb[0].mxu0
  %317 = vmatprep.mubr.f32.mxu0 0.0
  %318 = vmatmul.mubr.f32.gmra.mrb[0].mxu0 %v116
  %v319 = vpop.f32.mrb[0].mxu0
  %v320 = vadd.f32 %v55, %v319
  %v321 = vpop.f32.mrb[0].mxu0
  %322 = vmatprep.mubr.f32.mxu0 0.0
  %323 = vmatmul.mubr.f32.gmra.mrb[0].mxu0 %v119
  %v324 = vpop.f32.mrb[0].mxu0
  %v325 = vadd.f32 %v55, %v324
  %v326 = vpop.f32.mrb[0].mxu0
  %327 = vmatprep.mubr.f32.mxu0 0.0
  %328 = vmatmul.mubr.f32.gmra.mrb[0].mxu0 %v122
  %v329 = vpop.f32.mrb[0].mxu0
  %v330 = vadd.f32 %v55, %v329
  %v331 = vpop.f32.mrb[0].mxu0
  %332 = vmatprep.mubr.f32.mxu0 0.0
  %333 = vmatmul.mubr.f32.gmra.mrb[0].mxu0 %v125
  %v334 = vpop.f32.mrb[0].mxu0
  %v335 = vadd.f32 %v55, %v334
  %v336 = vpop.f32.mrb[0].mxu0
  %337 = vmatprep.mubr.f32.mxu0 0.0
  %338 = vmatmul.mubr.f32.gmra.mrb[0].mxu0 %v128
  %v339 = vpop.f32.mrb[0].mxu0
  %v340 = vadd.f32 %v55, %v339
  %v341 = vpop.f32.mrb[0].mxu0
  %342 = vmatprep.mubr.f32.mxu0 0.0
  %343 = vmatmul.mubr.f32.gmra.mrb[0].mxu0 %v131
  %v344 = vpop.f32.mrb[0].mxu0
  %v345 = vadd.f32 %v55, %v344
  %v346 = vpop.f32.mrb[0].mxu0
  %347 = vmatprep.mubr.f32.mxu0 0.0
  %348 = vmatmul.mubr.f32.gmra.mrb[0].mxu0 %v134
  %v349 = vpop.f32.mrb[0].mxu0
  %v350 = vadd.f32 %v55, %v349
  %v351 = vpop.f32.mrb[0].mxu0
  %352 = vmatprep.mubr.f32.mxu0 0.0
  %353 = vmatmul.mubr.f32.gmra.mrb[0].mxu0 %v137
  %v354 = vpop.f32.mrb[0].mxu0
  %v355 = vadd.f32 %v55, %v354
  %v356 = vpop.f32.mrb[0].mxu0
  %357 = vmatprep.mubr.f32.mxu0 0.0
  %358 = vmatmul.mubr.f32.gmra.mrb[0].mxu0 %v140
  %v359 = vpop.f32.mrb[0].mxu0
  %v360 = vadd.f32 %v55, %v359
  %v361 = vpop.f32.mrb[0].mxu0
  %362 = vmatprep.mubr.f32.mxu0 0.0
  %363 = vmatmul.mubr.f32.gmra.mrb[0].mxu0 %v143
  %v364 = vpop.f32.mrb[0].mxu0
  %v365 = vadd.f32 %v55, %v364
  %v366 = vpop.f32.mrb[0].mxu0
  %367 = vmatprep.mubr.f32.mxu0 0.0
  %368 = vmatmul.mubr.f32.gmra.mrb[0].mxu0 %v146
  %v369 = vpop.f32.mrb[0].mxu0
  %v370 = vadd.f32 %v55, %v369
  %v371 = vpop.f32.mrb[0].mxu0
  %372 = vmatprep.mubr.f32.mxu0 0.0
  %373 = vmatmul.mubr.f32.gmra.mrb[0].mxu0 %v149
  %v374 = vpop.f32.mrb[0].mxu0
  %v375 = vadd.f32 %v55, %v374
  %v376 = vpop.f32.mrb[0].mxu0
  %377 = vmatprep.mubr.f32.mxu0 0.0
  %378 = vmatmul.mubr.f32.gmra.mrb[0].mxu0 %v152
  %v379 = vpop.f32.mrb[0].mxu0
  %v380 = vadd.f32 %v55, %v379
  %v381 = vpop.f32.mrb[0].mxu0
  %382 = vdwg.mxu0
  %v383 = vmax.f32 %v225, 0.0
  %v384 = vmax.f32 %v230, 0.0
  %v385 = vmax.f32 %v235, 0.0
  %v386 = vmax.f32 %v240, 0.0
  %v387 = vmax.f32 %v245, 0.0
  %v388 = vmax.f32 %v250, 0.0
  %v389 = vmax.f32 %v255, 0.0
  %v390 = vmax.f32 %v260, 0.0
  %v391 = vmax.f32 %v265, 0.0
  %v392 = vmax.f32 %v270, 0.0
  %v393 = vmax.f32 %v275, 0.0
  %v394 = vmax.f32 %v280, 0.0
  %v395 = vmax.f32 %v285, 0.0
  %v396 = vmax.f32 %v290, 0.0
  %v397 = vmax.f32 %v295, 0.0
  %v398 = vmax.f32 %v300, 0.0
  %v399 = vmax.f32 %v305, 0.0
  %v400 = vmax.f32 %v310, 0.0
  %v401 = vmax.f32 %v315, 0.0
  %v402 = vmax.f32 %v320, 0.0
  %v403 = vmax.f32 %v325, 0.0
  %v404 = vmax.f32 %v330, 0.0
  %v405 = vmax.f32 %v335, 0.0
  %v406 = vmax.f32 %v340, 0.0
  %v407 = vmax.f32 %v345, 0.0
  %v408 = vmax.f32 %v350, 0.0
  %v409 = vmax.f32 %v355, 0.0
  %v410 = vmax.f32 %v360, 0.0
  %v411 = vmax.f32 %v365, 0.0
  %v412 = vmax.f32 %v370, 0.0
  %v413 = vmax.f32 %v375, 0.0
  %v414 = vmax.f32 %v380, 0.0
  %v415 = vpack.c.bf16 %v384, %v383
  %v416 = vpack.c.bf16 %v386, %v385
  %v417 = vpack.c.bf16 %v388, %v387
  %v418 = vpack.c.bf16 %v390, %v389
  %v419 = vpack.c.bf16 %v392, %v391
  %v420 = vpack.c.bf16 %v394, %v393
  %v421 = vpack.c.bf16 %v396, %v395
  %v422 = vpack.c.bf16 %v398, %v397
  %v423 = vpack.c.bf16 %v400, %v399
  %v424 = vpack.c.bf16 %v402, %v401
  %v425 = vpack.c.bf16 %v404, %v403
  %v426 = vpack.c.bf16 %v406, %v405
  %v427 = vpack.c.bf16 %v408, %v407
  %v428 = vpack.c.bf16 %v410, %v409
  %v429 = vpack.c.bf16 %v412, %v411
  %v430 = vpack.c.bf16 %v414, %v413
  %v447 = vunpack.c.l.b16 %v415
  %v448 = vunpack.c.h.b16 %v415
  %v449 = vunpack.c.l.b16 %v416
  %v450 = vunpack.c.h.b16 %v416
  %v451 = vunpack.c.l.b16 %v417
  %v452 = vunpack.c.h.b16 %v417
  %v453 = vunpack.c.l.b16 %v418
  %v454 = vunpack.c.h.b16 %v418
  %v455 = vunpack.c.l.b16 %v419
  %v456 = vunpack.c.h.b16 %v419
  %v457 = vunpack.c.l.b16 %v420
  %v458 = vunpack.c.h.b16 %v420
  %v459 = vunpack.c.l.b16 %v421
  %v460 = vunpack.c.h.b16 %v421
  %v461 = vunpack.c.l.b16 %v422
  %v462 = vunpack.c.h.b16 %v422
  %v463 = vunpack.c.l.b16 %v423
  %v464 = vunpack.c.h.b16 %v423
  %v465 = vunpack.c.l.b16 %v424
  %v466 = vunpack.c.h.b16 %v424
  %v467 = vunpack.c.l.b16 %v425
  %v468 = vunpack.c.h.b16 %v425
  %v469 = vunpack.c.l.b16 %v426
  %v470 = vunpack.c.h.b16 %v426
  %v471 = vunpack.c.l.b16 %v427
  %v472 = vunpack.c.h.b16 %v427
  %v473 = vunpack.c.l.b16 %v428
  %v474 = vunpack.c.h.b16 %v428
  %v475 = vunpack.c.l.b16 %v429
  %v476 = vunpack.c.h.b16 %v429
  %v477 = vunpack.c.l.b16 %v430
  %v478 = vunpack.c.h.b16 %v430
  %v479 = vpack.c.b16 %v447, %v447
  %v480 = vpack.c.b16 %v448, %v448
  %v481 = vpack.c.b16 %v449, %v449
  %v482 = vpack.c.b16 %v450, %v450
  %v483 = vpack.c.b16 %v451, %v451
  %v484 = vpack.c.b16 %v452, %v452
  %v485 = vpack.c.b16 %v453, %v453
  %v486 = vpack.c.b16 %v454, %v454
  %v487 = vpack.c.b16 %v455, %v455
  %v488 = vpack.c.b16 %v456, %v456
  %v489 = vpack.c.b16 %v457, %v457
  %v490 = vpack.c.b16 %v458, %v458
  %v491 = vpack.c.b16 %v459, %v459
  %v492 = vpack.c.b16 %v460, %v460
  %v493 = vpack.c.b16 %v461, %v461
  %v494 = vpack.c.b16 %v462, %v462
  %v495 = vpack.c.b16 %v463, %v463
  %v496 = vpack.c.b16 %v464, %v464
  %v497 = vpack.c.b16 %v465, %v465
  %v498 = vpack.c.b16 %v466, %v466
  %v499 = vpack.c.b16 %v467, %v467
  %v500 = vpack.c.b16 %v468, %v468
  %v501 = vpack.c.b16 %v469, %v469
  %v502 = vpack.c.b16 %v470, %v470
  %v503 = vpack.c.b16 %v471, %v471
  %v504 = vpack.c.b16 %v472, %v472
  %v505 = vpack.c.b16 %v473, %v473
  %v506 = vpack.c.b16 %v474, %v474
  %v507 = vpack.c.b16 %v475, %v475
  %v508 = vpack.c.b16 %v476, %v476
  %v509 = vpack.c.b16 %v477, %v477
  %v510 = vpack.c.b16 %v478, %v478
  %vm543 = vcmask 519168
  %544 = vst.msk [vmem:[%s3] sm:$0xf] %vm543, %v479
  %545 = vst.msk [vmem:[%s3 + $0x4] sm:$0xf] %vm543, %v480
  %546 = vst.msk [vmem:[%s3 + $0x8] sm:$0xf] %vm543, %v481
  %547 = vst.msk [vmem:[%s3 + $0xc] sm:$0xf] %vm543, %v482
  %548 = vst.msk [vmem:[%s3 + $0x10] sm:$0xf] %vm543, %v483
  %549 = vst.msk [vmem:[%s3 + $0x14] sm:$0xf] %vm543, %v484
  %550 = vst.msk [vmem:[%s3 + $0x18] sm:$0xf] %vm543, %v485
  %551 = vst.msk [vmem:[%s3 + $0x1c] sm:$0xf] %vm543, %v486
  %552 = vst.msk [vmem:[%s3 + $0x20] sm:$0xf] %vm543, %v487
  %553 = vst.msk [vmem:[%s3 + $0x24] sm:$0xf] %vm543, %v488
  %554 = vst.msk [vmem:[%s3 + $0x28] sm:$0xf] %vm543, %v489
  %555 = vst.msk [vmem:[%s3 + $0x2c] sm:$0xf] %vm543, %v490
  %556 = vst.msk [vmem:[%s3 + $0x30] sm:$0xf] %vm543, %v491
  %557 = vst.msk [vmem:[%s3 + $0x34] sm:$0xf] %vm543, %v492
  %558 = vst.msk [vmem:[%s3 + $0x38] sm:$0xf] %vm543, %v493
  %559 = vst.msk [vmem:[%s3 + $0x3c] sm:$0xf] %vm543, %v494
  %560 = vst.msk [vmem:[%s3 + $0x40] sm:$0xf] %vm543, %v495
  %561 = vst.msk [vmem:[%s3 + $0x44] sm:$0xf] %vm543, %v496
  %562 = vst.msk [vmem:[%s3 + $0x48] sm:$0xf] %vm543, %v497
  %563 = vst.msk [vmem:[%s3 + $0x4c] sm:$0xf] %vm543, %v498
  %564 = vst.msk [vmem:[%s3 + $0x50] sm:$0xf] %vm543, %v499
  %565 = vst.msk [vmem:[%s3 + $0x54] sm:$0xf] %vm543, %v500
  %566 = vst.msk [vmem:[%s3 + $0x58] sm:$0xf] %vm543, %v501
  %567 = vst.msk [vmem:[%s3 + $0x5c] sm:$0xf] %vm543, %v502
  %568 = vst.msk [vmem:[%s3 + $0x60] sm:$0xf] %vm543, %v503
  %569 = vst.msk [vmem:[%s3 + $0x64] sm:$0xf] %vm543, %v504
  %570 = vst.msk [vmem:[%s3 + $0x68] sm:$0xf] %vm543, %v505
  %571 = vst.msk [vmem:[%s3 + $0x6c] sm:$0xf] %vm543, %v506
  %572 = vst.msk [vmem:[%s3 + $0x70] sm:$0xf] %vm543, %v507
  %573 = vst.msk [vmem:[%s3 + $0x74] sm:$0xf] %vm543, %v508
  %574 = vst.msk [vmem:[%s3 + $0x78] sm:$0xf] %vm543, %v509
  %575 = vst.msk [vmem:[%s3 + $0x7c] sm:$0xf] %vm543, %v510
  // Predicated region
  $region14: #{_lambda_.8} parent=0 // pred_check
    _
  $region15: #{_lambda_.8} parent=0 // pred_check_branch
    %577 = sbr.rel (0) target = $region17
  $region16: #{_lambda_.8} parent=0 // pred_region
    _
  $region17: #{_lambda_.8} parent=0 // pred_fallthru
    _
  // Predicated region
  $region18: #{_lambda_.8} parent=0 // pred_check
    _
  $region19: #{_lambda_.8} parent=0 // pred_check_branch
    %579 = sbr.rel (0) target = $region21
  $region20: #{_lambda_.8} parent=0 // pred_region
    _
  $region21: #{_lambda_.8} parent=0 // pred_fallthru
    _

// kernel: _lambda_.7
$region0: #{_lambda_.7}
  #allocation0 [shape = 'u32[]', space=smem, size = 0x4, offset = 0x4, fixed_abs, tag = 'smem constant byte address 0x4 - core index']
  #allocation1 [shape = 'u32[144,128]{1,0:T(1,128)}', space=vmem, size = 0x12000, scoped, tag = 'internal scratch']
  %s0 = inlined_call_operand.vmem [shape: bf16[512,576], index: 0, kind: input, shape index: {}]
  %s1 = inlined_call_operand.vmem [shape: bf16[512,576], index: 1, kind: input, shape index: {}]
  %s2 = inlined_call_operand.vmem [shape: bf16[576,64], index: 2, kind: input, shape index: {}]
  %s3 = inlined_call_operand.vmem [shape: f32[1,64], index: 3, kind: input, shape index: {}]
  %s4 = inlined_call_operand.vmem [shape: f32[1,64], index: 4, kind: input, shape index: {}]
  %s5 = inlined_call_operand.vmem [shape: f32[1,1,64], index: 5, kind: output, shape index: {}]
  %s6 = sld [smem:[#allocation0]]
  $region30: #{_lambda_.7} parent=0
    _
  %s8 = ssub.s32 1, %s6
  %s9 = scalar_select 0, %s8, %s6
  // Predicated region
  $region2: #{_lambda_.7} parent=0 // pred_check
    _
  $region3: #{_lambda_.7} parent=0 // pred_check_branch
    %11 = sbr.rel (0) target = $region5
  $region4: #{_lambda_.7} parent=0 // pred_region
    _
  $region5: #{_lambda_.7} parent=0 // pred_fallthru
    _
  // Predicated region
  $region6: #{_lambda_.7} parent=0 // pred_check
    _
  $region7: #{_lambda_.7} parent=0 // pred_check_branch
    %13 = sbr.rel (0) target = $region9
  $region8: #{_lambda_.7} parent=0 // pred_region
    _
  $region9: #{_lambda_.7} parent=0 // pred_fallthru
    _
  // Predicated region
  $region10: #{_lambda_.7} parent=0 // pred_check
    _
  $region11: #{_lambda_.7} parent=0 // pred_check_branch
    %15 = sbr.rel (0) target = $region13
  $region12: #{_lambda_.7} parent=0 // pred_region
    _
  $region13: #{_lambda_.7} parent=0 // pred_fallthru
    _
  // Predicated region
  $region14: #{_lambda_.7} parent=0 // pred_check
    _
  $region15: #{_lambda_.7} parent=0 // pred_check_branch
    %17 = sbr.rel (0) target = $region17
  $region16: #{_lambda_.7} parent=0 // pred_region
    _
  $region17: #{_lambda_.7} parent=0 // pred_fallthru
    _
  // Predicated region
  $region18: #{_lambda_.7} parent=0 // pred_check
    _
  $region19: #{_lambda_.7} parent=0 // pred_check_branch
    %19 = sbr.rel (0) target = $region21
  $region20: #{_lambda_.7} parent=0 // pred_region
    _
  $region21: #{_lambda_.7} parent=0 // pred_fallthru
    _
  %v21 = vld [vmem:[%s0] sm:$0xff]
  %v22 = vld [vmem:[%s0 + $0x8] sm:$0xff]
  %v23 = vld [vmem:[%s0 + $0x10] sm:$0xf]
  %v24 = vld [vmem:[%s0 + $0x14] sm:$0xff]
  %v25 = vld [vmem:[%s0 + $0x1c] sm:$0xff]
  %v26 = vld [vmem:[%s0 + $0x24] sm:$0xf]
  %v27 = vld [vmem:[%s0 + $0x28] sm:$0xff]
  %v28 = vld [vmem:[%s0 + $0x30] sm:$0xff]
  %v29 = vld [vmem:[%s0 + $0x38] sm:$0xf]
  %v30 = vld [vmem:[%s0 + $0x3c] sm:$0xff]
  %v31 = vld [vmem:[%s0 + $0x44] sm:$0xff]
  %v32 = vld [vmem:[%s0 + $0x4c] sm:$0xf]
  %v33 = vld [vmem:[%s0 + $0x50] sm:$0xff]
  %v34 = vld [vmem:[%s0 + $0x58] sm:$0xff]
  %v35 = vld [vmem:[%s0 + $0x60] sm:$0xf]
  %v36 = vld [vmem:[%s0 + $0x64] sm:$0xff]
  %v37 = vld [vmem:[%s0 + $0x6c] sm:$0xff]
  %v38 = vld [vmem:[%s0 + $0x74] sm:$0xf]
  %v39 = vld [vmem:[%s0 + $0x78] sm:$0xff]
  %v40 = vld [vmem:[%s0 + $0x80] sm:$0xff]
  %v41 = vld [vmem:[%s0 + $0x88] sm:$0xf]
  %v42 = vld [vmem:[%s0 + $0x8c] sm:$0xff]
  %v43 = vld [vmem:[%s0 + $0x94] sm:$0xff]
  %v44 = vld [vmem:[%s0 + $0x9c] sm:$0xf]
  %v45 = vld [vmem:[%s0 + $0xa0] sm:$0xff]
  %v46 = vld [vmem:[%s0 + $0xa8] sm:$0xff]
  %v47 = vld [vmem:[%s0 + $0xb0] sm:$0xf]
  %v48 = vld [vmem:[%s0 + $0xb4] sm:$0xff]
  %v49 = vld [vmem:[%s0 + $0xbc] sm:$0xff]
  %v50 = vld [vmem:[%s0 + $0xc4] sm:$0xf]
  %v51 = vld [vmem:[%s0 + $0xc8] sm:$0xff]
  %v52 = vld [vmem:[%s0 + $0xd0] sm:$0xff]
  %v53 = vld [vmem:[%s0 + $0xd8] sm:$0xf]
  %v54 = vld [vmem:[%s0 + $0xdc] sm:$0xff]
  %v55 = vld [vmem:[%s0 + $0xe4] sm:$0xff]
  %v56 = vld [vmem:[%s0 + $0xec] sm:$0xf]
  %v57 = vld [vmem:[%s0 + $0xf0] sm:$0xff]
  %v58 = vld [vmem:[%s0 + $0xf8] sm:$0xff]
  %v59 = vld [vmem:[%s0 + $0x100] sm:$0xf]
  %v60 = vld [vmem:[%s0 + $0x104] sm:$0xff]
  %v61 = vld [vmem:[%s0 + $0x10c] sm:$0xff]
  %v62 = vld [vmem:[%s0 + $0x114] sm:$0xf]
  %v63 = vld [vmem:[%s0 + $0x118] sm:$0xff]
  %v64 = vld [vmem:[%s0 + $0x120] sm:$0xff]
  %v65 = vld [vmem:[%s0 + $0x128] sm:$0xf]
  %v66 = vld [vmem:[%s0 + $0x12c] sm:$0xff]
  %v67 = vld [vmem:[%s0 + $0x134] sm:$0xff]
  %v68 = vld [vmem:[%s0 + $0x13c] sm:$0xf]
  %v69 = vld [vmem:[%s0 + $0x140] sm:$0xff]
  %v70 = vld [vmem:[%s0 + $0x148] sm:$0xff]
  %v71 = vld [vmem:[%s0 + $0x150] sm:$0xf]
  %v72 = vld [vmem:[%s0 + $0x154] sm:$0xff]
  %v73 = vld [vmem:[%s0 + $0x15c] sm:$0xff]
  %v74 = vld [vmem:[%s0 + $0x164] sm:$0xf]
  %v75 = vld [vmem:[%s0 + $0x168] sm:$0xff]
  %v76 = vld [vmem:[%s0 + $0x170] sm:$0xff]
  %v77 = vld [vmem:[%s0 + $0x178] sm:$0xf]
  %v78 = vld [vmem:[%s0 + $0x17c] sm:$0xff]
  %v79 = vld [vmem:[%s0 + $0x184] sm:$0xff]
  %v80 = vld [vmem:[%s0 + $0x18c] sm:$0xf]
  %v81 = vld [vmem:[%s0 + $0x190] sm:$0xff]
  %v82 = vld [vmem:[%s0 + $0x198] sm:$0xff]
  %v83 = vld [vmem:[%s0 + $0x1a0] sm:$0xf]
  %v84 = vld [vmem:[%s0 + $0x1a4] sm:$0xff]
  %v85 = vld [vmem:[%s0 + $0x1ac] sm:$0xff]
  %v86 = vld [vmem:[%s0 + $0x1b4] sm:$0xf]
  %v87 = vld [vmem:[%s0 + $0x1b8] sm:$0xff]
  %v88 = vld [vmem:[%s0 + $0x1c0] sm:$0xff]
  %v89 = vld [vmem:[%s0 + $0x1c8] sm:$0xf]
  %v90 = vld [vmem:[%s0 + $0x1cc] sm:$0xff]
  %v91 = vld [vmem:[%s0 + $0x1d4] sm:$0xff]
  %v92 = vld [vmem:[%s0 + $0x1dc] sm:$0xf]
  %v93 = vld [vmem:[%s0 + $0x1e0] sm:$0xff]
  %v94 = vld [vmem:[%s0 + $0x1e8] sm:$0xff]
  %v95 = vld [vmem:[%s0 + $0x1f0] sm:$0xf]
  %v96 = vld [vmem:[%s0 + $0x1f4] sm:$0xff]
  %v97 = vld [vmem:[%s0 + $0x1fc] sm:$0xff]
  %v98 = vld [vmem:[%s0 + $0x204] sm:$0xf]
  %v99 = vld [vmem:[%s0 + $0x208] sm:$0xff]
  %v100 = vld [vmem:[%s0 + $0x210] sm:$0xff]
  %v101 = vld [vmem:[%s0 + $0x218] sm:$0xf]
  %v102 = vld [vmem:[%s0 + $0x21c] sm:$0xff]
  %v103 = vld [vmem:[%s0 + $0x224] sm:$0xff]
  %v104 = vld [vmem:[%s0 + $0x22c] sm:$0xf]
  %v105 = vld [vmem:[%s0 + $0x230] sm:$0xff]
  %v106 = vld [vmem:[%s0 + $0x238] sm:$0xff]
  %v107 = vld [vmem:[%s0 + $0x240] sm:$0xf]
  %v108 = vld [vmem:[%s0 + $0x244] sm:$0xff]
  %v109 = vld [vmem:[%s0 + $0x24c] sm:$0xff]
  %v110 = vld [vmem:[%s0 + $0x254] sm:$0xf]
  %v111 = vld [vmem:[%s0 + $0x258] sm:$0xff]
  %v112 = vld [vmem:[%s0 + $0x260] sm:$0xff]
  %v113 = vld [vmem:[%s0 + $0x268] sm:$0xf]
  %v114 = vld [vmem:[%s0 + $0x26c] sm:$0xff]
  %v115 = vld [vmem:[%s0 + $0x274] sm:$0xff]
  %v116 = vld [vmem:[%s0 + $0x27c] sm:$0xf]
  %v117 = vld [vmem:[%s0 + $0x280] sm:$0xff]
  %v118 = vld [vmem:[%s0 + $0x288] sm:$0xff]
  %v119 = vld [vmem:[%s0 + $0x290] sm:$0xf]
  %v120 = vld [vmem:[%s0 + $0x294] sm:$0xff]
  %v121 = vld [vmem:[%s0 + $0x29c] sm:$0xff]
  %v122 = vld [vmem:[%s0 + $0x2a4] sm:$0xf]
  %v123 = vld [vmem:[%s0 + $0x2a8] sm:$0xff]
  %v124 = vld [vmem:[%s0 + $0x2b0] sm:$0xff]
  %v125 = vld [vmem:[%s0 + $0x2b8] sm:$0xf]
  %v126 = vld [vmem:[%s0 + $0x2bc] sm:$0xff]
  %v127 = vld [vmem:[%s0 + $0x2c4] sm:$0xff]
  %v128 = vld [vmem:[%s0 + $0x2cc] sm:$0xf]
  %v129 = vld [vmem:[%s0 + $0x2d0] sm:$0xff]
  %v130 = vld [vmem:[%s0 + $0x2d8] sm:$0xff]
  %v131 = vld [vmem:[%s0 + $0x2e0] sm:$0xf]
  %v132 = vld [vmem:[%s0 + $0x2e4] sm:$0xff]
  %v133 = vld [vmem:[%s0 + $0x2ec] sm:$0xff]
  %v134 = vld [vmem:[%s0 + $0x2f4] sm:$0xf]
  %v135 = vld [vmem:[%s0 + $0x2f8] sm:$0xff]
  %v136 = vld [vmem:[%s0 + $0x300] sm:$0xff]
  %v137 = vld [vmem:[%s0 + $0x308] sm:$0xf]
  %v138 = vld [vmem:[%s0 + $0x30c] sm:$0xff]
  %v139 = vld [vmem:[%s0 + $0x314] sm:$0xff]
  %v140 = vld [vmem:[%s0 + $0x31c] sm:$0xf]
  %v141 = vld [vmem:[%s0 + $0x320] sm:$0xff]
  %v142 = vld [vmem:[%s0 + $0x328] sm:$0xff]
  %v143 = vld [vmem:[%s0 + $0x330] sm:$0xf]
  %v144 = vld [vmem:[%s0 + $0x334] sm:$0xff]
  %v145 = vld [vmem:[%s0 + $0x33c] sm:$0xff]
  %v146 = vld [vmem:[%s0 + $0x344] sm:$0xf]
  %v147 = vld [vmem:[%s0 + $0x348] sm:$0xff]
  %v148 = vld [vmem:[%s0 + $0x350] sm:$0xff]
  %v149 = vld [vmem:[%s0 + $0x358] sm:$0xf]
  %v150 = vld [vmem:[%s0 + $0x35c] sm:$0xff]
  %v151 = vld [vmem:[%s0 + $0x364] sm:$0xff]
  %v152 = vld [vmem:[%s0 + $0x36c] sm:$0xf]
  %v153 = vld [vmem:[%s0 + $0x370] sm:$0xff]
  %v154 = vld [vmem:[%s0 + $0x378] sm:$0xff]
  %v155 = vld [vmem:[%s0 + $0x380] sm:$0xf]
  %v156 = vld [vmem:[%s0 + $0x384] sm:$0xff]
  %v157 = vld [vmem:[%s0 + $0x38c] sm:$0xff]
  %v158 = vld [vmem:[%s0 + $0x394] sm:$0xf]
  %v159 = vld [vmem:[%s0 + $0x398] sm:$0xff]
  %v160 = vld [vmem:[%s0 + $0x3a0] sm:$0xff]
  %v161 = vld [vmem:[%s0 + $0x3a8] sm:$0xf]
  %v162 = vld [vmem:[%s0 + $0x3ac] sm:$0xff]
  %v163 = vld [vmem:[%s0 + $0x3b4] sm:$0xff]
  %v164 = vld [vmem:[%s0 + $0x3bc] sm:$0xf]
  %v165 = vld [vmem:[%s0 + $0x3c0] sm:$0xff]
  %v166 = vld [vmem:[%s0 + $0x3c8] sm:$0xff]
  %v167 = vld [vmem:[%s0 + $0x3d0] sm:$0xf]
  %v168 = vld [vmem:[%s0 + $0x3d4] sm:$0xff]
  %v169 = vld [vmem:[%s0 + $0x3dc] sm:$0xff]
  %v170 = vld [vmem:[%s0 + $0x3e4] sm:$0xf]
  %v171 = vld [vmem:[%s0 + $0x3e8] sm:$0xff]
  %v172 = vld [vmem:[%s0 + $0x3f0] sm:$0xff]
  %v173 = vld [vmem:[%s0 + $0x3f8] sm:$0xf]
  %v174 = vld [vmem:[%s0 + $0x3fc] sm:$0xff]
  %v175 = vld [vmem:[%s0 + $0x404] sm:$0xff]
  %v176 = vld [vmem:[%s0 + $0x40c] sm:$0xf]
  %v177 = vld [vmem:[%s0 + $0x410] sm:$0xff]
  %v178 = vld [vmem:[%s0 + $0x418] sm:$0xff]
  %v179 = vld [vmem:[%s0 + $0x420] sm:$0xf]
  %v180 = vld [vmem:[%s0 + $0x424] sm:$0xff]
  %v181 = vld [vmem:[%s0 + $0x42c] sm:$0xff]
  %v182 = vld [vmem:[%s0 + $0x434] sm:$0xf]
  %v183 = vld [vmem:[%s0 + $0x438] sm:$0xff]
  %v184 = vld [vmem:[%s0 + $0x440] sm:$0xff]
  %v185 = vld [vmem:[%s0 + $0x448] sm:$0xf]
  %v186 = vld [vmem:[%s0 + $0x44c] sm:$0xff]
  %v187 = vld [vmem:[%s0 + $0x454] sm:$0xff]
  %v188 = vld [vmem:[%s0 + $0x45c] sm:$0xf]
  %v189 = vld [vmem:[%s0 + $0x460] sm:$0xff]
  %v190 = vld [vmem:[%s0 + $0x468] sm:$0xff]
  %v191 = vld [vmem:[%s0 + $0x470] sm:$0xf]
  %v192 = vld [vmem:[%s0 + $0x474] sm:$0xff]
  %v193 = vld [vmem:[%s0 + $0x47c] sm:$0xff]
  %v194 = vld [vmem:[%s0 + $0x484] sm:$0xf]
  %v195 = vld [vmem:[%s0 + $0x488] sm:$0xff]
  %v196 = vld [vmem:[%s0 + $0x490] sm:$0xff]
  %v197 = vld [vmem:[%s0 + $0x498] sm:$0xf]
  %v198 = vld [vmem:[%s0 + $0x49c] sm:$0xff]
  %v199 = vld [vmem:[%s0 + $0x4a4] sm:$0xff]
  %v200 = vld [vmem:[%s0 + $0x4ac] sm:$0xf]
  %v201 = vld [vmem:[%s0 + $0x4b0] sm:$0xff]
  %v202 = vld [vmem:[%s0 + $0x4b8] sm:$0xff]
  %v203 = vld [vmem:[%s0 + $0x4c0] sm:$0xf]
  %v204 = vld [vmem:[%s0 + $0x4c4] sm:$0xff]
  %v205 = vld [vmem:[%s0 + $0x4cc] sm:$0xff]
  %v206 = vld [vmem:[%s0 + $0x4d4] sm:$0xf]
  %v207 = vld [vmem:[%s0 + $0x4d8] sm:$0xff]
  %v208 = vld [vmem:[%s0 + $0x4e0] sm:$0xff]
  %v209 = vld [vmem:[%s0 + $0x4e8] sm:$0xf]
  %v210 = vld [vmem:[%s0 + $0x4ec] sm:$0xff]
  %v211 = vld [vmem:[%s0 + $0x4f4] sm:$0xff]
  %v212 = vld [vmem:[%s0 + $0x4fc] sm:$0xf]
  %v213 = vld [vmem:[%s2] sm:$0xf]
  %v214 = vld [vmem:[%s2 + $0x4] sm:$0xf]
  %v215 = vld [vmem:[%s2 + $0x8] sm:$0xf]
  %v216 = vld [vmem:[%s2 + $0xc] sm:$0xf]
  %v217 = vld [vmem:[%s2 + $0x10] sm:$0xf]
  %v218 = vld [vmem:[%s2 + $0x14] sm:$0xf]
  %v219 = vld [vmem:[%s2 + $0x18] sm:$0xf]
  %v220 = vld [vmem:[%s2 + $0x1c] sm:$0xf]
  %v221 = vld [vmem:[%s2 + $0x20] sm:$0xf]
  %v222 = vld [vmem:[%s2 + $0x24] sm:$0xf]
  %v223 = vld [vmem:[%s2 + $0x28] sm:$0xf]
  %v224 = vld [vmem:[%s2 + $0x2c] sm:$0xf]
  %v225 = vld [vmem:[%s2 + $0x30] sm:$0xf]
  %v226 = vld [vmem:[%s2 + $0x34] sm:$0xf]
  %v227 = vld [vmem:[%s2 + $0x38] sm:$0xf]
  %v228 = vld [vmem:[%s2 + $0x3c] sm:$0xf]
  %v229 = vld [vmem:[%s2 + $0x40] sm:$0xf]
  %v230 = vld [vmem:[%s2 + $0x44] sm:$0xf]
  %v231 = vld [vmem:[%s2 + $0x48] sm:$0xf]
  %v232 = vld [vmem:[%s2 + $0x4c] sm:$0xf]
  %v233 = vld [vmem:[%s2 + $0x50] sm:$0xf]
  %v234 = vld [vmem:[%s2 + $0x54] sm:$0xf]
  %v235 = vld [vmem:[%s2 + $0x58] sm:$0xf]
  %v236 = vld [vmem:[%s2 + $0x5c] sm:$0xf]
  %v237 = vld [vmem:[%s2 + $0x60] sm:$0xf]
  %v238 = vld [vmem:[%s2 + $0x64] sm:$0xf]
  %v239 = vld [vmem:[%s2 + $0x68] sm:$0xf]
  %v240 = vld [vmem:[%s2 + $0x6c] sm:$0xf]
  %v241 = vld [vmem:[%s2 + $0x70] sm:$0xf]
  %v242 = vld [vmem:[%s2 + $0x74] sm:$0xf]
  %v243 = vld [vmem:[%s2 + $0x78] sm:$0xf]
  %v244 = vld [vmem:[%s2 + $0x7c] sm:$0xf]
  %v245 = vld [vmem:[%s2 + $0x80] sm:$0xf]
  %v246 = vld [vmem:[%s2 + $0x84] sm:$0xf]
  %v247 = vld [vmem:[%s2 + $0x88] sm:$0xf]
  %v248 = vld [vmem:[%s2 + $0x8c] sm:$0xf]
  %v249 = vld [vmem:[%s2 + $0x90] sm:$0xf]
  %v250 = vld [vmem:[%s2 + $0x94] sm:$0xf]
  %v251 = vld [vmem:[%s2 + $0x98] sm:$0xf]
  %v252 = vld [vmem:[%s2 + $0x9c] sm:$0xf]
  %v253 = vld [vmem:[%s2 + $0xa0] sm:$0xf]
  %v254 = vld [vmem:[%s2 + $0xa4] sm:$0xf]
  %v255 = vld [vmem:[%s2 + $0xa8] sm:$0xf]
  %v256 = vld [vmem:[%s2 + $0xac] sm:$0xf]
  %v257 = vld [vmem:[%s2 + $0xb0] sm:$0xf]
  %v258 = vld [vmem:[%s2 + $0xb4] sm:$0xf]
  %v259 = vld [vmem:[%s2 + $0xb8] sm:$0xf]
  %v260 = vld [vmem:[%s2 + $0xbc] sm:$0xf]
  %v261 = vld [vmem:[%s2 + $0xc0] sm:$0xf]
  %v262 = vld [vmem:[%s2 + $0xc4] sm:$0xf]
  %v263 = vld [vmem:[%s2 + $0xc8] sm:$0xf]
  %v264 = vld [vmem:[%s2 + $0xcc] sm:$0xf]
  %v265 = vld [vmem:[%s2 + $0xd0] sm:$0xf]
  %v266 = vld [vmem:[%s2 + $0xd4] sm:$0xf]
  %v267 = vld [vmem:[%s2 + $0xd8] sm:$0xf]
  %v268 = vld [vmem:[%s2 + $0xdc] sm:$0xf]
  %v269 = vld [vmem:[%s2 + $0xe0] sm:$0xf]
  %v270 = vld [vmem:[%s2 + $0xe4] sm:$0xf]
  %v271 = vld [vmem:[%s2 + $0xe8] sm:$0xf]
  %v272 = vld [vmem:[%s2 + $0xec] sm:$0xf]
  %v273 = vld [vmem:[%s2 + $0xf0] sm:$0xf]
  %v274 = vld [vmem:[%s2 + $0xf4] sm:$0xf]
  %v275 = vld [vmem:[%s2 + $0xf8] sm:$0xf]
  %v276 = vld [vmem:[%s2 + $0xfc] sm:$0xf]
  %v277 = vld [vmem:[%s2 + $0x100] sm:$0xf]
  %v278 = vld [vmem:[%s2 + $0x104] sm:$0xf]
  %v279 = vld [vmem:[%s2 + $0x108] sm:$0xf]
  %v280 = vld [vmem:[%s2 + $0x10c] sm:$0xf]
  %v281 = vld [vmem:[%s2 + $0x110] sm:$0xf]
  %v282 = vld [vmem:[%s2 + $0x114] sm:$0xf]
  %v283 = vld [vmem:[%s2 + $0x118] sm:$0xf]
  %v284 = vld [vmem:[%s2 + $0x11c] sm:$0xf]
  %v285 = vld [vmem:[%s3] sm:$0x1]
  %v287 = vlaneseq
  %v288 = vshrl.u32 %v287, 7
  %v289 = vsub.s32 0, %v288
  %v290 = vrot.slane %v285, %v289
  %v484 = vunpack.c.l.b16 %v21
  %v485 = vunpack.c.h.b16 %v21
  %v486 = vunpack.c.l.b16 %v22
  %v487 = vunpack.c.h.b16 %v22
  %v488 = vunpack.c.l.b16 %v23
  %v489 = vunpack.c.l.b16 %v24
  %v490 = vunpack.c.h.b16 %v24
  %v491 = vunpack.c.l.b16 %v25
  %v492 = vunpack.c.h.b16 %v25
  %v493 = vunpack.c.l.b16 %v26
  %v494 = vunpack.c.l.b16 %v27
  %v495 = vunpack.c.h.b16 %v27
  %v496 = vunpack.c.l.b16 %v28
  %v497 = vunpack.c.h.b16 %v28
  %v498 = vunpack.c.l.b16 %v29
  %v499 = vunpack.c.l.b16 %v30
  %v500 = vunpack.c.h.b16 %v30
  %v501 = vunpack.c.l.b16 %v31
  %v502 = vunpack.c.h.b16 %v31
  %v503 = vunpack.c.l.b16 %v32
  %v504 = vunpack.c.l.b16 %v33
  %v505 = vunpack.c.h.b16 %v33
  %v506 = vunpack.c.l.b16 %v34
  %v507 = vunpack.c.h.b16 %v34
  %v508 = vunpack.c.l.b16 %v35
  %v509 = vunpack.c.l.b16 %v36
  %v510 = vunpack.c.h.b16 %v36
  %v511 = vunpack.c.l.b16 %v37
  %v512 = vunpack.c.h.b16 %v37
  %v513 = vunpack.c.l.b16 %v38
  %v514 = vunpack.c.l.b16 %v39
  %v515 = vunpack.c.h.b16 %v39
  %v516 = vunpack.c.l.b16 %v40
  %v517 = vunpack.c.h.b16 %v40
  %v518 = vunpack.c.l.b16 %v41
  %v519 = vunpack.c.l.b16 %v42
  %v520 = vunpack.c.h.b16 %v42
  %v521 = vunpack.c.l.b16 %v43
  %v522 = vunpack.c.h.b16 %v43
  %v523 = vunpack.c.l.b16 %v44
  %v524 = vunpack.c.l.b16 %v45
  %v525 = vunpack.c.h.b16 %v45
  %v526 = vunpack.c.l.b16 %v46
  %v527 = vunpack.c.h.b16 %v46
  %v528 = vunpack.c.l.b16 %v47
  %v529 = vunpack.c.l.b16 %v48
  %v530 = vunpack.c.h.b16 %v48
  %v531 = vunpack.c.l.b16 %v49
  %v532 = vunpack.c.h.b16 %v49
  %v533 = vunpack.c.l.b16 %v50
  %v534 = vunpack.c.l.b16 %v51
  %v535 = vunpack.c.h.b16 %v51
  %v536 = vunpack.c.l.b16 %v52
  %v537 = vunpack.c.h.b16 %v52
  %v538 = vunpack.c.l.b16 %v53
  %v539 = vunpack.c.l.b16 %v54
  %v540 = vunpack.c.h.b16 %v54
  %v541 = vunpack.c.l.b16 %v55
  %v542 = vunpack.c.h.b16 %v55
  %v543 = vunpack.c.l.b16 %v56
  %v544 = vunpack.c.l.b16 %v57
  %v545 = vunpack.c.h.b16 %v57
  %v546 = vunpack.c.l.b16 %v58
  %v547 = vunpack.c.h.b16 %v58
  %v548 = vunpack.c.l.b16 %v59
  %v549 = vunpack.c.l.b16 %v60
  %v550 = vunpack.c.h.b16 %v60
  %v551 = vunpack.c.l.b16 %v61
  %v552 = vunpack.c.h.b16 %v61
  %v553 = vunpack.c.l.b16 %v62
  %v554 = vunpack.c.l.b16 %v63
  %v555 = vunpack.c.h.b16 %v63
  %v556 = vunpack.c.l.b16 %v64
  %v557 = vunpack.c.h.b16 %v64
  %v558 = vunpack.c.l.b16 %v65
  %v559 = vunpack.c.l.b16 %v66
  %v560 = vunpack.c.h.b16 %v66
  %v561 = vunpack.c.l.b16 %v67
  %v562 = vunpack.c.h.b16 %v67
  %v563 = vunpack.c.l.b16 %v68
  %v564 = vunpack.c.l.b16 %v69
  %v565 = vunpack.c.h.b16 %v69
  %v566 = vunpack.c.l.b16 %v70
  %v567 = vunpack.c.h.b16 %v70
  %v568 = vunpack.c.l.b16 %v71
  %v569 = vunpack.c.l.b16 %v72
  %v570 = vunpack.c.h.b16 %v72
  %v571 = vunpack.c.l.b16 %v73
  %v572 = vunpack.c.h.b16 %v73
  %v573 = vunpack.c.l.b16 %v74
  %v574 = vunpack.c.l.b16 %v75
  %v575 = vunpack.c.h.b16 %v75
  %v576 = vunpack.c.l.b16 %v76
  %v577 = vunpack.c.h.b16 %v76
  %v578 = vunpack.c.l.b16 %v77
  %v579 = vunpack.c.l.b16 %v78
  %v580 = vunpack.c.h.b16 %v78
  %v581 = vunpack.c.l.b16 %v79
  %v582 = vunpack.c.h.b16 %v79
  %v583 = vunpack.c.l.b16 %v80
  %v584 = vunpack.c.l.b16 %v81
  %v585 = vunpack.c.h.b16 %v81
  %v586 = vunpack.c.l.b16 %v82
  %v587 = vunpack.c.h.b16 %v82
  %v588 = vunpack.c.l.b16 %v83
  %v589 = vunpack.c.l.b16 %v84
  %v590 = vunpack.c.h.b16 %v84
  %v591 = vunpack.c.l.b16 %v85
  %v592 = vunpack.c.h.b16 %v85
  %v593 = vunpack.c.l.b16 %v86
  %v594 = vunpack.c.l.b16 %v87
  %v595 = vunpack.c.h.b16 %v87
  %v596 = vunpack.c.l.b16 %v88
  %v597 = vunpack.c.h.b16 %v88
  %v598 = vunpack.c.l.b16 %v89
  %v599 = vunpack.c.l.b16 %v90
  %v600 = vunpack.c.h.b16 %v90
  %v601 = vunpack.c.l.b16 %v91
  %v602 = vunpack.c.h.b16 %v91
  %v603 = vunpack.c.l.b16 %v92
  %v604 = vunpack.c.l.b16 %v93
  %v605 = vunpack.c.h.b16 %v93
  %v606 = vunpack.c.l.b16 %v94
  %v607 = vunpack.c.h.b16 %v94
  %v608 = vunpack.c.l.b16 %v95
  %v609 = vunpack.c.l.b16 %v96
  %v610 = vunpack.c.h.b16 %v96
  %v611 = vunpack.c.l.b16 %v97
  %v612 = vunpack.c.h.b16 %v97
  %v613 = vunpack.c.l.b16 %v98
  %v614 = vunpack.c.l.b16 %v99
  %v615 = vunpack.c.h.b16 %v99
  %v616 = vunpack.c.l.b16 %v100
  %v617 = vunpack.c.h.b16 %v100
  %v618 = vunpack.c.l.b16 %v101
  %v619 = vunpack.c.l.b16 %v102
  %v620 = vunpack.c.h.b16 %v102
  %v621 = vunpack.c.l.b16 %v103
  %v622 = vunpack.c.h.b16 %v103
  %v623 = vunpack.c.l.b16 %v104
  %v624 = vunpack.c.l.b16 %v105
  %v625 = vunpack.c.h.b16 %v105
  %v626 = vunpack.c.l.b16 %v106
  %v627 = vunpack.c.h.b16 %v106
  %v628 = vunpack.c.l.b16 %v107
  %v629 = vunpack.c.l.b16 %v108
  %v630 = vunpack.c.h.b16 %v108
  %v631 = vunpack.c.l.b16 %v109
  %v632 = vunpack.c.h.b16 %v109
  %v633 = vunpack.c.l.b16 %v110
  %v634 = vunpack.c.l.b16 %v111
  %v635 = vunpack.c.h.b16 %v111
  %v636 = vunpack.c.l.b16 %v112
  %v637 = vunpack.c.h.b16 %v112
  %v638 = vunpack.c.l.b16 %v113
  %v639 = vunpack.c.l.b16 %v114
  %v640 = vunpack.c.h.b16 %v114
  %v641 = vunpack.c.l.b16 %v115
  %v642 = vunpack.c.h.b16 %v115
  %v643 = vunpack.c.l.b16 %v116
  %v644 = vunpack.c.l.b16 %v117
  %v645 = vunpack.c.h.b16 %v117
  %v646 = vunpack.c.l.b16 %v118
  %v647 = vunpack.c.h.b16 %v118
  %v648 = vunpack.c.l.b16 %v119
  %v649 = vunpack.c.l.b16 %v120
  %v650 = vunpack.c.h.b16 %v120
  %v651 = vunpack.c.l.b16 %v121
  %v652 = vunpack.c.h.b16 %v121
  %v653 = vunpack.c.l.b16 %v122
  %v654 = vunpack.c.l.b16 %v123
  %v655 = vunpack.c.h.b16 %v123
  %v656 = vunpack.c.l.b16 %v124
  %v657 = vunpack.c.h.b16 %v124
  %v658 = vunpack.c.l.b16 %v125
  %v659 = vunpack.c.l.b16 %v126
  %v660 = vunpack.c.h.b16 %v126
  %v661 = vunpack.c.l.b16 %v127
  %v662 = vunpack.c.h.b16 %v127
  %v663 = vunpack.c.l.b16 %v128
  %v664 = vunpack.c.l.b16 %v129
  %v665 = vunpack.c.h.b16 %v129
  %v666 = vunpack.c.l.b16 %v130
  %v667 = vunpack.c.h.b16 %v130
  %v668 = vunpack.c.l.b16 %v131
  %v669 = vunpack.c.l.b16 %v132
  %v670 = vunpack.c.h.b16 %v132
  %v671 = vunpack.c.l.b16 %v133
  %v672 = vunpack.c.h.b16 %v133
  %v673 = vunpack.c.l.b16 %v134
  %v674 = vunpack.c.l.b16 %v135
  %v675 = vunpack.c.h.b16 %v135
  %v676 = vunpack.c.l.b16 %v136
  %v677 = vunpack.c.h.b16 %v136
  %v678 = vunpack.c.l.b16 %v137
  %v679 = vunpack.c.l.b16 %v138
  %v680 = vunpack.c.h.b16 %v138
  %v681 = vunpack.c.l.b16 %v139
  %v682 = vunpack.c.h.b16 %v139
  %v683 = vunpack.c.l.b16 %v140
  %v684 = vunpack.c.l.b16 %v141
  %v685 = vunpack.c.h.b16 %v141
  %v686 = vunpack.c.l.b16 %v142
  %v687 = vunpack.c.h.b16 %v142
  %v688 = vunpack.c.l.b16 %v143
  %v689 = vunpack.c.l.b16 %v144
  %v690 = vunpack.c.h.b16 %v144
  %v691 = vunpack.c.l.b16 %v145
  %v692 = vunpack.c.h.b16 %v145
  %v693 = vunpack.c.l.b16 %v146
  %v694 = vunpack.c.l.b16 %v147
  %v695 = vunpack.c.h.b16 %v147
  %v696 = vunpack.c.l.b16 %v148
  %v697 = vunpack.c.h.b16 %v148
  %v698 = vunpack.c.l.b16 %v149
  %v699 = vunpack.c.l.b16 %v150
  %v700 = vunpack.c.h.b16 %v150
  %v701 = vunpack.c.l.b16 %v151
  %v702 = vunpack.c.h.b16 %v151
  %v703 = vunpack.c.l.b16 %v152
  %v704 = vunpack.c.l.b16 %v153
  %v705 = vunpack.c.h.b16 %v153
  %v706 = vunpack.c.l.b16 %v154
  %v707 = vunpack.c.h.b16 %v154
  %v708 = vunpack.c.l.b16 %v155
  %v709 = vunpack.c.l.b16 %v156
  %v710 = vunpack.c.h.b16 %v156
  %v711 = vunpack.c.l.b16 %v157
  %v712 = vunpack.c.h.b16 %v157
  %v713 = vunpack.c.l.b16 %v158
  %v714 = vunpack.c.l.b16 %v159
  %v715 = vunpack.c.h.b16 %v159
  %v716 = vunpack.c.l.b16 %v160
  %v717 = vunpack.c.h.b16 %v160
  %v718 = vunpack.c.l.b16 %v161
  %v719 = vunpack.c.l.b16 %v162
  %v720 = vunpack.c.h.b16 %v162
  %v721 = vunpack.c.l.b16 %v163
  %v722 = vunpack.c.h.b16 %v163
  %v723 = vunpack.c.l.b16 %v164
  %v724 = vunpack.c.l.b16 %v165
  %v725 = vunpack.c.h.b16 %v165
  %v726 = vunpack.c.l.b16 %v166
  %v727 = vunpack.c.h.b16 %v166
  %v728 = vunpack.c.l.b16 %v167
  %v729 = vunpack.c.l.b16 %v168
  %v730 = vunpack.c.h.b16 %v168
  %v731 = vunpack.c.l.b16 %v169
  %v732 = vunpack.c.h.b16 %v169
  %v733 = vunpack.c.l.b16 %v170
  %v734 = vunpack.c.l.b16 %v171
  %v735 = vunpack.c.h.b16 %v171
  %v736 = vunpack.c.l.b16 %v172
  %v737 = vunpack.c.h.b16 %v172
  %v738 = vunpack.c.l.b16 %v173
  %v739 = vunpack.c.l.b16 %v174
  %v740 = vunpack.c.h.b16 %v174
  %v741 = vunpack.c.l.b16 %v175
  %v742 = vunpack.c.h.b16 %v175
  %v743 = vunpack.c.l.b16 %v176
  %v744 = vunpack.c.l.b16 %v177
  %v745 = vunpack.c.h.b16 %v177
  %v746 = vunpack.c.l.b16 %v178
  %v747 = vunpack.c.h.b16 %v178
  %v748 = vunpack.c.l.b16 %v179
  %v749 = vunpack.c.l.b16 %v180
  %v750 = vunpack.c.h.b16 %v180
  %v751 = vunpack.c.l.b16 %v181
  %v752 = vunpack.c.h.b16 %v181
  %v753 = vunpack.c.l.b16 %v182
  %v754 = vunpack.c.l.b16 %v183
  %v755 = vunpack.c.h.b16 %v183
  %v756 = vunpack.c.l.b16 %v184
  %v757 = vunpack.c.h.b16 %v184
  %v758 = vunpack.c.l.b16 %v185
  %v759 = vunpack.c.l.b16 %v186
  %v760 = vunpack.c.h.b16 %v186
  %v761 = vunpack.c.l.b16 %v187
  %v762 = vunpack.c.h.b16 %v187
  %v763 = vunpack.c.l.b16 %v188
  %v764 = vunpack.c.l.b16 %v189
  %v765 = vunpack.c.h.b16 %v189
  %v766 = vunpack.c.l.b16 %v190
  %v767 = vunpack.c.h.b16 %v190
  %v768 = vunpack.c.l.b16 %v191
  %v769 = vunpack.c.l.b16 %v192
  %v770 = vunpack.c.h.b16 %v192
  %v771 = vunpack.c.l.b16 %v193
  %v772 = vunpack.c.h.b16 %v193
  %v773 = vunpack.c.l.b16 %v194
  %v774 = vunpack.c.l.b16 %v195
  %v775 = vunpack.c.h.b16 %v195
  %v776 = vunpack.c.l.b16 %v196
  %v777 = vunpack.c.h.b16 %v196
  %v778 = vunpack.c.l.b16 %v197
  %v779 = vunpack.c.l.b16 %v198
  %v780 = vunpack.c.h.b16 %v198
  %v781 = vunpack.c.l.b16 %v199
  %v782 = vunpack.c.h.b16 %v199
  %v783 = vunpack.c.l.b16 %v200
  %v784 = vunpack.c.l.b16 %v201
  %v785 = vunpack.c.h.b16 %v201
  %v786 = vunpack.c.l.b16 %v202
  %v787 = vunpack.c.h.b16 %v202
  %v788 = vunpack.c.l.b16 %v203
  %v789 = vunpack.c.l.b16 %v204
  %v790 = vunpack.c.h.b16 %v204
  %v791 = vunpack.c.l.b16 %v205
  %v792 = vunpack.c.h.b16 %v205
  %v793 = vunpack.c.l.b16 %v206
  %v794 = vunpack.c.l.b16 %v207
  %v795 = vunpack.c.h.b16 %v207
  %v796 = vunpack.c.l.b16 %v208
  %v797 = vunpack.c.h.b16 %v208
  %v798 = vunpack.c.l.b16 %v209
  %v799 = vunpack.c.l.b16 %v210
  %v800 = vunpack.c.h.b16 %v210
  %v801 = vunpack.c.l.b16 %v211
  %v802 = vunpack.c.h.b16 %v211
  %v803 = vunpack.c.l.b16 %v212
  %v804 = vpack.c.b16 %v489, %v484
  %v805 = vpack.c.b16 %v490, %v485
  %v806 = vpack.c.b16 %v491, %v486
  %v807 = vpack.c.b16 %v492, %v487
  %v808 = vpack.c.b16 %v493, %v488
  %v809 = vpack.c.b16 %v499, %v494
  %v810 = vpack.c.b16 %v500, %v495
  %v811 = vpack.c.b16 %v501, %v496
  %v812 = vpack.c.b16 %v502, %v497
  %v813 = vpack.c.b16 %v503, %v498
  %v814 = vpack.c.b16 %v509, %v504
  %v815 = vpack.c.b16 %v510, %v505
  %v816 = vpack.c.b16 %v511, %v506
  %v817 = vpack.c.b16 %v512, %v507
  %v818 = vpack.c.b16 %v513, %v508
  %v819 = vpack.c.b16 %v519, %v514
  %v820 = vpack.c.b16 %v520, %v515
  %v821 = vpack.c.b16 %v521, %v516
  %v822 = vpack.c.b16 %v522, %v517
  %v823 = vpack.c.b16 %v523, %v518
  %v824 = vpack.c.b16 %v529, %v524
  %v825 = vpack.c.b16 %v530, %v525
  %v826 = vpack.c.b16 %v531, %v526
  %v827 = vpack.c.b16 %v532, %v527
  %v828 = vpack.c.b16 %v533, %v528
  %v829 = vpack.c.b16 %v539, %v534
  %v830 = vpack.c.b16 %v540, %v535
  %v831 = vpack.c.b16 %v541, %v536
  %v832 = vpack.c.b16 %v542, %v537
  %v833 = vpack.c.b16 %v543, %v538
  %v834 = vpack.c.b16 %v549, %v544
  %v835 = vpack.c.b16 %v550, %v545
  %v836 = vpack.c.b16 %v551, %v546
  %v837 = vpack.c.b16 %v552, %v547
  %v838 = vpack.c.b16 %v553, %v548
  %v839 = vpack.c.b16 %v559, %v554
  %v840 = vpack.c.b16 %v560, %v555
  %v841 = vpack.c.b16 %v561, %v556
  %v842 = vpack.c.b16 %v562, %v557
  %v843 = vpack.c.b16 %v563, %v558
  %v844 = vpack.c.b16 %v569, %v564
  %v845 = vpack.c.b16 %v570, %v565
  %v846 = vpack.c.b16 %v571, %v566
  %v847 = vpack.c.b16 %v572, %v567
  %v848 = vpack.c.b16 %v573, %v568
  %v849 = vpack.c.b16 %v579, %v574
  %v850 = vpack.c.b16 %v580, %v575
  %v851 = vpack.c.b16 %v581, %v576
  %v852 = vpack.c.b16 %v582, %v577
  %v853 = vpack.c.b16 %v583, %v578
  %v854 = vpack.c.b16 %v589, %v584
  %v855 = vpack.c.b16 %v590, %v585
  %v856 = vpack.c.b16 %v591, %v586
  %v857 = vpack.c.b16 %v592, %v587
  %v858 = vpack.c.b16 %v593, %v588
  %v859 = vpack.c.b16 %v599, %v594
  %v860 = vpack.c.b16 %v600, %v595
  %v861 = vpack.c.b16 %v601, %v596
  %v862 = vpack.c.b16 %v602, %v597
  %v863 = vpack.c.b16 %v603, %v598
  %v864 = vpack.c.b16 %v609, %v604
  %v865 = vpack.c.b16 %v610, %v605
  %v866 = vpack.c.b16 %v611, %v606
  %v867 = vpack.c.b16 %v612, %v607
  %v868 = vpack.c.b16 %v613, %v608
  %v869 = vpack.c.b16 %v619, %v614
  %v870 = vpack.c.b16 %v620, %v615
  %v871 = vpack.c.b16 %v621, %v616
  %v872 = vpack.c.b16 %v622, %v617
  %v873 = vpack.c.b16 %v623, %v618
  %v874 = vpack.c.b16 %v629, %v624
  %v875 = vpack.c.b16 %v630, %v625
  %v876 = vpack.c.b16 %v631, %v626
  %v877 = vpack.c.b16 %v632, %v627
  %v878 = vpack.c.b16 %v633, %v628
  %v879 = vpack.c.b16 %v639, %v634
  %v880 = vpack.c.b16 %v640, %v635
  %v881 = vpack.c.b16 %v641, %v636
  %v882 = vpack.c.b16 %v642, %v637
  %v883 = vpack.c.b16 %v643, %v638
  %v884 = vpack.c.b16 %v649, %v644
  %v885 = vpack.c.b16 %v650, %v645
  %v886 = vpack.c.b16 %v651, %v646
  %v887 = vpack.c.b16 %v652, %v647
  %v888 = vpack.c.b16 %v653, %v648
  %v889 = vpack.c.b16 %v659, %v654
  %v890 = vpack.c.b16 %v660, %v655
  %v891 = vpack.c.b16 %v661, %v656
  %v892 = vpack.c.b16 %v662, %v657
  %v893 = vpack.c.b16 %v663, %v658
  %v894 = vpack.c.b16 %v669, %v664
  %v895 = vpack.c.b16 %v670, %v665
  %v896 = vpack.c.b16 %v671, %v666
  %v897 = vpack.c.b16 %v672, %v667
  %v898 = vpack.c.b16 %v673, %v668
  %v899 = vpack.c.b16 %v679, %v674
  %v900 = vpack.c.b16 %v680, %v675
  %v901 = vpack.c.b16 %v681, %v676
  %v902 = vpack.c.b16 %v682, %v677
  %v903 = vpack.c.b16 %v683, %v678
  %v904 = vpack.c.b16 %v689, %v684
  %v905 = vpack.c.b16 %v690, %v685
  %v906 = vpack.c.b16 %v691, %v686
  %v907 = vpack.c.b16 %v692, %v687
  %v908 = vpack.c.b16 %v693, %v688
  %v909 = vpack.c.b16 %v699, %v694
  %v910 = vpack.c.b16 %v700, %v695
  %v911 = vpack.c.b16 %v701, %v696
  %v912 = vpack.c.b16 %v702, %v697
  %v913 = vpack.c.b16 %v703, %v698
  %v914 = vpack.c.b16 %v709, %v704
  %v915 = vpack.c.b16 %v710, %v705
  %v916 = vpack.c.b16 %v711, %v706
  %v917 = vpack.c.b16 %v712, %v707
  %v918 = vpack.c.b16 %v713, %v708
  %v919 = vpack.c.b16 %v719, %v714
  %v920 = vpack.c.b16 %v720, %v715
  %v921 = vpack.c.b16 %v721, %v716
  %v922 = vpack.c.b16 %v722, %v717
  %v923 = vpack.c.b16 %v723, %v718
  %v924 = vpack.c.b16 %v729, %v724
  %v925 = vpack.c.b16 %v730, %v725
  %v926 = vpack.c.b16 %v731, %v726
  %v927 = vpack.c.b16 %v732, %v727
  %v928 = vpack.c.b16 %v733, %v728
  %v929 = vpack.c.b16 %v739, %v734
  %v930 = vpack.c.b16 %v740, %v735
  %v931 = vpack.c.b16 %v741, %v736
  %v932 = vpack.c.b16 %v742, %v737
  %v933 = vpack.c.b16 %v743, %v738
  %v934 = vpack.c.b16 %v749, %v744
  %v935 = vpack.c.b16 %v750, %v745
  %v936 = vpack.c.b16 %v751, %v746
  %v937 = vpack.c.b16 %v752, %v747
  %v938 = vpack.c.b16 %v753, %v748
  %v939 = vpack.c.b16 %v759, %v754
  %v940 = vpack.c.b16 %v760, %v755
  %v941 = vpack.c.b16 %v761, %v756
  %v942 = vpack.c.b16 %v762, %v757
  %v943 = vpack.c.b16 %v763, %v758
  %v944 = vpack.c.b16 %v769, %v764
  %v945 = vpack.c.b16 %v770, %v765
  %v946 = vpack.c.b16 %v771, %v766
  %v947 = vpack.c.b16 %v772, %v767
  %v948 = vpack.c.b16 %v773, %v768
  %v949 = vpack.c.b16 %v779, %v774
  %v950 = vpack.c.b16 %v780, %v775
  %v951 = vpack.c.b16 %v781, %v776
  %v952 = vpack.c.b16 %v782, %v777
  %v953 = vpack.c.b16 %v783, %v778
  %v954 = vpack.c.b16 %v789, %v784
  %v955 = vpack.c.b16 %v790, %v785
  %v956 = vpack.c.b16 %v791, %v786
  %v957 = vpack.c.b16 %v792, %v787
  %v958 = vpack.c.b16 %v793, %v788
  %v959 = vpack.c.b16 %v799, %v794
  %v960 = vpack.c.b16 %v800, %v795
  %v961 = vpack.c.b16 %v801, %v796
  %v962 = vpack.c.b16 %v802, %v797
  %v963 = vpack.c.b16 %v803, %v798
  %v1164 = vunpack.c.l.b16 %v213
  %v1165 = vunpack.c.l.b16 %v214
  %v1166 = vunpack.c.l.b16 %v215
  %v1167 = vunpack.c.l.b16 %v216
  %v1168 = vunpack.c.l.b16 %v217
  %v1169 = vunpack.c.l.b16 %v218
  %v1170 = vunpack.c.l.b16 %v219
  %v1171 = vunpack.c.l.b16 %v220
  %v1172 = vunpack.c.l.b16 %v221
  %v1173 = vunpack.c.l.b16 %v222
  %v1174 = vunpack.c.l.b16 %v223
  %v1175 = vunpack.c.l.b16 %v224
  %v1176 = vunpack.c.l.b16 %v225
  %v1177 = vunpack.c.l.b16 %v226
  %v1178 = vunpack.c.l.b16 %v227
  %v1179 = vunpack.c.l.b16 %v228
  %v1180 = vunpack.c.l.b16 %v229
  %v1181 = vunpack.c.l.b16 %v230
  %v1182 = vunpack.c.l.b16 %v231
  %v1183 = vunpack.c.l.b16 %v232
  %v1184 = vunpack.c.l.b16 %v233
  %v1185 = vunpack.c.l.b16 %v234
  %v1186 = vunpack.c.l.b16 %v235
  %v1187 = vunpack.c.l.b16 %v236
  %v1188 = vunpack.c.l.b16 %v237
  %v1189 = vunpack.c.l.b16 %v238
  %v1190 = vunpack.c.l.b16 %v239
  %v1191 = vunpack.c.l.b16 %v240
  %v1192 = vunpack.c.l.b16 %v241
  %v1193 = vunpack.c.l.b16 %v242
  %v1194 = vunpack.c.l.b16 %v243
  %v1195 = vunpack.c.l.b16 %v244
  %v1196 = vunpack.c.l.b16 %v245
  %v1197 = vunpack.c.l.b16 %v246
  %v1198 = vunpack.c.l.b16 %v247
  %v1199 = vunpack.c.l.b16 %v248
  %v1200 = vunpack.c.l.b16 %v249
  %v1201 = vunpack.c.l.b16 %v250
  %v1202 = vunpack.c.l.b16 %v251
  %v1203 = vunpack.c.l.b16 %v252
  %v1204 = vunpack.c.l.b16 %v253
  %v1205 = vunpack.c.l.b16 %v254
  %v1206 = vunpack.c.l.b16 %v255
  %v1207 = vunpack.c.l.b16 %v256
  %v1208 = vunpack.c.l.b16 %v257
  %v1209 = vunpack.c.l.b16 %v258
  %v1210 = vunpack.c.l.b16 %v259
  %v1211 = vunpack.c.l.b16 %v260
  %v1212 = vunpack.c.l.b16 %v261
  %v1213 = vunpack.c.l.b16 %v262
  %v1214 = vunpack.c.l.b16 %v263
  %v1215 = vunpack.c.l.b16 %v264
  %v1216 = vunpack.c.l.b16 %v265
  %v1217 = vunpack.c.l.b16 %v266
  %v1218 = vunpack.c.l.b16 %v267
  %v1219 = vunpack.c.l.b16 %v268
  %v1220 = vunpack.c.l.b16 %v269
  %v1221 = vunpack.c.l.b16 %v270
  %v1222 = vunpack.c.l.b16 %v271
  %v1223 = vunpack.c.l.b16 %v272
  %v1224 = vunpack.c.l.b16 %v273
  %v1225 = vunpack.c.l.b16 %v274
  %v1226 = vunpack.c.l.b16 %v275
  %v1227 = vunpack.c.l.b16 %v276
  %v1228 = vunpack.c.l.b16 %v277
  %v1229 = vunpack.c.l.b16 %v278
  %v1230 = vunpack.c.l.b16 %v279
  %v1231 = vunpack.c.l.b16 %v280
  %v1232 = vunpack.c.l.b16 %v281
  %v1233 = vunpack.c.l.b16 %v282
  %v1234 = vunpack.c.l.b16 %v283
  %v1235 = vunpack.c.l.b16 %v284
  %v1236 = vpack.c.b16 %v1165, %v1164
  %v1237 = vpack.c.b16 %v1167, %v1166
  %v1238 = vpack.c.b16 %v1169, %v1168
  %v1239 = vpack.c.b16 %v1171, %v1170
  %v1240 = vpack.c.b16 %v1173, %v1172
  %v1241 = vpack.c.b16 %v1175, %v1174
  %v1242 = vpack.c.b16 %v1177, %v1176
  %v1243 = vpack.c.b16 %v1179, %v1178
  %v1244 = vpack.c.b16 %v1181, %v1180
  %v1245 = vpack.c.b16 %v1183, %v1182
  %v1246 = vpack.c.b16 %v1185, %v1184
  %v1247 = vpack.c.b16 %v1187, %v1186
  %v1248 = vpack.c.b16 %v1189, %v1188
  %v1249 = vpack.c.b16 %v1191, %v1190
  %v1250 = vpack.c.b16 %v1193, %v1192
  %v1251 = vpack.c.b16 %v1195, %v1194
  %v1252 = vpack.c.b16 %v1197, %v1196
  %v1253 = vpack.c.b16 %v1199, %v1198
  %v1254 = vpack.c.b16 %v1201, %v1200
  %v1255 = vpack.c.b16 %v1203, %v1202
  %v1256 = vpack.c.b16 %v1205, %v1204
  %v1257 = vpack.c.b16 %v1207, %v1206
  %v1258 = vpack.c.b16 %v1209, %v1208
  %v1259 = vpack.c.b16 %v1211, %v1210
  %v1260 = vpack.c.b16 %v1213, %v1212
  %v1261 = vpack.c.b16 %v1215, %v1214
  %v1262 = vpack.c.b16 %v1217, %v1216
  %v1263 = vpack.c.b16 %v1219, %v1218
  %v1264 = vpack.c.b16 %v1221, %v1220
  %v1265 = vpack.c.b16 %v1223, %v1222
  %v1266 = vpack.c.b16 %v1225, %v1224
  %v1267 = vpack.c.b16 %v1227, %v1226
  %v1268 = vpack.c.b16 %v1229, %v1228
  %v1269 = vpack.c.b16 %v1231, %v1230
  %v1270 = vpack.c.b16 %v1233, %v1232
  %v1271 = vpack.c.b16 %v1235, %v1234
  %vm1308 = vcmask 523264
  %v1310 = vsel %vm1308, %v808, 0
  %v1313 = vsel %vm1308, %v813, 0
  %v1316 = vsel %vm1308, %v818, 0
  %v1319 = vsel %vm1308, %v823, 0
  %v1322 = vsel %vm1308, %v828, 0
  %v1325 = vsel %vm1308, %v833, 0
  %v1328 = vsel %vm1308, %v838, 0
  %v1331 = vsel %vm1308, %v843, 0
  %v1334 = vsel %vm1308, %v848, 0
  %v1337 = vsel %vm1308, %v853, 0
  %v1340 = vsel %vm1308, %v858, 0
  %v1343 = vsel %vm1308, %v863, 0
  %v1346 = vsel %vm1308, %v868, 0
  %v1349 = vsel %vm1308, %v873, 0
  %v1352 = vsel %vm1308, %v878, 0
  %v1355 = vsel %vm1308, %v883, 0
  %v1358 = vsel %vm1308, %v888, 0
  %v1361 = vsel %vm1308, %v893, 0
  %v1364 = vsel %vm1308, %v898, 0
  %v1367 = vsel %vm1308, %v903, 0
  %v1370 = vsel %vm1308, %v908, 0
  %v1373 = vsel %vm1308, %v913, 0
  %v1376 = vsel %vm1308, %v918, 0
  %v1379 = vsel %vm1308, %v923, 0
  %v1382 = vsel %vm1308, %v928, 0
  %v1385 = vsel %vm1308, %v933, 0
  %v1388 = vsel %vm1308, %v938, 0
  %v1391 = vsel %vm1308, %v943, 0
  %v1394 = vsel %vm1308, %v948, 0
  %v1397 = vsel %vm1308, %v953, 0
  %v1400 = vsel %vm1308, %v958, 0
  %v1403 = vsel %vm1308, %v963, 0
  %1405 = vmatprep.subr.bf16.mxu0 0
  %1406 = vmatpush1.bf16.msra.mxu0 %v1236
  %1407 = vmatprep.subr.bf16.mxu0 0
  %1408 = vmatpush1.bf16.msra.mxu0 %v1237
  %1409 = vmatprep.subr.bf16.mxu0 0
  %1410 = vmatpush1.bf16.msra.mxu0 %v1238
  %1411 = vmatprep.subr.bf16.mxu0 0
  %1412 = vmatpush1.bf16.msra.mxu0 %v1239
  %1413 = vmatprep.subr.bf16.mxu0 0
  %1414 = vmatpush1.bf16.msra.mxu0 %v1240
  %1415 = vmatprep.subr.bf16.mxu0 0
  %1416 = vmatpush1.bf16.msra.mxu0 %v1241
  %1417 = vmatprep.subr.bf16.mxu0 0
  %1418 = vmatpush1.bf16.msra.mxu0 %v1242
  %1419 = vmatprep.subr.bf16.mxu0 0
  %1420 = vmatpush1.bf16.msra.mxu0 %v1243
  %1421 = vmatprep.subr.bf16.mxu0 0
  %1422 = vmatpush1.bf16.msra.mxu0 %v1244
  %1423 = vmatprep.subr.bf16.mxu0 0
  %1424 = vmatpush1.bf16.msra.mxu0 %v1245
  %1425 = vmatprep.subr.bf16.mxu0 0
  %1426 = vmatpush1.bf16.msra.mxu0 %v1246
  %1427 = vmatprep.subr.bf16.mxu0 0
  %1428 = vmatpush1.bf16.msra.mxu0 %v1247
  %1429 = vmatprep.subr.bf16.mxu0 0
  %1430 = vmatpush1.bf16.msra.mxu0 %v1248
  %1431 = vmatprep.subr.bf16.mxu0 0
  %1432 = vmatpush1.bf16.msra.mxu0 %v1249
  %1433 = vmatprep.subr.bf16.mxu0 0
  %1434 = vmatpush1.bf16.msra.mxu0 %v1250
  %1435 = vmatprep.subr.bf16.mxu0 0
  %1436 = vmatpush1.bf16.msra.mxu0 %v1251
  %1437 = vmatprep.mubr.bf16.mxu0 %v805
  %1438 = vmatmul.mubr.bf16.gmra.mrb[0].mxu0 %v804
  %v1439 = vpop.f32.mrb[0].mxu0
  %v1440 = vadd.f32 %v290, %v1439
  %v1441 = vpop.f32.mrb[0].mxu0
  %v1442 = vpop.f32.mrb[0].mxu0
  %v1443 = vadd.f32 %v290, %v1442
  %v1444 = vpop.f32.mrb[0].mxu0
  %1445 = vmatprep.mubr.bf16.mxu0 %v810
  %1446 = vmatmul.mubr.bf16.gmra.mrb[0].mxu0 %v809
  %v1447 = vpop.f32.mrb[0].mxu0
  %v1448 = vadd.f32 %v290, %v1447
  %v1449 = vpop.f32.mrb[0].mxu0
  %v1450 = vpop.f32.mrb[0].mxu0
  %v1451 = vadd.f32 %v290, %v1450
  %v1452 = vpop.f32.mrb[0].mxu0
  %1453 = vmatprep.mubr.bf16.mxu0 %v815
  %1454 = vmatmul.mubr.bf16.gmra.mrb[0].mxu0 %v814
  %v1455 = vpop.f32.mrb[0].mxu0
  %v1456 = vadd.f32 %v290, %v1455
  %v1457 = vpop.f32.mrb[0].mxu0
  %v1458 = vpop.f32.mrb[0].mxu0
  %v1459 = vadd.f32 %v290, %v1458
  %v1460 = vpop.f32.mrb[0].mxu0
  %1461 = vmatprep.mubr.bf16.mxu0 %v820
  %1462 = vmatmul.mubr.bf16.gmra.mrb[0].mxu0 %v819
  %v1463 = vpop.f32.mrb[0].mxu0
  %v1464 = vadd.f32 %v290, %v1463
  %v1465 = vpop.f32.mrb[0].mxu0
  %v1466 = vpop.f32.mrb[0].mxu0
  %v1467 = vadd.f32 %v290, %v1466
  %v1468 = vpop.f32.mrb[0].mxu0
  %1469 = vmatprep.mubr.bf16.mxu0 %v825
  %1470 = vmatmul.mubr.bf16.gmra.mrb[0].mxu0 %v824
  %v1471 = vpop.f32.mrb[0].mxu0
  %v1472 = vadd.f32 %v290, %v1471
  %v1473 = vpop.f32.mrb[0].mxu0
  %v1474 = vpop.f32.mrb[0].mxu0
  %v1475 = vadd.f32 %v290, %v1474
  %v1476 = vpop.f32.mrb[0].mxu0
  %1477 = vmatprep.mubr.bf16.mxu0 %v830
  %1478 = vmatmul.mubr.bf16.gmra.mrb[0].mxu0 %v829
  %v1479 = vpop.f32.mrb[0].mxu0
  %v1480 = vadd.f32 %v290, %v1479
  %v1481 = vpop.f32.mrb[0].mxu0
  %v1482 = vpop.f32.mrb[0].mxu0
  %v1483 = vadd.f32 %v290, %v1482
  %v1484 = vpop.f32.mrb[0].mxu0
  %1485 = vmatprep.mubr.bf16.mxu0 %v835
  %1486 = vmatmul.mubr.bf16.gmra.mrb[0].mxu0 %v834
  %v1487 = vpop.f32.mrb[0].mxu0
  %v1488 = vadd.f32 %v290, %v1487
  %v1489 = vpop.f32.mrb[0].mxu0
  %v1490 = vpop.f32.mrb[0].mxu0
  %v1491 = vadd.f32 %v290, %v1490
  %v1492 = vpop.f32.mrb[0].mxu0
  %1493 = vmatprep.mubr.bf16.mxu0 %v840
  %1494 = vmatmul.mubr.bf16.gmra.mrb[0].mxu0 %v839
  %v1495 = vpop.f32.mrb[0].mxu0
  %v1496 = vadd.f32 %v290, %v1495
  %v1497 = vpop.f32.mrb[0].mxu0
  %v1498 = vpop.f32.mrb[0].mxu0
  %v1499 = vadd.f32 %v290, %v1498
  %v1500 = vpop.f32.mrb[0].mxu0
  %1501 = vmatprep.mubr.bf16.mxu0 %v845
  %1502 = vmatmul.mubr.bf16.gmra.mrb[0].mxu0 %v844
  %v1503 = vpop.f32.mrb[0].mxu0
  %v1504 = vadd.f32 %v290, %v1503
  %v1505 = vpop.f32.mrb[0].mxu0
  %v1506 = vpop.f32.mrb[0].mxu0
  %v1507 = vadd.f32 %v290, %v1506
  %v1508 = vpop.f32.mrb[0].mxu0
  %1509 = vmatprep.mubr.bf16.mxu0 %v850
  %1510 = vmatmul.mubr.bf16.gmra.mrb[0].mxu0 %v849
  %v1511 = vpop.f32.mrb[0].mxu0
  %v1512 = vadd.f32 %v290, %v1511
  %v1513 = vpop.f32.mrb[0].mxu0
  %v1514 = vpop.f32.mrb[0].mxu0
  %v1515 = vadd.f32 %v290, %v1514
  %v1516 = vpop.f32.mrb[0].mxu0
  %1517 = vmatprep.mubr.bf16.mxu0 %v855
  %1518 = vmatmul.mubr.bf16.gmra.mrb[0].mxu0 %v854
  %v1519 = vpop.f32.mrb[0].mxu0
  %v1520 = vadd.f32 %v290, %v1519
  %v1521 = vpop.f32.mrb[0].mxu0
  %v1522 = vpop.f32.mrb[0].mxu0
  %v1523 = vadd.f32 %v290, %v1522
  %v1524 = vpop.f32.mrb[0].mxu0
  %1525 = vmatprep.mubr.bf16.mxu0 %v860
  %1526 = vmatmul.mubr.bf16.gmra.mrb[0].mxu0 %v859
  %v1527 = vpop.f32.mrb[0].mxu0
  %v1528 = vadd.f32 %v290, %v1527
  %v1529 = vpop.f32.mrb[0].mxu0
  %v1530 = vpop.f32.mrb[0].mxu0
  %v1531 = vadd.f32 %v290, %v1530
  %v1532 = vpop.f32.mrb[0].mxu0
  %1533 = vmatprep.mubr.bf16.mxu0 %v865
  %1534 = vmatmul.mubr.bf16.gmra.mrb[0].mxu0 %v864
  %v1535 = vpop.f32.mrb[0].mxu0
  %v1536 = vadd.f32 %v290, %v1535
  %v1537 = vpop.f32.mrb[0].mxu0
  %v1538 = vpop.f32.mrb[0].mxu0
  %v1539 = vadd.f32 %v290, %v1538
  %v1540 = vpop.f32.mrb[0].mxu0
  %1541 = vmatprep.mubr.bf16.mxu0 %v870
  %1542 = vmatmul.mubr.bf16.gmra.mrb[0].mxu0 %v869
  %v1543 = vpop.f32.mrb[0].mxu0
  %v1544 = vadd.f32 %v290, %v1543
  %v1545 = vpop.f32.mrb[0].mxu0
  %v1546 = vpop.f32.mrb[0].mxu0
  %v1547 = vadd.f32 %v290, %v1546
  %v1548 = vpop.f32.mrb[0].mxu0
  %1549 = vmatprep.mubr.bf16.mxu0 %v875
  %1550 = vmatmul.mubr.bf16.gmra.mrb[0].mxu0 %v874
  %v1551 = vpop.f32.mrb[0].mxu0
  %v1552 = vadd.f32 %v290, %v1551
  %v1553 = vpop.f32.mrb[0].mxu0
  %v1554 = vpop.f32.mrb[0].mxu0
  %v1555 = vadd.f32 %v290, %v1554
  %v1556 = vpop.f32.mrb[0].mxu0
  %1557 = vmatprep.mubr.bf16.mxu0 %v880
  %1558 = vmatmul.mubr.bf16.gmra.mrb[0].mxu0 %v879
  %v1559 = vpop.f32.mrb[0].mxu0
  %v1560 = vadd.f32 %v290, %v1559
  %v1561 = vpop.f32.mrb[0].mxu0
  %v1562 = vpop.f32.mrb[0].mxu0
  %v1563 = vadd.f32 %v290, %v1562
  %v1564 = vpop.f32.mrb[0].mxu0
  %1565 = vmatprep.mubr.bf16.mxu0 %v885
  %1566 = vmatmul.mubr.bf16.gmra.mrb[0].mxu0 %v884
  %v1567 = vpop.f32.mrb[0].mxu0
  %v1568 = vadd.f32 %v290, %v1567
  %v1569 = vpop.f32.mrb[0].mxu0
  %v1570 = vpop.f32.mrb[0].mxu0
  %v1571 = vadd.f32 %v290, %v1570
  %v1572 = vpop.f32.mrb[0].mxu0
  %1573 = vmatprep.mubr.bf16.mxu0 %v890
  %1574 = vmatmul.mubr.bf16.gmra.mrb[0].mxu0 %v889
  %v1575 = vpop.f32.mrb[0].mxu0
  %v1576 = vadd.f32 %v290, %v1575
  %v1577 = vpop.f32.mrb[0].mxu0
  %v1578 = vpop.f32.mrb[0].mxu0
  %v1579 = vadd.f32 %v290, %v1578
  %v1580 = vpop.f32.mrb[0].mxu0
  %1581 = vmatprep.mubr.bf16.mxu0 %v895
  %1582 = vmatmul.mubr.bf16.gmra.mrb[0].mxu0 %v894
  %v1583 = vpop.f32.mrb[0].mxu0
  %v1584 = vadd.f32 %v290, %v1583
  %v1585 = vpop.f32.mrb[0].mxu0
  %v1586 = vpop.f32.mrb[0].mxu0
  %v1587 = vadd.f32 %v290, %v1586
  %v1588 = vpop.f32.mrb[0].mxu0
  %1589 = vmatprep.mubr.bf16.mxu0 %v900
  %1590 = vmatmul.mubr.bf16.gmra.mrb[0].mxu0 %v899
  %v1591 = vpop.f32.mrb[0].mxu0
  %v1592 = vadd.f32 %v290, %v1591
  %v1593 = vpop.f32.mrb[0].mxu0
  %v1594 = vpop.f32.mrb[0].mxu0
  %v1595 = vadd.f32 %v290, %v1594
  %v1596 = vpop.f32.mrb[0].mxu0
  %1597 = vmatprep.mubr.bf16.mxu0 %v905
  %1598 = vmatmul.mubr.bf16.gmra.mrb[0].mxu0 %v904
  %v1599 = vpop.f32.mrb[0].mxu0
  %v1600 = vadd.f32 %v290, %v1599
  %v1601 = vpop.f32.mrb[0].mxu0
  %v1602 = vpop.f32.mrb[0].mxu0
  %v1603 = vadd.f32 %v290, %v1602
  %v1604 = vpop.f32.mrb[0].mxu0
  %1605 = vmatprep.mubr.bf16.mxu0 %v910
  %1606 = vmatmul.mubr.bf16.gmra.mrb[0].mxu0 %v909
  %v1607 = vpop.f32.mrb[0].mxu0
  %v1608 = vadd.f32 %v290, %v1607
  %v1609 = vpop.f32.mrb[0].mxu0
  %v1610 = vpop.f32.mrb[0].mxu0
  %v1611 = vadd.f32 %v290, %v1610
  %v1612 = vpop.f32.mrb[0].mxu0
  %1613 = vmatprep.mubr.bf16.mxu0 %v915
  %1614 = vmatmul.mubr.bf16.gmra.mrb[0].mxu0 %v914
  %v1615 = vpop.f32.mrb[0].mxu0
  %v1616 = vadd.f32 %v290, %v1615
  %v1617 = vpop.f32.mrb[0].mxu0
  %v1618 = vpop.f32.mrb[0].mxu0
  %v1619 = vadd.f32 %v290, %v1618
  %v1620 = vpop.f32.mrb[0].mxu0
  %1621 = vmatprep.mubr.bf16.mxu0 %v920
  %1622 = vmatmul.mubr.bf16.gmra.mrb[0].mxu0 %v919
  %v1623 = vpop.f32.mrb[0].mxu0
  %v1624 = vadd.f32 %v290, %v1623
  %v1625 = vpop.f32.mrb[0].mxu0
  %v1626 = vpop.f32.mrb[0].mxu0
  %v1627 = vadd.f32 %v290, %v1626
  %v1628 = vpop.f32.mrb[0].mxu0
  %1629 = vmatprep.mubr.bf16.mxu0 %v925
  %1630 = vmatmul.mubr.bf16.gmra.mrb[0].mxu0 %v924
  %v1631 = vpop.f32.mrb[0].mxu0
  %v1632 = vadd.f32 %v290, %v1631
  %v1633 = vpop.f32.mrb[0].mxu0
  %v1634 = vpop.f32.mrb[0].mxu0
  %v1635 = vadd.f32 %v290, %v1634
  %v1636 = vpop.f32.mrb[0].mxu0
  %1637 = vmatprep.mubr.bf16.mxu0 %v930
  %1638 = vmatmul.mubr.bf16.gmra.mrb[0].mxu0 %v929
  %v1639 = vpop.f32.mrb[0].mxu0
  %v1640 = vadd.f32 %v290, %v1639
  %v1641 = vpop.f32.mrb[0].mxu0
  %v1642 = vpop.f32.mrb[0].mxu0
  %v1643 = vadd.f32 %v290, %v1642
  %v1644 = vpop.f32.mrb[0].mxu0
  %1645 = vmatprep.mubr.bf16.mxu0 %v935
  %1646 = vmatmul.mubr.bf16.gmra.mrb[0].mxu0 %v934
  %v1647 = vpop.f32.mrb[0].mxu0
  %v1648 = vadd.f32 %v290, %v1647
  %v1649 = vpop.f32.mrb[0].mxu0
  %v1650 = vpop.f32.mrb[0].mxu0
  %v1651 = vadd.f32 %v290, %v1650
  %v1652 = vpop.f32.mrb[0].mxu0
  %1653 = vmatprep.mubr.bf16.mxu0 %v940
  %1654 = vmatmul.mubr.bf16.gmra.mrb[0].mxu0 %v939
  %v1655 = vpop.f32.mrb[0].mxu0
  %v1656 = vadd.f32 %v290, %v1655
  %v1657 = vpop.f32.mrb[0].mxu0
  %v1658 = vpop.f32.mrb[0].mxu0
  %v1659 = vadd.f32 %v290, %v1658
  %v1660 = vpop.f32.mrb[0].mxu0
  %1661 = vmatprep.mubr.bf16.mxu0 %v945
  %1662 = vmatmul.mubr.bf16.gmra.mrb[0].mxu0 %v944
  %v1663 = vpop.f32.mrb[0].mxu0
  %v1664 = vadd.f32 %v290, %v1663
  %v1665 = vpop.f32.mrb[0].mxu0
  %v1666 = vpop.f32.mrb[0].mxu0
  %v1667 = vadd.f32 %v290, %v1666
  %v1668 = vpop.f32.mrb[0].mxu0
  %1669 = vmatprep.mubr.bf16.mxu0 %v950
  %1670 = vmatmul.mubr.bf16.gmra.mrb[0].mxu0 %v949
  %v1671 = vpop.f32.mrb[0].mxu0
  %v1672 = vadd.f32 %v290, %v1671
  %v1673 = vpop.f32.mrb[0].mxu0
  %v1674 = vpop.f32.mrb[0].mxu0
  %v1675 = vadd.f32 %v290, %v1674
  %v1676 = vpop.f32.mrb[0].mxu0
  %1677 = vmatprep.mubr.bf16.mxu0 %v955
  %1678 = vmatmul.mubr.bf16.gmra.mrb[0].mxu0 %v954
  %v1679 = vpop.f32.mrb[0].mxu0
  %v1680 = vadd.f32 %v290, %v1679
  %v1681 = vpop.f32.mrb[0].mxu0
  %v1682 = vpop.f32.mrb[0].mxu0
  %v1683 = vadd.f32 %v290, %v1682
  %v1684 = vpop.f32.mrb[0].mxu0
  %1685 = vmatprep.mubr.bf16.mxu0 %v960
  %1686 = vmatmul.mubr.bf16.gmra.mrb[0].mxu0 %v959
  %v1687 = vpop.f32.mrb[0].mxu0
  %v1688 = vadd.f32 %v290, %v1687
  %v1689 = vpop.f32.mrb[0].mxu0
  %v1690 = vpop.f32.mrb[0].mxu0
  %v1691 = vadd.f32 %v290, %v1690
  %v1692 = vpop.f32.mrb[0].mxu0
  %1693 = vdwg.mxu0
  %1694 = vmatprep.subr.bf16.mxu0 0
  %1695 = vmatpush1.bf16.msra.mxu0 %v1252
  %1696 = vmatprep.subr.bf16.mxu0 0
  %1697 = vmatpush1.bf16.msra.mxu0 %v1253
  %1698 = vmatprep.subr.bf16.mxu0 0
  %1699 = vmatpush1.bf16.msra.mxu0 %v1254
  %1700 = vmatprep.subr.bf16.mxu0 0
  %1701 = vmatpush1.bf16.msra.mxu0 %v1255
  %1702 = vmatprep.subr.bf16.mxu0 0
  %1703 = vmatpush1.bf16.msra.mxu0 %v1256
  %1704 = vmatprep.subr.bf16.mxu0 0
  %1705 = vmatpush1.bf16.msra.mxu0 %v1257
  %1706 = vmatprep.subr.bf16.mxu0 0
  %1707 = vmatpush1.bf16.msra.mxu0 %v1258
  %1708 = vmatprep.subr.bf16.mxu0 0
  %1709 = vmatpush1.bf16.msra.mxu0 %v1259
  %1710 = vmatprep.subr.bf16.mxu0 0
  %1711 = vmatpush1.bf16.msra.mxu0 %v1260
  %1712 = vmatprep.subr.bf16.mxu0 0
  %1713 = vmatpush1.bf16.msra.mxu0 %v1261
  %1714 = vmatprep.subr.bf16.mxu0 0
  %1715 = vmatpush1.bf16.msra.mxu0 %v1262
  %1716 = vmatprep.subr.bf16.mxu0 0
  %1717 = vmatpush1.bf16.msra.mxu0 %v1263
  %1718 = vmatprep.subr.bf16.mxu0 0
  %1719 = vmatpush1.bf16.msra.mxu0 %v1264
  %1720 = vmatprep.subr.bf16.mxu0 0
  %1721 = vmatpush1.bf16.msra.mxu0 %v1265
  %1722 = vmatprep.subr.bf16.mxu0 0
  %1723 = vmatpush1.bf16.msra.mxu0 %v1266
  %1724 = vmatprep.subr.bf16.mxu0 0
  %1725 = vmatpush1.bf16.msra.mxu0 %v1267
  %1726 = vmatprep.mubr.bf16.mxu0 %v807
  %1727 = vmatmul.mubr.bf16.gmra.mrb[0].mxu0 %v806
  %v1728 = vpop.f32.mrb[0].mxu0
  %v1729 = vadd.f32 %v1440, %v1728
  %v1730 = vpop.f32.mrb[0].mxu0
  %v1731 = vpop.f32.mrb[0].mxu0
  %v1732 = vadd.f32 %v1443, %v1731
  %v1733 = vpop.f32.mrb[0].mxu0
  %1734 = vmatprep.mubr.bf16.mxu0 %v812
  %1735 = vmatmul.mubr.bf16.gmra.mrb[0].mxu0 %v811
  %v1736 = vpop.f32.mrb[0].mxu0
  %v1737 = vadd.f32 %v1448, %v1736
  %v1738 = vpop.f32.mrb[0].mxu0
  %v1739 = vpop.f32.mrb[0].mxu0
  %v1740 = vadd.f32 %v1451, %v1739
  %v1741 = vpop.f32.mrb[0].mxu0
  %1742 = vmatprep.mubr.bf16.mxu0 %v817
  %1743 = vmatmul.mubr.bf16.gmra.mrb[0].mxu0 %v816
  %v1744 = vpop.f32.mrb[0].mxu0
  %v1745 = vadd.f32 %v1456, %v1744
  %v1746 = vpop.f32.mrb[0].mxu0
  %v1747 = vpop.f32.mrb[0].mxu0
  %v1748 = vadd.f32 %v1459, %v1747
  %v1749 = vpop.f32.mrb[0].mxu0
  %1750 = vmatprep.mubr.bf16.mxu0 %v822
  %1751 = vmatmul.mubr.bf16.gmra.mrb[0].mxu0 %v821
  %v1752 = vpop.f32.mrb[0].mxu0
  %v1753 = vadd.f32 %v1464, %v1752
  %v1754 = vpop.f32.mrb[0].mxu0
  %v1755 = vpop.f32.mrb[0].mxu0
  %v1756 = vadd.f32 %v1467, %v1755
  %v1757 = vpop.f32.mrb[0].mxu0
  %1758 = vmatprep.mubr.bf16.mxu0 %v827
  %1759 = vmatmul.mubr.bf16.gmra.mrb[0].mxu0 %v826
  %v1760 = vpop.f32.mrb[0].mxu0
  %v1761 = vadd.f32 %v1472, %v1760
  %v1762 = vpop.f32.mrb[0].mxu0
  %v1763 = vpop.f32.mrb[0].mxu0
  %v1764 = vadd.f32 %v1475, %v1763
  %v1765 = vpop.f32.mrb[0].mxu0
  %1766 = vmatprep.mubr.bf16.mxu0 %v832
  %1767 = vmatmul.mubr.bf16.gmra.mrb[0].mxu0 %v831
  %v1768 = vpop.f32.mrb[0].mxu0
  %v1769 = vadd.f32 %v1480, %v1768
  %v1770 = vpop.f32.mrb[0].mxu0
  %v1771 = vpop.f32.mrb[0].mxu0
  %v1772 = vadd.f32 %v1483, %v1771
  %v1773 = vpop.f32.mrb[0].mxu0
  %1774 = vmatprep.mubr.bf16.mxu0 %v837
  %1775 = vmatmul.mubr.bf16.gmra.mrb[0].mxu0 %v836
  %v1776 = vpop.f32.mrb[0].mxu0
  %v1777 = vadd.f32 %v1488, %v1776
  %v1778 = vpop.f32.mrb[0].mxu0
  %v1779 = vpop.f32.mrb[0].mxu0
  %v1780 = vadd.f32 %v1491, %v1779
  %v1781 = vpop.f32.mrb[0].mxu0
  %1782 = vmatprep.mubr.bf16.mxu0 %v842
  %1783 = vmatmul.mubr.bf16.gmra.mrb[0].mxu0 %v841
  %v1784 = vpop.f32.mrb[0].mxu0
  %v1785 = vadd.f32 %v1496, %v1784
  %v1786 = vpop.f32.mrb[0].mxu0
  %v1787 = vpop.f32.mrb[0].mxu0
  %v1788 = vadd.f32 %v1499, %v1787
  %v1789 = vpop.f32.mrb[0].mxu0
  %1790 = vmatprep.mubr.bf16.mxu0 %v847
  %1791 = vmatmul.mubr.bf16.gmra.mrb[0].mxu0 %v846
  %v1792 = vpop.f32.mrb[0].mxu0
  %v1793 = vadd.f32 %v1504, %v1792
  %v1794 = vpop.f32.mrb[0].mxu0
  %v1795 = vpop.f32.mrb[0].mxu0
  %v1796 = vadd.f32 %v1507, %v1795
  %v1797 = vpop.f32.mrb[0].mxu0
  %1798 = vmatprep.mubr.bf16.mxu0 %v852
  %1799 = vmatmul.mubr.bf16.gmra.mrb[0].mxu0 %v851
  %v1800 = vpop.f32.mrb[0].mxu0
  %v1801 = vadd.f32 %v1512, %v1800
  %v1802 = vpop.f32.mrb[0].mxu0
  %v1803 = vpop.f32.mrb[0].mxu0
  %v1804 = vadd.f32 %v1515, %v1803
  %v1805 = vpop.f32.mrb[0].mxu0
  %1806 = vmatprep.mubr.bf16.mxu0 %v857
  %1807 = vmatmul.mubr.bf16.gmra.mrb[0].mxu0 %v856
  %v1808 = vpop.f32.mrb[0].mxu0
  %v1809 = vadd.f32 %v1520, %v1808
  %v1810 = vpop.f32.mrb[0].mxu0
  %v1811 = vpop.f32.mrb[0].mxu0
  %v1812 = vadd.f32 %v1523, %v1811
  %v1813 = vpop.f32.mrb[0].mxu0
  %1814 = vmatprep.mubr.bf16.mxu0 %v862
  %1815 = vmatmul.mubr.bf16.gmra.mrb[0].mxu0 %v861
  %v1816 = vpop.f32.mrb[0].mxu0
  %v1817 = vadd.f32 %v1528, %v1816
  %v1818 = vpop.f32.mrb[0].mxu0
  %v1819 = vpop.f32.mrb[0].mxu0
  %v1820 = vadd.f32 %v1531, %v1819
  %v1821 = vpop.f32.mrb[0].mxu0
  %1822 = vmatprep.mubr.bf16.mxu0 %v867
  %1823 = vmatmul.mubr.bf16.gmra.mrb[0].mxu0 %v866
  %v1824 = vpop.f32.mrb[0].mxu0
  %v1825 = vadd.f32 %v1536, %v1824
  %v1826 = vpop.f32.mrb[0].mxu0
  %v1827 = vpop.f32.mrb[0].mxu0
  %v1828 = vadd.f32 %v1539, %v1827
  %v1829 = vpop.f32.mrb[0].mxu0
  %1830 = vmatprep.mubr.bf16.mxu0 %v872
  %1831 = vmatmul.mubr.bf16.gmra.mrb[0].mxu0 %v871
  %v1832 = vpop.f32.mrb[0].mxu0
  %v1833 = vadd.f32 %v1544, %v1832
  %v1834 = vpop.f32.mrb[0].mxu0
  %v1835 = vpop.f32.mrb[0].mxu0
  %v1836 = vadd.f32 %v1547, %v1835
  %v1837 = vpop.f32.mrb[0].mxu0
  %1838 = vmatprep.mubr.bf16.mxu0 %v877
  %1839 = vmatmul.mubr.bf16.gmra.mrb[0].mxu0 %v876
  %v1840 = vpop.f32.mrb[0].mxu0
  %v1841 = vadd.f32 %v1552, %v1840
  %v1842 = vpop.f32.mrb[0].mxu0
  %v1843 = vpop.f32.mrb[0].mxu0
  %v1844 = vadd.f32 %v1555, %v1843
  %v1845 = vpop.f32.mrb[0].mxu0
  %1846 = vmatprep.mubr.bf16.mxu0 %v882
  %1847 = vmatmul.mubr.bf16.gmra.mrb[0].mxu0 %v881
  %v1848 = vpop.f32.mrb[0].mxu0
  %v1849 = vadd.f32 %v1560, %v1848
  %v1850 = vpop.f32.mrb[0].mxu0
  %v1851 = vpop.f32.mrb[0].mxu0
  %v1852 = vadd.f32 %v1563, %v1851
  %v1853 = vpop.f32.mrb[0].mxu0
  %1854 = vmatprep.mubr.bf16.mxu0 %v887
  %1855 = vmatmul.mubr.bf16.gmra.mrb[0].mxu0 %v886
  %v1856 = vpop.f32.mrb[0].mxu0
  %v1857 = vadd.f32 %v1568, %v1856
  %v1858 = vpop.f32.mrb[0].mxu0
  %v1859 = vpop.f32.mrb[0].mxu0
  %v1860 = vadd.f32 %v1571, %v1859
  %v1861 = vpop.f32.mrb[0].mxu0
  %1862 = vmatprep.mubr.bf16.mxu0 %v892
  %1863 = vmatmul.mubr.bf16.gmra.mrb[0].mxu0 %v891
  %v1864 = vpop.f32.mrb[0].mxu0
  %v1865 = vadd.f32 %v1576, %v1864
  %v1866 = vpop.f32.mrb[0].mxu0
  %v1867 = vpop.f32.mrb[0].mxu0
  %v1868 = vadd.f32 %v1579, %v1867
  %v1869 = vpop.f32.mrb[0].mxu0
  %1870 = vmatprep.mubr.bf16.mxu0 %v897
  %1871 = vmatmul.mubr.bf16.gmra.mrb[0].mxu0 %v896
  %v1872 = vpop.f32.mrb[0].mxu0
  %v1873 = vadd.f32 %v1584, %v1872
  %v1874 = vpop.f32.mrb[0].mxu0
  %v1875 = vpop.f32.mrb[0].mxu0
  %v1876 = vadd.f32 %v1587, %v1875
  %v1877 = vpop.f32.mrb[0].mxu0
  %1878 = vmatprep.mubr.bf16.mxu0 %v902
  %1879 = vmatmul.mubr.bf16.gmra.mrb[0].mxu0 %v901
  %v1880 = vpop.f32.mrb[0].mxu0
  %v1881 = vadd.f32 %v1592, %v1880
  %v1882 = vpop.f32.mrb[0].mxu0
  %v1883 = vpop.f32.mrb[0].mxu0
  %v1884 = vadd.f32 %v1595, %v1883
  %v1885 = vpop.f32.mrb[0].mxu0
  %1886 = vmatprep.mubr.bf16.mxu0 %v907
  %1887 = vmatmul.mubr.bf16.gmra.mrb[0].mxu0 %v906
  %v1888 = vpop.f32.mrb[0].mxu0
  %v1889 = vadd.f32 %v1600, %v1888
  %v1890 = vpop.f32.mrb[0].mxu0
  %v1891 = vpop.f32.mrb[0].mxu0
  %v1892 = vadd.f32 %v1603, %v1891
  %v1893 = vpop.f32.mrb[0].mxu0
  %1894 = vmatprep.mubr.bf16.mxu0 %v912
  %1895 = vmatmul.mubr.bf16.gmra.mrb[0].mxu0 %v911
  %v1896 = vpop.f32.mrb[0].mxu0
  %v1897 = vadd.f32 %v1608, %v1896
  %v1898 = vpop.f32.mrb[0].mxu0
  %v1899 = vpop.f32.mrb[0].mxu0
  %v1900 = vadd.f32 %v1611, %v1899
  %v1901 = vpop.f32.mrb[0].mxu0
  %1902 = vmatprep.mubr.bf16.mxu0 %v917
  %1903 = vmatmul.mubr.bf16.gmra.mrb[0].mxu0 %v916
  %v1904 = vpop.f32.mrb[0].mxu0
  %v1905 = vadd.f32 %v1616, %v1904
  %v1906 = vpop.f32.mrb[0].mxu0
  %v1907 = vpop.f32.mrb[0].mxu0
  %v1908 = vadd.f32 %v1619, %v1907
  %v1909 = vpop.f32.mrb[0].mxu0
  %1910 = vmatprep.mubr.bf16.mxu0 %v922
  %1911 = vmatmul.mubr.bf16.gmra.mrb[0].mxu0 %v921
  %v1912 = vpop.f32.mrb[0].mxu0
  %v1913 = vadd.f32 %v1624, %v1912
  %v1914 = vpop.f32.mrb[0].mxu0
  %v1915 = vpop.f32.mrb[0].mxu0
  %v1916 = vadd.f32 %v1627, %v1915
  %v1917 = vpop.f32.mrb[0].mxu0
  %1918 = vmatprep.mubr.bf16.mxu0 %v927
  %1919 = vmatmul.mubr.bf16.gmra.mrb[0].mxu0 %v926
  %v1920 = vpop.f32.mrb[0].mxu0
  %v1921 = vadd.f32 %v1632, %v1920
  %v1922 = vpop.f32.mrb[0].mxu0
  %v1923 = vpop.f32.mrb[0].mxu0
  %v1924 = vadd.f32 %v1635, %v1923
  %v1925 = vpop.f32.mrb[0].mxu0
  %1926 = vmatprep.mubr.bf16.mxu0 %v932
  %1927 = vmatmul.mubr.bf16.gmra.mrb[0].mxu0 %v931
  %v1928 = vpop.f32.mrb[0].mxu0
  %v1929 = vadd.f32 %v1640, %v1928
  %v1930 = vpop.f32.mrb[0].mxu0
  %v1931 = vpop.f32.mrb[0].mxu0
  %v1932 = vadd.f32 %v1643, %v1931
  %v1933 = vpop.f32.mrb[0].mxu0
  %1934 = vmatprep.mubr.bf16.mxu0 %v937
  %1935 = vmatmul.mubr.bf16.gmra.mrb[0].mxu0 %v936
  %v1936 = vpop.f32.mrb[0].mxu0
  %v1937 = vadd.f32 %v1648, %v1936
  %v1938 = vpop.f32.mrb[0].mxu0
  %v1939 = vpop.f32.mrb[0].mxu0
  %v1940 = vadd.f32 %v1651, %v1939
  %v1941 = vpop.f32.mrb[0].mxu0
  %1942 = vmatprep.mubr.bf16.mxu0 %v942
  %1943 = vmatmul.mubr.bf16.gmra.mrb[0].mxu0 %v941
  %v1944 = vpop.f32.mrb[0].mxu0
  %v1945 = vadd.f32 %v1656, %v1944
  %v1946 = vpop.f32.mrb[0].mxu0
  %v1947 = vpop.f32.mrb[0].mxu0
  %v1948 = vadd.f32 %v1659, %v1947
  %v1949 = vpop.f32.mrb[0].mxu0
  %1950 = vmatprep.mubr.bf16.mxu0 %v947
  %1951 = vmatmul.mubr.bf16.gmra.mrb[0].mxu0 %v946
  %v1952 = vpop.f32.mrb[0].mxu0
  %v1953 = vadd.f32 %v1664, %v1952
  %v1954 = vpop.f32.mrb[0].mxu0
  %v1955 = vpop.f32.mrb[0].mxu0
  %v1956 = vadd.f32 %v1667, %v1955
  %v1957 = vpop.f32.mrb[0].mxu0
  %1958 = vmatprep.mubr.bf16.mxu0 %v952
  %1959 = vmatmul.mubr.bf16.gmra.mrb[0].mxu0 %v951
  %v1960 = vpop.f32.mrb[0].mxu0
  %v1961 = vadd.f32 %v1672, %v1960
  %v1962 = vpop.f32.mrb[0].mxu0
  %v1963 = vpop.f32.mrb[0].mxu0
  %v1964 = vadd.f32 %v1675, %v1963
  %v1965 = vpop.f32.mrb[0].mxu0
  %1966 = vmatprep.mubr.bf16.mxu0 %v957
  %1967 = vmatmul.mubr.bf16.gmra.mrb[0].mxu0 %v956
  %v1968 = vpop.f32.mrb[0].mxu0
  %v1969 = vadd.f32 %v1680, %v1968
  %v1970 = vpop.f32.mrb[0].mxu0
  %v1971 = vpop.f32.mrb[0].mxu0
  %v1972 = vadd.f32 %v1683, %v1971
  %v1973 = vpop.f32.mrb[0].mxu0
  %1974 = vmatprep.mubr.bf16.mxu0 %v962
  %1975 = vmatmul.mubr.bf16.gmra.mrb[0].mxu0 %v961
  %v1976 = vpop.f32.mrb[0].mxu0
  %v1977 = vadd.f32 %v1688, %v1976
  %v1978 = vpop.f32.mrb[0].mxu0
  %v1979 = vpop.f32.mrb[0].mxu0
  %v1980 = vadd.f32 %v1691, %v1979
  %v1981 = vpop.f32.mrb[0].mxu0
  %1982 = vdwg.mxu0
  %1983 = vmatprep.subr.bf16.mxu0 0
  %1984 = vmatpush1.bf16.msra.mxu0 %v1268
  %1985 = vmatprep.subr.bf16.mxu0 0
  %1986 = vmatpush1.bf16.msra.mxu0 %v1269
  %1987 = vmatprep.subr.bf16.mxu0 0
  %1988 = vmatpush1.bf16.msra.mxu0 %v1270
  %1989 = vmatprep.subr.bf16.mxu0 0
  %1990 = vmatpush1.bf16.msra.mxu0 %v1271
  %1991 = vmatprep.subr.bf16.mxu0 0
  %1992 = vmatpush1.bf16.msra.mxu0 0
  %1993 = vmatprep.subr.bf16.mxu0 0
  %1994 = vmatpush1.bf16.msra.mxu0 0
  %1995 = vmatprep.subr.bf16.mxu0 0
  %1996 = vmatpush1.bf16.msra.mxu0 0
  %1997 = vmatprep.subr.bf16.mxu0 0
  %1998 = vmatpush1.bf16.msra.mxu0 0
  %1999 = vmatprep.subr.bf16.mxu0 0
  %2000 = vmatpush1.bf16.msra.mxu0 0
  %2001 = vmatprep.subr.bf16.mxu0 0
  %2002 = vmatpush1.bf16.msra.mxu0 0
  %2003 = vmatprep.subr.bf16.mxu0 0
  %2004 = vmatpush1.bf16.msra.mxu0 0
  %2005 = vmatprep.subr.bf16.mxu0 0
  %2006 = vmatpush1.bf16.msra.mxu0 0
  %2007 = vmatprep.subr.bf16.mxu0 0
  %2008 = vmatpush1.bf16.msra.mxu0 0
  %2009 = vmatprep.subr.bf16.mxu0 0
  %2010 = vmatpush1.bf16.msra.mxu0 0
  %2011 = vmatprep.subr.bf16.mxu0 0
  %2012 = vmatpush1.bf16.msra.mxu0 0
  %2013 = vmatprep.subr.bf16.mxu0 0
  %2014 = vmatpush1.bf16.msra.mxu0 0
  %2015 = vmatprep.mubr.bf16.mxu0 0
  %2016 = vmatmul.mubr.bf16.gmra.mrb[0].mxu0 %v1310
  %v2017 = vpop.f32.mrb[0].mxu0
  %v2018 = vadd.f32 %v1729, %v2017
  %v2019 = vpop.f32.mrb[0].mxu0
  %v2020 = vpop.f32.mrb[0].mxu0
  %v2021 = vadd.f32 %v1732, %v2020
  %v2022 = vpop.f32.mrb[0].mxu0
  %2023 = vmatprep.mubr.bf16.mxu0 0
  %2024 = vmatmul.mubr.bf16.gmra.mrb[0].mxu0 %v1313
  %v2025 = vpop.f32.mrb[0].mxu0
  %v2026 = vadd.f32 %v1737, %v2025
  %v2027 = vpop.f32.mrb[0].mxu0
  %v2028 = vpop.f32.mrb[0].mxu0
  %v2029 = vadd.f32 %v1740, %v2028
  %v2030 = vpop.f32.mrb[0].mxu0
  %2031 = vmatprep.mubr.bf16.mxu0 0
  %2032 = vmatmul.mubr.bf16.gmra.mrb[0].mxu0 %v1316
  %v2033 = vpop.f32.mrb[0].mxu0
  %v2034 = vadd.f32 %v1745, %v2033
  %v2035 = vpop.f32.mrb[0].mxu0
  %v2036 = vpop.f32.mrb[0].mxu0
  %v2037 = vadd.f32 %v1748, %v2036
  %v2038 = vpop.f32.mrb[0].mxu0
  %2039 = vmatprep.mubr.bf16.mxu0 0
  %2040 = vmatmul.mubr.bf16.gmra.mrb[0].mxu0 %v1319
  %v2041 = vpop.f32.mrb[0].mxu0
  %v2042 = vadd.f32 %v1753, %v2041
  %v2043 = vpop.f32.mrb[0].mxu0
  %v2044 = vpop.f32.mrb[0].mxu0
  %v2045 = vadd.f32 %v1756, %v2044
  %v2046 = vpop.f32.mrb[0].mxu0
  %2047 = vmatprep.mubr.bf16.mxu0 0
  %2048 = vmatmul.mubr.bf16.gmra.mrb[0].mxu0 %v1322
  %v2049 = vpop.f32.mrb[0].mxu0
  %v2050 = vadd.f32 %v1761, %v2049
  %v2051 = vpop.f32.mrb[0].mxu0
  %v2052 = vpop.f32.mrb[0].mxu0
  %v2053 = vadd.f32 %v1764, %v2052
  %v2054 = vpop.f32.mrb[0].mxu0
  %2055 = vmatprep.mubr.bf16.mxu0 0
  %2056 = vmatmul.mubr.bf16.gmra.mrb[0].mxu0 %v1325
  %v2057 = vpop.f32.mrb[0].mxu0
  %v2058 = vadd.f32 %v1769, %v2057
  %v2059 = vpop.f32.mrb[0].mxu0
  %v2060 = vpop.f32.mrb[0].mxu0
  %v2061 = vadd.f32 %v1772, %v2060
  %v2062 = vpop.f32.mrb[0].mxu0
  %2063 = vmatprep.mubr.bf16.mxu0 0
  %2064 = vmatmul.mubr.bf16.gmra.mrb[0].mxu0 %v1328
  %v2065 = vpop.f32.mrb[0].mxu0
  %v2066 = vadd.f32 %v1777, %v2065
  %v2067 = vpop.f32.mrb[0].mxu0
  %v2068 = vpop.f32.mrb[0].mxu0
  %v2069 = vadd.f32 %v1780, %v2068
  %v2070 = vpop.f32.mrb[0].mxu0
  %2071 = vmatprep.mubr.bf16.mxu0 0
  %2072 = vmatmul.mubr.bf16.gmra.mrb[0].mxu0 %v1331
  %v2073 = vpop.f32.mrb[0].mxu0
  %v2074 = vadd.f32 %v1785, %v2073
  %v2075 = vpop.f32.mrb[0].mxu0
  %v2076 = vpop.f32.mrb[0].mxu0
  %v2077 = vadd.f32 %v1788, %v2076
  %v2078 = vpop.f32.mrb[0].mxu0
  %2079 = vmatprep.mubr.bf16.mxu0 0
  %2080 = vmatmul.mubr.bf16.gmra.mrb[0].mxu0 %v1334
  %v2081 = vpop.f32.mrb[0].mxu0
  %v2082 = vadd.f32 %v1793, %v2081
  %v2083 = vpop.f32.mrb[0].mxu0
  %v2084 = vpop.f32.mrb[0].mxu0
  %v2085 = vadd.f32 %v1796, %v2084
  %v2086 = vpop.f32.mrb[0].mxu0
  %2087 = vmatprep.mubr.bf16.mxu0 0
  %2088 = vmatmul.mubr.bf16.gmra.mrb[0].mxu0 %v1337
  %v2089 = vpop.f32.mrb[0].mxu0
  %v2090 = vadd.f32 %v1801, %v2089
  %v2091 = vpop.f32.mrb[0].mxu0
  %v2092 = vpop.f32.mrb[0].mxu0
  %v2093 = vadd.f32 %v1804, %v2092
  %v2094 = vpop.f32.mrb[0].mxu0
  %2095 = vmatprep.mubr.bf16.mxu0 0
  %2096 = vmatmul.mubr.bf16.gmra.mrb[0].mxu0 %v1340
  %v2097 = vpop.f32.mrb[0].mxu0
  %v2098 = vadd.f32 %v1809, %v2097
  %v2099 = vpop.f32.mrb[0].mxu0
  %v2100 = vpop.f32.mrb[0].mxu0
  %v2101 = vadd.f32 %v1812, %v2100
  %v2102 = vpop.f32.mrb[0].mxu0
  %2103 = vmatprep.mubr.bf16.mxu0 0
  %2104 = vmatmul.mubr.bf16.gmra.mrb[0].mxu0 %v1343
  %v2105 = vpop.f32.mrb[0].mxu0
  %v2106 = vadd.f32 %v1817, %v2105
  %v2107 = vpop.f32.mrb[0].mxu0
  %v2108 = vpop.f32.mrb[0].mxu0
  %v2109 = vadd.f32 %v1820, %v2108
  %v2110 = vpop.f32.mrb[0].mxu0
  %2111 = vmatprep.mubr.bf16.mxu0 0
  %2112 = vmatmul.mubr.bf16.gmra.mrb[0].mxu0 %v1346
  %v2113 = vpop.f32.mrb[0].mxu0
  %v2114 = vadd.f32 %v1825, %v2113
  %v2115 = vpop.f32.mrb[0].mxu0
  %v2116 = vpop.f32.mrb[0].mxu0
  %v2117 = vadd.f32 %v1828, %v2116
  %v2118 = vpop.f32.mrb[0].mxu0
  %2119 = vmatprep.mubr.bf16.mxu0 0
  %2120 = vmatmul.mubr.bf16.gmra.mrb[0].mxu0 %v1349
  %v2121 = vpop.f32.mrb[0].mxu0
  %v2122 = vadd.f32 %v1833, %v2121
  %v2123 = vpop.f32.mrb[0].mxu0
  %v2124 = vpop.f32.mrb[0].mxu0
  %v2125 = vadd.f32 %v1836, %v2124
  %v2126 = vpop.f32.mrb[0].mxu0
  %2127 = vmatprep.mubr.bf16.mxu0 0
  %2128 = vmatmul.mubr.bf16.gmra.mrb[0].mxu0 %v1352
  %v2129 = vpop.f32.mrb[0].mxu0
  %v2130 = vadd.f32 %v1841, %v2129
  %v2131 = vpop.f32.mrb[0].mxu0
  %v2132 = vpop.f32.mrb[0].mxu0
  %v2133 = vadd.f32 %v1844, %v2132
  %v2134 = vpop.f32.mrb[0].mxu0
  %2135 = vmatprep.mubr.bf16.mxu0 0
  %2136 = vmatmul.mubr.bf16.gmra.mrb[0].mxu0 %v1355
  %v2137 = vpop.f32.mrb[0].mxu0
  %v2138 = vadd.f32 %v1849, %v2137
  %v2139 = vpop.f32.mrb[0].mxu0
  %v2140 = vpop.f32.mrb[0].mxu0
  %v2141 = vadd.f32 %v1852, %v2140
  %v2142 = vpop.f32.mrb[0].mxu0
  %2143 = vmatprep.mubr.bf16.mxu0 0
  %2144 = vmatmul.mubr.bf16.gmra.mrb[0].mxu0 %v1358
  %v2145 = vpop.f32.mrb[0].mxu0
  %v2146 = vadd.f32 %v1857, %v2145
  %v2147 = vpop.f32.mrb[0].mxu0
  %v2148 = vpop.f32.mrb[0].mxu0
  %v2149 = vadd.f32 %v1860, %v2148
  %v2150 = vpop.f32.mrb[0].mxu0
  %2151 = vmatprep.mubr.bf16.mxu0 0
  %2152 = vmatmul.mubr.bf16.gmra.mrb[0].mxu0 %v1361
  %v2153 = vpop.f32.mrb[0].mxu0
  %v2154 = vadd.f32 %v1865, %v2153
  %v2155 = vpop.f32.mrb[0].mxu0
  %v2156 = vpop.f32.mrb[0].mxu0
  %v2157 = vadd.f32 %v1868, %v2156
  %v2158 = vpop.f32.mrb[0].mxu0
  %2159 = vmatprep.mubr.bf16.mxu0 0
  %2160 = vmatmul.mubr.bf16.gmra.mrb[0].mxu0 %v1364
  %v2161 = vpop.f32.mrb[0].mxu0
  %v2162 = vadd.f32 %v1873, %v2161
  %v2163 = vpop.f32.mrb[0].mxu0
  %v2164 = vpop.f32.mrb[0].mxu0
  %v2165 = vadd.f32 %v1876, %v2164
  %v2166 = vpop.f32.mrb[0].mxu0
  %2167 = vmatprep.mubr.bf16.mxu0 0
  %2168 = vmatmul.mubr.bf16.gmra.mrb[0].mxu0 %v1367
  %v2169 = vpop.f32.mrb[0].mxu0
  %v2170 = vadd.f32 %v1881, %v2169
  %v2171 = vpop.f32.mrb[0].mxu0
  %v2172 = vpop.f32.mrb[0].mxu0
  %v2173 = vadd.f32 %v1884, %v2172
  %v2174 = vpop.f32.mrb[0].mxu0
  %2175 = vmatprep.mubr.bf16.mxu0 0
  %2176 = vmatmul.mubr.bf16.gmra.mrb[0].mxu0 %v1370
  %v2177 = vpop.f32.mrb[0].mxu0
  %v2178 = vadd.f32 %v1889, %v2177
  %v2179 = vpop.f32.mrb[0].mxu0
  %v2180 = vpop.f32.mrb[0].mxu0
  %v2181 = vadd.f32 %v1892, %v2180
  %v2182 = vpop.f32.mrb[0].mxu0
  %2183 = vmatprep.mubr.bf16.mxu0 0
  %2184 = vmatmul.mubr.bf16.gmra.mrb[0].mxu0 %v1373
  %v2185 = vpop.f32.mrb[0].mxu0
  %v2186 = vadd.f32 %v1897, %v2185
  %v2187 = vpop.f32.mrb[0].mxu0
  %v2188 = vpop.f32.mrb[0].mxu0
  %v2189 = vadd.f32 %v1900, %v2188
  %v2190 = vpop.f32.mrb[0].mxu0
  %2191 = vmatprep.mubr.bf16.mxu0 0
  %2192 = vmatmul.mubr.bf16.gmra.mrb[0].mxu0 %v1376
  %v2193 = vpop.f32.mrb[0].mxu0
  %v2194 = vadd.f32 %v1905, %v2193
  %v2195 = vpop.f32.mrb[0].mxu0
  %v2196 = vpop.f32.mrb[0].mxu0
  %v2197 = vadd.f32 %v1908, %v2196
  %v2198 = vpop.f32.mrb[0].mxu0
  %2199 = vmatprep.mubr.bf16.mxu0 0
  %2200 = vmatmul.mubr.bf16.gmra.mrb[0].mxu0 %v1379
  %v2201 = vpop.f32.mrb[0].mxu0
  %v2202 = vadd.f32 %v1913, %v2201
  %v2203 = vpop.f32.mrb[0].mxu0
  %v2204 = vpop.f32.mrb[0].mxu0
  %v2205 = vadd.f32 %v1916, %v2204
  %v2206 = vpop.f32.mrb[0].mxu0
  %2207 = vmatprep.mubr.bf16.mxu0 0
  %2208 = vmatmul.mubr.bf16.gmra.mrb[0].mxu0 %v1382
  %v2209 = vpop.f32.mrb[0].mxu0
  %v2210 = vadd.f32 %v1921, %v2209
  %v2211 = vpop.f32.mrb[0].mxu0
  %v2212 = vpop.f32.mrb[0].mxu0
  %v2213 = vadd.f32 %v1924, %v2212
  %v2214 = vpop.f32.mrb[0].mxu0
  %2215 = vmatprep.mubr.bf16.mxu0 0
  %2216 = vmatmul.mubr.bf16.gmra.mrb[0].mxu0 %v1385
  %v2217 = vpop.f32.mrb[0].mxu0
  %v2218 = vadd.f32 %v1929, %v2217
  %v2219 = vpop.f32.mrb[0].mxu0
  %v2220 = vpop.f32.mrb[0].mxu0
  %v2221 = vadd.f32 %v1932, %v2220
  %v2222 = vpop.f32.mrb[0].mxu0
  %2223 = vmatprep.mubr.bf16.mxu0 0
  %2224 = vmatmul.mubr.bf16.gmra.mrb[0].mxu0 %v1388
  %v2225 = vpop.f32.mrb[0].mxu0
  %v2226 = vadd.f32 %v1937, %v2225
  %v2227 = vpop.f32.mrb[0].mxu0
  %v2228 = vpop.f32.mrb[0].mxu0
  %v2229 = vadd.f32 %v1940, %v2228
  %v2230 = vpop.f32.mrb[0].mxu0
  %2231 = vmatprep.mubr.bf16.mxu0 0
  %2232 = vmatmul.mubr.bf16.gmra.mrb[0].mxu0 %v1391
  %v2233 = vpop.f32.mrb[0].mxu0
  %v2234 = vadd.f32 %v1945, %v2233
  %v2235 = vpop.f32.mrb[0].mxu0
  %v2236 = vpop.f32.mrb[0].mxu0
  %v2237 = vadd.f32 %v1948, %v2236
  %v2238 = vpop.f32.mrb[0].mxu0
  %2239 = vmatprep.mubr.bf16.mxu0 0
  %2240 = vmatmul.mubr.bf16.gmra.mrb[0].mxu0 %v1394
  %v2241 = vpop.f32.mrb[0].mxu0
  %v2242 = vadd.f32 %v1953, %v2241
  %v2243 = vpop.f32.mrb[0].mxu0
  %v2244 = vpop.f32.mrb[0].mxu0
  %v2245 = vadd.f32 %v1956, %v2244
  %v2246 = vpop.f32.mrb[0].mxu0
  %2247 = vmatprep.mubr.bf16.mxu0 0
  %2248 = vmatmul.mubr.bf16.gmra.mrb[0].mxu0 %v1397
  %v2249 = vpop.f32.mrb[0].mxu0
  %v2250 = vadd.f32 %v1961, %v2249
  %v2251 = vpop.f32.mrb[0].mxu0
  %v2252 = vpop.f32.mrb[0].mxu0
  %v2253 = vadd.f32 %v1964, %v2252
  %v2254 = vpop.f32.mrb[0].mxu0
  %2255 = vmatprep.mubr.bf16.mxu0 0
  %2256 = vmatmul.mubr.bf16.gmra.mrb[0].mxu0 %v1400
  %v2257 = vpop.f32.mrb[0].mxu0
  %v2258 = vadd.f32 %v1969, %v2257
  %v2259 = vpop.f32.mrb[0].mxu0
  %v2260 = vpop.f32.mrb[0].mxu0
  %v2261 = vadd.f32 %v1972, %v2260
  %v2262 = vpop.f32.mrb[0].mxu0
  %2263 = vmatprep.mubr.bf16.mxu0 0
  %2264 = vmatmul.mubr.bf16.gmra.mrb[0].mxu0 %v1403
  %v2265 = vpop.f32.mrb[0].mxu0
  %v2266 = vadd.f32 %v1977, %v2265
  %v2267 = vpop.f32.mrb[0].mxu0
  %v2268 = vpop.f32.mrb[0].mxu0
  %v2269 = vadd.f32 %v1980, %v2268
  %v2270 = vpop.f32.mrb[0].mxu0
  %2271 = vdwg.mxu0
  %v2272 = vmax.f32 %v2018, 0.0
  %v2273 = vmax.f32 %v2021, 0.0
  %v2274 = vmax.f32 %v2026, 0.0
  %v2275 = vmax.f32 %v2029, 0.0
  %v2276 = vmax.f32 %v2034, 0.0
  %v2277 = vmax.f32 %v2037, 0.0
  %v2278 = vmax.f32 %v2042, 0.0
  %v2279 = vmax.f32 %v2045, 0.0
  %v2280 = vmax.f32 %v2050, 0.0
  %v2281 = vmax.f32 %v2053, 0.0
  %v2282 = vmax.f32 %v2058, 0.0
  %v2283 = vmax.f32 %v2061, 0.0
  %v2284 = vmax.f32 %v2066, 0.0
  %v2285 = vmax.f32 %v2069, 0.0
  %v2286 = vmax.f32 %v2074, 0.0
  %v2287 = vmax.f32 %v2077, 0.0
  %v2288 = vmax.f32 %v2082, 0.0
  %v2289 = vmax.f32 %v2085, 0.0
  %v2290 = vmax.f32 %v2090, 0.0
  %v2291 = vmax.f32 %v2093, 0.0
  %v2292 = vmax.f32 %v2098, 0.0
  %v2293 = vmax.f32 %v2101, 0.0
  %v2294 = vmax.f32 %v2106, 0.0
  %v2295 = vmax.f32 %v2109, 0.0
  %v2296 = vmax.f32 %v2114, 0.0
  %v2297 = vmax.f32 %v2117, 0.0
  %v2298 = vmax.f32 %v2122, 0.0
  %v2299 = vmax.f32 %v2125, 0.0
  %v2300 = vmax.f32 %v2130, 0.0
  %v2301 = vmax.f32 %v2133, 0.0
  %v2302 = vmax.f32 %v2138, 0.0
  %v2303 = vmax.f32 %v2141, 0.0
  %v2304 = vmax.f32 %v2146, 0.0
  %v2305 = vmax.f32 %v2149, 0.0
  %v2306 = vmax.f32 %v2154, 0.0
  %v2307 = vmax.f32 %v2157, 0.0
  %v2308 = vmax.f32 %v2162, 0.0
  %v2309 = vmax.f32 %v2165, 0.0
  %v2310 = vmax.f32 %v2170, 0.0
  %v2311 = vmax.f32 %v2173, 0.0
  %v2312 = vmax.f32 %v2178, 0.0
  %v2313 = vmax.f32 %v2181, 0.0
  %v2314 = vmax.f32 %v2186, 0.0
  %v2315 = vmax.f32 %v2189, 0.0
  %v2316 = vmax.f32 %v2194, 0.0
  %v2317 = vmax.f32 %v2197, 0.0
  %v2318 = vmax.f32 %v2202, 0.0
  %v2319 = vmax.f32 %v2205, 0.0
  %v2320 = vmax.f32 %v2210, 0.0
  %v2321 = vmax.f32 %v2213, 0.0
  %v2322 = vmax.f32 %v2218, 0.0
  %v2323 = vmax.f32 %v2221, 0.0
  %v2324 = vmax.f32 %v2226, 0.0
  %v2325 = vmax.f32 %v2229, 0.0
  %v2326 = vmax.f32 %v2234, 0.0
  %v2327 = vmax.f32 %v2237, 0.0
  %v2328 = vmax.f32 %v2242, 0.0
  %v2329 = vmax.f32 %v2245, 0.0
  %v2330 = vmax.f32 %v2250, 0.0
  %v2331 = vmax.f32 %v2253, 0.0
  %v2332 = vmax.f32 %v2258, 0.0
  %v2333 = vmax.f32 %v2261, 0.0
  %v2334 = vmax.f32 %v2266, 0.0
  %v2335 = vmax.f32 %v2269, 0.0
  %v2336 = vld [vmem:[%s1] sm:$0xff]
  %v2337 = vld [vmem:[%s1 + $0x8] sm:$0xff]
  %v2338 = vld [vmem:[%s1 + $0x10] sm:$0xf]
  %v2339 = vld [vmem:[%s1 + $0x14] sm:$0xff]
  %v2340 = vld [vmem:[%s1 + $0x1c] sm:$0xff]
  %v2341 = vld [vmem:[%s1 + $0x24] sm:$0xf]
  %v2342 = vld [vmem:[%s1 + $0x28] sm:$0xff]
  %v2343 = vld [vmem:[%s1 + $0x30] sm:$0xff]
  %v2344 = vld [vmem:[%s1 + $0x38] sm:$0xf]
  %v2345 = vld [vmem:[%s1 + $0x3c] sm:$0xff]
  %v2346 = vld [vmem:[%s1 + $0x44] sm:$0xff]
  %v2347 = vld [vmem:[%s1 + $0x4c] sm:$0xf]
  %v2348 = vld [vmem:[%s1 + $0x50] sm:$0xff]
  %v2349 = vld [vmem:[%s1 + $0x58] sm:$0xff]
  %v2350 = vld [vmem:[%s1 + $0x60] sm:$0xf]
  %v2351 = vld [vmem:[%s1 + $0x64] sm:$0xff]
  %v2352 = vld [vmem:[%s1 + $0x6c] sm:$0xff]
  %v2353 = vld [vmem:[%s1 + $0x74] sm:$0xf]
  %v2354 = vld [vmem:[%s1 + $0x78] sm:$0xff]
  %v2355 = vld [vmem:[%s1 + $0x80] sm:$0xff]
  %v2356 = vld [vmem:[%s1 + $0x88] sm:$0xf]
  %v2357 = vld [vmem:[%s1 + $0x8c] sm:$0xff]
  %v2358 = vld [vmem:[%s1 + $0x94] sm:$0xff]
  %v2359 = vld [vmem:[%s1 + $0x9c] sm:$0xf]
  %v2360 = vld [vmem:[%s1 + $0xa0] sm:$0xff]
  %v2361 = vld [vmem:[%s1 + $0xa8] sm:$0xff]
  %v2362 = vld [vmem:[%s1 + $0xb0] sm:$0xf]
  %v2363 = vld [vmem:[%s1 + $0xb4] sm:$0xff]
  %v2364 = vld [vmem:[%s1 + $0xbc] sm:$0xff]
  %v2365 = vld [vmem:[%s1 + $0xc4] sm:$0xf]
  %v2366 = vld [vmem:[%s1 + $0xc8] sm:$0xff]
  %v2367 = vld [vmem:[%s1 + $0xd0] sm:$0xff]
  %v2368 = vld [vmem:[%s1 + $0xd8] sm:$0xf]
  %v2369 = vld [vmem:[%s1 + $0xdc] sm:$0xff]
  %v2370 = vld [vmem:[%s1 + $0xe4] sm:$0xff]
  %v2371 = vld [vmem:[%s1 + $0xec] sm:$0xf]
  %v2372 = vld [vmem:[%s1 + $0xf0] sm:$0xff]
  %v2373 = vld [vmem:[%s1 + $0xf8] sm:$0xff]
  %v2374 = vld [vmem:[%s1 + $0x100] sm:$0xf]
  %v2375 = vld [vmem:[%s1 + $0x104] sm:$0xff]
  %v2376 = vld [vmem:[%s1 + $0x10c] sm:$0xff]
  %v2377 = vld [vmem:[%s1 + $0x114] sm:$0xf]
  %v2378 = vld [vmem:[%s1 + $0x118] sm:$0xff]
  %v2379 = vld [vmem:[%s1 + $0x120] sm:$0xff]
  %v2380 = vld [vmem:[%s1 + $0x128] sm:$0xf]
  %v2381 = vld [vmem:[%s1 + $0x12c] sm:$0xff]
  %v2382 = vld [vmem:[%s1 + $0x134] sm:$0xff]
  %v2383 = vld [vmem:[%s1 + $0x13c] sm:$0xf]
  %v2384 = vld [vmem:[%s1 + $0x140] sm:$0xff]
  %v2385 = vld [vmem:[%s1 + $0x148] sm:$0xff]
  %v2386 = vld [vmem:[%s1 + $0x150] sm:$0xf]
  %v2387 = vld [vmem:[%s1 + $0x154] sm:$0xff]
  %v2388 = vld [vmem:[%s1 + $0x15c] sm:$0xff]
  %v2389 = vld [vmem:[%s1 + $0x164] sm:$0xf]
  %v2390 = vld [vmem:[%s1 + $0x168] sm:$0xff]
  %v2391 = vld [vmem:[%s1 + $0x170] sm:$0xff]
  %v2392 = vld [vmem:[%s1 + $0x178] sm:$0xf]
  %v2393 = vld [vmem:[%s1 + $0x17c] sm:$0xff]
  %v2394 = vld [vmem:[%s1 + $0x184] sm:$0xff]
  %v2395 = vld [vmem:[%s1 + $0x18c] sm:$0xf]
  %v2396 = vld [vmem:[%s1 + $0x190] sm:$0xff]
  %v2397 = vld [vmem:[%s1 + $0x198] sm:$0xff]
  %v2398 = vld [vmem:[%s1 + $0x1a0] sm:$0xf]
  %v2399 = vld [vmem:[%s1 + $0x1a4] sm:$0xff]
  %v2400 = vld [vmem:[%s1 + $0x1ac] sm:$0xff]
  %v2401 = vld [vmem:[%s1 + $0x1b4] sm:$0xf]
  %v2402 = vld [vmem:[%s1 + $0x1b8] sm:$0xff]
  %v2403 = vld [vmem:[%s1 + $0x1c0] sm:$0xff]
  %v2404 = vld [vmem:[%s1 + $0x1c8] sm:$0xf]
  %v2405 = vld [vmem:[%s1 + $0x1cc] sm:$0xff]
  %v2406 = vld [vmem:[%s1 + $0x1d4] sm:$0xff]
  %v2407 = vld [vmem:[%s1 + $0x1dc] sm:$0xf]
  %v2408 = vld [vmem:[%s1 + $0x1e0] sm:$0xff]
  %v2409 = vld [vmem:[%s1 + $0x1e8] sm:$0xff]
  %v2410 = vld [vmem:[%s1 + $0x1f0] sm:$0xf]
  %v2411 = vld [vmem:[%s1 + $0x1f4] sm:$0xff]
  %v2412 = vld [vmem:[%s1 + $0x1fc] sm:$0xff]
  %v2413 = vld [vmem:[%s1 + $0x204] sm:$0xf]
  %v2414 = vld [vmem:[%s1 + $0x208] sm:$0xff]
  %v2415 = vld [vmem:[%s1 + $0x210] sm:$0xff]
  %v2416 = vld [vmem:[%s1 + $0x218] sm:$0xf]
  %v2417 = vld [vmem:[%s1 + $0x21c] sm:$0xff]
  %v2418 = vld [vmem:[%s1 + $0x224] sm:$0xff]
  %v2419 = vld [vmem:[%s1 + $0x22c] sm:$0xf]
  %v2420 = vld [vmem:[%s1 + $0x230] sm:$0xff]
  %v2421 = vld [vmem:[%s1 + $0x238] sm:$0xff]
  %v2422 = vld [vmem:[%s1 + $0x240] sm:$0xf]
  %v2423 = vld [vmem:[%s1 + $0x244] sm:$0xff]
  %v2424 = vld [vmem:[%s1 + $0x24c] sm:$0xff]
  %v2425 = vld [vmem:[%s1 + $0x254] sm:$0xf]
  %v2426 = vld [vmem:[%s1 + $0x258] sm:$0xff]
  %v2427 = vld [vmem:[%s1 + $0x260] sm:$0xff]
  %v2428 = vld [vmem:[%s1 + $0x268] sm:$0xf]
  %v2429 = vld [vmem:[%s1 + $0x26c] sm:$0xff]
  %v2430 = vld [vmem:[%s1 + $0x274] sm:$0xff]
  %v2431 = vld [vmem:[%s1 + $0x27c] sm:$0xf]
  %v2432 = vld [vmem:[%s1 + $0x280] sm:$0xff]
  %v2433 = vld [vmem:[%s1 + $0x288] sm:$0xff]
  %v2434 = vld [vmem:[%s1 + $0x290] sm:$0xf]
  %v2435 = vld [vmem:[%s1 + $0x294] sm:$0xff]
  %v2436 = vld [vmem:[%s1 + $0x29c] sm:$0xff]
  %v2437 = vld [vmem:[%s1 + $0x2a4] sm:$0xf]
  %v2438 = vld [vmem:[%s1 + $0x2a8] sm:$0xff]
  %v2439 = vld [vmem:[%s1 + $0x2b0] sm:$0xff]
  %v2440 = vld [vmem:[%s1 + $0x2b8] sm:$0xf]
  %v2441 = vld [vmem:[%s1 + $0x2bc] sm:$0xff]
  %v2442 = vld [vmem:[%s1 + $0x2c4] sm:$0xff]
  %v2443 = vld [vmem:[%s1 + $0x2cc] sm:$0xf]
  %v2444 = vld [vmem:[%s1 + $0x2d0] sm:$0xff]
  %v2445 = vld [vmem:[%s1 + $0x2d8] sm:$0xff]
  %v2446 = vld [vmem:[%s1 + $0x2e0] sm:$0xf]
  %v2447 = vld [vmem:[%s1 + $0x2e4] sm:$0xff]
  %v2448 = vld [vmem:[%s1 + $0x2ec] sm:$0xff]
  %v2449 = vld [vmem:[%s1 + $0x2f4] sm:$0xf]
  %v2450 = vld [vmem:[%s1 + $0x2f8] sm:$0xff]
  %v2451 = vld [vmem:[%s1 + $0x300] sm:$0xff]
  %v2452 = vld [vmem:[%s1 + $0x308] sm:$0xf]
  %v2453 = vld [vmem:[%s1 + $0x30c] sm:$0xff]
  %v2454 = vld [vmem:[%s1 + $0x314] sm:$0xff]
  %v2455 = vld [vmem:[%s1 + $0x31c] sm:$0xf]
  %v2456 = vld [vmem:[%s1 + $0x320] sm:$0xff]
  %v2457 = vld [vmem:[%s1 + $0x328] sm:$0xff]
  %v2458 = vld [vmem:[%s1 + $0x330] sm:$0xf]
  %v2459 = vld [vmem:[%s1 + $0x334] sm:$0xff]
  %v2460 = vld [vmem:[%s1 + $0x33c] sm:$0xff]
  %v2461 = vld [vmem:[%s1 + $0x344] sm:$0xf]
  %v2462 = vld [vmem:[%s1 + $0x348] sm:$0xff]
  %v2463 = vld [vmem:[%s1 + $0x350] sm:$0xff]
  %v2464 = vld [vmem:[%s1 + $0x358] sm:$0xf]
  %v2465 = vld [vmem:[%s1 + $0x35c] sm:$0xff]
  %v2466 = vld [vmem:[%s1 + $0x364] sm:$0xff]
  %v2467 = vld [vmem:[%s1 + $0x36c] sm:$0xf]
  %v2468 = vld [vmem:[%s1 + $0x370] sm:$0xff]
  %v2469 = vld [vmem:[%s1 + $0x378] sm:$0xff]
  %v2470 = vld [vmem:[%s1 + $0x380] sm:$0xf]
  %v2471 = vld [vmem:[%s1 + $0x384] sm:$0xff]
  %v2472 = vld [vmem:[%s1 + $0x38c] sm:$0xff]
  %v2473 = vld [vmem:[%s1 + $0x394] sm:$0xf]
  %v2474 = vld [vmem:[%s1 + $0x398] sm:$0xff]
  %v2475 = vld [vmem:[%s1 + $0x3a0] sm:$0xff]
  %v2476 = vld [vmem:[%s1 + $0x3a8] sm:$0xf]
  %v2477 = vld [vmem:[%s1 + $0x3ac] sm:$0xff]
  %v2478 = vld [vmem:[%s1 + $0x3b4] sm:$0xff]
  %v2479 = vld [vmem:[%s1 + $0x3bc] sm:$0xf]
  %v2480 = vld [vmem:[%s1 + $0x3c0] sm:$0xff]
  %v2481 = vld [vmem:[%s1 + $0x3c8] sm:$0xff]
  %v2482 = vld [vmem:[%s1 + $0x3d0] sm:$0xf]
  %v2483 = vld [vmem:[%s1 + $0x3d4] sm:$0xff]
  %v2484 = vld [vmem:[%s1 + $0x3dc] sm:$0xff]
  %v2485 = vld [vmem:[%s1 + $0x3e4] sm:$0xf]
  %v2486 = vld [vmem:[%s1 + $0x3e8] sm:$0xff]
  %v2487 = vld [vmem:[%s1 + $0x3f0] sm:$0xff]
  %v2488 = vld [vmem:[%s1 + $0x3f8] sm:$0xf]
  %v2489 = vld [vmem:[%s1 + $0x3fc] sm:$0xff]
  %v2490 = vld [vmem:[%s1 + $0x404] sm:$0xff]
  %v2491 = vld [vmem:[%s1 + $0x40c] sm:$0xf]
  %v2492 = vld [vmem:[%s1 + $0x410] sm:$0xff]
  %v2493 = vld [vmem:[%s1 + $0x418] sm:$0xff]
  %v2494 = vld [vmem:[%s1 + $0x420] sm:$0xf]
  %v2495 = vld [vmem:[%s1 + $0x424] sm:$0xff]
  %v2496 = vld [vmem:[%s1 + $0x42c] sm:$0xff]
  %v2497 = vld [vmem:[%s1 + $0x434] sm:$0xf]
  %v2498 = vld [vmem:[%s1 + $0x438] sm:$0xff]
  %v2499 = vld [vmem:[%s1 + $0x440] sm:$0xff]
  %v2500 = vld [vmem:[%s1 + $0x448] sm:$0xf]
  %v2501 = vld [vmem:[%s1 + $0x44c] sm:$0xff]
  %v2502 = vld [vmem:[%s1 + $0x454] sm:$0xff]
  %v2503 = vld [vmem:[%s1 + $0x45c] sm:$0xf]
  %v2504 = vld [vmem:[%s1 + $0x460] sm:$0xff]
  %v2505 = vld [vmem:[%s1 + $0x468] sm:$0xff]
  %v2506 = vld [vmem:[%s1 + $0x470] sm:$0xf]
  %v2507 = vld [vmem:[%s1 + $0x474] sm:$0xff]
  %v2508 = vld [vmem:[%s1 + $0x47c] sm:$0xff]
  %v2509 = vld [vmem:[%s1 + $0x484] sm:$0xf]
  %v2510 = vld [vmem:[%s1 + $0x488] sm:$0xff]
  %v2511 = vld [vmem:[%s1 + $0x490] sm:$0xff]
  %v2512 = vld [vmem:[%s1 + $0x498] sm:$0xf]
  %v2513 = vld [vmem:[%s1 + $0x49c] sm:$0xff]
  %v2514 = vld [vmem:[%s1 + $0x4a4] sm:$0xff]
  %v2515 = vld [vmem:[%s1 + $0x4ac] sm:$0xf]
  %v2516 = vld [vmem:[%s1 + $0x4b0] sm:$0xff]
  %v2517 = vld [vmem:[%s1 + $0x4b8] sm:$0xff]
  %v2518 = vld [vmem:[%s1 + $0x4c0] sm:$0xf]
  %v2519 = vld [vmem:[%s1 + $0x4c4] sm:$0xff]
  %v2520 = vld [vmem:[%s1 + $0x4cc] sm:$0xff]
  %v2521 = vld [vmem:[%s1 + $0x4d4] sm:$0xf]
  %v2522 = vld [vmem:[%s1 + $0x4d8] sm:$0xff]
  %v2523 = vld [vmem:[%s1 + $0x4e0] sm:$0xff]
  %v2524 = vld [vmem:[%s1 + $0x4e8] sm:$0xf]
  %v2525 = vld [vmem:[%s1 + $0x4ec] sm:$0xff]
  %v2526 = vld [vmem:[%s1 + $0x4f4] sm:$0xff]
  %v2527 = vld [vmem:[%s1 + $0x4fc] sm:$0xf]
  %v2720 = vunpack.c.l.b16 %v2336
  %v2721 = vunpack.c.h.b16 %v2336
  %v2722 = vunpack.c.l.b16 %v2337
  %v2723 = vunpack.c.h.b16 %v2337
  %v2724 = vunpack.c.l.b16 %v2338
  %v2725 = vunpack.c.l.b16 %v2339
  %v2726 = vunpack.c.h.b16 %v2339
  %v2727 = vunpack.c.l.b16 %v2340
  %v2728 = vunpack.c.h.b16 %v2340
  %v2729 = vunpack.c.l.b16 %v2341
  %v2730 = vunpack.c.l.b16 %v2342
  %v2731 = vunpack.c.h.b16 %v2342
  %v2732 = vunpack.c.l.b16 %v2343
  %v2733 = vunpack.c.h.b16 %v2343
  %v2734 = vunpack.c.l.b16 %v2344
  %v2735 = vunpack.c.l.b16 %v2345
  %v2736 = vunpack.c.h.b16 %v2345
  %v2737 = vunpack.c.l.b16 %v2346
  %v2738 = vunpack.c.h.b16 %v2346
  %v2739 = vunpack.c.l.b16 %v2347
  %v2740 = vunpack.c.l.b16 %v2348
  %v2741 = vunpack.c.h.b16 %v2348
  %v2742 = vunpack.c.l.b16 %v2349
  %v2743 = vunpack.c.h.b16 %v2349
  %v2744 = vunpack.c.l.b16 %v2350
  %v2745 = vunpack.c.l.b16 %v2351
  %v2746 = vunpack.c.h.b16 %v2351
  %v2747 = vunpack.c.l.b16 %v2352
  %v2748 = vunpack.c.h.b16 %v2352
  %v2749 = vunpack.c.l.b16 %v2353
  %v2750 = vunpack.c.l.b16 %v2354
  %v2751 = vunpack.c.h.b16 %v2354
  %v2752 = vunpack.c.l.b16 %v2355
  %v2753 = vunpack.c.h.b16 %v2355
  %v2754 = vunpack.c.l.b16 %v2356
  %v2755 = vunpack.c.l.b16 %v2357
  %v2756 = vunpack.c.h.b16 %v2357
  %v2757 = vunpack.c.l.b16 %v2358
  %v2758 = vunpack.c.h.b16 %v2358
  %v2759 = vunpack.c.l.b16 %v2359
  %v2760 = vunpack.c.l.b16 %v2360
  %v2761 = vunpack.c.h.b16 %v2360
  %v2762 = vunpack.c.l.b16 %v2361
  %v2763 = vunpack.c.h.b16 %v2361
  %v2764 = vunpack.c.l.b16 %v2362
  %v2765 = vunpack.c.l.b16 %v2363
  %v2766 = vunpack.c.h.b16 %v2363
  %v2767 = vunpack.c.l.b16 %v2364
  %v2768 = vunpack.c.h.b16 %v2364
  %v2769 = vunpack.c.l.b16 %v2365
  %v2770 = vunpack.c.l.b16 %v2366
  %v2771 = vunpack.c.h.b16 %v2366
  %v2772 = vunpack.c.l.b16 %v2367
  %v2773 = vunpack.c.h.b16 %v2367
  %v2774 = vunpack.c.l.b16 %v2368
  %v2775 = vunpack.c.l.b16 %v2369
  %v2776 = vunpack.c.h.b16 %v2369
  %v2777 = vunpack.c.l.b16 %v2370
  %v2778 = vunpack.c.h.b16 %v2370
  %v2779 = vunpack.c.l.b16 %v2371
  %v2780 = vunpack.c.l.b16 %v2372
  %v2781 = vunpack.c.h.b16 %v2372
  %v2782 = vunpack.c.l.b16 %v2373
  %v2783 = vunpack.c.h.b16 %v2373
  %v2784 = vunpack.c.l.b16 %v2374
  %v2785 = vunpack.c.l.b16 %v2375
  %v2786 = vunpack.c.h.b16 %v2375
  %v2787 = vunpack.c.l.b16 %v2376
  %v2788 = vunpack.c.h.b16 %v2376
  %v2789 = vunpack.c.l.b16 %v2377
  %v2790 = vunpack.c.l.b16 %v2378
  %v2791 = vunpack.c.h.b16 %v2378
  %v2792 = vunpack.c.l.b16 %v2379
  %v2793 = vunpack.c.h.b16 %v2379
  %v2794 = vunpack.c.l.b16 %v2380
  %v2795 = vunpack.c.l.b16 %v2381
  %v2796 = vunpack.c.h.b16 %v2381
  %v2797 = vunpack.c.l.b16 %v2382
  %v2798 = vunpack.c.h.b16 %v2382
  %v2799 = vunpack.c.l.b16 %v2383
  %v2800 = vunpack.c.l.b16 %v2384
  %v2801 = vunpack.c.h.b16 %v2384
  %v2802 = vunpack.c.l.b16 %v2385
  %v2803 = vunpack.c.h.b16 %v2385
  %v2804 = vunpack.c.l.b16 %v2386
  %v2805 = vunpack.c.l.b16 %v2387
  %v2806 = vunpack.c.h.b16 %v2387
  %v2807 = vunpack.c.l.b16 %v2388
  %v2808 = vunpack.c.h.b16 %v2388
  %v2809 = vunpack.c.l.b16 %v2389
  %v2810 = vunpack.c.l.b16 %v2390
  %v2811 = vunpack.c.h.b16 %v2390
  %v2812 = vunpack.c.l.b16 %v2391
  %v2813 = vunpack.c.h.b16 %v2391
  %v2814 = vunpack.c.l.b16 %v2392
  %v2815 = vunpack.c.l.b16 %v2393
  %v2816 = vunpack.c.h.b16 %v2393
  %v2817 = vunpack.c.l.b16 %v2394
  %v2818 = vunpack.c.h.b16 %v2394
  %v2819 = vunpack.c.l.b16 %v2395
  %v2820 = vunpack.c.l.b16 %v2396
  %v2821 = vunpack.c.h.b16 %v2396
  %v2822 = vunpack.c.l.b16 %v2397
  %v2823 = vunpack.c.h.b16 %v2397
  %v2824 = vunpack.c.l.b16 %v2398
  %v2825 = vunpack.c.l.b16 %v2399
  %v2826 = vunpack.c.h.b16 %v2399
  %v2827 = vunpack.c.l.b16 %v2400
  %v2828 = vunpack.c.h.b16 %v2400
  %v2829 = vunpack.c.l.b16 %v2401
  %v2830 = vunpack.c.l.b16 %v2402
  %v2831 = vunpack.c.h.b16 %v2402
  %v2832 = vunpack.c.l.b16 %v2403
  %v2833 = vunpack.c.h.b16 %v2403
  %v2834 = vunpack.c.l.b16 %v2404
  %v2835 = vunpack.c.l.b16 %v2405
  %v2836 = vunpack.c.h.b16 %v2405
  %v2837 = vunpack.c.l.b16 %v2406
  %v2838 = vunpack.c.h.b16 %v2406
  %v2839 = vunpack.c.l.b16 %v2407
  %v2840 = vunpack.c.l.b16 %v2408
  %v2841 = vunpack.c.h.b16 %v2408
  %v2842 = vunpack.c.l.b16 %v2409
  %v2843 = vunpack.c.h.b16 %v2409
  %v2844 = vunpack.c.l.b16 %v2410
  %v2845 = vunpack.c.l.b16 %v2411
  %v2846 = vunpack.c.h.b16 %v2411
  %v2847 = vunpack.c.l.b16 %v2412
  %v2848 = vunpack.c.h.b16 %v2412
  %v2849 = vunpack.c.l.b16 %v2413
  %v2850 = vunpack.c.l.b16 %v2414
  %v2851 = vunpack.c.h.b16 %v2414
  %v2852 = vunpack.c.l.b16 %v2415
  %v2853 = vunpack.c.h.b16 %v2415
  %v2854 = vunpack.c.l.b16 %v2416
  %v2855 = vunpack.c.l.b16 %v2417
  %v2856 = vunpack.c.h.b16 %v2417
  %v2857 = vunpack.c.l.b16 %v2418
  %v2858 = vunpack.c.h.b16 %v2418
  %v2859 = vunpack.c.l.b16 %v2419
  %v2860 = vunpack.c.l.b16 %v2420
  %v2861 = vunpack.c.h.b16 %v2420
  %v2862 = vunpack.c.l.b16 %v2421
  %v2863 = vunpack.c.h.b16 %v2421
  %v2864 = vunpack.c.l.b16 %v2422
  %v2865 = vunpack.c.l.b16 %v2423
  %v2866 = vunpack.c.h.b16 %v2423
  %v2867 = vunpack.c.l.b16 %v2424
  %v2868 = vunpack.c.h.b16 %v2424
  %v2869 = vunpack.c.l.b16 %v2425
  %v2870 = vunpack.c.l.b16 %v2426
  %v2871 = vunpack.c.h.b16 %v2426
  %v2872 = vunpack.c.l.b16 %v2427
  %v2873 = vunpack.c.h.b16 %v2427
  %v2874 = vunpack.c.l.b16 %v2428
  %v2875 = vunpack.c.l.b16 %v2429
  %v2876 = vunpack.c.h.b16 %v2429
  %v2877 = vunpack.c.l.b16 %v2430
  %v2878 = vunpack.c.h.b16 %v2430
  %v2879 = vunpack.c.l.b16 %v2431
  %v2880 = vunpack.c.l.b16 %v2432
  %v2881 = vunpack.c.h.b16 %v2432
  %v2882 = vunpack.c.l.b16 %v2433
  %v2883 = vunpack.c.h.b16 %v2433
  %v2884 = vunpack.c.l.b16 %v2434
  %v2885 = vunpack.c.l.b16 %v2435
  %v2886 = vunpack.c.h.b16 %v2435
  %v2887 = vunpack.c.l.b16 %v2436
  %v2888 = vunpack.c.h.b16 %v2436
  %v2889 = vunpack.c.l.b16 %v2437
  %v2890 = vunpack.c.l.b16 %v2438
  %v2891 = vunpack.c.h.b16 %v2438
  %v2892 = vunpack.c.l.b16 %v2439
  %v2893 = vunpack.c.h.b16 %v2439
  %v2894 = vunpack.c.l.b16 %v2440
  %v2895 = vunpack.c.l.b16 %v2441
  %v2896 = vunpack.c.h.b16 %v2441
  %v2897 = vunpack.c.l.b16 %v2442
  %v2898 = vunpack.c.h.b16 %v2442
  %v2899 = vunpack.c.l.b16 %v2443
  %v2900 = vunpack.c.l.b16 %v2444
  %v2901 = vunpack.c.h.b16 %v2444
  %v2902 = vunpack.c.l.b16 %v2445
  %v2903 = vunpack.c.h.b16 %v2445
  %v2904 = vunpack.c.l.b16 %v2446
  %v2905 = vunpack.c.l.b16 %v2447
  %v2906 = vunpack.c.h.b16 %v2447
  %v2907 = vunpack.c.l.b16 %v2448
  %v2908 = vunpack.c.h.b16 %v2448
  %v2909 = vunpack.c.l.b16 %v2449
  %v2910 = vunpack.c.l.b16 %v2450
  %v2911 = vunpack.c.h.b16 %v2450
  %v2912 = vunpack.c.l.b16 %v2451
  %v2913 = vunpack.c.h.b16 %v2451
  %v2914 = vunpack.c.l.b16 %v2452
  %v2915 = vunpack.c.l.b16 %v2453
  %v2916 = vunpack.c.h.b16 %v2453
  %v2917 = vunpack.c.l.b16 %v2454
  %v2918 = vunpack.c.h.b16 %v2454
  %v2919 = vunpack.c.l.b16 %v2455
  %v2920 = vunpack.c.l.b16 %v2456
  %v2921 = vunpack.c.h.b16 %v2456
  %v2922 = vunpack.c.l.b16 %v2457
  %v2923 = vunpack.c.h.b16 %v2457
  %v2924 = vunpack.c.l.b16 %v2458
  %v2925 = vunpack.c.l.b16 %v2459
  %v2926 = vunpack.c.h.b16 %v2459
  %v2927 = vunpack.c.l.b16 %v2460
  %v2928 = vunpack.c.h.b16 %v2460
  %v2929 = vunpack.c.l.b16 %v2461
  %v2930 = vunpack.c.l.b16 %v2462
  %v2931 = vunpack.c.h.b16 %v2462
  %v2932 = vunpack.c.l.b16 %v2463
  %v2933 = vunpack.c.h.b16 %v2463
  %v2934 = vunpack.c.l.b16 %v2464
  %v2935 = vunpack.c.l.b16 %v2465
  %v2936 = vunpack.c.h.b16 %v2465
  %v2937 = vunpack.c.l.b16 %v2466
  %v2938 = vunpack.c.h.b16 %v2466
  %v2939 = vunpack.c.l.b16 %v2467
  %v2940 = vunpack.c.l.b16 %v2468
  %v2941 = vunpack.c.h.b16 %v2468
  %v2942 = vunpack.c.l.b16 %v2469
  %v2943 = vunpack.c.h.b16 %v2469
  %v2944 = vunpack.c.l.b16 %v2470
  %v2945 = vunpack.c.l.b16 %v2471
  %v2946 = vunpack.c.h.b16 %v2471
  %v2947 = vunpack.c.l.b16 %v2472
  %v2948 = vunpack.c.h.b16 %v2472
  %v2949 = vunpack.c.l.b16 %v2473
  %v2950 = vunpack.c.l.b16 %v2474
  %v2951 = vunpack.c.h.b16 %v2474
  %v2952 = vunpack.c.l.b16 %v2475
  %v2953 = vunpack.c.h.b16 %v2475
  %v2954 = vunpack.c.l.b16 %v2476
  %v2955 = vunpack.c.l.b16 %v2477
  %v2956 = vunpack.c.h.b16 %v2477
  %v2957 = vunpack.c.l.b16 %v2478
  %v2958 = vunpack.c.h.b16 %v2478
  %v2959 = vunpack.c.l.b16 %v2479
  %v2960 = vunpack.c.l.b16 %v2480
  %v2961 = vunpack.c.h.b16 %v2480
  %v2962 = vunpack.c.l.b16 %v2481
  %v2963 = vunpack.c.h.b16 %v2481
  %v2964 = vunpack.c.l.b16 %v2482
  %v2965 = vunpack.c.l.b16 %v2483
  %v2966 = vunpack.c.h.b16 %v2483
  %v2967 = vunpack.c.l.b16 %v2484
  %v2968 = vunpack.c.h.b16 %v2484
  %v2969 = vunpack.c.l.b16 %v2485
  %v2970 = vunpack.c.l.b16 %v2486
  %v2971 = vunpack.c.h.b16 %v2486
  %v2972 = vunpack.c.l.b16 %v2487
  %v2973 = vunpack.c.h.b16 %v2487
  %v2974 = vunpack.c.l.b16 %v2488
  %v2975 = vunpack.c.l.b16 %v2489
  %v2976 = vunpack.c.h.b16 %v2489
  %v2977 = vunpack.c.l.b16 %v2490
  %v2978 = vunpack.c.h.b16 %v2490
  %v2979 = vunpack.c.l.b16 %v2491
  %v2980 = vunpack.c.l.b16 %v2492
  %v2981 = vunpack.c.h.b16 %v2492
  %v2982 = vunpack.c.l.b16 %v2493
  %v2983 = vunpack.c.h.b16 %v2493
  %v2984 = vunpack.c.l.b16 %v2494
  %v2985 = vunpack.c.l.b16 %v2495
  %v2986 = vunpack.c.h.b16 %v2495
  %v2987 = vunpack.c.l.b16 %v2496
  %v2988 = vunpack.c.h.b16 %v2496
  %v2989 = vunpack.c.l.b16 %v2497
  %v2990 = vunpack.c.l.b16 %v2498
  %v2991 = vunpack.c.h.b16 %v2498
  %v2992 = vunpack.c.l.b16 %v2499
  %v2993 = vunpack.c.h.b16 %v2499
  %v2994 = vunpack.c.l.b16 %v2500
  %v2995 = vunpack.c.l.b16 %v2501
  %v2996 = vunpack.c.h.b16 %v2501
  %v2997 = vunpack.c.l.b16 %v2502
  %v2998 = vunpack.c.h.b16 %v2502
  %v2999 = vunpack.c.l.b16 %v2503
  %v3000 = vunpack.c.l.b16 %v2504
  %v3001 = vunpack.c.h.b16 %v2504
  %v3002 = vunpack.c.l.b16 %v2505
  %v3003 = vunpack.c.h.b16 %v2505
  %v3004 = vunpack.c.l.b16 %v2506
  %v3005 = vunpack.c.l.b16 %v2507
  %v3006 = vunpack.c.h.b16 %v2507
  %v3007 = vunpack.c.l.b16 %v2508
  %v3008 = vunpack.c.h.b16 %v2508
  %v3009 = vunpack.c.l.b16 %v2509
  %v3010 = vunpack.c.l.b16 %v2510
  %v3011 = vunpack.c.h.b16 %v2510
  %v3012 = vunpack.c.l.b16 %v2511
  %v3013 = vunpack.c.h.b16 %v2511
  %v3014 = vunpack.c.l.b16 %v2512
  %v3015 = vunpack.c.l.b16 %v2513
  %v3016 = vunpack.c.h.b16 %v2513
  %v3017 = vunpack.c.l.b16 %v2514
  %v3018 = vunpack.c.h.b16 %v2514
  %v3019 = vunpack.c.l.b16 %v2515
  %v3020 = vunpack.c.l.b16 %v2516
  %v3021 = vunpack.c.h.b16 %v2516
  %v3022 = vunpack.c.l.b16 %v2517
  %v3023 = vunpack.c.h.b16 %v2517
  %v3024 = vunpack.c.l.b16 %v2518
  %v3025 = vunpack.c.l.b16 %v2519
  %v3026 = vunpack.c.h.b16 %v2519
  %v3027 = vunpack.c.l.b16 %v2520
  %v3028 = vunpack.c.h.b16 %v2520
  %v3029 = vunpack.c.l.b16 %v2521
  %v3030 = vunpack.c.l.b16 %v2522
  %v3031 = vunpack.c.h.b16 %v2522
  %v3032 = vunpack.c.l.b16 %v2523
  %v3033 = vunpack.c.h.b16 %v2523
  %v3034 = vunpack.c.l.b16 %v2524
  %v3035 = vunpack.c.l.b16 %v2525
  %v3036 = vunpack.c.h.b16 %v2525
  %v3037 = vunpack.c.l.b16 %v2526
  %v3038 = vunpack.c.h.b16 %v2526
  %v3039 = vunpack.c.l.b16 %v2527
  %v3040 = vpack.c.b16 %v2725, %v2720
  %v3041 = vpack.c.b16 %v2726, %v2721
  %v3042 = vpack.c.b16 %v2727, %v2722
  %v3043 = vpack.c.b16 %v2728, %v2723
  %v3044 = vpack.c.b16 %v2729, %v2724
  %v3045 = vpack.c.b16 %v2735, %v2730
  %v3046 = vpack.c.b16 %v2736, %v2731
  %v3047 = vpack.c.b16 %v2737, %v2732
  %v3048 = vpack.c.b16 %v2738, %v2733
  %v3049 = vpack.c.b16 %v2739, %v2734
  %v3050 = vpack.c.b16 %v2745, %v2740
  %v3051 = vpack.c.b16 %v2746, %v2741
  %v3052 = vpack.c.b16 %v2747, %v2742
  %v3053 = vpack.c.b16 %v2748, %v2743
  %v3054 = vpack.c.b16 %v2749, %v2744
  %v3055 = vpack.c.b16 %v2755, %v2750
  %v3056 = vpack.c.b16 %v2756, %v2751
  %v3057 = vpack.c.b16 %v2757, %v2752
  %v3058 = vpack.c.b16 %v2758, %v2753
  %v3059 = vpack.c.b16 %v2759, %v2754
  %v3060 = vpack.c.b16 %v2765, %v2760
  %v3061 = vpack.c.b16 %v2766, %v2761
  %v3062 = vpack.c.b16 %v2767, %v2762
  %v3063 = vpack.c.b16 %v2768, %v2763
  %v3064 = vpack.c.b16 %v2769, %v2764
  %v3065 = vpack.c.b16 %v2775, %v2770
  %v3066 = vpack.c.b16 %v2776, %v2771
  %v3067 = vpack.c.b16 %v2777, %v2772
  %v3068 = vpack.c.b16 %v2778, %v2773
  %v3069 = vpack.c.b16 %v2779, %v2774
  %v3070 = vpack.c.b16 %v2785, %v2780
  %v3071 = vpack.c.b16 %v2786, %v2781
  %v3072 = vpack.c.b16 %v2787, %v2782
  %v3073 = vpack.c.b16 %v2788, %v2783
  %v3074 = vpack.c.b16 %v2789, %v2784
  %v3075 = vpack.c.b16 %v2795, %v2790
  %v3076 = vpack.c.b16 %v2796, %v2791
  %v3077 = vpack.c.b16 %v2797, %v2792
  %v3078 = vpack.c.b16 %v2798, %v2793
  %v3079 = vpack.c.b16 %v2799, %v2794
  %v3080 = vpack.c.b16 %v2805, %v2800
  %v3081 = vpack.c.b16 %v2806, %v2801
  %v3082 = vpack.c.b16 %v2807, %v2802
  %v3083 = vpack.c.b16 %v2808, %v2803
  %v3084 = vpack.c.b16 %v2809, %v2804
  %v3085 = vpack.c.b16 %v2815, %v2810
  %v3086 = vpack.c.b16 %v2816, %v2811
  %v3087 = vpack.c.b16 %v2817, %v2812
  %v3088 = vpack.c.b16 %v2818, %v2813
  %v3089 = vpack.c.b16 %v2819, %v2814
  %v3090 = vpack.c.b16 %v2825, %v2820
  %v3091 = vpack.c.b16 %v2826, %v2821
  %v3092 = vpack.c.b16 %v2827, %v2822
  %v3093 = vpack.c.b16 %v2828, %v2823
  %v3094 = vpack.c.b16 %v2829, %v2824
  %v3095 = vpack.c.b16 %v2835, %v2830
  %v3096 = vpack.c.b16 %v2836, %v2831
  %v3097 = vpack.c.b16 %v2837, %v2832
  %v3098 = vpack.c.b16 %v2838, %v2833
  %v3099 = vpack.c.b16 %v2839, %v2834
  %v3100 = vpack.c.b16 %v2845, %v2840
  %v3101 = vpack.c.b16 %v2846, %v2841
  %v3102 = vpack.c.b16 %v2847, %v2842
  %v3103 = vpack.c.b16 %v2848, %v2843
  %v3104 = vpack.c.b16 %v2849, %v2844
  %v3105 = vpack.c.b16 %v2855, %v2850
  %v3106 = vpack.c.b16 %v2856, %v2851
  %v3107 = vpack.c.b16 %v2857, %v2852
  %v3108 = vpack.c.b16 %v2858, %v2853
  %v3109 = vpack.c.b16 %v2859, %v2854
  %v3110 = vpack.c.b16 %v2865, %v2860
  %v3111 = vpack.c.b16 %v2866, %v2861
  %v3112 = vpack.c.b16 %v2867, %v2862
  %v3113 = vpack.c.b16 %v2868, %v2863
  %v3114 = vpack.c.b16 %v2869, %v2864
  %v3115 = vpack.c.b16 %v2875, %v2870
  %v3116 = vpack.c.b16 %v2876, %v2871
  %v3117 = vpack.c.b16 %v2877, %v2872
  %v3118 = vpack.c.b16 %v2878, %v2873
  %v3119 = vpack.c.b16 %v2879, %v2874
  %v3120 = vpack.c.b16 %v2885, %v2880
  %v3121 = vpack.c.b16 %v2886, %v2881
  %v3122 = vpack.c.b16 %v2887, %v2882
  %v3123 = vpack.c.b16 %v2888, %v2883
  %v3124 = vpack.c.b16 %v2889, %v2884
  %v3125 = vpack.c.b16 %v2895, %v2890
  %v3126 = vpack.c.b16 %v2896, %v2891
  %v3127 = vpack.c.b16 %v2897, %v2892
  %v3128 = vpack.c.b16 %v2898, %v2893
  %v3129 = vpack.c.b16 %v2899, %v2894
  %v3130 = vpack.c.b16 %v2905, %v2900
  %v3131 = vpack.c.b16 %v2906, %v2901
  %v3132 = vpack.c.b16 %v2907, %v2902
  %v3133 = vpack.c.b16 %v2908, %v2903
  %v3134 = vpack.c.b16 %v2909, %v2904
  %v3135 = vpack.c.b16 %v2915, %v2910
  %v3136 = vpack.c.b16 %v2916, %v2911
  %v3137 = vpack.c.b16 %v2917, %v2912
  %v3138 = vpack.c.b16 %v2918, %v2913
  %v3139 = vpack.c.b16 %v2919, %v2914
  %v3140 = vpack.c.b16 %v2925, %v2920
  %v3141 = vpack.c.b16 %v2926, %v2921
  %v3142 = vpack.c.b16 %v2927, %v2922
  %v3143 = vpack.c.b16 %v2928, %v2923
  %v3144 = vpack.c.b16 %v2929, %v2924
  %v3145 = vpack.c.b16 %v2935, %v2930
  %v3146 = vpack.c.b16 %v2936, %v2931
  %v3147 = vpack.c.b16 %v2937, %v2932
  %v3148 = vpack.c.b16 %v2938, %v2933
  %v3149 = vpack.c.b16 %v2939, %v2934
  %v3150 = vpack.c.b16 %v2945, %v2940
  %v3151 = vpack.c.b16 %v2946, %v2941
  %v3152 = vpack.c.b16 %v2947, %v2942
  %v3153 = vpack.c.b16 %v2948, %v2943
  %v3154 = vpack.c.b16 %v2949, %v2944
  %v3155 = vpack.c.b16 %v2955, %v2950
  %v3156 = vpack.c.b16 %v2956, %v2951
  %v3157 = vpack.c.b16 %v2957, %v2952
  %v3158 = vpack.c.b16 %v2958, %v2953
  %v3159 = vpack.c.b16 %v2959, %v2954
  %v3160 = vpack.c.b16 %v2965, %v2960
  %v3161 = vpack.c.b16 %v2966, %v2961
  %v3162 = vpack.c.b16 %v2967, %v2962
  %v3163 = vpack.c.b16 %v2968, %v2963
  %v3164 = vpack.c.b16 %v2969, %v2964
  %v3165 = vpack.c.b16 %v2975, %v2970
  %v3166 = vpack.c.b16 %v2976, %v2971
  %v3167 = vpack.c.b16 %v2977, %v2972
  %v3168 = vpack.c.b16 %v2978, %v2973
  %v3169 = vpack.c.b16 %v2979, %v2974
  %v3170 = vpack.c.b16 %v2985, %v2980
  %v3171 = vpack.c.b16 %v2986, %v2981
  %v3172 = vpack.c.b16 %v2987, %v2982
  %v3173 = vpack.c.b16 %v2988, %v2983
  %v3174 = vpack.c.b16 %v2989, %v2984
  %v3175 = vpack.c.b16 %v2995, %v2990
  %v3176 = vpack.c.b16 %v2996, %v2991
  %v3177 = vpack.c.b16 %v2997, %v2992
  %v3178 = vpack.c.b16 %v2998, %v2993
  %v3179 = vpack.c.b16 %v2999, %v2994
  %v3180 = vpack.c.b16 %v3005, %v3000
  %v3181 = vpack.c.b16 %v3006, %v3001
  %v3182 = vpack.c.b16 %v3007, %v3002
  %v3183 = vpack.c.b16 %v3008, %v3003
  %v3184 = vpack.c.b16 %v3009, %v3004
  %v3185 = vpack.c.b16 %v3015, %v3010
  %v3186 = vpack.c.b16 %v3016, %v3011
  %v3187 = vpack.c.b16 %v3017, %v3012
  %v3188 = vpack.c.b16 %v3018, %v3013
  %v3189 = vpack.c.b16 %v3019, %v3014
  %v3190 = vpack.c.b16 %v3025, %v3020
  %v3191 = vpack.c.b16 %v3026, %v3021
  %v3192 = vpack.c.b16 %v3027, %v3022
  %v3193 = vpack.c.b16 %v3028, %v3023
  %v3194 = vpack.c.b16 %v3029, %v3024
  %v3195 = vpack.c.b16 %v3035, %v3030
  %v3196 = vpack.c.b16 %v3036, %v3031
  %v3197 = vpack.c.b16 %v3037, %v3032
  %v3198 = vpack.c.b16 %v3038, %v3033
  %v3199 = vpack.c.b16 %v3039, %v3034
  %v3329 = vsel %vm1308, %v3044, 0
  %v3332 = vsel %vm1308, %v3049, 0
  %v3335 = vsel %vm1308, %v3054, 0
  %v3338 = vsel %vm1308, %v3059, 0
  %v3341 = vsel %vm1308, %v3064, 0
  %v3344 = vsel %vm1308, %v3069, 0
  %v3347 = vsel %vm1308, %v3074, 0
  %v3350 = vsel %vm1308, %v3079, 0
  %v3353 = vsel %vm1308, %v3084, 0
  %v3356 = vsel %vm1308, %v3089, 0
  %v3359 = vsel %vm1308, %v3094, 0
  %v3362 = vsel %vm1308, %v3099, 0
  %v3365 = vsel %vm1308, %v3104, 0
  %v3368 = vsel %vm1308, %v3109, 0
  %v3371 = vsel %vm1308, %v3114, 0
  %v3374 = vsel %vm1308, %v3119, 0
  %v3377 = vsel %vm1308, %v3124, 0
  %v3380 = vsel %vm1308, %v3129, 0
  %v3383 = vsel %vm1308, %v3134, 0
  %v3386 = vsel %vm1308, %v3139, 0
  %v3389 = vsel %vm1308, %v3144, 0
  %v3392 = vsel %vm1308, %v3149, 0
  %v3395 = vsel %vm1308, %v3154, 0
  %v3398 = vsel %vm1308, %v3159, 0
  %v3401 = vsel %vm1308, %v3164, 0
  %v3404 = vsel %vm1308, %v3169, 0
  %v3407 = vsel %vm1308, %v3174, 0
  %v3410 = vsel %vm1308, %v3179, 0
  %v3413 = vsel %vm1308, %v3184, 0
  %v3416 = vsel %vm1308, %v3189, 0
  %v3419 = vsel %vm1308, %v3194, 0
  %v3422 = vsel %vm1308, %v3199, 0
  %3424 = vmatprep.subr.bf16.mxu0 0
  %3425 = vmatpush1.bf16.msra.mxu0 %v1236
  %3426 = vmatprep.subr.bf16.mxu0 0
  %3427 = vmatpush1.bf16.msra.mxu0 %v1237
  %3428 = vmatprep.subr.bf16.mxu0 0
  %3429 = vmatpush1.bf16.msra.mxu0 %v1238
  %3430 = vmatprep.subr.bf16.mxu0 0
  %3431 = vmatpush1.bf16.msra.mxu0 %v1239
  %3432 = vmatprep.subr.bf16.mxu0 0
  %3433 = vmatpush1.bf16.msra.mxu0 %v1240
  %3434 = vmatprep.subr.bf16.mxu0 0
  %3435 = vmatpush1.bf16.msra.mxu0 %v1241
  %3436 = vmatprep.subr.bf16.mxu0 0
  %3437 = vmatpush1.bf16.msra.mxu0 %v1242
  %3438 = vmatprep.subr.bf16.mxu0 0
  %3439 = vmatpush1.bf16.msra.mxu0 %v1243
  %3440 = vmatprep.subr.bf16.mxu0 0
  %3441 = vmatpush1.bf16.msra.mxu0 %v1244
  %3442 = vmatprep.subr.bf16.mxu0 0
  %3443 = vmatpush1.bf16.msra.mxu0 %v1245
  %3444 = vmatprep.subr.bf16.mxu0 0
  %3445 = vmatpush1.bf16.msra.mxu0 %v1246
  %3446 = vmatprep.subr.bf16.mxu0 0
  %3447 = vmatpush1.bf16.msra.mxu0 %v1247
  %3448 = vmatprep.subr.bf16.mxu0 0
  %3449 = vmatpush1.bf16.msra.mxu0 %v1248
  %3450 = vmatprep.subr.bf16.mxu0 0
  %3451 = vmatpush1.bf16.msra.mxu0 %v1249
  %3452 = vmatprep.subr.bf16.mxu0 0
  %3453 = vmatpush1.bf16.msra.mxu0 %v1250
  %3454 = vmatprep.subr.bf16.mxu0 0
  %3455 = vmatpush1.bf16.msra.mxu0 %v1251
  %3456 = vmatprep.mubr.bf16.mxu0 %v3041
  %3457 = vmatmul.mubr.bf16.gmra.mrb[0].mxu0 %v3040
  %v3458 = vpop.f32.mrb[0].mxu0
  %v3459 = vadd.f32 %v290, %v3458
  %v3460 = vpop.f32.mrb[0].mxu0
  %v3461 = vpop.f32.mrb[0].mxu0
  %v3462 = vadd.f32 %v290, %v3461
  %v3463 = vpop.f32.mrb[0].mxu0
  %3464 = vmatprep.mubr.bf16.mxu0 %v3046
  %3465 = vmatmul.mubr.bf16.gmra.mrb[0].mxu0 %v3045
  %v3466 = vpop.f32.mrb[0].mxu0
  %v3467 = vadd.f32 %v290, %v3466
  %v3468 = vpop.f32.mrb[0].mxu0
  %v3469 = vpop.f32.mrb[0].mxu0
  %v3470 = vadd.f32 %v290, %v3469
  %v3471 = vpop.f32.mrb[0].mxu0
  %3472 = vmatprep.mubr.bf16.mxu0 %v3051
  %3473 = vmatmul.mubr.bf16.gmra.mrb[0].mxu0 %v3050
  %v3474 = vpop.f32.mrb[0].mxu0
  %v3475 = vadd.f32 %v290, %v3474
  %v3476 = vpop.f32.mrb[0].mxu0
  %v3477 = vpop.f32.mrb[0].mxu0
  %v3478 = vadd.f32 %v290, %v3477
  %v3479 = vpop.f32.mrb[0].mxu0
  %3480 = vmatprep.mubr.bf16.mxu0 %v3056
  %3481 = vmatmul.mubr.bf16.gmra.mrb[0].mxu0 %v3055
  %v3482 = vpop.f32.mrb[0].mxu0
  %v3483 = vadd.f32 %v290, %v3482
  %v3484 = vpop.f32.mrb[0].mxu0
  %v3485 = vpop.f32.mrb[0].mxu0
  %v3486 = vadd.f32 %v290, %v3485
  %v3487 = vpop.f32.mrb[0].mxu0
  %3488 = vmatprep.mubr.bf16.mxu0 %v3061
  %3489 = vmatmul.mubr.bf16.gmra.mrb[0].mxu0 %v3060
  %v3490 = vpop.f32.mrb[0].mxu0
  %v3491 = vadd.f32 %v290, %v3490
  %v3492 = vpop.f32.mrb[0].mxu0
  %v3493 = vpop.f32.mrb[0].mxu0
  %v3494 = vadd.f32 %v290, %v3493
  %v3495 = vpop.f32.mrb[0].mxu0
  %3496 = vmatprep.mubr.bf16.mxu0 %v3066
  %3497 = vmatmul.mubr.bf16.gmra.mrb[0].mxu0 %v3065
  %v3498 = vpop.f32.mrb[0].mxu0
  %v3499 = vadd.f32 %v290, %v3498
  %v3500 = vpop.f32.mrb[0].mxu0
  %v3501 = vpop.f32.mrb[0].mxu0
  %v3502 = vadd.f32 %v290, %v3501
  %v3503 = vpop.f32.mrb[0].mxu0
  %3504 = vmatprep.mubr.bf16.mxu0 %v3071
  %3505 = vmatmul.mubr.bf16.gmra.mrb[0].mxu0 %v3070
  %v3506 = vpop.f32.mrb[0].mxu0
  %v3507 = vadd.f32 %v290, %v3506
  %v3508 = vpop.f32.mrb[0].mxu0
  %v3509 = vpop.f32.mrb[0].mxu0
  %v3510 = vadd.f32 %v290, %v3509
  %v3511 = vpop.f32.mrb[0].mxu0
  %3512 = vmatprep.mubr.bf16.mxu0 %v3076
  %3513 = vmatmul.mubr.bf16.gmra.mrb[0].mxu0 %v3075
  %v3514 = vpop.f32.mrb[0].mxu0
  %v3515 = vadd.f32 %v290, %v3514
  %v3516 = vpop.f32.mrb[0].mxu0
  %v3517 = vpop.f32.mrb[0].mxu0
  %v3518 = vadd.f32 %v290, %v3517
  %v3519 = vpop.f32.mrb[0].mxu0
  %3520 = vmatprep.mubr.bf16.mxu0 %v3081
  %3521 = vmatmul.mubr.bf16.gmra.mrb[0].mxu0 %v3080
  %v3522 = vpop.f32.mrb[0].mxu0
  %v3523 = vadd.f32 %v290, %v3522
  %v3524 = vpop.f32.mrb[0].mxu0
  %v3525 = vpop.f32.mrb[0].mxu0
  %v3526 = vadd.f32 %v290, %v3525
  %v3527 = vpop.f32.mrb[0].mxu0
  %3528 = vmatprep.mubr.bf16.mxu0 %v3086
  %3529 = vmatmul.mubr.bf16.gmra.mrb[0].mxu0 %v3085
  %v3530 = vpop.f32.mrb[0].mxu0
  %v3531 = vadd.f32 %v290, %v3530
  %v3532 = vpop.f32.mrb[0].mxu0
  %v3533 = vpop.f32.mrb[0].mxu0
  %v3534 = vadd.f32 %v290, %v3533
  %v3535 = vpop.f32.mrb[0].mxu0
  %3536 = vmatprep.mubr.bf16.mxu0 %v3091
  %3537 = vmatmul.mubr.bf16.gmra.mrb[0].mxu0 %v3090
  %v3538 = vpop.f32.mrb[0].mxu0
  %v3539 = vadd.f32 %v290, %v3538
  %v3540 = vpop.f32.mrb[0].mxu0
  %v3541 = vpop.f32.mrb[0].mxu0
  %v3542 = vadd.f32 %v290, %v3541
  %v3543 = vpop.f32.mrb[0].mxu0
  %3544 = vmatprep.mubr.bf16.mxu0 %v3096
  %3545 = vmatmul.mubr.bf16.gmra.mrb[0].mxu0 %v3095
  %v3546 = vpop.f32.mrb[0].mxu0
  %v3547 = vadd.f32 %v290, %v3546
  %v3548 = vpop.f32.mrb[0].mxu0
  %v3549 = vpop.f32.mrb[0].mxu0
  %v3550 = vadd.f32 %v290, %v3549
  %v3551 = vpop.f32.mrb[0].mxu0
  %3552 = vmatprep.mubr.bf16.mxu0 %v3101
  %3553 = vmatmul.mubr.bf16.gmra.mrb[0].mxu0 %v3100
  %v3554 = vpop.f32.mrb[0].mxu0
  %v3555 = vadd.f32 %v290, %v3554
  %v3556 = vpop.f32.mrb[0].mxu0
  %v3557 = vpop.f32.mrb[0].mxu0
  %v3558 = vadd.f32 %v290, %v3557
  %v3559 = vpop.f32.mrb[0].mxu0
  %3560 = vmatprep.mubr.bf16.mxu0 %v3106
  %3561 = vmatmul.mubr.bf16.gmra.mrb[0].mxu0 %v3105
  %v3562 = vpop.f32.mrb[0].mxu0
  %v3563 = vadd.f32 %v290, %v3562
  %v3564 = vpop.f32.mrb[0].mxu0
  %v3565 = vpop.f32.mrb[0].mxu0
  %v3566 = vadd.f32 %v290, %v3565
  %v3567 = vpop.f32.mrb[0].mxu0
  %3568 = vmatprep.mubr.bf16.mxu0 %v3111
  %3569 = vmatmul.mubr.bf16.gmra.mrb[0].mxu0 %v3110
  %v3570 = vpop.f32.mrb[0].mxu0
  %v3571 = vadd.f32 %v290, %v3570
  %v3572 = vpop.f32.mrb[0].mxu0
  %v3573 = vpop.f32.mrb[0].mxu0
  %v3574 = vadd.f32 %v290, %v3573
  %v3575 = vpop.f32.mrb[0].mxu0
  %3576 = vmatprep.mubr.bf16.mxu0 %v3116
  %3577 = vmatmul.mubr.bf16.gmra.mrb[0].mxu0 %v3115
  %v3578 = vpop.f32.mrb[0].mxu0
  %v3579 = vadd.f32 %v290, %v3578
  %v3580 = vpop.f32.mrb[0].mxu0
  %v3581 = vpop.f32.mrb[0].mxu0
  %v3582 = vadd.f32 %v290, %v3581
  %v3583 = vpop.f32.mrb[0].mxu0
  %3584 = vmatprep.mubr.bf16.mxu0 %v3121
  %3585 = vmatmul.mubr.bf16.gmra.mrb[0].mxu0 %v3120
  %v3586 = vpop.f32.mrb[0].mxu0
  %v3587 = vadd.f32 %v290, %v3586
  %v3588 = vpop.f32.mrb[0].mxu0
  %v3589 = vpop.f32.mrb[0].mxu0
  %v3590 = vadd.f32 %v290, %v3589
  %v3591 = vpop.f32.mrb[0].mxu0
  %3592 = vmatprep.mubr.bf16.mxu0 %v3126
  %3593 = vmatmul.mubr.bf16.gmra.mrb[0].mxu0 %v3125
  %v3594 = vpop.f32.mrb[0].mxu0
  %v3595 = vadd.f32 %v290, %v3594
  %v3596 = vpop.f32.mrb[0].mxu0
  %v3597 = vpop.f32.mrb[0].mxu0
  %v3598 = vadd.f32 %v290, %v3597
  %v3599 = vpop.f32.mrb[0].mxu0
  %3600 = vmatprep.mubr.bf16.mxu0 %v3131
  %3601 = vmatmul.mubr.bf16.gmra.mrb[0].mxu0 %v3130
  %v3602 = vpop.f32.mrb[0].mxu0
  %v3603 = vadd.f32 %v290, %v3602
  %v3604 = vpop.f32.mrb[0].mxu0
  %v3605 = vpop.f32.mrb[0].mxu0
  %v3606 = vadd.f32 %v290, %v3605
  %v3607 = vpop.f32.mrb[0].mxu0
  %3608 = vmatprep.mubr.bf16.mxu0 %v3136
  %3609 = vmatmul.mubr.bf16.gmra.mrb[0].mxu0 %v3135
  %v3610 = vpop.f32.mrb[0].mxu0
  %v3611 = vadd.f32 %v290, %v3610
  %v3612 = vpop.f32.mrb[0].mxu0
  %v3613 = vpop.f32.mrb[0].mxu0
  %v3614 = vadd.f32 %v290, %v3613
  %v3615 = vpop.f32.mrb[0].mxu0
  %3616 = vmatprep.mubr.bf16.mxu0 %v3141
  %3617 = vmatmul.mubr.bf16.gmra.mrb[0].mxu0 %v3140
  %v3618 = vpop.f32.mrb[0].mxu0
  %v3619 = vadd.f32 %v290, %v3618
  %v3620 = vpop.f32.mrb[0].mxu0
  %v3621 = vpop.f32.mrb[0].mxu0
  %v3622 = vadd.f32 %v290, %v3621
  %v3623 = vpop.f32.mrb[0].mxu0
  %3624 = vmatprep.mubr.bf16.mxu0 %v3146
  %3625 = vmatmul.mubr.bf16.gmra.mrb[0].mxu0 %v3145
  %v3626 = vpop.f32.mrb[0].mxu0
  %v3627 = vadd.f32 %v290, %v3626
  %v3628 = vpop.f32.mrb[0].mxu0
  %v3629 = vpop.f32.mrb[0].mxu0
  %v3630 = vadd.f32 %v290, %v3629
  %v3631 = vpop.f32.mrb[0].mxu0
  %3632 = vmatprep.mubr.bf16.mxu0 %v3151
  %3633 = vmatmul.mubr.bf16.gmra.mrb[0].mxu0 %v3150
  %v3634 = vpop.f32.mrb[0].mxu0
  %v3635 = vadd.f32 %v290, %v3634
  %v3636 = vpop.f32.mrb[0].mxu0
  %v3637 = vpop.f32.mrb[0].mxu0
  %v3638 = vadd.f32 %v290, %v3637
  %v3639 = vpop.f32.mrb[0].mxu0
  %3640 = vmatprep.mubr.bf16.mxu0 %v3156
  %3641 = vmatmul.mubr.bf16.gmra.mrb[0].mxu0 %v3155
  %v3642 = vpop.f32.mrb[0].mxu0
  %v3643 = vadd.f32 %v290, %v3642
  %v3644 = vpop.f32.mrb[0].mxu0
  %v3645 = vpop.f32.mrb[0].mxu0
  %v3646 = vadd.f32 %v290, %v3645
  %v3647 = vpop.f32.mrb[0].mxu0
  %3648 = vmatprep.mubr.bf16.mxu0 %v3161
  %3649 = vmatmul.mubr.bf16.gmra.mrb[0].mxu0 %v3160
  %v3650 = vpop.f32.mrb[0].mxu0
  %v3651 = vadd.f32 %v290, %v3650
  %v3652 = vpop.f32.mrb[0].mxu0
  %v3653 = vpop.f32.mrb[0].mxu0
  %v3654 = vadd.f32 %v290, %v3653
  %v3655 = vpop.f32.mrb[0].mxu0
  %3656 = vmatprep.mubr.bf16.mxu0 %v3166
  %3657 = vmatmul.mubr.bf16.gmra.mrb[0].mxu0 %v3165
  %v3658 = vpop.f32.mrb[0].mxu0
  %v3659 = vadd.f32 %v290, %v3658
  %v3660 = vpop.f32.mrb[0].mxu0
  %v3661 = vpop.f32.mrb[0].mxu0
  %v3662 = vadd.f32 %v290, %v3661
  %v3663 = vpop.f32.mrb[0].mxu0
  %3664 = vmatprep.mubr.bf16.mxu0 %v3171
  %3665 = vmatmul.mubr.bf16.gmra.mrb[0].mxu0 %v3170
  %v3666 = vpop.f32.mrb[0].mxu0
  %v3667 = vadd.f32 %v290, %v3666
  %v3668 = vpop.f32.mrb[0].mxu0
  %v3669 = vpop.f32.mrb[0].mxu0
  %v3670 = vadd.f32 %v290, %v3669
  %v3671 = vpop.f32.mrb[0].mxu0
  %3672 = vmatprep.mubr.bf16.mxu0 %v3176
  %3673 = vmatmul.mubr.bf16.gmra.mrb[0].mxu0 %v3175
  %v3674 = vpop.f32.mrb[0].mxu0
  %v3675 = vadd.f32 %v290, %v3674
  %v3676 = vpop.f32.mrb[0].mxu0
  %v3677 = vpop.f32.mrb[0].mxu0
  %v3678 = vadd.f32 %v290, %v3677
  %v3679 = vpop.f32.mrb[0].mxu0
  %3680 = vmatprep.mubr.bf16.mxu0 %v3181
  %3681 = vmatmul.mubr.bf16.gmra.mrb[0].mxu0 %v3180
  %v3682 = vpop.f32.mrb[0].mxu0
  %v3683 = vadd.f32 %v290, %v3682
  %v3684 = vpop.f32.mrb[0].mxu0
  %v3685 = vpop.f32.mrb[0].mxu0
  %v3686 = vadd.f32 %v290, %v3685
  %v3687 = vpop.f32.mrb[0].mxu0
  %3688 = vmatprep.mubr.bf16.mxu0 %v3186
  %3689 = vmatmul.mubr.bf16.gmra.mrb[0].mxu0 %v3185
  %v3690 = vpop.f32.mrb[0].mxu0
  %v3691 = vadd.f32 %v290, %v3690
  %v3692 = vpop.f32.mrb[0].mxu0
  %v3693 = vpop.f32.mrb[0].mxu0
  %v3694 = vadd.f32 %v290, %v3693
  %v3695 = vpop.f32.mrb[0].mxu0
  %3696 = vmatprep.mubr.bf16.mxu0 %v3191
  %3697 = vmatmul.mubr.bf16.gmra.mrb[0].mxu0 %v3190
  %v3698 = vpop.f32.mrb[0].mxu0
  %v3699 = vadd.f32 %v290, %v3698
  %v3700 = vpop.f32.mrb[0].mxu0
  %v3701 = vpop.f32.mrb[0].mxu0
  %v3702 = vadd.f32 %v290, %v3701
  %v3703 = vpop.f32.mrb[0].mxu0
  %3704 = vmatprep.mubr.bf16.mxu0 %v3196
  %3705 = vmatmul.mubr.bf16.gmra.mrb[0].mxu0 %v3195
  %v3706 = vpop.f32.mrb[0].mxu0
  %v3707 = vadd.f32 %v290, %v3706
  %v3708 = vpop.f32.mrb[0].mxu0
  %v3709 = vpop.f32.mrb[0].mxu0
  %v3710 = vadd.f32 %v290, %v3709
  %v3711 = vpop.f32.mrb[0].mxu0
  %3712 = vdwg.mxu0
  %3713 = vmatprep.subr.bf16.mxu0 0
  %3714 = vmatpush1.bf16.msra.mxu0 %v1252
  %3715 = vmatprep.subr.bf16.mxu0 0
  %3716 = vmatpush1.bf16.msra.mxu0 %v1253
  %3717 = vmatprep.subr.bf16.mxu0 0
  %3718 = vmatpush1.bf16.msra.mxu0 %v1254
  %3719 = vmatprep.subr.bf16.mxu0 0
  %3720 = vmatpush1.bf16.msra.mxu0 %v1255
  %3721 = vmatprep.subr.bf16.mxu0 0
  %3722 = vmatpush1.bf16.msra.mxu0 %v1256
  %3723 = vmatprep.subr.bf16.mxu0 0
  %3724 = vmatpush1.bf16.msra.mxu0 %v1257
  %3725 = vmatprep.subr.bf16.mxu0 0
  %3726 = vmatpush1.bf16.msra.mxu0 %v1258
  %3727 = vmatprep.subr.bf16.mxu0 0
  %3728 = vmatpush1.bf16.msra.mxu0 %v1259
  %3729 = vmatprep.subr.bf16.mxu0 0
  %3730 = vmatpush1.bf16.msra.mxu0 %v1260
  %3731 = vmatprep.subr.bf16.mxu0 0
  %3732 = vmatpush1.bf16.msra.mxu0 %v1261
  %3733 = vmatprep.subr.bf16.mxu0 0
  %3734 = vmatpush1.bf16.msra.mxu0 %v1262
  %3735 = vmatprep.subr.bf16.mxu0 0
  %3736 = vmatpush1.bf16.msra.mxu0 %v1263
  %3737 = vmatprep.subr.bf16.mxu0 0
  %3738 = vmatpush1.bf16.msra.mxu0 %v1264
  %3739 = vmatprep.subr.bf16.mxu0 0
  %3740 = vmatpush1.bf16.msra.mxu0 %v1265
  %3741 = vmatprep.subr.bf16.mxu0 0
  %3742 = vmatpush1.bf16.msra.mxu0 %v1266
  %3743 = vmatprep.subr.bf16.mxu0 0
  %3744 = vmatpush1.bf16.msra.mxu0 %v1267
  %3745 = vmatprep.mubr.bf16.mxu0 %v3043
  %3746 = vmatmul.mubr.bf16.gmra.mrb[0].mxu0 %v3042
  %v3747 = vpop.f32.mrb[0].mxu0
  %v3748 = vadd.f32 %v3459, %v3747
  %v3749 = vpop.f32.mrb[0].mxu0
  %v3750 = vpop.f32.mrb[0].mxu0
  %v3751 = vadd.f32 %v3462, %v3750
  %v3752 = vpop.f32.mrb[0].mxu0
  %3753 = vmatprep.mubr.bf16.mxu0 %v3048
  %3754 = vmatmul.mubr.bf16.gmra.mrb[0].mxu0 %v3047
  %v3755 = vpop.f32.mrb[0].mxu0
  %v3756 = vadd.f32 %v3467, %v3755
  %v3757 = vpop.f32.mrb[0].mxu0
  %v3758 = vpop.f32.mrb[0].mxu0
  %v3759 = vadd.f32 %v3470, %v3758
  %v3760 = vpop.f32.mrb[0].mxu0
  %3761 = vmatprep.mubr.bf16.mxu0 %v3053
  %3762 = vmatmul.mubr.bf16.gmra.mrb[0].mxu0 %v3052
  %v3763 = vpop.f32.mrb[0].mxu0
  %v3764 = vadd.f32 %v3475, %v3763
  %v3765 = vpop.f32.mrb[0].mxu0
  %v3766 = vpop.f32.mrb[0].mxu0
  %v3767 = vadd.f32 %v3478, %v3766
  %v3768 = vpop.f32.mrb[0].mxu0
  %3769 = vmatprep.mubr.bf16.mxu0 %v3058
  %3770 = vmatmul.mubr.bf16.gmra.mrb[0].mxu0 %v3057
  %v3771 = vpop.f32.mrb[0].mxu0
  %v3772 = vadd.f32 %v3483, %v3771
  %v3773 = vpop.f32.mrb[0].mxu0
  %v3774 = vpop.f32.mrb[0].mxu0
  %v3775 = vadd.f32 %v3486, %v3774
  %v3776 = vpop.f32.mrb[0].mxu0
  %3777 = vmatprep.mubr.bf16.mxu0 %v3063
  %3778 = vmatmul.mubr.bf16.gmra.mrb[0].mxu0 %v3062
  %v3779 = vpop.f32.mrb[0].mxu0
  %v3780 = vadd.f32 %v3491, %v3779
  %v3781 = vpop.f32.mrb[0].mxu0
  %v3782 = vpop.f32.mrb[0].mxu0
  %v3783 = vadd.f32 %v3494, %v3782
  %v3784 = vpop.f32.mrb[0].mxu0
  %3785 = vmatprep.mubr.bf16.mxu0 %v3068
  %3786 = vmatmul.mubr.bf16.gmra.mrb[0].mxu0 %v3067
  %v3787 = vpop.f32.mrb[0].mxu0
  %v3788 = vadd.f32 %v3499, %v3787
  %v3789 = vpop.f32.mrb[0].mxu0
  %v3790 = vpop.f32.mrb[0].mxu0
  %v3791 = vadd.f32 %v3502, %v3790
  %v3792 = vpop.f32.mrb[0].mxu0
  %3793 = vmatprep.mubr.bf16.mxu0 %v3073
  %3794 = vmatmul.mubr.bf16.gmra.mrb[0].mxu0 %v3072
  %v3795 = vpop.f32.mrb[0].mxu0
  %v3796 = vadd.f32 %v3507, %v3795
  %v3797 = vpop.f32.mrb[0].mxu0
  %v3798 = vpop.f32.mrb[0].mxu0
  %v3799 = vadd.f32 %v3510, %v3798
  %v3800 = vpop.f32.mrb[0].mxu0
  %3801 = vmatprep.mubr.bf16.mxu0 %v3078
  %3802 = vmatmul.mubr.bf16.gmra.mrb[0].mxu0 %v3077
  %v3803 = vpop.f32.mrb[0].mxu0
  %v3804 = vadd.f32 %v3515, %v3803
  %v3805 = vpop.f32.mrb[0].mxu0
  %v3806 = vpop.f32.mrb[0].mxu0
  %v3807 = vadd.f32 %v3518, %v3806
  %v3808 = vpop.f32.mrb[0].mxu0
  %3809 = vmatprep.mubr.bf16.mxu0 %v3083
  %3810 = vmatmul.mubr.bf16.gmra.mrb[0].mxu0 %v3082
  %v3811 = vpop.f32.mrb[0].mxu0
  %v3812 = vadd.f32 %v3523, %v3811
  %v3813 = vpop.f32.mrb[0].mxu0
  %v3814 = vpop.f32.mrb[0].mxu0
  %v3815 = vadd.f32 %v3526, %v3814
  %v3816 = vpop.f32.mrb[0].mxu0
  %3817 = vmatprep.mubr.bf16.mxu0 %v3088
  %3818 = vmatmul.mubr.bf16.gmra.mrb[0].mxu0 %v3087
  %v3819 = vpop.f32.mrb[0].mxu0
  %v3820 = vadd.f32 %v3531, %v3819
  %v3821 = vpop.f32.mrb[0].mxu0
  %v3822 = vpop.f32.mrb[0].mxu0
  %v3823 = vadd.f32 %v3534, %v3822
  %v3824 = vpop.f32.mrb[0].mxu0
  %3825 = vmatprep.mubr.bf16.mxu0 %v3093
  %3826 = vmatmul.mubr.bf16.gmra.mrb[0].mxu0 %v3092
  %v3827 = vpop.f32.mrb[0].mxu0
  %v3828 = vadd.f32 %v3539, %v3827
  %v3829 = vpop.f32.mrb[0].mxu0
  %v3830 = vpop.f32.mrb[0].mxu0
  %v3831 = vadd.f32 %v3542, %v3830
  %v3832 = vpop.f32.mrb[0].mxu0
  %3833 = vmatprep.mubr.bf16.mxu0 %v3098
  %3834 = vmatmul.mubr.bf16.gmra.mrb[0].mxu0 %v3097
  %v3835 = vpop.f32.mrb[0].mxu0
  %v3836 = vadd.f32 %v3547, %v3835
  %v3837 = vpop.f32.mrb[0].mxu0
  %v3838 = vpop.f32.mrb[0].mxu0
  %v3839 = vadd.f32 %v3550, %v3838
  %v3840 = vpop.f32.mrb[0].mxu0
  %3841 = vmatprep.mubr.bf16.mxu0 %v3103
  %3842 = vmatmul.mubr.bf16.gmra.mrb[0].mxu0 %v3102
  %v3843 = vpop.f32.mrb[0].mxu0
  %v3844 = vadd.f32 %v3555, %v3843
  %v3845 = vpop.f32.mrb[0].mxu0
  %v3846 = vpop.f32.mrb[0].mxu0
  %v3847 = vadd.f32 %v3558, %v3846
  %v3848 = vpop.f32.mrb[0].mxu0
  %3849 = vmatprep.mubr.bf16.mxu0 %v3108
  %3850 = vmatmul.mubr.bf16.gmra.mrb[0].mxu0 %v3107
  %v3851 = vpop.f32.mrb[0].mxu0
  %v3852 = vadd.f32 %v3563, %v3851
  %v3853 = vpop.f32.mrb[0].mxu0
  %v3854 = vpop.f32.mrb[0].mxu0
  %v3855 = vadd.f32 %v3566, %v3854
  %v3856 = vpop.f32.mrb[0].mxu0
  %3857 = vmatprep.mubr.bf16.mxu0 %v3113
  %3858 = vmatmul.mubr.bf16.gmra.mrb[0].mxu0 %v3112
  %v3859 = vpop.f32.mrb[0].mxu0
  %v3860 = vadd.f32 %v3571, %v3859
  %v3861 = vpop.f32.mrb[0].mxu0
  %v3862 = vpop.f32.mrb[0].mxu0
  %v3863 = vadd.f32 %v3574, %v3862
  %v3864 = vpop.f32.mrb[0].mxu0
  %3865 = vmatprep.mubr.bf16.mxu0 %v3118
  %3866 = vmatmul.mubr.bf16.gmra.mrb[0].mxu0 %v3117
  %v3867 = vpop.f32.mrb[0].mxu0
  %v3868 = vadd.f32 %v3579, %v3867
  %v3869 = vpop.f32.mrb[0].mxu0
  %v3870 = vpop.f32.mrb[0].mxu0
  %v3871 = vadd.f32 %v3582, %v3870
  %v3872 = vpop.f32.mrb[0].mxu0
  %3873 = vmatprep.mubr.bf16.mxu0 %v3123
  %3874 = vmatmul.mubr.bf16.gmra.mrb[0].mxu0 %v3122
  %v3875 = vpop.f32.mrb[0].mxu0
  %v3876 = vadd.f32 %v3587, %v3875
  %v3877 = vpop.f32.mrb[0].mxu0
  %v3878 = vpop.f32.mrb[0].mxu0
  %v3879 = vadd.f32 %v3590, %v3878
  %v3880 = vpop.f32.mrb[0].mxu0
  %3881 = vmatprep.mubr.bf16.mxu0 %v3128
  %3882 = vmatmul.mubr.bf16.gmra.mrb[0].mxu0 %v3127
  %v3883 = vpop.f32.mrb[0].mxu0
  %v3884 = vadd.f32 %v3595, %v3883
  %v3885 = vpop.f32.mrb[0].mxu0
  %v3886 = vpop.f32.mrb[0].mxu0
  %v3887 = vadd.f32 %v3598, %v3886
  %v3888 = vpop.f32.mrb[0].mxu0
  %3889 = vmatprep.mubr.bf16.mxu0 %v3133
  %3890 = vmatmul.mubr.bf16.gmra.mrb[0].mxu0 %v3132
  %v3891 = vpop.f32.mrb[0].mxu0
  %v3892 = vadd.f32 %v3603, %v3891
  %v3893 = vpop.f32.mrb[0].mxu0
  %v3894 = vpop.f32.mrb[0].mxu0
  %v3895 = vadd.f32 %v3606, %v3894
  %v3896 = vpop.f32.mrb[0].mxu0
  %3897 = vmatprep.mubr.bf16.mxu0 %v3138
  %3898 = vmatmul.mubr.bf16.gmra.mrb[0].mxu0 %v3137
  %v3899 = vpop.f32.mrb[0].mxu0
  %v3900 = vadd.f32 %v3611, %v3899
  %v3901 = vpop.f32.mrb[0].mxu0
  %v3902 = vpop.f32.mrb[0].mxu0
  %v3903 = vadd.f32 %v3614, %v3902
  %v3904 = vpop.f32.mrb[0].mxu0
  %3905 = vmatprep.mubr.bf16.mxu0 %v3143
  %3906 = vmatmul.mubr.bf16.gmra.mrb[0].mxu0 %v3142
  %v3907 = vpop.f32.mrb[0].mxu0
  %v3908 = vadd.f32 %v3619, %v3907
  %v3909 = vpop.f32.mrb[0].mxu0
  %v3910 = vpop.f32.mrb[0].mxu0
  %v3911 = vadd.f32 %v3622, %v3910
  %v3912 = vpop.f32.mrb[0].mxu0
  %3913 = vmatprep.mubr.bf16.mxu0 %v3148
  %3914 = vmatmul.mubr.bf16.gmra.mrb[0].mxu0 %v3147
  %v3915 = vpop.f32.mrb[0].mxu0
  %v3916 = vadd.f32 %v3627, %v3915
  %v3917 = vpop.f32.mrb[0].mxu0
  %v3918 = vpop.f32.mrb[0].mxu0
  %v3919 = vadd.f32 %v3630, %v3918
  %v3920 = vpop.f32.mrb[0].mxu0
  %3921 = vmatprep.mubr.bf16.mxu0 %v3153
  %3922 = vmatmul.mubr.bf16.gmra.mrb[0].mxu0 %v3152
  %v3923 = vpop.f32.mrb[0].mxu0
  %v3924 = vadd.f32 %v3635, %v3923
  %v3925 = vpop.f32.mrb[0].mxu0
  %v3926 = vpop.f32.mrb[0].mxu0
  %v3927 = vadd.f32 %v3638, %v3926
  %v3928 = vpop.f32.mrb[0].mxu0
  %3929 = vmatprep.mubr.bf16.mxu0 %v3158
  %3930 = vmatmul.mubr.bf16.gmra.mrb[0].mxu0 %v3157
  %v3931 = vpop.f32.mrb[0].mxu0
  %v3932 = vadd.f32 %v3643, %v3931
  %v3933 = vpop.f32.mrb[0].mxu0
  %v3934 = vpop.f32.mrb[0].mxu0
  %v3935 = vadd.f32 %v3646, %v3934
  %v3936 = vpop.f32.mrb[0].mxu0
  %3937 = vmatprep.mubr.bf16.mxu0 %v3163
  %3938 = vmatmul.mubr.bf16.gmra.mrb[0].mxu0 %v3162
  %v3939 = vpop.f32.mrb[0].mxu0
  %v3940 = vadd.f32 %v3651, %v3939
  %v3941 = vpop.f32.mrb[0].mxu0
  %v3942 = vpop.f32.mrb[0].mxu0
  %v3943 = vadd.f32 %v3654, %v3942
  %v3944 = vpop.f32.mrb[0].mxu0
  %3945 = vmatprep.mubr.bf16.mxu0 %v3168
  %3946 = vmatmul.mubr.bf16.gmra.mrb[0].mxu0 %v3167
  %v3947 = vpop.f32.mrb[0].mxu0
  %v3948 = vadd.f32 %v3659, %v3947
  %v3949 = vpop.f32.mrb[0].mxu0
  %v3950 = vpop.f32.mrb[0].mxu0
  %v3951 = vadd.f32 %v3662, %v3950
  %v3952 = vpop.f32.mrb[0].mxu0
  %3953 = vmatprep.mubr.bf16.mxu0 %v3173
  %3954 = vmatmul.mubr.bf16.gmra.mrb[0].mxu0 %v3172
  %v3955 = vpop.f32.mrb[0].mxu0
  %v3956 = vadd.f32 %v3667, %v3955
  %v3957 = vpop.f32.mrb[0].mxu0
  %v3958 = vpop.f32.mrb[0].mxu0
  %v3959 = vadd.f32 %v3670, %v3958
  %v3960 = vpop.f32.mrb[0].mxu0
  %3961 = vmatprep.mubr.bf16.mxu0 %v3178
  %3962 = vmatmul.mubr.bf16.gmra.mrb[0].mxu0 %v3177
  %v3963 = vpop.f32.mrb[0].mxu0
  %v3964 = vadd.f32 %v3675, %v3963
  %v3965 = vpop.f32.mrb[0].mxu0
  %v3966 = vpop.f32.mrb[0].mxu0
  %v3967 = vadd.f32 %v3678, %v3966
  %v3968 = vpop.f32.mrb[0].mxu0
  %3969 = vmatprep.mubr.bf16.mxu0 %v3183
  %3970 = vmatmul.mubr.bf16.gmra.mrb[0].mxu0 %v3182
  %v3971 = vpop.f32.mrb[0].mxu0
  %v3972 = vadd.f32 %v3683, %v3971
  %v3973 = vpop.f32.mrb[0].mxu0
  %v3974 = vpop.f32.mrb[0].mxu0
  %v3975 = vadd.f32 %v3686, %v3974
  %v3976 = vpop.f32.mrb[0].mxu0
  %3977 = vmatprep.mubr.bf16.mxu0 %v3188
  %3978 = vmatmul.mubr.bf16.gmra.mrb[0].mxu0 %v3187
  %v3979 = vpop.f32.mrb[0].mxu0
  %v3980 = vadd.f32 %v3691, %v3979
  %v3981 = vpop.f32.mrb[0].mxu0
  %v3982 = vpop.f32.mrb[0].mxu0
  %v3983 = vadd.f32 %v3694, %v3982
  %v3984 = vpop.f32.mrb[0].mxu0
  %3985 = vmatprep.mubr.bf16.mxu0 %v3193
  %3986 = vmatmul.mubr.bf16.gmra.mrb[0].mxu0 %v3192
  %v3987 = vpop.f32.mrb[0].mxu0
  %v3988 = vadd.f32 %v3699, %v3987
  %v3989 = vpop.f32.mrb[0].mxu0
  %v3990 = vpop.f32.mrb[0].mxu0
  %v3991 = vadd.f32 %v3702, %v3990
  %v3992 = vpop.f32.mrb[0].mxu0
  %3993 = vmatprep.mubr.bf16.mxu0 %v3198
  %3994 = vmatmul.mubr.bf16.gmra.mrb[0].mxu0 %v3197
  %v3995 = vpop.f32.mrb[0].mxu0
  %v3996 = vadd.f32 %v3707, %v3995
  %v3997 = vpop.f32.mrb[0].mxu0
  %v3998 = vpop.f32.mrb[0].mxu0
  %v3999 = vadd.f32 %v3710, %v3998
  %v4000 = vpop.f32.mrb[0].mxu0
  %4001 = vdwg.mxu0
  %4002 = vmatprep.subr.bf16.mxu0 0
  %4003 = vmatpush1.bf16.msra.mxu0 %v1268
  %4004 = vmatprep.subr.bf16.mxu0 0
  %4005 = vmatpush1.bf16.msra.mxu0 %v1269
  %4006 = vmatprep.subr.bf16.mxu0 0
  %4007 = vmatpush1.bf16.msra.mxu0 %v1270
  %4008 = vmatprep.subr.bf16.mxu0 0
  %4009 = vmatpush1.bf16.msra.mxu0 %v1271
  %4010 = vmatprep.subr.bf16.mxu0 0
  %4011 = vmatpush1.bf16.msra.mxu0 0
  %4012 = vmatprep.subr.bf16.mxu0 0
  %4013 = vmatpush1.bf16.msra.mxu0 0
  %4014 = vmatprep.subr.bf16.mxu0 0
  %4015 = vmatpush1.bf16.msra.mxu0 0
  %4016 = vmatprep.subr.bf16.mxu0 0
  %4017 = vmatpush1.bf16.msra.mxu0 0
  %4018 = vmatprep.subr.bf16.mxu0 0
  %4019 = vmatpush1.bf16.msra.mxu0 0
  %4020 = vmatprep.subr.bf16.mxu0 0
  %4021 = vmatpush1.bf16.msra.mxu0 0
  %4022 = vmatprep.subr.bf16.mxu0 0
  %4023 = vmatpush1.bf16.msra.mxu0 0
  %4024 = vmatprep.subr.bf16.mxu0 0
  %4025 = vmatpush1.bf16.msra.mxu0 0
  %4026 = vmatprep.subr.bf16.mxu0 0
  %4027 = vmatpush1.bf16.msra.mxu0 0
  %4028 = vmatprep.subr.bf16.mxu0 0
  %4029 = vmatpush1.bf16.msra.mxu0 0
  %4030 = vmatprep.subr.bf16.mxu0 0
  %4031 = vmatpush1.bf16.msra.mxu0 0
  %4032 = vmatprep.subr.bf16.mxu0 0
  %4033 = vmatpush1.bf16.msra.mxu0 0
  %4034 = vmatprep.mubr.bf16.mxu0 0
  %4035 = vmatmul.mubr.bf16.gmra.mrb[0].mxu0 %v3329
  %v4036 = vpop.f32.mrb[0].mxu0
  %v4037 = vadd.f32 %v3748, %v4036
  %v4038 = vpop.f32.mrb[0].mxu0
  %v4039 = vpop.f32.mrb[0].mxu0
  %v4040 = vadd.f32 %v3751, %v4039
  %v4041 = vpop.f32.mrb[0].mxu0
  %4042 = vmatprep.mubr.bf16.mxu0 0
  %4043 = vmatmul.mubr.bf16.gmra.mrb[0].mxu0 %v3332
  %v4044 = vpop.f32.mrb[0].mxu0
  %v4045 = vadd.f32 %v3756, %v4044
  %v4046 = vpop.f32.mrb[0].mxu0
  %v4047 = vpop.f32.mrb[0].mxu0
  %v4048 = vadd.f32 %v3759, %v4047
  %v4049 = vpop.f32.mrb[0].mxu0
  %4050 = vmatprep.mubr.bf16.mxu0 0
  %4051 = vmatmul.mubr.bf16.gmra.mrb[0].mxu0 %v3335
  %v4052 = vpop.f32.mrb[0].mxu0
  %v4053 = vadd.f32 %v3764, %v4052
  %v4054 = vpop.f32.mrb[0].mxu0
  %v4055 = vpop.f32.mrb[0].mxu0
  %v4056 = vadd.f32 %v3767, %v4055
  %v4057 = vpop.f32.mrb[0].mxu0
  %4058 = vmatprep.mubr.bf16.mxu0 0
  %4059 = vmatmul.mubr.bf16.gmra.mrb[0].mxu0 %v3338
  %v4060 = vpop.f32.mrb[0].mxu0
  %v4061 = vadd.f32 %v3772, %v4060
  %v4062 = vpop.f32.mrb[0].mxu0
  %v4063 = vpop.f32.mrb[0].mxu0
  %v4064 = vadd.f32 %v3775, %v4063
  %v4065 = vpop.f32.mrb[0].mxu0
  %4066 = vmatprep.mubr.bf16.mxu0 0
  %4067 = vmatmul.mubr.bf16.gmra.mrb[0].mxu0 %v3341
  %v4068 = vpop.f32.mrb[0].mxu0
  %v4069 = vadd.f32 %v3780, %v4068
  %v4070 = vpop.f32.mrb[0].mxu0
  %v4071 = vpop.f32.mrb[0].mxu0
  %v4072 = vadd.f32 %v3783, %v4071
  %v4073 = vpop.f32.mrb[0].mxu0
  %4074 = vmatprep.mubr.bf16.mxu0 0
  %4075 = vmatmul.mubr.bf16.gmra.mrb[0].mxu0 %v3344
  %v4076 = vpop.f32.mrb[0].mxu0
  %v4077 = vadd.f32 %v3788, %v4076
  %v4078 = vpop.f32.mrb[0].mxu0
  %v4079 = vpop.f32.mrb[0].mxu0
  %v4080 = vadd.f32 %v3791, %v4079
  %v4081 = vpop.f32.mrb[0].mxu0
  %4082 = vmatprep.mubr.bf16.mxu0 0
  %4083 = vmatmul.mubr.bf16.gmra.mrb[0].mxu0 %v3347
  %v4084 = vpop.f32.mrb[0].mxu0
  %v4085 = vadd.f32 %v3796, %v4084
  %v4086 = vpop.f32.mrb[0].mxu0
  %v4087 = vpop.f32.mrb[0].mxu0
  %v4088 = vadd.f32 %v3799, %v4087
  %v4089 = vpop.f32.mrb[0].mxu0
  %4090 = vmatprep.mubr.bf16.mxu0 0
  %4091 = vmatmul.mubr.bf16.gmra.mrb[0].mxu0 %v3350
  %v4092 = vpop.f32.mrb[0].mxu0
  %v4093 = vadd.f32 %v3804, %v4092
  %v4094 = vpop.f32.mrb[0].mxu0
  %v4095 = vpop.f32.mrb[0].mxu0
  %v4096 = vadd.f32 %v3807, %v4095
  %v4097 = vpop.f32.mrb[0].mxu0
  %4098 = vmatprep.mubr.bf16.mxu0 0
  %4099 = vmatmul.mubr.bf16.gmra.mrb[0].mxu0 %v3353
  %v4100 = vpop.f32.mrb[0].mxu0
  %v4101 = vadd.f32 %v3812, %v4100
  %v4102 = vpop.f32.mrb[0].mxu0
  %v4103 = vpop.f32.mrb[0].mxu0
  %v4104 = vadd.f32 %v3815, %v4103
  %v4105 = vpop.f32.mrb[0].mxu0
  %4106 = vmatprep.mubr.bf16.mxu0 0
  %4107 = vmatmul.mubr.bf16.gmra.mrb[0].mxu0 %v3356
  %v4108 = vpop.f32.mrb[0].mxu0
  %v4109 = vadd.f32 %v3820, %v4108
  %v4110 = vpop.f32.mrb[0].mxu0
  %v4111 = vpop.f32.mrb[0].mxu0
  %v4112 = vadd.f32 %v3823, %v4111
  %v4113 = vpop.f32.mrb[0].mxu0
  %4114 = vmatprep.mubr.bf16.mxu0 0
  %4115 = vmatmul.mubr.bf16.gmra.mrb[0].mxu0 %v3359
  %v4116 = vpop.f32.mrb[0].mxu0
  %v4117 = vadd.f32 %v3828, %v4116
  %v4118 = vpop.f32.mrb[0].mxu0
  %v4119 = vpop.f32.mrb[0].mxu0
  %v4120 = vadd.f32 %v3831, %v4119
  %v4121 = vpop.f32.mrb[0].mxu0
  %4122 = vmatprep.mubr.bf16.mxu0 0
  %4123 = vmatmul.mubr.bf16.gmra.mrb[0].mxu0 %v3362
  %v4124 = vpop.f32.mrb[0].mxu0
  %v4125 = vadd.f32 %v3836, %v4124
  %v4126 = vpop.f32.mrb[0].mxu0
  %v4127 = vpop.f32.mrb[0].mxu0
  %v4128 = vadd.f32 %v3839, %v4127
  %v4129 = vpop.f32.mrb[0].mxu0
  %4130 = vmatprep.mubr.bf16.mxu0 0
  %4131 = vmatmul.mubr.bf16.gmra.mrb[0].mxu0 %v3365
  %v4132 = vpop.f32.mrb[0].mxu0
  %v4133 = vadd.f32 %v3844, %v4132
  %v4134 = vpop.f32.mrb[0].mxu0
  %v4135 = vpop.f32.mrb[0].mxu0
  %v4136 = vadd.f32 %v3847, %v4135
  %v4137 = vpop.f32.mrb[0].mxu0
  %4138 = vmatprep.mubr.bf16.mxu0 0
  %4139 = vmatmul.mubr.bf16.gmra.mrb[0].mxu0 %v3368
  %v4140 = vpop.f32.mrb[0].mxu0
  %v4141 = vadd.f32 %v3852, %v4140
  %v4142 = vpop.f32.mrb[0].mxu0
  %v4143 = vpop.f32.mrb[0].mxu0
  %v4144 = vadd.f32 %v3855, %v4143
  %v4145 = vpop.f32.mrb[0].mxu0
  %4146 = vmatprep.mubr.bf16.mxu0 0
  %4147 = vmatmul.mubr.bf16.gmra.mrb[0].mxu0 %v3371
  %v4148 = vpop.f32.mrb[0].mxu0
  %v4149 = vadd.f32 %v3860, %v4148
  %v4150 = vpop.f32.mrb[0].mxu0
  %v4151 = vpop.f32.mrb[0].mxu0
  %v4152 = vadd.f32 %v3863, %v4151
  %v4153 = vpop.f32.mrb[0].mxu0
  %4154 = vmatprep.mubr.bf16.mxu0 0
  %4155 = vmatmul.mubr.bf16.gmra.mrb[0].mxu0 %v3374
  %v4156 = vpop.f32.mrb[0].mxu0
  %v4157 = vadd.f32 %v3868, %v4156
  %v4158 = vpop.f32.mrb[0].mxu0
  %v4159 = vpop.f32.mrb[0].mxu0
  %v4160 = vadd.f32 %v3871, %v4159
  %v4161 = vpop.f32.mrb[0].mxu0
  %4162 = vmatprep.mubr.bf16.mxu0 0
  %4163 = vmatmul.mubr.bf16.gmra.mrb[0].mxu0 %v3377
  %v4164 = vpop.f32.mrb[0].mxu0
  %v4165 = vadd.f32 %v3876, %v4164
  %v4166 = vpop.f32.mrb[0].mxu0
  %v4167 = vpop.f32.mrb[0].mxu0
  %v4168 = vadd.f32 %v3879, %v4167
  %v4169 = vpop.f32.mrb[0].mxu0
  %4170 = vmatprep.mubr.bf16.mxu0 0
  %4171 = vmatmul.mubr.bf16.gmra.mrb[0].mxu0 %v3380
  %v4172 = vpop.f32.mrb[0].mxu0
  %v4173 = vadd.f32 %v3884, %v4172
  %v4174 = vpop.f32.mrb[0].mxu0
  %v4175 = vpop.f32.mrb[0].mxu0
  %v4176 = vadd.f32 %v3887, %v4175
  %v4177 = vpop.f32.mrb[0].mxu0
  %4178 = vmatprep.mubr.bf16.mxu0 0
  %4179 = vmatmul.mubr.bf16.gmra.mrb[0].mxu0 %v3383
  %v4180 = vpop.f32.mrb[0].mxu0
  %v4181 = vadd.f32 %v3892, %v4180
  %v4182 = vpop.f32.mrb[0].mxu0
  %v4183 = vpop.f32.mrb[0].mxu0
  %v4184 = vadd.f32 %v3895, %v4183
  %v4185 = vpop.f32.mrb[0].mxu0
  %4186 = vmatprep.mubr.bf16.mxu0 0
  %4187 = vmatmul.mubr.bf16.gmra.mrb[0].mxu0 %v3386
  %v4188 = vpop.f32.mrb[0].mxu0
  %v4189 = vadd.f32 %v3900, %v4188
  %v4190 = vpop.f32.mrb[0].mxu0
  %v4191 = vpop.f32.mrb[0].mxu0
  %v4192 = vadd.f32 %v3903, %v4191
  %v4193 = vpop.f32.mrb[0].mxu0
  %4194 = vmatprep.mubr.bf16.mxu0 0
  %4195 = vmatmul.mubr.bf16.gmra.mrb[0].mxu0 %v3389
  %v4196 = vpop.f32.mrb[0].mxu0
  %v4197 = vadd.f32 %v3908, %v4196
  %v4198 = vpop.f32.mrb[0].mxu0
  %v4199 = vpop.f32.mrb[0].mxu0
  %v4200 = vadd.f32 %v3911, %v4199
  %v4201 = vpop.f32.mrb[0].mxu0
  %4202 = vmatprep.mubr.bf16.mxu0 0
  %4203 = vmatmul.mubr.bf16.gmra.mrb[0].mxu0 %v3392
  %v4204 = vpop.f32.mrb[0].mxu0
  %v4205 = vadd.f32 %v3916, %v4204
  %v4206 = vpop.f32.mrb[0].mxu0
  %v4207 = vpop.f32.mrb[0].mxu0
  %v4208 = vadd.f32 %v3919, %v4207
  %v4209 = vpop.f32.mrb[0].mxu0
  %4210 = vmatprep.mubr.bf16.mxu0 0
  %4211 = vmatmul.mubr.bf16.gmra.mrb[0].mxu0 %v3395
  %v4212 = vpop.f32.mrb[0].mxu0
  %v4213 = vadd.f32 %v3924, %v4212
  %v4214 = vpop.f32.mrb[0].mxu0
  %v4215 = vpop.f32.mrb[0].mxu0
  %v4216 = vadd.f32 %v3927, %v4215
  %v4217 = vpop.f32.mrb[0].mxu0
  %4218 = vmatprep.mubr.bf16.mxu0 0
  %4219 = vmatmul.mubr.bf16.gmra.mrb[0].mxu0 %v3398
  %v4220 = vpop.f32.mrb[0].mxu0
  %v4221 = vadd.f32 %v3932, %v4220
  %v4222 = vpop.f32.mrb[0].mxu0
  %v4223 = vpop.f32.mrb[0].mxu0
  %v4224 = vadd.f32 %v3935, %v4223
  %v4225 = vpop.f32.mrb[0].mxu0
  %4226 = vmatprep.mubr.bf16.mxu0 0
  %4227 = vmatmul.mubr.bf16.gmra.mrb[0].mxu0 %v3401
  %v4228 = vpop.f32.mrb[0].mxu0
  %v4229 = vadd.f32 %v3940, %v4228
  %v4230 = vpop.f32.mrb[0].mxu0
  %v4231 = vpop.f32.mrb[0].mxu0
  %v4232 = vadd.f32 %v3943, %v4231
  %v4233 = vpop.f32.mrb[0].mxu0
  %4234 = vmatprep.mubr.bf16.mxu0 0
  %4235 = vmatmul.mubr.bf16.gmra.mrb[0].mxu0 %v3404
  %v4236 = vpop.f32.mrb[0].mxu0
  %v4237 = vadd.f32 %v3948, %v4236
  %v4238 = vpop.f32.mrb[0].mxu0
  %v4239 = vpop.f32.mrb[0].mxu0
  %v4240 = vadd.f32 %v3951, %v4239
  %v4241 = vpop.f32.mrb[0].mxu0
  %4242 = vmatprep.mubr.bf16.mxu0 0
  %4243 = vmatmul.mubr.bf16.gmra.mrb[0].mxu0 %v3407
  %v4244 = vpop.f32.mrb[0].mxu0
  %v4245 = vadd.f32 %v3956, %v4244
  %v4246 = vpop.f32.mrb[0].mxu0
  %v4247 = vpop.f32.mrb[0].mxu0
  %v4248 = vadd.f32 %v3959, %v4247
  %v4249 = vpop.f32.mrb[0].mxu0
  %4250 = vmatprep.mubr.bf16.mxu0 0
  %4251 = vmatmul.mubr.bf16.gmra.mrb[0].mxu0 %v3410
  %v4252 = vpop.f32.mrb[0].mxu0
  %v4253 = vadd.f32 %v3964, %v4252
  %v4254 = vpop.f32.mrb[0].mxu0
  %v4255 = vpop.f32.mrb[0].mxu0
  %v4256 = vadd.f32 %v3967, %v4255
  %v4257 = vpop.f32.mrb[0].mxu0
  %4258 = vmatprep.mubr.bf16.mxu0 0
  %4259 = vmatmul.mubr.bf16.gmra.mrb[0].mxu0 %v3413
  %v4260 = vpop.f32.mrb[0].mxu0
  %v4261 = vadd.f32 %v3972, %v4260
  %v4262 = vpop.f32.mrb[0].mxu0
  %v4263 = vpop.f32.mrb[0].mxu0
  %v4264 = vadd.f32 %v3975, %v4263
  %v4265 = vpop.f32.mrb[0].mxu0
  %4266 = vmatprep.mubr.bf16.mxu0 0
  %4267 = vmatmul.mubr.bf16.gmra.mrb[0].mxu0 %v3416
  %v4268 = vpop.f32.mrb[0].mxu0
  %v4269 = vadd.f32 %v3980, %v4268
  %v4270 = vpop.f32.mrb[0].mxu0
  %v4271 = vpop.f32.mrb[0].mxu0
  %v4272 = vadd.f32 %v3983, %v4271
  %v4273 = vpop.f32.mrb[0].mxu0
  %4274 = vmatprep.mubr.bf16.mxu0 0
  %4275 = vmatmul.mubr.bf16.gmra.mrb[0].mxu0 %v3419
  %v4276 = vpop.f32.mrb[0].mxu0
  %v4277 = vadd.f32 %v3988, %v4276
  %v4278 = vpop.f32.mrb[0].mxu0
  %v4279 = vpop.f32.mrb[0].mxu0
  %v4280 = vadd.f32 %v3991, %v4279
  %v4281 = vpop.f32.mrb[0].mxu0
  %4282 = vmatprep.mubr.bf16.mxu0 0
  %4283 = vmatmul.mubr.bf16.gmra.mrb[0].mxu0 %v3422
  %v4284 = vpop.f32.mrb[0].mxu0
  %v4285 = vadd.f32 %v3996, %v4284
  %v4286 = vpop.f32.mrb[0].mxu0
  %v4287 = vpop.f32.mrb[0].mxu0
  %v4288 = vadd.f32 %v3999, %v4287
  %v4289 = vpop.f32.mrb[0].mxu0
  %4290 = vdwg.mxu0
  %v4291 = vmax.f32 %v4037, 0.0
  %v4292 = vmax.f32 %v4040, 0.0
  %v4293 = vmax.f32 %v4045, 0.0
  %v4294 = vmax.f32 %v4048, 0.0
  %v4295 = vmax.f32 %v4053, 0.0
  %v4296 = vmax.f32 %v4056, 0.0
  %v4297 = vmax.f32 %v4061, 0.0
  %v4298 = vmax.f32 %v4064, 0.0
  %v4299 = vmax.f32 %v4069, 0.0
  %v4300 = vmax.f32 %v4072, 0.0
  %v4301 = vmax.f32 %v4077, 0.0
  %v4302 = vmax.f32 %v4080, 0.0
  %v4303 = vmax.f32 %v4085, 0.0
  %v4304 = vmax.f32 %v4088, 0.0
  %v4305 = vmax.f32 %v4093, 0.0
  %v4306 = vmax.f32 %v4096, 0.0
  %v4307 = vmax.f32 %v4101, 0.0
  %v4308 = vmax.f32 %v4104, 0.0
  %v4309 = vmax.f32 %v4109, 0.0
  %v4310 = vmax.f32 %v4112, 0.0
  %v4311 = vmax.f32 %v4117, 0.0
  %v4312 = vmax.f32 %v4120, 0.0
  %v4313 = vmax.f32 %v4125, 0.0
  %v4314 = vmax.f32 %v4128, 0.0
  %v4315 = vmax.f32 %v4133, 0.0
  %v4316 = vmax.f32 %v4136, 0.0
  %v4317 = vmax.f32 %v4141, 0.0
  %v4318 = vmax.f32 %v4144, 0.0
  %v4319 = vmax.f32 %v4149, 0.0
  %v4320 = vmax.f32 %v4152, 0.0
  %v4321 = vmax.f32 %v4157, 0.0
  %v4322 = vmax.f32 %v4160, 0.0
  %v4323 = vmax.f32 %v4165, 0.0
  %v4324 = vmax.f32 %v4168, 0.0
  %v4325 = vmax.f32 %v4173, 0.0
  %v4326 = vmax.f32 %v4176, 0.0
  %v4327 = vmax.f32 %v4181, 0.0
  %v4328 = vmax.f32 %v4184, 0.0
  %v4329 = vmax.f32 %v4189, 0.0
  %v4330 = vmax.f32 %v4192, 0.0
  %v4331 = vmax.f32 %v4197, 0.0
  %v4332 = vmax.f32 %v4200, 0.0
  %v4333 = vmax.f32 %v4205, 0.0
  %v4334 = vmax.f32 %v4208, 0.0
  %v4335 = vmax.f32 %v4213, 0.0
  %v4336 = vmax.f32 %v4216, 0.0
  %v4337 = vmax.f32 %v4221, 0.0
  %v4338 = vmax.f32 %v4224, 0.0
  %v4339 = vmax.f32 %v4229, 0.0
  %v4340 = vmax.f32 %v4232, 0.0
  %v4341 = vmax.f32 %v4237, 0.0
  %v4342 = vmax.f32 %v4240, 0.0
  %v4343 = vmax.f32 %v4245, 0.0
  %v4344 = vmax.f32 %v4248, 0.0
  %v4345 = vmax.f32 %v4253, 0.0
  %v4346 = vmax.f32 %v4256, 0.0
  %v4347 = vmax.f32 %v4261, 0.0
  %v4348 = vmax.f32 %v4264, 0.0
  %v4349 = vmax.f32 %v4269, 0.0
  %v4350 = vmax.f32 %v4272, 0.0
  %v4351 = vmax.f32 %v4277, 0.0
  %v4352 = vmax.f32 %v4280, 0.0
  %v4353 = vmax.f32 %v4285, 0.0
  %v4354 = vmax.f32 %v4288, 0.0
  %v4355 = vmul.f32 %v2272, %v2272
  %v4356 = vmul.f32 %v2273, %v2273
  %v4357 = vmul.f32 %v2274, %v2274
  %v4358 = vmul.f32 %v2275, %v2275
  %v4359 = vmul.f32 %v2276, %v2276
  %v4360 = vmul.f32 %v2277, %v2277
  %v4361 = vmul.f32 %v2278, %v2278
  %v4362 = vmul.f32 %v2279, %v2279
  %v4363 = vmul.f32 %v2280, %v2280
  %v4364 = vmul.f32 %v2281, %v2281
  %v4365 = vmul.f32 %v2282, %v2282
  %v4366 = vmul.f32 %v2283, %v2283
  %v4367 = vmul.f32 %v2284, %v2284
  %v4368 = vmul.f32 %v2285, %v2285
  %v4369 = vmul.f32 %v2286, %v2286
  %v4370 = vmul.f32 %v2287, %v2287
  %v4371 = vmul.f32 %v2288, %v2288
  %v4372 = vmul.f32 %v2289, %v2289
  %v4373 = vmul.f32 %v2290, %v2290
  %v4374 = vmul.f32 %v2291, %v2291
  %v4375 = vmul.f32 %v2292, %v2292
  %v4376 = vmul.f32 %v2293, %v2293
  %v4377 = vmul.f32 %v2294, %v2294
  %v4378 = vmul.f32 %v2295, %v2295
  %v4379 = vmul.f32 %v2296, %v2296
  %v4380 = vmul.f32 %v2297, %v2297
  %v4381 = vmul.f32 %v2298, %v2298
  %v4382 = vmul.f32 %v2299, %v2299
  %v4383 = vmul.f32 %v2300, %v2300
  %v4384 = vmul.f32 %v2301, %v2301
  %v4385 = vmul.f32 %v2302, %v2302
  %v4386 = vmul.f32 %v2303, %v2303
  %v4387 = vmul.f32 %v2304, %v2304
  %v4388 = vmul.f32 %v2305, %v2305
  %v4389 = vmul.f32 %v2306, %v2306
  %v4390 = vmul.f32 %v2307, %v2307
  %v4391 = vmul.f32 %v2308, %v2308
  %v4392 = vmul.f32 %v2309, %v2309
  %v4393 = vmul.f32 %v2310, %v2310
  %v4394 = vmul.f32 %v2311, %v2311
  %v4395 = vmul.f32 %v2312, %v2312
  %v4396 = vmul.f32 %v2313, %v2313
  %v4397 = vmul.f32 %v2314, %v2314
  %v4398 = vmul.f32 %v2315, %v2315
  %v4399 = vmul.f32 %v2316, %v2316
  %v4400 = vmul.f32 %v2317, %v2317
  %v4401 = vmul.f32 %v2318, %v2318
  %v4402 = vmul.f32 %v2319, %v2319
  %v4403 = vmul.f32 %v2320, %v2320
  %v4404 = vmul.f32 %v2321, %v2321
  %v4405 = vmul.f32 %v2322, %v2322
  %v4406 = vmul.f32 %v2323, %v2323
  %v4407 = vmul.f32 %v2324, %v2324
  %v4408 = vmul.f32 %v2325, %v2325
  %v4409 = vmul.f32 %v2326, %v2326
  %v4410 = vmul.f32 %v2327, %v2327
  %v4411 = vmul.f32 %v2328, %v2328
  %v4412 = vmul.f32 %v2329, %v2329
  %v4413 = vmul.f32 %v2330, %v2330
  %v4414 = vmul.f32 %v2331, %v2331
  %v4415 = vmul.f32 %v2332, %v2332
  %v4416 = vmul.f32 %v2333, %v2333
  %v4417 = vmul.f32 %v2334, %v2334
  %v4418 = vmul.f32 %v2335, %v2335
  %v4419 = vsel %vm1308, %v4355, 0.0
  %4420 = vadd.xlane.f32.xlu0 %v4419
  %v4421 = vpop.xlane.xlu0 %4420
  %v4422 = vsel %vm1308, %v4356, 0.0
  %4423 = vadd.xlane.f32.xlu0 %v4422
  %v4424 = vpop.xlane.xlu0 %4423
  %v4425 = vsel %vm1308, %v4357, 0.0
  %4426 = vadd.xlane.f32.xlu0 %v4425
  %v4427 = vpop.xlane.xlu0 %4426
  %v4428 = vsel %vm1308, %v4358, 0.0
  %4429 = vadd.xlane.f32.xlu0 %v4428
  %v4430 = vpop.xlane.xlu0 %4429
  %v4431 = vsel %vm1308, %v4359, 0.0
  %4432 = vadd.xlane.f32.xlu0 %v4431
  %v4433 = vpop.xlane.xlu0 %4432
  %v4434 = vsel %vm1308, %v4360, 0.0
  %4435 = vadd.xlane.f32.xlu0 %v4434
  %v4436 = vpop.xlane.xlu0 %4435
  %v4437 = vsel %vm1308, %v4361, 0.0
  %4438 = vadd.xlane.f32.xlu0 %v4437
  %v4439 = vpop.xlane.xlu0 %4438
  %v4440 = vsel %vm1308, %v4362, 0.0
  %4441 = vadd.xlane.f32.xlu0 %v4440
  %v4442 = vpop.xlane.xlu0 %4441
  %v4443 = vsel %vm1308, %v4363, 0.0
  %4444 = vadd.xlane.f32.xlu0 %v4443
  %v4445 = vpop.xlane.xlu0 %4444
  %v4446 = vsel %vm1308, %v4364, 0.0
  %4447 = vadd.xlane.f32.xlu0 %v4446
  %v4448 = vpop.xlane.xlu0 %4447
  %v4449 = vsel %vm1308, %v4365, 0.0
  %4450 = vadd.xlane.f32.xlu0 %v4449
  %v4451 = vpop.xlane.xlu0 %4450
  %v4452 = vsel %vm1308, %v4366, 0.0
  %4453 = vadd.xlane.f32.xlu0 %v4452
  %v4454 = vpop.xlane.xlu0 %4453
  %v4455 = vsel %vm1308, %v4367, 0.0
  %4456 = vadd.xlane.f32.xlu0 %v4455
  %v4457 = vpop.xlane.xlu0 %4456
  %v4458 = vsel %vm1308, %v4368, 0.0
  %4459 = vadd.xlane.f32.xlu0 %v4458
  %v4460 = vpop.xlane.xlu0 %4459
  %v4461 = vsel %vm1308, %v4369, 0.0
  %4462 = vadd.xlane.f32.xlu0 %v4461
  %v4463 = vpop.xlane.xlu0 %4462
  %v4464 = vsel %vm1308, %v4370, 0.0
  %4465 = vadd.xlane.f32.xlu0 %v4464
  %v4466 = vpop.xlane.xlu0 %4465
  %v4467 = vsel %vm1308, %v4371, 0.0
  %4468 = vadd.xlane.f32.xlu0 %v4467
  %v4469 = vpop.xlane.xlu0 %4468
  %v4470 = vsel %vm1308, %v4372, 0.0
  %4471 = vadd.xlane.f32.xlu0 %v4470
  %v4472 = vpop.xlane.xlu0 %4471
  %v4473 = vsel %vm1308, %v4373, 0.0
  %4474 = vadd.xlane.f32.xlu0 %v4473
  %v4475 = vpop.xlane.xlu0 %4474
  %v4476 = vsel %vm1308, %v4374, 0.0
  %4477 = vadd.xlane.f32.xlu0 %v4476
  %v4478 = vpop.xlane.xlu0 %4477
  %v4479 = vsel %vm1308, %v4375, 0.0
  %4480 = vadd.xlane.f32.xlu0 %v4479
  %v4481 = vpop.xlane.xlu0 %4480
  %v4482 = vsel %vm1308, %v4376, 0.0
  %4483 = vadd.xlane.f32.xlu0 %v4482
  %v4484 = vpop.xlane.xlu0 %4483
  %v4485 = vsel %vm1308, %v4377, 0.0
  %4486 = vadd.xlane.f32.xlu0 %v4485
  %v4487 = vpop.xlane.xlu0 %4486
  %v4488 = vsel %vm1308, %v4378, 0.0
  %4489 = vadd.xlane.f32.xlu0 %v4488
  %v4490 = vpop.xlane.xlu0 %4489
  %v4491 = vsel %vm1308, %v4379, 0.0
  %4492 = vadd.xlane.f32.xlu0 %v4491
  %v4493 = vpop.xlane.xlu0 %4492
  %v4494 = vsel %vm1308, %v4380, 0.0
  %4495 = vadd.xlane.f32.xlu0 %v4494
  %v4496 = vpop.xlane.xlu0 %4495
  %v4497 = vsel %vm1308, %v4381, 0.0
  %4498 = vadd.xlane.f32.xlu0 %v4497
  %v4499 = vpop.xlane.xlu0 %4498
  %v4500 = vsel %vm1308, %v4382, 0.0
  %4501 = vadd.xlane.f32.xlu0 %v4500
  %v4502 = vpop.xlane.xlu0 %4501
  %v4503 = vsel %vm1308, %v4383, 0.0
  %4504 = vadd.xlane.f32.xlu0 %v4503
  %v4505 = vpop.xlane.xlu0 %4504
  %v4506 = vsel %vm1308, %v4384, 0.0
  %4507 = vadd.xlane.f32.xlu0 %v4506
  %v4508 = vpop.xlane.xlu0 %4507
  %v4509 = vsel %vm1308, %v4385, 0.0
  %4510 = vadd.xlane.f32.xlu0 %v4509
  %v4511 = vpop.xlane.xlu0 %4510
  %v4512 = vsel %vm1308, %v4386, 0.0
  %4513 = vadd.xlane.f32.xlu0 %v4512
  %v4514 = vpop.xlane.xlu0 %4513
  %v4515 = vsel %vm1308, %v4387, 0.0
  %4516 = vadd.xlane.f32.xlu0 %v4515
  %v4517 = vpop.xlane.xlu0 %4516
  %v4518 = vsel %vm1308, %v4388, 0.0
  %4519 = vadd.xlane.f32.xlu0 %v4518
  %v4520 = vpop.xlane.xlu0 %4519
  %v4521 = vsel %vm1308, %v4389, 0.0
  %4522 = vadd.xlane.f32.xlu0 %v4521
  %v4523 = vpop.xlane.xlu0 %4522
  %v4524 = vsel %vm1308, %v4390, 0.0
  %4525 = vadd.xlane.f32.xlu0 %v4524
  %v4526 = vpop.xlane.xlu0 %4525
  %v4527 = vsel %vm1308, %v4391, 0.0
  %4528 = vadd.xlane.f32.xlu0 %v4527
  %v4529 = vpop.xlane.xlu0 %4528
  %v4530 = vsel %vm1308, %v4392, 0.0
  %4531 = vadd.xlane.f32.xlu0 %v4530
  %v4532 = vpop.xlane.xlu0 %4531
  %v4533 = vsel %vm1308, %v4393, 0.0
  %4534 = vadd.xlane.f32.xlu0 %v4533
  %v4535 = vpop.xlane.xlu0 %4534
  %v4536 = vsel %vm1308, %v4394, 0.0
  %4537 = vadd.xlane.f32.xlu0 %v4536
  %v4538 = vpop.xlane.xlu0 %4537
  %v4539 = vsel %vm1308, %v4395, 0.0
  %4540 = vadd.xlane.f32.xlu0 %v4539
  %v4541 = vpop.xlane.xlu0 %4540
  %v4542 = vsel %vm1308, %v4396, 0.0
  %4543 = vadd.xlane.f32.xlu0 %v4542
  %v4544 = vpop.xlane.xlu0 %4543
  %v4545 = vsel %vm1308, %v4397, 0.0
  %4546 = vadd.xlane.f32.xlu0 %v4545
  %v4547 = vpop.xlane.xlu0 %4546
  %v4548 = vsel %vm1308, %v4398, 0.0
  %4549 = vadd.xlane.f32.xlu0 %v4548
  %v4550 = vpop.xlane.xlu0 %4549
  %v4551 = vsel %vm1308, %v4399, 0.0
  %4552 = vadd.xlane.f32.xlu0 %v4551
  %v4553 = vpop.xlane.xlu0 %4552
  %v4554 = vsel %vm1308, %v4400, 0.0
  %4555 = vadd.xlane.f32.xlu0 %v4554
  %v4556 = vpop.xlane.xlu0 %4555
  %v4557 = vsel %vm1308, %v4401, 0.0
  %4558 = vadd.xlane.f32.xlu0 %v4557
  %v4559 = vpop.xlane.xlu0 %4558
  %v4560 = vsel %vm1308, %v4402, 0.0
  %4561 = vadd.xlane.f32.xlu0 %v4560
  %v4562 = vpop.xlane.xlu0 %4561
  %v4563 = vsel %vm1308, %v4403, 0.0
  %4564 = vadd.xlane.f32.xlu0 %v4563
  %v4565 = vpop.xlane.xlu0 %4564
  %v4566 = vsel %vm1308, %v4404, 0.0
  %4567 = vadd.xlane.f32.xlu0 %v4566
  %v4568 = vpop.xlane.xlu0 %4567
  %v4569 = vsel %vm1308, %v4405, 0.0
  %4570 = vadd.xlane.f32.xlu0 %v4569
  %v4571 = vpop.xlane.xlu0 %4570
  %v4572 = vsel %vm1308, %v4406, 0.0
  %4573 = vadd.xlane.f32.xlu0 %v4572
  %v4574 = vpop.xlane.xlu0 %4573
  %v4575 = vsel %vm1308, %v4407, 0.0
  %4576 = vadd.xlane.f32.xlu0 %v4575
  %v4577 = vpop.xlane.xlu0 %4576
  %v4578 = vsel %vm1308, %v4408, 0.0
  %4579 = vadd.xlane.f32.xlu0 %v4578
  %v4580 = vpop.xlane.xlu0 %4579
  %v4581 = vsel %vm1308, %v4409, 0.0
  %4582 = vadd.xlane.f32.xlu0 %v4581
  %v4583 = vpop.xlane.xlu0 %4582
  %v4584 = vsel %vm1308, %v4410, 0.0
  %4585 = vadd.xlane.f32.xlu0 %v4584
  %v4586 = vpop.xlane.xlu0 %4585
  %v4587 = vsel %vm1308, %v4411, 0.0
  %4588 = vadd.xlane.f32.xlu0 %v4587
  %v4589 = vpop.xlane.xlu0 %4588
  %v4590 = vsel %vm1308, %v4412, 0.0
  %4591 = vadd.xlane.f32.xlu0 %v4590
  %v4592 = vpop.xlane.xlu0 %4591
  %v4593 = vsel %vm1308, %v4413, 0.0
  %4594 = vadd.xlane.f32.xlu0 %v4593
  %v4595 = vpop.xlane.xlu0 %4594
  %v4596 = vsel %vm1308, %v4414, 0.0
  %4597 = vadd.xlane.f32.xlu0 %v4596
  %v4598 = vpop.xlane.xlu0 %4597
  %v4599 = vsel %vm1308, %v4415, 0.0
  %4600 = vadd.xlane.f32.xlu0 %v4599
  %v4601 = vpop.xlane.xlu0 %4600
  %v4602 = vsel %vm1308, %v4416, 0.0
  %4603 = vadd.xlane.f32.xlu0 %v4602
  %v4604 = vpop.xlane.xlu0 %4603
  %v4605 = vsel %vm1308, %v4417, 0.0
  %4606 = vadd.xlane.f32.xlu0 %v4605
  %v4607 = vpop.xlane.xlu0 %4606
  %v4608 = vsel %vm1308, %v4418, 0.0
  %4609 = vadd.xlane.f32.xlu0 %v4608
  %v4610 = vpop.xlane.xlu0 %4609
  %v4611 = vrsqrt.pop %v4421
  %v4612 = vmul.f32 %v4421, %v4611
  %vm4613 = vcmp.eq.f32.partialorder %v4421, inf
  %v4614 = vsel %vm4613, %v4421, %v4612
  %vm4615 = vcmp.eq.f32.partialorder %v4421, 0.0
  %v4616 = vand.u32 %v4421, 2147483648
  %v4617 = vsel %vm4615, %v4616, %v4614
  %v4618 = vrsqrt.pop %v4424
  %v4619 = vmul.f32 %v4424, %v4618
  %vm4620 = vcmp.eq.f32.partialorder %v4424, inf
  %v4621 = vsel %vm4620, %v4424, %v4619
  %vm4622 = vcmp.eq.f32.partialorder %v4424, 0.0
  %v4623 = vand.u32 %v4424, 2147483648
  %v4624 = vsel %vm4622, %v4623, %v4621
  %v4625 = vrsqrt.pop %v4427
  %v4626 = vmul.f32 %v4427, %v4625
  %vm4627 = vcmp.eq.f32.partialorder %v4427, inf
  %v4628 = vsel %vm4627, %v4427, %v4626
  %vm4629 = vcmp.eq.f32.partialorder %v4427, 0.0
  %v4630 = vand.u32 %v4427, 2147483648
  %v4631 = vsel %vm4629, %v4630, %v4628
  %v4632 = vrsqrt.pop %v4430
  %v4633 = vmul.f32 %v4430, %v4632
  %vm4634 = vcmp.eq.f32.partialorder %v4430, inf
  %v4635 = vsel %vm4634, %v4430, %v4633
  %vm4636 = vcmp.eq.f32.partialorder %v4430, 0.0
  %v4637 = vand.u32 %v4430, 2147483648
  %v4638 = vsel %vm4636, %v4637, %v4635
  %v4639 = vrsqrt.pop %v4433
  %v4640 = vmul.f32 %v4433, %v4639
  %vm4641 = vcmp.eq.f32.partialorder %v4433, inf
  %v4642 = vsel %vm4641, %v4433, %v4640
  %vm4643 = vcmp.eq.f32.partialorder %v4433, 0.0
  %v4644 = vand.u32 %v4433, 2147483648
  %v4645 = vsel %vm4643, %v4644, %v4642
  %v4646 = vrsqrt.pop %v4436
  %v4647 = vmul.f32 %v4436, %v4646
  %vm4648 = vcmp.eq.f32.partialorder %v4436, inf
  %v4649 = vsel %vm4648, %v4436, %v4647
  %vm4650 = vcmp.eq.f32.partialorder %v4436, 0.0
  %v4651 = vand.u32 %v4436, 2147483648
  %v4652 = vsel %vm4650, %v4651, %v4649
  %v4653 = vrsqrt.pop %v4439
  %v4654 = vmul.f32 %v4439, %v4653
  %vm4655 = vcmp.eq.f32.partialorder %v4439, inf
  %v4656 = vsel %vm4655, %v4439, %v4654
  %vm4657 = vcmp.eq.f32.partialorder %v4439, 0.0
  %v4658 = vand.u32 %v4439, 2147483648
  %v4659 = vsel %vm4657, %v4658, %v4656
  %v4660 = vrsqrt.pop %v4442
  %v4661 = vmul.f32 %v4442, %v4660
  %vm4662 = vcmp.eq.f32.partialorder %v4442, inf
  %v4663 = vsel %vm4662, %v4442, %v4661
  %vm4664 = vcmp.eq.f32.partialorder %v4442, 0.0
  %v4665 = vand.u32 %v4442, 2147483648
  %v4666 = vsel %vm4664, %v4665, %v4663
  %v4667 = vrsqrt.pop %v4445
  %v4668 = vmul.f32 %v4445, %v4667
  %vm4669 = vcmp.eq.f32.partialorder %v4445, inf
  %v4670 = vsel %vm4669, %v4445, %v4668
  %vm4671 = vcmp.eq.f32.partialorder %v4445, 0.0
  %v4672 = vand.u32 %v4445, 2147483648
  %v4673 = vsel %vm4671, %v4672, %v4670
  %v4674 = vrsqrt.pop %v4448
  %v4675 = vmul.f32 %v4448, %v4674
  %vm4676 = vcmp.eq.f32.partialorder %v4448, inf
  %v4677 = vsel %vm4676, %v4448, %v4675
  %vm4678 = vcmp.eq.f32.partialorder %v4448, 0.0
  %v4679 = vand.u32 %v4448, 2147483648
  %v4680 = vsel %vm4678, %v4679, %v4677
  %v4681 = vrsqrt.pop %v4451
  %v4682 = vmul.f32 %v4451, %v4681
  %vm4683 = vcmp.eq.f32.partialorder %v4451, inf
  %v4684 = vsel %vm4683, %v4451, %v4682
  %vm4685 = vcmp.eq.f32.partialorder %v4451, 0.0
  %v4686 = vand.u32 %v4451, 2147483648
  %v4687 = vsel %vm4685, %v4686, %v4684
  %v4688 = vrsqrt.pop %v4454
  %v4689 = vmul.f32 %v4454, %v4688
  %vm4690 = vcmp.eq.f32.partialorder %v4454, inf
  %v4691 = vsel %vm4690, %v4454, %v4689
  %vm4692 = vcmp.eq.f32.partialorder %v4454, 0.0
  %v4693 = vand.u32 %v4454, 2147483648
  %v4694 = vsel %vm4692, %v4693, %v4691
  %v4695 = vrsqrt.pop %v4457
  %v4696 = vmul.f32 %v4457, %v4695
  %vm4697 = vcmp.eq.f32.partialorder %v4457, inf
  %v4698 = vsel %vm4697, %v4457, %v4696
  %vm4699 = vcmp.eq.f32.partialorder %v4457, 0.0
  %v4700 = vand.u32 %v4457, 2147483648
  %v4701 = vsel %vm4699, %v4700, %v4698
  %v4702 = vrsqrt.pop %v4460
  %v4703 = vmul.f32 %v4460, %v4702
  %vm4704 = vcmp.eq.f32.partialorder %v4460, inf
  %v4705 = vsel %vm4704, %v4460, %v4703
  %vm4706 = vcmp.eq.f32.partialorder %v4460, 0.0
  %v4707 = vand.u32 %v4460, 2147483648
  %v4708 = vsel %vm4706, %v4707, %v4705
  %v4709 = vrsqrt.pop %v4463
  %v4710 = vmul.f32 %v4463, %v4709
  %vm4711 = vcmp.eq.f32.partialorder %v4463, inf
  %v4712 = vsel %vm4711, %v4463, %v4710
  %vm4713 = vcmp.eq.f32.partialorder %v4463, 0.0
  %v4714 = vand.u32 %v4463, 2147483648
  %v4715 = vsel %vm4713, %v4714, %v4712
  %v4716 = vrsqrt.pop %v4466
  %v4717 = vmul.f32 %v4466, %v4716
  %vm4718 = vcmp.eq.f32.partialorder %v4466, inf
  %v4719 = vsel %vm4718, %v4466, %v4717
  %vm4720 = vcmp.eq.f32.partialorder %v4466, 0.0
  %v4721 = vand.u32 %v4466, 2147483648
  %v4722 = vsel %vm4720, %v4721, %v4719
  %v4723 = vrsqrt.pop %v4469
  %v4724 = vmul.f32 %v4469, %v4723
  %vm4725 = vcmp.eq.f32.partialorder %v4469, inf
  %v4726 = vsel %vm4725, %v4469, %v4724
  %vm4727 = vcmp.eq.f32.partialorder %v4469, 0.0
  %v4728 = vand.u32 %v4469, 2147483648
  %v4729 = vsel %vm4727, %v4728, %v4726
  %v4730 = vrsqrt.pop %v4472
  %v4731 = vmul.f32 %v4472, %v4730
  %vm4732 = vcmp.eq.f32.partialorder %v4472, inf
  %v4733 = vsel %vm4732, %v4472, %v4731
  %vm4734 = vcmp.eq.f32.partialorder %v4472, 0.0
  %v4735 = vand.u32 %v4472, 2147483648
  %v4736 = vsel %vm4734, %v4735, %v4733
  %v4737 = vrsqrt.pop %v4475
  %v4738 = vmul.f32 %v4475, %v4737
  %vm4739 = vcmp.eq.f32.partialorder %v4475, inf
  %v4740 = vsel %vm4739, %v4475, %v4738
  %vm4741 = vcmp.eq.f32.partialorder %v4475, 0.0
  %v4742 = vand.u32 %v4475, 2147483648
  %v4743 = vsel %vm4741, %v4742, %v4740
  %v4744 = vrsqrt.pop %v4478
  %v4745 = vmul.f32 %v4478, %v4744
  %vm4746 = vcmp.eq.f32.partialorder %v4478, inf
  %v4747 = vsel %vm4746, %v4478, %v4745
  %vm4748 = vcmp.eq.f32.partialorder %v4478, 0.0
  %v4749 = vand.u32 %v4478, 2147483648
  %v4750 = vsel %vm4748, %v4749, %v4747
  %v4751 = vrsqrt.pop %v4481
  %v4752 = vmul.f32 %v4481, %v4751
  %vm4753 = vcmp.eq.f32.partialorder %v4481, inf
  %v4754 = vsel %vm4753, %v4481, %v4752
  %vm4755 = vcmp.eq.f32.partialorder %v4481, 0.0
  %v4756 = vand.u32 %v4481, 2147483648
  %v4757 = vsel %vm4755, %v4756, %v4754
  %v4758 = vrsqrt.pop %v4484
  %v4759 = vmul.f32 %v4484, %v4758
  %vm4760 = vcmp.eq.f32.partialorder %v4484, inf
  %v4761 = vsel %vm4760, %v4484, %v4759
  %vm4762 = vcmp.eq.f32.partialorder %v4484, 0.0
  %v4763 = vand.u32 %v4484, 2147483648
  %v4764 = vsel %vm4762, %v4763, %v4761
  %v4765 = vrsqrt.pop %v4487
  %v4766 = vmul.f32 %v4487, %v4765
  %vm4767 = vcmp.eq.f32.partialorder %v4487, inf
  %v4768 = vsel %vm4767, %v4487, %v4766
  %vm4769 = vcmp.eq.f32.partialorder %v4487, 0.0
  %v4770 = vand.u32 %v4487, 2147483648
  %v4771 = vsel %vm4769, %v4770, %v4768
  %v4772 = vrsqrt.pop %v4490
  %v4773 = vmul.f32 %v4490, %v4772
  %vm4774 = vcmp.eq.f32.partialorder %v4490, inf
  %v4775 = vsel %vm4774, %v4490, %v4773
  %vm4776 = vcmp.eq.f32.partialorder %v4490, 0.0
  %v4777 = vand.u32 %v4490, 2147483648
  %v4778 = vsel %vm4776, %v4777, %v4775
  %v4779 = vrsqrt.pop %v4493
  %v4780 = vmul.f32 %v4493, %v4779
  %vm4781 = vcmp.eq.f32.partialorder %v4493, inf
  %v4782 = vsel %vm4781, %v4493, %v4780
  %vm4783 = vcmp.eq.f32.partialorder %v4493, 0.0
  %v4784 = vand.u32 %v4493, 2147483648
  %v4785 = vsel %vm4783, %v4784, %v4782
  %v4786 = vrsqrt.pop %v4496
  %v4787 = vmul.f32 %v4496, %v4786
  %vm4788 = vcmp.eq.f32.partialorder %v4496, inf
  %v4789 = vsel %vm4788, %v4496, %v4787
  %vm4790 = vcmp.eq.f32.partialorder %v4496, 0.0
  %v4791 = vand.u32 %v4496, 2147483648
  %v4792 = vsel %vm4790, %v4791, %v4789
  %v4793 = vrsqrt.pop %v4499
  %v4794 = vmul.f32 %v4499, %v4793
  %vm4795 = vcmp.eq.f32.partialorder %v4499, inf
  %v4796 = vsel %vm4795, %v4499, %v4794
  %vm4797 = vcmp.eq.f32.partialorder %v4499, 0.0
  %v4798 = vand.u32 %v4499, 2147483648
  %v4799 = vsel %vm4797, %v4798, %v4796
  %v4800 = vrsqrt.pop %v4502
  %v4801 = vmul.f32 %v4502, %v4800
  %vm4802 = vcmp.eq.f32.partialorder %v4502, inf
  %v4803 = vsel %vm4802, %v4502, %v4801
  %vm4804 = vcmp.eq.f32.partialorder %v4502, 0.0
  %v4805 = vand.u32 %v4502, 2147483648
  %v4806 = vsel %vm4804, %v4805, %v4803
  %v4807 = vrsqrt.pop %v4505
  %v4808 = vmul.f32 %v4505, %v4807
  %vm4809 = vcmp.eq.f32.partialorder %v4505, inf
  %v4810 = vsel %vm4809, %v4505, %v4808
  %vm4811 = vcmp.eq.f32.partialorder %v4505, 0.0
  %v4812 = vand.u32 %v4505, 2147483648
  %v4813 = vsel %vm4811, %v4812, %v4810
  %v4814 = vrsqrt.pop %v4508
  %v4815 = vmul.f32 %v4508, %v4814
  %vm4816 = vcmp.eq.f32.partialorder %v4508, inf
  %v4817 = vsel %vm4816, %v4508, %v4815
  %vm4818 = vcmp.eq.f32.partialorder %v4508, 0.0
  %v4819 = vand.u32 %v4508, 2147483648
  %v4820 = vsel %vm4818, %v4819, %v4817
  %v4821 = vrsqrt.pop %v4511
  %v4822 = vmul.f32 %v4511, %v4821
  %vm4823 = vcmp.eq.f32.partialorder %v4511, inf
  %v4824 = vsel %vm4823, %v4511, %v4822
  %vm4825 = vcmp.eq.f32.partialorder %v4511, 0.0
  %v4826 = vand.u32 %v4511, 2147483648
  %v4827 = vsel %vm4825, %v4826, %v4824
  %v4828 = vrsqrt.pop %v4514
  %v4829 = vmul.f32 %v4514, %v4828
  %vm4830 = vcmp.eq.f32.partialorder %v4514, inf
  %v4831 = vsel %vm4830, %v4514, %v4829
  %vm4832 = vcmp.eq.f32.partialorder %v4514, 0.0
  %v4833 = vand.u32 %v4514, 2147483648
  %v4834 = vsel %vm4832, %v4833, %v4831
  %v4835 = vrsqrt.pop %v4517
  %v4836 = vmul.f32 %v4517, %v4835
  %vm4837 = vcmp.eq.f32.partialorder %v4517, inf
  %v4838 = vsel %vm4837, %v4517, %v4836
  %vm4839 = vcmp.eq.f32.partialorder %v4517, 0.0
  %v4840 = vand.u32 %v4517, 2147483648
  %v4841 = vsel %vm4839, %v4840, %v4838
  %v4842 = vrsqrt.pop %v4520
  %v4843 = vmul.f32 %v4520, %v4842
  %vm4844 = vcmp.eq.f32.partialorder %v4520, inf
  %v4845 = vsel %vm4844, %v4520, %v4843
  %vm4846 = vcmp.eq.f32.partialorder %v4520, 0.0
  %v4847 = vand.u32 %v4520, 2147483648
  %v4848 = vsel %vm4846, %v4847, %v4845
  %v4849 = vrsqrt.pop %v4523
  %v4850 = vmul.f32 %v4523, %v4849
  %vm4851 = vcmp.eq.f32.partialorder %v4523, inf
  %v4852 = vsel %vm4851, %v4523, %v4850
  %vm4853 = vcmp.eq.f32.partialorder %v4523, 0.0
  %v4854 = vand.u32 %v4523, 2147483648
  %v4855 = vsel %vm4853, %v4854, %v4852
  %v4856 = vrsqrt.pop %v4526
  %v4857 = vmul.f32 %v4526, %v4856
  %vm4858 = vcmp.eq.f32.partialorder %v4526, inf
  %v4859 = vsel %vm4858, %v4526, %v4857
  %vm4860 = vcmp.eq.f32.partialorder %v4526, 0.0
  %v4861 = vand.u32 %v4526, 2147483648
  %v4862 = vsel %vm4860, %v4861, %v4859
  %v4863 = vrsqrt.pop %v4529
  %v4864 = vmul.f32 %v4529, %v4863
  %vm4865 = vcmp.eq.f32.partialorder %v4529, inf
  %v4866 = vsel %vm4865, %v4529, %v4864
  %vm4867 = vcmp.eq.f32.partialorder %v4529, 0.0
  %v4868 = vand.u32 %v4529, 2147483648
  %v4869 = vsel %vm4867, %v4868, %v4866
  %v4870 = vrsqrt.pop %v4532
  %v4871 = vmul.f32 %v4532, %v4870
  %vm4872 = vcmp.eq.f32.partialorder %v4532, inf
  %v4873 = vsel %vm4872, %v4532, %v4871
  %vm4874 = vcmp.eq.f32.partialorder %v4532, 0.0
  %v4875 = vand.u32 %v4532, 2147483648
  %v4876 = vsel %vm4874, %v4875, %v4873
  %v4877 = vrsqrt.pop %v4535
  %v4878 = vmul.f32 %v4535, %v4877
  %vm4879 = vcmp.eq.f32.partialorder %v4535, inf
  %v4880 = vsel %vm4879, %v4535, %v4878
  %vm4881 = vcmp.eq.f32.partialorder %v4535, 0.0
  %v4882 = vand.u32 %v4535, 2147483648
  %v4883 = vsel %vm4881, %v4882, %v4880
  %v4884 = vrsqrt.pop %v4538
  %v4885 = vmul.f32 %v4538, %v4884
  %vm4886 = vcmp.eq.f32.partialorder %v4538, inf
  %v4887 = vsel %vm4886, %v4538, %v4885
  %vm4888 = vcmp.eq.f32.partialorder %v4538, 0.0
  %v4889 = vand.u32 %v4538, 2147483648
  %v4890 = vsel %vm4888, %v4889, %v4887
  %v4891 = vrsqrt.pop %v4541
  %v4892 = vmul.f32 %v4541, %v4891
  %vm4893 = vcmp.eq.f32.partialorder %v4541, inf
  %v4894 = vsel %vm4893, %v4541, %v4892
  %vm4895 = vcmp.eq.f32.partialorder %v4541, 0.0
  %v4896 = vand.u32 %v4541, 2147483648
  %v4897 = vsel %vm4895, %v4896, %v4894
  %v4898 = vrsqrt.pop %v4544
  %v4899 = vmul.f32 %v4544, %v4898
  %vm4900 = vcmp.eq.f32.partialorder %v4544, inf
  %v4901 = vsel %vm4900, %v4544, %v4899
  %vm4902 = vcmp.eq.f32.partialorder %v4544, 0.0
  %v4903 = vand.u32 %v4544, 2147483648
  %v4904 = vsel %vm4902, %v4903, %v4901
  %v4905 = vrsqrt.pop %v4547
  %v4906 = vmul.f32 %v4547, %v4905
  %vm4907 = vcmp.eq.f32.partialorder %v4547, inf
  %v4908 = vsel %vm4907, %v4547, %v4906
  %vm4909 = vcmp.eq.f32.partialorder %v4547, 0.0
  %v4910 = vand.u32 %v4547, 2147483648
  %v4911 = vsel %vm4909, %v4910, %v4908
  %v4912 = vrsqrt.pop %v4550
  %v4913 = vmul.f32 %v4550, %v4912
  %vm4914 = vcmp.eq.f32.partialorder %v4550, inf
  %v4915 = vsel %vm4914, %v4550, %v4913
  %vm4916 = vcmp.eq.f32.partialorder %v4550, 0.0
  %v4917 = vand.u32 %v4550, 2147483648
  %v4918 = vsel %vm4916, %v4917, %v4915
  %v4919 = vrsqrt.pop %v4553
  %v4920 = vmul.f32 %v4553, %v4919
  %vm4921 = vcmp.eq.f32.partialorder %v4553, inf
  %v4922 = vsel %vm4921, %v4553, %v4920
  %vm4923 = vcmp.eq.f32.partialorder %v4553, 0.0
  %v4924 = vand.u32 %v4553, 2147483648
  %v4925 = vsel %vm4923, %v4924, %v4922
  %v4926 = vrsqrt.pop %v4556
  %v4927 = vmul.f32 %v4556, %v4926
  %vm4928 = vcmp.eq.f32.partialorder %v4556, inf
  %v4929 = vsel %vm4928, %v4556, %v4927
  %vm4930 = vcmp.eq.f32.partialorder %v4556, 0.0
  %v4931 = vand.u32 %v4556, 2147483648
  %v4932 = vsel %vm4930, %v4931, %v4929
  %v4933 = vrsqrt.pop %v4559
  %v4934 = vmul.f32 %v4559, %v4933
  %vm4935 = vcmp.eq.f32.partialorder %v4559, inf
  %v4936 = vsel %vm4935, %v4559, %v4934
  %vm4937 = vcmp.eq.f32.partialorder %v4559, 0.0
  %v4938 = vand.u32 %v4559, 2147483648
  %v4939 = vsel %vm4937, %v4938, %v4936
  %v4940 = vrsqrt.pop %v4562
  %v4941 = vmul.f32 %v4562, %v4940
  %vm4942 = vcmp.eq.f32.partialorder %v4562, inf
  %v4943 = vsel %vm4942, %v4562, %v4941
  %vm4944 = vcmp.eq.f32.partialorder %v4562, 0.0
  %v4945 = vand.u32 %v4562, 2147483648
  %v4946 = vsel %vm4944, %v4945, %v4943
  %v4947 = vrsqrt.pop %v4565
  %v4948 = vmul.f32 %v4565, %v4947
  %vm4949 = vcmp.eq.f32.partialorder %v4565, inf
  %v4950 = vsel %vm4949, %v4565, %v4948
  %vm4951 = vcmp.eq.f32.partialorder %v4565, 0.0
  %v4952 = vand.u32 %v4565, 2147483648
  %v4953 = vsel %vm4951, %v4952, %v4950
  %v4954 = vrsqrt.pop %v4568
  %v4955 = vmul.f32 %v4568, %v4954
  %vm4956 = vcmp.eq.f32.partialorder %v4568, inf
  %v4957 = vsel %vm4956, %v4568, %v4955
  %vm4958 = vcmp.eq.f32.partialorder %v4568, 0.0
  %v4959 = vand.u32 %v4568, 2147483648
  %v4960 = vsel %vm4958, %v4959, %v4957
  %v4961 = vrsqrt.pop %v4571
  %v4962 = vmul.f32 %v4571, %v4961
  %vm4963 = vcmp.eq.f32.partialorder %v4571, inf
  %v4964 = vsel %vm4963, %v4571, %v4962
  %vm4965 = vcmp.eq.f32.partialorder %v4571, 0.0
  %v4966 = vand.u32 %v4571, 2147483648
  %v4967 = vsel %vm4965, %v4966, %v4964
  %v4968 = vrsqrt.pop %v4574
  %v4969 = vmul.f32 %v4574, %v4968
  %vm4970 = vcmp.eq.f32.partialorder %v4574, inf
  %v4971 = vsel %vm4970, %v4574, %v4969
  %vm4972 = vcmp.eq.f32.partialorder %v4574, 0.0
  %v4973 = vand.u32 %v4574, 2147483648
  %v4974 = vsel %vm4972, %v4973, %v4971
  %v4975 = vrsqrt.pop %v4577
  %v4976 = vmul.f32 %v4577, %v4975
  %vm4977 = vcmp.eq.f32.partialorder %v4577, inf
  %v4978 = vsel %vm4977, %v4577, %v4976
  %vm4979 = vcmp.eq.f32.partialorder %v4577, 0.0
  %v4980 = vand.u32 %v4577, 2147483648
  %v4981 = vsel %vm4979, %v4980, %v4978
  %v4982 = vrsqrt.pop %v4580
  %v4983 = vmul.f32 %v4580, %v4982
  %vm4984 = vcmp.eq.f32.partialorder %v4580, inf
  %v4985 = vsel %vm4984, %v4580, %v4983
  %vm4986 = vcmp.eq.f32.partialorder %v4580, 0.0
  %v4987 = vand.u32 %v4580, 2147483648
  %v4988 = vsel %vm4986, %v4987, %v4985
  %v4989 = vrsqrt.pop %v4583
  %v4990 = vmul.f32 %v4583, %v4989
  %vm4991 = vcmp.eq.f32.partialorder %v4583, inf
  %v4992 = vsel %vm4991, %v4583, %v4990
  %vm4993 = vcmp.eq.f32.partialorder %v4583, 0.0
  %v4994 = vand.u32 %v4583, 2147483648
  %v4995 = vsel %vm4993, %v4994, %v4992
  %v4996 = vrsqrt.pop %v4586
  %v4997 = vmul.f32 %v4586, %v4996
  %vm4998 = vcmp.eq.f32.partialorder %v4586, inf
  %v4999 = vsel %vm4998, %v4586, %v4997
  %vm5000 = vcmp.eq.f32.partialorder %v4586, 0.0
  %v5001 = vand.u32 %v4586, 2147483648
  %v5002 = vsel %vm5000, %v5001, %v4999
  %v5003 = vrsqrt.pop %v4589
  %v5004 = vmul.f32 %v4589, %v5003
  %vm5005 = vcmp.eq.f32.partialorder %v4589, inf
  %v5006 = vsel %vm5005, %v4589, %v5004
  %vm5007 = vcmp.eq.f32.partialorder %v4589, 0.0
  %v5008 = vand.u32 %v4589, 2147483648
  %v5009 = vsel %vm5007, %v5008, %v5006
  %v5010 = vrsqrt.pop %v4592
  %v5011 = vmul.f32 %v4592, %v5010
  %vm5012 = vcmp.eq.f32.partialorder %v4592, inf
  %v5013 = vsel %vm5012, %v4592, %v5011
  %vm5014 = vcmp.eq.f32.partialorder %v4592, 0.0
  %v5015 = vand.u32 %v4592, 2147483648
  %v5016 = vsel %vm5014, %v5015, %v5013
  %v5017 = vrsqrt.pop %v4595
  %v5018 = vmul.f32 %v4595, %v5017
  %vm5019 = vcmp.eq.f32.partialorder %v4595, inf
  %v5020 = vsel %vm5019, %v4595, %v5018
  %vm5021 = vcmp.eq.f32.partialorder %v4595, 0.0
  %v5022 = vand.u32 %v4595, 2147483648
  %v5023 = vsel %vm5021, %v5022, %v5020
  %v5024 = vrsqrt.pop %v4598
  %v5025 = vmul.f32 %v4598, %v5024
  %vm5026 = vcmp.eq.f32.partialorder %v4598, inf
  %v5027 = vsel %vm5026, %v4598, %v5025
  %vm5028 = vcmp.eq.f32.partialorder %v4598, 0.0
  %v5029 = vand.u32 %v4598, 2147483648
  %v5030 = vsel %vm5028, %v5029, %v5027
  %v5031 = vrsqrt.pop %v4601
  %v5032 = vmul.f32 %v4601, %v5031
  %vm5033 = vcmp.eq.f32.partialorder %v4601, inf
  %v5034 = vsel %vm5033, %v4601, %v5032
  %vm5035 = vcmp.eq.f32.partialorder %v4601, 0.0
  %v5036 = vand.u32 %v4601, 2147483648
  %v5037 = vsel %vm5035, %v5036, %v5034
  %v5038 = vrsqrt.pop %v4604
  %v5039 = vmul.f32 %v4604, %v5038
  %vm5040 = vcmp.eq.f32.partialorder %v4604, inf
  %v5041 = vsel %vm5040, %v4604, %v5039
  %vm5042 = vcmp.eq.f32.partialorder %v4604, 0.0
  %v5043 = vand.u32 %v4604, 2147483648
  %v5044 = vsel %vm5042, %v5043, %v5041
  %v5045 = vrsqrt.pop %v4607
  %v5046 = vmul.f32 %v4607, %v5045
  %vm5047 = vcmp.eq.f32.partialorder %v4607, inf
  %v5048 = vsel %vm5047, %v4607, %v5046
  %vm5049 = vcmp.eq.f32.partialorder %v4607, 0.0
  %v5050 = vand.u32 %v4607, 2147483648
  %v5051 = vsel %vm5049, %v5050, %v5048
  %v5052 = vrsqrt.pop %v4610
  %v5053 = vmul.f32 %v4610, %v5052
  %vm5054 = vcmp.eq.f32.partialorder %v4610, inf
  %v5055 = vsel %vm5054, %v4610, %v5053
  %vm5056 = vcmp.eq.f32.partialorder %v4610, 0.0
  %v5057 = vand.u32 %v4610, 2147483648
  %v5058 = vsel %vm5056, %v5057, %v5055
  %v5059 = vadd.f32 %v4617, 1e-10
  %v5060 = vadd.f32 %v4624, 1e-10
  %v5061 = vadd.f32 %v4631, 1e-10
  %v5062 = vadd.f32 %v4638, 1e-10
  %v5063 = vadd.f32 %v4645, 1e-10
  %v5064 = vadd.f32 %v4652, 1e-10
  %v5065 = vadd.f32 %v4659, 1e-10
  %v5066 = vadd.f32 %v4666, 1e-10
  %v5067 = vadd.f32 %v4673, 1e-10
  %v5068 = vadd.f32 %v4680, 1e-10
  %v5069 = vadd.f32 %v4687, 1e-10
  %v5070 = vadd.f32 %v4694, 1e-10
  %v5071 = vadd.f32 %v4701, 1e-10
  %v5072 = vadd.f32 %v4708, 1e-10
  %v5073 = vadd.f32 %v4715, 1e-10
  %v5074 = vadd.f32 %v4722, 1e-10
  %v5075 = vadd.f32 %v4729, 1e-10
  %v5076 = vadd.f32 %v4736, 1e-10
  %v5077 = vadd.f32 %v4743, 1e-10
  %v5078 = vadd.f32 %v4750, 1e-10
  %v5079 = vadd.f32 %v4757, 1e-10
  %v5080 = vadd.f32 %v4764, 1e-10
  %v5081 = vadd.f32 %v4771, 1e-10
  %v5082 = vadd.f32 %v4778, 1e-10
  %v5083 = vadd.f32 %v4785, 1e-10
  %v5084 = vadd.f32 %v4792, 1e-10
  %v5085 = vadd.f32 %v4799, 1e-10
  %v5086 = vadd.f32 %v4806, 1e-10
  %v5087 = vadd.f32 %v4813, 1e-10
  %v5088 = vadd.f32 %v4820, 1e-10
  %v5089 = vadd.f32 %v4827, 1e-10
  %v5090 = vadd.f32 %v4834, 1e-10
  %v5091 = vadd.f32 %v4841, 1e-10
  %v5092 = vadd.f32 %v4848, 1e-10
  %v5093 = vadd.f32 %v4855, 1e-10
  %v5094 = vadd.f32 %v4862, 1e-10
  %v5095 = vadd.f32 %v4869, 1e-10
  %v5096 = vadd.f32 %v4876, 1e-10
  %v5097 = vadd.f32 %v4883, 1e-10
  %v5098 = vadd.f32 %v4890, 1e-10
  %v5099 = vadd.f32 %v4897, 1e-10
  %v5100 = vadd.f32 %v4904, 1e-10
  %v5101 = vadd.f32 %v4911, 1e-10
  %v5102 = vadd.f32 %v4918, 1e-10
  %v5103 = vadd.f32 %v4925, 1e-10
  %v5104 = vadd.f32 %v4932, 1e-10
  %v5105 = vadd.f32 %v4939, 1e-10
  %v5106 = vadd.f32 %v4946, 1e-10
  %v5107 = vadd.f32 %v4953, 1e-10
  %v5108 = vadd.f32 %v4960, 1e-10
  %v5109 = vadd.f32 %v4967, 1e-10
  %v5110 = vadd.f32 %v4974, 1e-10
  %v5111 = vadd.f32 %v4981, 1e-10
  %v5112 = vadd.f32 %v4988, 1e-10
  %v5113 = vadd.f32 %v4995, 1e-10
  %v5114 = vadd.f32 %v5002, 1e-10
  %v5115 = vadd.f32 %v5009, 1e-10
  %v5116 = vadd.f32 %v5016, 1e-10
  %v5117 = vadd.f32 %v5023, 1e-10
  %v5118 = vadd.f32 %v5030, 1e-10
  %v5119 = vadd.f32 %v5037, 1e-10
  %v5120 = vadd.f32 %v5044, 1e-10
  %v5121 = vadd.f32 %v5051, 1e-10
  %v5122 = vadd.f32 %v5058, 1e-10
  %v5123 = vrcp.pop %v5059
  %v5124 = vrcp.pop %v5060
  %v5125 = vrcp.pop %v5061
  %v5126 = vrcp.pop %v5062
  %v5127 = vrcp.pop %v5063
  %v5128 = vrcp.pop %v5064
  %v5129 = vrcp.pop %v5065
  %v5130 = vrcp.pop %v5066
  %v5131 = vrcp.pop %v5067
  %v5132 = vrcp.pop %v5068
  %v5133 = vrcp.pop %v5069
  %v5134 = vrcp.pop %v5070
  %v5135 = vrcp.pop %v5071
  %v5136 = vrcp.pop %v5072
  %v5137 = vrcp.pop %v5073
  %v5138 = vrcp.pop %v5074
  %v5139 = vrcp.pop %v5075
  %v5140 = vrcp.pop %v5076
  %v5141 = vrcp.pop %v5077
  %v5142 = vrcp.pop %v5078
  %v5143 = vrcp.pop %v5079
  %v5144 = vrcp.pop %v5080
  %v5145 = vrcp.pop %v5081
  %v5146 = vrcp.pop %v5082
  %v5147 = vrcp.pop %v5083
  %v5148 = vrcp.pop %v5084
  %v5149 = vrcp.pop %v5085
  %v5150 = vrcp.pop %v5086
  %v5151 = vrcp.pop %v5087
  %v5152 = vrcp.pop %v5088
  %v5153 = vrcp.pop %v5089
  %v5154 = vrcp.pop %v5090
  %v5155 = vrcp.pop %v5091
  %v5156 = vrcp.pop %v5092
  %v5157 = vrcp.pop %v5093
  %v5158 = vrcp.pop %v5094
  %v5159 = vrcp.pop %v5095
  %v5160 = vrcp.pop %v5096
  %v5161 = vrcp.pop %v5097
  %v5162 = vrcp.pop %v5098
  %v5163 = vrcp.pop %v5099
  %v5164 = vrcp.pop %v5100
  %v5165 = vrcp.pop %v5101
  %v5166 = vrcp.pop %v5102
  %v5167 = vrcp.pop %v5103
  %v5168 = vrcp.pop %v5104
  %v5169 = vrcp.pop %v5105
  %v5170 = vrcp.pop %v5106
  %v5171 = vrcp.pop %v5107
  %v5172 = vrcp.pop %v5108
  %v5173 = vrcp.pop %v5109
  %v5174 = vrcp.pop %v5110
  %v5175 = vrcp.pop %v5111
  %v5176 = vrcp.pop %v5112
  %v5177 = vrcp.pop %v5113
  %v5178 = vrcp.pop %v5114
  %v5179 = vrcp.pop %v5115
  %v5180 = vrcp.pop %v5116
  %v5181 = vrcp.pop %v5117
  %v5182 = vrcp.pop %v5118
  %v5183 = vrcp.pop %v5119
  %v5184 = vrcp.pop %v5120
  %v5185 = vrcp.pop %v5121
  %v5186 = vrcp.pop %v5122
  %v5187 = vmul.f32 %v4291, %v4291
  %v5188 = vmul.f32 %v4292, %v4292
  %v5189 = vmul.f32 %v4293, %v4293
  %v5190 = vmul.f32 %v4294, %v4294
  %v5191 = vmul.f32 %v4295, %v4295
  %v5192 = vmul.f32 %v4296, %v4296
  %v5193 = vmul.f32 %v4297, %v4297
  %v5194 = vmul.f32 %v4298, %v4298
  %v5195 = vmul.f32 %v4299, %v4299
  %v5196 = vmul.f32 %v4300, %v4300
  %v5197 = vmul.f32 %v4301, %v4301
  %v5198 = vmul.f32 %v4302, %v4302
  %v5199 = vmul.f32 %v4303, %v4303
  %v5200 = vmul.f32 %v4304, %v4304
  %v5201 = vmul.f32 %v4305, %v4305
  %v5202 = vmul.f32 %v4306, %v4306
  %v5203 = vmul.f32 %v4307, %v4307
  %v5204 = vmul.f32 %v4308, %v4308
  %v5205 = vmul.f32 %v4309, %v4309
  %v5206 = vmul.f32 %v4310, %v4310
  %v5207 = vmul.f32 %v4311, %v4311
  %v5208 = vmul.f32 %v4312, %v4312
  %v5209 = vmul.f32 %v4313, %v4313
  %v5210 = vmul.f32 %v4314, %v4314
  %v5211 = vmul.f32 %v4315, %v4315
  %v5212 = vmul.f32 %v4316, %v4316
  %v5213 = vmul.f32 %v4317, %v4317
  %v5214 = vmul.f32 %v4318, %v4318
  %v5215 = vmul.f32 %v4319, %v4319
  %v5216 = vmul.f32 %v4320, %v4320
  %v5217 = vmul.f32 %v4321, %v4321
  %v5218 = vmul.f32 %v4322, %v4322
  %v5219 = vmul.f32 %v4323, %v4323
  %v5220 = vmul.f32 %v4324, %v4324
  %v5221 = vmul.f32 %v4325, %v4325
  %v5222 = vmul.f32 %v4326, %v4326
  %v5223 = vmul.f32 %v4327, %v4327
  %v5224 = vmul.f32 %v4328, %v4328
  %v5225 = vmul.f32 %v4329, %v4329
  %v5226 = vmul.f32 %v4330, %v4330
  %v5227 = vmul.f32 %v4331, %v4331
  %v5228 = vmul.f32 %v4332, %v4332
  %v5229 = vmul.f32 %v4333, %v4333
  %v5230 = vmul.f32 %v4334, %v4334
  %v5231 = vmul.f32 %v4335, %v4335
  %v5232 = vmul.f32 %v4336, %v4336
  %v5233 = vmul.f32 %v4337, %v4337
  %v5234 = vmul.f32 %v4338, %v4338
  %v5235 = vmul.f32 %v4339, %v4339
  %v5236 = vmul.f32 %v4340, %v4340
  %v5237 = vmul.f32 %v4341, %v4341
  %v5238 = vmul.f32 %v4342, %v4342
  %v5239 = vmul.f32 %v4343, %v4343
  %v5240 = vmul.f32 %v4344, %v4344
  %v5241 = vmul.f32 %v4345, %v4345
  %v5242 = vmul.f32 %v4346, %v4346
  %v5243 = vmul.f32 %v4347, %v4347
  %v5244 = vmul.f32 %v4348, %v4348
  %v5245 = vmul.f32 %v4349, %v4349
  %v5246 = vmul.f32 %v4350, %v4350
  %v5247 = vmul.f32 %v4351, %v4351
  %v5248 = vmul.f32 %v4352, %v4352
  %v5249 = vmul.f32 %v4353, %v4353
  %v5250 = vmul.f32 %v4354, %v4354
  %v5251 = vsel %vm1308, %v5187, 0.0
  %5252 = vadd.xlane.f32.xlu0 %v5251
  %v5253 = vpop.xlane.xlu0 %5252
  %v5254 = vsel %vm1308, %v5188, 0.0
  %5255 = vadd.xlane.f32.xlu0 %v5254
  %v5256 = vpop.xlane.xlu0 %5255
  %v5257 = vsel %vm1308, %v5189, 0.0
  %5258 = vadd.xlane.f32.xlu0 %v5257
  %v5259 = vpop.xlane.xlu0 %5258
  %v5260 = vsel %vm1308, %v5190, 0.0
  %5261 = vadd.xlane.f32.xlu0 %v5260
  %v5262 = vpop.xlane.xlu0 %5261
  %v5263 = vsel %vm1308, %v5191, 0.0
  %5264 = vadd.xlane.f32.xlu0 %v5263
  %v5265 = vpop.xlane.xlu0 %5264
  %v5266 = vsel %vm1308, %v5192, 0.0
  %5267 = vadd.xlane.f32.xlu0 %v5266
  %v5268 = vpop.xlane.xlu0 %5267
  %v5269 = vsel %vm1308, %v5193, 0.0
  %5270 = vadd.xlane.f32.xlu0 %v5269
  %v5271 = vpop.xlane.xlu0 %5270
  %v5272 = vsel %vm1308, %v5194, 0.0
  %5273 = vadd.xlane.f32.xlu0 %v5272
  %v5274 = vpop.xlane.xlu0 %5273
  %v5275 = vsel %vm1308, %v5195, 0.0
  %5276 = vadd.xlane.f32.xlu0 %v5275
  %v5277 = vpop.xlane.xlu0 %5276
  %v5278 = vsel %vm1308, %v5196, 0.0
  %5279 = vadd.xlane.f32.xlu0 %v5278
  %v5280 = vpop.xlane.xlu0 %5279
  %v5281 = vsel %vm1308, %v5197, 0.0
  %5282 = vadd.xlane.f32.xlu0 %v5281
  %v5283 = vpop.xlane.xlu0 %5282
  %v5284 = vsel %vm1308, %v5198, 0.0
  %5285 = vadd.xlane.f32.xlu0 %v5284
  %v5286 = vpop.xlane.xlu0 %5285
  %v5287 = vsel %vm1308, %v5199, 0.0
  %5288 = vadd.xlane.f32.xlu0 %v5287
  %v5289 = vpop.xlane.xlu0 %5288
  %v5290 = vsel %vm1308, %v5200, 0.0
  %5291 = vadd.xlane.f32.xlu0 %v5290
  %v5292 = vpop.xlane.xlu0 %5291
  %v5293 = vsel %vm1308, %v5201, 0.0
  %5294 = vadd.xlane.f32.xlu0 %v5293
  %v5295 = vpop.xlane.xlu0 %5294
  %v5296 = vsel %vm1308, %v5202, 0.0
  %5297 = vadd.xlane.f32.xlu0 %v5296
  %v5298 = vpop.xlane.xlu0 %5297
  %v5299 = vsel %vm1308, %v5203, 0.0
  %5300 = vadd.xlane.f32.xlu0 %v5299
  %v5301 = vpop.xlane.xlu0 %5300
  %v5302 = vsel %vm1308, %v5204, 0.0
  %5303 = vadd.xlane.f32.xlu0 %v5302
  %v5304 = vpop.xlane.xlu0 %5303
  %v5305 = vsel %vm1308, %v5205, 0.0
  %5306 = vadd.xlane.f32.xlu0 %v5305
  %v5307 = vpop.xlane.xlu0 %5306
  %v5308 = vsel %vm1308, %v5206, 0.0
  %5309 = vadd.xlane.f32.xlu0 %v5308
  %v5310 = vpop.xlane.xlu0 %5309
  %v5311 = vsel %vm1308, %v5207, 0.0
  %5312 = vadd.xlane.f32.xlu0 %v5311
  %v5313 = vpop.xlane.xlu0 %5312
  %v5314 = vsel %vm1308, %v5208, 0.0
  %5315 = vadd.xlane.f32.xlu0 %v5314
  %v5316 = vpop.xlane.xlu0 %5315
  %v5317 = vsel %vm1308, %v5209, 0.0
  %5318 = vadd.xlane.f32.xlu0 %v5317
  %v5319 = vpop.xlane.xlu0 %5318
  %v5320 = vsel %vm1308, %v5210, 0.0
  %5321 = vadd.xlane.f32.xlu0 %v5320
  %v5322 = vpop.xlane.xlu0 %5321
  %v5323 = vsel %vm1308, %v5211, 0.0
  %5324 = vadd.xlane.f32.xlu0 %v5323
  %v5325 = vpop.xlane.xlu0 %5324
  %v5326 = vsel %vm1308, %v5212, 0.0
  %5327 = vadd.xlane.f32.xlu0 %v5326
  %v5328 = vpop.xlane.xlu0 %5327
  %v5329 = vsel %vm1308, %v5213, 0.0
  %5330 = vadd.xlane.f32.xlu0 %v5329
  %v5331 = vpop.xlane.xlu0 %5330
  %v5332 = vsel %vm1308, %v5214, 0.0
  %5333 = vadd.xlane.f32.xlu0 %v5332
  %v5334 = vpop.xlane.xlu0 %5333
  %v5335 = vsel %vm1308, %v5215, 0.0
  %5336 = vadd.xlane.f32.xlu0 %v5335
  %v5337 = vpop.xlane.xlu0 %5336
  %v5338 = vsel %vm1308, %v5216, 0.0
  %5339 = vadd.xlane.f32.xlu0 %v5338
  %v5340 = vpop.xlane.xlu0 %5339
  %v5341 = vsel %vm1308, %v5217, 0.0
  %5342 = vadd.xlane.f32.xlu0 %v5341
  %v5343 = vpop.xlane.xlu0 %5342
  %v5344 = vsel %vm1308, %v5218, 0.0
  %5345 = vadd.xlane.f32.xlu0 %v5344
  %v5346 = vpop.xlane.xlu0 %5345
  %v5347 = vsel %vm1308, %v5219, 0.0
  %5348 = vadd.xlane.f32.xlu0 %v5347
  %v5349 = vpop.xlane.xlu0 %5348
  %v5350 = vsel %vm1308, %v5220, 0.0
  %5351 = vadd.xlane.f32.xlu0 %v5350
  %v5352 = vpop.xlane.xlu0 %5351
  %v5353 = vsel %vm1308, %v5221, 0.0
  %5354 = vadd.xlane.f32.xlu0 %v5353
  %v5355 = vpop.xlane.xlu0 %5354
  %v5356 = vsel %vm1308, %v5222, 0.0
  %5357 = vadd.xlane.f32.xlu0 %v5356
  %v5358 = vpop.xlane.xlu0 %5357
  %v5359 = vsel %vm1308, %v5223, 0.0
  %5360 = vadd.xlane.f32.xlu0 %v5359
  %v5361 = vpop.xlane.xlu0 %5360
  %v5362 = vsel %vm1308, %v5224, 0.0
  %5363 = vadd.xlane.f32.xlu0 %v5362
  %v5364 = vpop.xlane.xlu0 %5363
  %v5365 = vsel %vm1308, %v5225, 0.0
  %5366 = vadd.xlane.f32.xlu0 %v5365
  %v5367 = vpop.xlane.xlu0 %5366
  %v5368 = vsel %vm1308, %v5226, 0.0
  %5369 = vadd.xlane.f32.xlu0 %v5368
  %v5370 = vpop.xlane.xlu0 %5369
  %v5371 = vsel %vm1308, %v5227, 0.0
  %5372 = vadd.xlane.f32.xlu0 %v5371
  %v5373 = vpop.xlane.xlu0 %5372
  %v5374 = vsel %vm1308, %v5228, 0.0
  %5375 = vadd.xlane.f32.xlu0 %v5374
  %v5376 = vpop.xlane.xlu0 %5375
  %v5377 = vsel %vm1308, %v5229, 0.0
  %5378 = vadd.xlane.f32.xlu0 %v5377
  %v5379 = vpop.xlane.xlu0 %5378
  %v5380 = vsel %vm1308, %v5230, 0.0
  %5381 = vadd.xlane.f32.xlu0 %v5380
  %v5382 = vpop.xlane.xlu0 %5381
  %v5383 = vsel %vm1308, %v5231, 0.0
  %5384 = vadd.xlane.f32.xlu0 %v5383
  %v5385 = vpop.xlane.xlu0 %5384
  %v5386 = vsel %vm1308, %v5232, 0.0
  %5387 = vadd.xlane.f32.xlu0 %v5386
  %v5388 = vpop.xlane.xlu0 %5387
  %v5389 = vsel %vm1308, %v5233, 0.0
  %5390 = vadd.xlane.f32.xlu0 %v5389
  %v5391 = vpop.xlane.xlu0 %5390
  %v5392 = vsel %vm1308, %v5234, 0.0
  %5393 = vadd.xlane.f32.xlu0 %v5392
  %v5394 = vpop.xlane.xlu0 %5393
  %v5395 = vsel %vm1308, %v5235, 0.0
  %5396 = vadd.xlane.f32.xlu0 %v5395
  %v5397 = vpop.xlane.xlu0 %5396
  %v5398 = vsel %vm1308, %v5236, 0.0
  %5399 = vadd.xlane.f32.xlu0 %v5398
  %v5400 = vpop.xlane.xlu0 %5399
  %v5401 = vsel %vm1308, %v5237, 0.0
  %5402 = vadd.xlane.f32.xlu0 %v5401
  %v5403 = vpop.xlane.xlu0 %5402
  %v5404 = vsel %vm1308, %v5238, 0.0
  %5405 = vadd.xlane.f32.xlu0 %v5404
  %v5406 = vpop.xlane.xlu0 %5405
  %v5407 = vsel %vm1308, %v5239, 0.0
  %5408 = vadd.xlane.f32.xlu0 %v5407
  %v5409 = vpop.xlane.xlu0 %5408
  %v5410 = vsel %vm1308, %v5240, 0.0
  %5411 = vadd.xlane.f32.xlu0 %v5410
  %v5412 = vpop.xlane.xlu0 %5411
  %v5413 = vsel %vm1308, %v5241, 0.0
  %5414 = vadd.xlane.f32.xlu0 %v5413
  %v5415 = vpop.xlane.xlu0 %5414
  %v5416 = vsel %vm1308, %v5242, 0.0
  %5417 = vadd.xlane.f32.xlu0 %v5416
  %v5418 = vpop.xlane.xlu0 %5417
  %v5419 = vsel %vm1308, %v5243, 0.0
  %5420 = vadd.xlane.f32.xlu0 %v5419
  %v5421 = vpop.xlane.xlu0 %5420
  %v5422 = vsel %vm1308, %v5244, 0.0
  %5423 = vadd.xlane.f32.xlu0 %v5422
  %v5424 = vpop.xlane.xlu0 %5423
  %v5425 = vsel %vm1308, %v5245, 0.0
  %5426 = vadd.xlane.f32.xlu0 %v5425
  %v5427 = vpop.xlane.xlu0 %5426
  %v5428 = vsel %vm1308, %v5246, 0.0
  %5429 = vadd.xlane.f32.xlu0 %v5428
  %v5430 = vpop.xlane.xlu0 %5429
  %v5431 = vsel %vm1308, %v5247, 0.0
  %5432 = vadd.xlane.f32.xlu0 %v5431
  %v5433 = vpop.xlane.xlu0 %5432
  %v5434 = vsel %vm1308, %v5248, 0.0
  %5435 = vadd.xlane.f32.xlu0 %v5434
  %v5436 = vpop.xlane.xlu0 %5435
  %v5437 = vsel %vm1308, %v5249, 0.0
  %5438 = vadd.xlane.f32.xlu0 %v5437
  %v5439 = vpop.xlane.xlu0 %5438
  %v5440 = vsel %vm1308, %v5250, 0.0
  %5441 = vadd.xlane.f32.xlu0 %v5440
  %v5442 = vpop.xlane.xlu0 %5441
  %v5443 = vrsqrt.pop %v5253
  %v5444 = vmul.f32 %v5253, %v5443
  %vm5445 = vcmp.eq.f32.partialorder %v5253, inf
  %v5446 = vsel %vm5445, %v5253, %v5444
  %vm5447 = vcmp.eq.f32.partialorder %v5253, 0.0
  %v5448 = vand.u32 %v5253, 2147483648
  %v5449 = vsel %vm5447, %v5448, %v5446
  %v5450 = vrsqrt.pop %v5256
  %v5451 = vmul.f32 %v5256, %v5450
  %vm5452 = vcmp.eq.f32.partialorder %v5256, inf
  %v5453 = vsel %vm5452, %v5256, %v5451
  %vm5454 = vcmp.eq.f32.partialorder %v5256, 0.0
  %v5455 = vand.u32 %v5256, 2147483648
  %v5456 = vsel %vm5454, %v5455, %v5453
  %v5457 = vrsqrt.pop %v5259
  %v5458 = vmul.f32 %v5259, %v5457
  %vm5459 = vcmp.eq.f32.partialorder %v5259, inf
  %v5460 = vsel %vm5459, %v5259, %v5458
  %vm5461 = vcmp.eq.f32.partialorder %v5259, 0.0
  %v5462 = vand.u32 %v5259, 2147483648
  %v5463 = vsel %vm5461, %v5462, %v5460
  %v5464 = vrsqrt.pop %v5262
  %v5465 = vmul.f32 %v5262, %v5464
  %vm5466 = vcmp.eq.f32.partialorder %v5262, inf
  %v5467 = vsel %vm5466, %v5262, %v5465
  %vm5468 = vcmp.eq.f32.partialorder %v5262, 0.0
  %v5469 = vand.u32 %v5262, 2147483648
  %v5470 = vsel %vm5468, %v5469, %v5467
  %v5471 = vrsqrt.pop %v5265
  %v5472 = vmul.f32 %v5265, %v5471
  %vm5473 = vcmp.eq.f32.partialorder %v5265, inf
  %v5474 = vsel %vm5473, %v5265, %v5472
  %vm5475 = vcmp.eq.f32.partialorder %v5265, 0.0
  %v5476 = vand.u32 %v5265, 2147483648
  %v5477 = vsel %vm5475, %v5476, %v5474
  %v5478 = vrsqrt.pop %v5268
  %v5479 = vmul.f32 %v5268, %v5478
  %vm5480 = vcmp.eq.f32.partialorder %v5268, inf
  %v5481 = vsel %vm5480, %v5268, %v5479
  %vm5482 = vcmp.eq.f32.partialorder %v5268, 0.0
  %v5483 = vand.u32 %v5268, 2147483648
  %v5484 = vsel %vm5482, %v5483, %v5481
  %v5485 = vrsqrt.pop %v5271
  %v5486 = vmul.f32 %v5271, %v5485
  %vm5487 = vcmp.eq.f32.partialorder %v5271, inf
  %v5488 = vsel %vm5487, %v5271, %v5486
  %vm5489 = vcmp.eq.f32.partialorder %v5271, 0.0
  %v5490 = vand.u32 %v5271, 2147483648
  %v5491 = vsel %vm5489, %v5490, %v5488
  %v5492 = vrsqrt.pop %v5274
  %v5493 = vmul.f32 %v5274, %v5492
  %vm5494 = vcmp.eq.f32.partialorder %v5274, inf
  %v5495 = vsel %vm5494, %v5274, %v5493
  %vm5496 = vcmp.eq.f32.partialorder %v5274, 0.0
  %v5497 = vand.u32 %v5274, 2147483648
  %v5498 = vsel %vm5496, %v5497, %v5495
  %v5499 = vrsqrt.pop %v5277
  %v5500 = vmul.f32 %v5277, %v5499
  %vm5501 = vcmp.eq.f32.partialorder %v5277, inf
  %v5502 = vsel %vm5501, %v5277, %v5500
  %vm5503 = vcmp.eq.f32.partialorder %v5277, 0.0
  %v5504 = vand.u32 %v5277, 2147483648
  %v5505 = vsel %vm5503, %v5504, %v5502
  %v5506 = vrsqrt.pop %v5280
  %v5507 = vmul.f32 %v5280, %v5506
  %vm5508 = vcmp.eq.f32.partialorder %v5280, inf
  %v5509 = vsel %vm5508, %v5280, %v5507
  %vm5510 = vcmp.eq.f32.partialorder %v5280, 0.0
  %v5511 = vand.u32 %v5280, 2147483648
  %v5512 = vsel %vm5510, %v5511, %v5509
  %v5513 = vrsqrt.pop %v5283
  %v5514 = vmul.f32 %v5283, %v5513
  %vm5515 = vcmp.eq.f32.partialorder %v5283, inf
  %v5516 = vsel %vm5515, %v5283, %v5514
  %vm5517 = vcmp.eq.f32.partialorder %v5283, 0.0
  %v5518 = vand.u32 %v5283, 2147483648
  %v5519 = vsel %vm5517, %v5518, %v5516
  %v5520 = vrsqrt.pop %v5286
  %v5521 = vmul.f32 %v5286, %v5520
  %vm5522 = vcmp.eq.f32.partialorder %v5286, inf
  %v5523 = vsel %vm5522, %v5286, %v5521
  %vm5524 = vcmp.eq.f32.partialorder %v5286, 0.0
  %v5525 = vand.u32 %v5286, 2147483648
  %v5526 = vsel %vm5524, %v5525, %v5523
  %v5527 = vrsqrt.pop %v5289
  %v5528 = vmul.f32 %v5289, %v5527
  %vm5529 = vcmp.eq.f32.partialorder %v5289, inf
  %v5530 = vsel %vm5529, %v5289, %v5528
  %vm5531 = vcmp.eq.f32.partialorder %v5289, 0.0
  %v5532 = vand.u32 %v5289, 2147483648
  %v5533 = vsel %vm5531, %v5532, %v5530
  %v5534 = vrsqrt.pop %v5292
  %v5535 = vmul.f32 %v5292, %v5534
  %vm5536 = vcmp.eq.f32.partialorder %v5292, inf
  %v5537 = vsel %vm5536, %v5292, %v5535
  %vm5538 = vcmp.eq.f32.partialorder %v5292, 0.0
  %v5539 = vand.u32 %v5292, 2147483648
  %v5540 = vsel %vm5538, %v5539, %v5537
  %v5541 = vrsqrt.pop %v5295
  %v5542 = vmul.f32 %v5295, %v5541
  %vm5543 = vcmp.eq.f32.partialorder %v5295, inf
  %v5544 = vsel %vm5543, %v5295, %v5542
  %vm5545 = vcmp.eq.f32.partialorder %v5295, 0.0
  %v5546 = vand.u32 %v5295, 2147483648
  %v5547 = vsel %vm5545, %v5546, %v5544
  %v5548 = vrsqrt.pop %v5298
  %v5549 = vmul.f32 %v5298, %v5548
  %vm5550 = vcmp.eq.f32.partialorder %v5298, inf
  %v5551 = vsel %vm5550, %v5298, %v5549
  %vm5552 = vcmp.eq.f32.partialorder %v5298, 0.0
  %v5553 = vand.u32 %v5298, 2147483648
  %v5554 = vsel %vm5552, %v5553, %v5551
  %v5555 = vrsqrt.pop %v5301
  %v5556 = vmul.f32 %v5301, %v5555
  %vm5557 = vcmp.eq.f32.partialorder %v5301, inf
  %v5558 = vsel %vm5557, %v5301, %v5556
  %vm5559 = vcmp.eq.f32.partialorder %v5301, 0.0
  %v5560 = vand.u32 %v5301, 2147483648
  %v5561 = vsel %vm5559, %v5560, %v5558
  %v5562 = vrsqrt.pop %v5304
  %v5563 = vmul.f32 %v5304, %v5562
  %vm5564 = vcmp.eq.f32.partialorder %v5304, inf
  %v5565 = vsel %vm5564, %v5304, %v5563
  %vm5566 = vcmp.eq.f32.partialorder %v5304, 0.0
  %v5567 = vand.u32 %v5304, 2147483648
  %v5568 = vsel %vm5566, %v5567, %v5565
  %v5569 = vrsqrt.pop %v5307
  %v5570 = vmul.f32 %v5307, %v5569
  %vm5571 = vcmp.eq.f32.partialorder %v5307, inf
  %v5572 = vsel %vm5571, %v5307, %v5570
  %vm5573 = vcmp.eq.f32.partialorder %v5307, 0.0
  %v5574 = vand.u32 %v5307, 2147483648
  %v5575 = vsel %vm5573, %v5574, %v5572
  %v5576 = vrsqrt.pop %v5310
  %v5577 = vmul.f32 %v5310, %v5576
  %vm5578 = vcmp.eq.f32.partialorder %v5310, inf
  %v5579 = vsel %vm5578, %v5310, %v5577
  %vm5580 = vcmp.eq.f32.partialorder %v5310, 0.0
  %v5581 = vand.u32 %v5310, 2147483648
  %v5582 = vsel %vm5580, %v5581, %v5579
  %v5583 = vrsqrt.pop %v5313
  %v5584 = vmul.f32 %v5313, %v5583
  %vm5585 = vcmp.eq.f32.partialorder %v5313, inf
  %v5586 = vsel %vm5585, %v5313, %v5584
  %vm5587 = vcmp.eq.f32.partialorder %v5313, 0.0
  %v5588 = vand.u32 %v5313, 2147483648
  %v5589 = vsel %vm5587, %v5588, %v5586
  %v5590 = vrsqrt.pop %v5316
  %v5591 = vmul.f32 %v5316, %v5590
  %vm5592 = vcmp.eq.f32.partialorder %v5316, inf
  %v5593 = vsel %vm5592, %v5316, %v5591
  %vm5594 = vcmp.eq.f32.partialorder %v5316, 0.0
  %v5595 = vand.u32 %v5316, 2147483648
  %v5596 = vsel %vm5594, %v5595, %v5593
  %v5597 = vrsqrt.pop %v5319
  %v5598 = vmul.f32 %v5319, %v5597
  %vm5599 = vcmp.eq.f32.partialorder %v5319, inf
  %v5600 = vsel %vm5599, %v5319, %v5598
  %vm5601 = vcmp.eq.f32.partialorder %v5319, 0.0
  %v5602 = vand.u32 %v5319, 2147483648
  %v5603 = vsel %vm5601, %v5602, %v5600
  %v5604 = vrsqrt.pop %v5322
  %v5605 = vmul.f32 %v5322, %v5604
  %vm5606 = vcmp.eq.f32.partialorder %v5322, inf
  %v5607 = vsel %vm5606, %v5322, %v5605
  %vm5608 = vcmp.eq.f32.partialorder %v5322, 0.0
  %v5609 = vand.u32 %v5322, 2147483648
  %v5610 = vsel %vm5608, %v5609, %v5607
  %v5611 = vrsqrt.pop %v5325
  %v5612 = vmul.f32 %v5325, %v5611
  %vm5613 = vcmp.eq.f32.partialorder %v5325, inf
  %v5614 = vsel %vm5613, %v5325, %v5612
  %vm5615 = vcmp.eq.f32.partialorder %v5325, 0.0
  %v5616 = vand.u32 %v5325, 2147483648
  %v5617 = vsel %vm5615, %v5616, %v5614
  %v5618 = vrsqrt.pop %v5328
  %v5619 = vmul.f32 %v5328, %v5618
  %vm5620 = vcmp.eq.f32.partialorder %v5328, inf
  %v5621 = vsel %vm5620, %v5328, %v5619
  %vm5622 = vcmp.eq.f32.partialorder %v5328, 0.0
  %v5623 = vand.u32 %v5328, 2147483648
  %v5624 = vsel %vm5622, %v5623, %v5621
  %v5625 = vrsqrt.pop %v5331
  %v5626 = vmul.f32 %v5331, %v5625
  %vm5627 = vcmp.eq.f32.partialorder %v5331, inf
  %v5628 = vsel %vm5627, %v5331, %v5626
  %vm5629 = vcmp.eq.f32.partialorder %v5331, 0.0
  %v5630 = vand.u32 %v5331, 2147483648
  %v5631 = vsel %vm5629, %v5630, %v5628
  %v5632 = vrsqrt.pop %v5334
  %v5633 = vmul.f32 %v5334, %v5632
  %vm5634 = vcmp.eq.f32.partialorder %v5334, inf
  %v5635 = vsel %vm5634, %v5334, %v5633
  %vm5636 = vcmp.eq.f32.partialorder %v5334, 0.0
  %v5637 = vand.u32 %v5334, 2147483648
  %v5638 = vsel %vm5636, %v5637, %v5635
  %v5639 = vrsqrt.pop %v5337
  %v5640 = vmul.f32 %v5337, %v5639
  %vm5641 = vcmp.eq.f32.partialorder %v5337, inf
  %v5642 = vsel %vm5641, %v5337, %v5640
  %vm5643 = vcmp.eq.f32.partialorder %v5337, 0.0
  %v5644 = vand.u32 %v5337, 2147483648
  %v5645 = vsel %vm5643, %v5644, %v5642
  %v5646 = vrsqrt.pop %v5340
  %v5647 = vmul.f32 %v5340, %v5646
  %vm5648 = vcmp.eq.f32.partialorder %v5340, inf
  %v5649 = vsel %vm5648, %v5340, %v5647
  %vm5650 = vcmp.eq.f32.partialorder %v5340, 0.0
  %v5651 = vand.u32 %v5340, 2147483648
  %v5652 = vsel %vm5650, %v5651, %v5649
  %v5653 = vrsqrt.pop %v5343
  %v5654 = vmul.f32 %v5343, %v5653
  %vm5655 = vcmp.eq.f32.partialorder %v5343, inf
  %v5656 = vsel %vm5655, %v5343, %v5654
  %vm5657 = vcmp.eq.f32.partialorder %v5343, 0.0
  %v5658 = vand.u32 %v5343, 2147483648
  %v5659 = vsel %vm5657, %v5658, %v5656
  %v5660 = vrsqrt.pop %v5346
  %v5661 = vmul.f32 %v5346, %v5660
  %vm5662 = vcmp.eq.f32.partialorder %v5346, inf
  %v5663 = vsel %vm5662, %v5346, %v5661
  %vm5664 = vcmp.eq.f32.partialorder %v5346, 0.0
  %v5665 = vand.u32 %v5346, 2147483648
  %v5666 = vsel %vm5664, %v5665, %v5663
  %v5667 = vrsqrt.pop %v5349
  %v5668 = vmul.f32 %v5349, %v5667
  %vm5669 = vcmp.eq.f32.partialorder %v5349, inf
  %v5670 = vsel %vm5669, %v5349, %v5668
  %vm5671 = vcmp.eq.f32.partialorder %v5349, 0.0
  %v5672 = vand.u32 %v5349, 2147483648
  %v5673 = vsel %vm5671, %v5672, %v5670
  %v5674 = vrsqrt.pop %v5352
  %v5675 = vmul.f32 %v5352, %v5674
  %vm5676 = vcmp.eq.f32.partialorder %v5352, inf
  %v5677 = vsel %vm5676, %v5352, %v5675
  %vm5678 = vcmp.eq.f32.partialorder %v5352, 0.0
  %v5679 = vand.u32 %v5352, 2147483648
  %v5680 = vsel %vm5678, %v5679, %v5677
  %v5681 = vrsqrt.pop %v5355
  %v5682 = vmul.f32 %v5355, %v5681
  %vm5683 = vcmp.eq.f32.partialorder %v5355, inf
  %v5684 = vsel %vm5683, %v5355, %v5682
  %vm5685 = vcmp.eq.f32.partialorder %v5355, 0.0
  %v5686 = vand.u32 %v5355, 2147483648
  %v5687 = vsel %vm5685, %v5686, %v5684
  %v5688 = vrsqrt.pop %v5358
  %v5689 = vmul.f32 %v5358, %v5688
  %vm5690 = vcmp.eq.f32.partialorder %v5358, inf
  %v5691 = vsel %vm5690, %v5358, %v5689
  %vm5692 = vcmp.eq.f32.partialorder %v5358, 0.0
  %v5693 = vand.u32 %v5358, 2147483648
  %v5694 = vsel %vm5692, %v5693, %v5691
  %v5695 = vrsqrt.pop %v5361
  %v5696 = vmul.f32 %v5361, %v5695
  %vm5697 = vcmp.eq.f32.partialorder %v5361, inf
  %v5698 = vsel %vm5697, %v5361, %v5696
  %vm5699 = vcmp.eq.f32.partialorder %v5361, 0.0
  %v5700 = vand.u32 %v5361, 2147483648
  %v5701 = vsel %vm5699, %v5700, %v5698
  %v5702 = vrsqrt.pop %v5364
  %v5703 = vmul.f32 %v5364, %v5702
  %vm5704 = vcmp.eq.f32.partialorder %v5364, inf
  %v5705 = vsel %vm5704, %v5364, %v5703
  %vm5706 = vcmp.eq.f32.partialorder %v5364, 0.0
  %v5707 = vand.u32 %v5364, 2147483648
  %v5708 = vsel %vm5706, %v5707, %v5705
  %v5709 = vrsqrt.pop %v5367
  %v5710 = vmul.f32 %v5367, %v5709
  %vm5711 = vcmp.eq.f32.partialorder %v5367, inf
  %v5712 = vsel %vm5711, %v5367, %v5710
  %vm5713 = vcmp.eq.f32.partialorder %v5367, 0.0
  %v5714 = vand.u32 %v5367, 2147483648
  %v5715 = vsel %vm5713, %v5714, %v5712
  %v5716 = vrsqrt.pop %v5370
  %v5717 = vmul.f32 %v5370, %v5716
  %vm5718 = vcmp.eq.f32.partialorder %v5370, inf
  %v5719 = vsel %vm5718, %v5370, %v5717
  %vm5720 = vcmp.eq.f32.partialorder %v5370, 0.0
  %v5721 = vand.u32 %v5370, 2147483648
  %v5722 = vsel %vm5720, %v5721, %v5719
  %v5723 = vrsqrt.pop %v5373
  %v5724 = vmul.f32 %v5373, %v5723
  %vm5725 = vcmp.eq.f32.partialorder %v5373, inf
  %v5726 = vsel %vm5725, %v5373, %v5724
  %vm5727 = vcmp.eq.f32.partialorder %v5373, 0.0
  %v5728 = vand.u32 %v5373, 2147483648
  %v5729 = vsel %vm5727, %v5728, %v5726
  %v5730 = vrsqrt.pop %v5376
  %v5731 = vmul.f32 %v5376, %v5730
  %vm5732 = vcmp.eq.f32.partialorder %v5376, inf
  %v5733 = vsel %vm5732, %v5376, %v5731
  %vm5734 = vcmp.eq.f32.partialorder %v5376, 0.0
  %v5735 = vand.u32 %v5376, 2147483648
  %v5736 = vsel %vm5734, %v5735, %v5733
  %v5737 = vrsqrt.pop %v5379
  %v5738 = vmul.f32 %v5379, %v5737
  %vm5739 = vcmp.eq.f32.partialorder %v5379, inf
  %v5740 = vsel %vm5739, %v5379, %v5738
  %vm5741 = vcmp.eq.f32.partialorder %v5379, 0.0
  %v5742 = vand.u32 %v5379, 2147483648
  %v5743 = vsel %vm5741, %v5742, %v5740
  %v5744 = vrsqrt.pop %v5382
  %v5745 = vmul.f32 %v5382, %v5744
  %vm5746 = vcmp.eq.f32.partialorder %v5382, inf
  %v5747 = vsel %vm5746, %v5382, %v5745
  %vm5748 = vcmp.eq.f32.partialorder %v5382, 0.0
  %v5749 = vand.u32 %v5382, 2147483648
  %v5750 = vsel %vm5748, %v5749, %v5747
  %v5751 = vrsqrt.pop %v5385
  %v5752 = vmul.f32 %v5385, %v5751
  %vm5753 = vcmp.eq.f32.partialorder %v5385, inf
  %v5754 = vsel %vm5753, %v5385, %v5752
  %vm5755 = vcmp.eq.f32.partialorder %v5385, 0.0
  %v5756 = vand.u32 %v5385, 2147483648
  %v5757 = vsel %vm5755, %v5756, %v5754
  %v5758 = vrsqrt.pop %v5388
  %v5759 = vmul.f32 %v5388, %v5758
  %vm5760 = vcmp.eq.f32.partialorder %v5388, inf
  %v5761 = vsel %vm5760, %v5388, %v5759
  %vm5762 = vcmp.eq.f32.partialorder %v5388, 0.0
  %v5763 = vand.u32 %v5388, 2147483648
  %v5764 = vsel %vm5762, %v5763, %v5761
  %v5765 = vrsqrt.pop %v5391
  %v5766 = vmul.f32 %v5391, %v5765
  %vm5767 = vcmp.eq.f32.partialorder %v5391, inf
  %v5768 = vsel %vm5767, %v5391, %v5766
  %vm5769 = vcmp.eq.f32.partialorder %v5391, 0.0
  %v5770 = vand.u32 %v5391, 2147483648
  %v5771 = vsel %vm5769, %v5770, %v5768
  %v5772 = vrsqrt.pop %v5394
  %v5773 = vmul.f32 %v5394, %v5772
  %vm5774 = vcmp.eq.f32.partialorder %v5394, inf
  %v5775 = vsel %vm5774, %v5394, %v5773
  %vm5776 = vcmp.eq.f32.partialorder %v5394, 0.0
  %v5777 = vand.u32 %v5394, 2147483648
  %v5778 = vsel %vm5776, %v5777, %v5775
  %v5779 = vrsqrt.pop %v5397
  %v5780 = vmul.f32 %v5397, %v5779
  %vm5781 = vcmp.eq.f32.partialorder %v5397, inf
  %v5782 = vsel %vm5781, %v5397, %v5780
  %vm5783 = vcmp.eq.f32.partialorder %v5397, 0.0
  %v5784 = vand.u32 %v5397, 2147483648
  %v5785 = vsel %vm5783, %v5784, %v5782
  %v5786 = vrsqrt.pop %v5400
  %v5787 = vmul.f32 %v5400, %v5786
  %vm5788 = vcmp.eq.f32.partialorder %v5400, inf
  %v5789 = vsel %vm5788, %v5400, %v5787
  %vm5790 = vcmp.eq.f32.partialorder %v5400, 0.0
  %v5791 = vand.u32 %v5400, 2147483648
  %v5792 = vsel %vm5790, %v5791, %v5789
  %v5793 = vrsqrt.pop %v5403
  %v5794 = vmul.f32 %v5403, %v5793
  %vm5795 = vcmp.eq.f32.partialorder %v5403, inf
  %v5796 = vsel %vm5795, %v5403, %v5794
  %vm5797 = vcmp.eq.f32.partialorder %v5403, 0.0
  %v5798 = vand.u32 %v5403, 2147483648
  %v5799 = vsel %vm5797, %v5798, %v5796
  %v5800 = vrsqrt.pop %v5406
  %v5801 = vmul.f32 %v5406, %v5800
  %vm5802 = vcmp.eq.f32.partialorder %v5406, inf
  %v5803 = vsel %vm5802, %v5406, %v5801
  %vm5804 = vcmp.eq.f32.partialorder %v5406, 0.0
  %v5805 = vand.u32 %v5406, 2147483648
  %v5806 = vsel %vm5804, %v5805, %v5803
  %v5807 = vrsqrt.pop %v5409
  %v5808 = vmul.f32 %v5409, %v5807
  %vm5809 = vcmp.eq.f32.partialorder %v5409, inf
  %v5810 = vsel %vm5809, %v5409, %v5808
  %vm5811 = vcmp.eq.f32.partialorder %v5409, 0.0
  %v5812 = vand.u32 %v5409, 2147483648
  %v5813 = vsel %vm5811, %v5812, %v5810
  %v5814 = vrsqrt.pop %v5412
  %v5815 = vmul.f32 %v5412, %v5814
  %vm5816 = vcmp.eq.f32.partialorder %v5412, inf
  %v5817 = vsel %vm5816, %v5412, %v5815
  %vm5818 = vcmp.eq.f32.partialorder %v5412, 0.0
  %v5819 = vand.u32 %v5412, 2147483648
  %v5820 = vsel %vm5818, %v5819, %v5817
  %v5821 = vrsqrt.pop %v5415
  %v5822 = vmul.f32 %v5415, %v5821
  %vm5823 = vcmp.eq.f32.partialorder %v5415, inf
  %v5824 = vsel %vm5823, %v5415, %v5822
  %vm5825 = vcmp.eq.f32.partialorder %v5415, 0.0
  %v5826 = vand.u32 %v5415, 2147483648
  %v5827 = vsel %vm5825, %v5826, %v5824
  %v5828 = vrsqrt.pop %v5418
  %v5829 = vmul.f32 %v5418, %v5828
  %vm5830 = vcmp.eq.f32.partialorder %v5418, inf
  %v5831 = vsel %vm5830, %v5418, %v5829
  %vm5832 = vcmp.eq.f32.partialorder %v5418, 0.0
  %v5833 = vand.u32 %v5418, 2147483648
  %v5834 = vsel %vm5832, %v5833, %v5831
  %v5835 = vrsqrt.pop %v5421
  %v5836 = vmul.f32 %v5421, %v5835
  %vm5837 = vcmp.eq.f32.partialorder %v5421, inf
  %v5838 = vsel %vm5837, %v5421, %v5836
  %vm5839 = vcmp.eq.f32.partialorder %v5421, 0.0
  %v5840 = vand.u32 %v5421, 2147483648
  %v5841 = vsel %vm5839, %v5840, %v5838
  %v5842 = vrsqrt.pop %v5424
  %v5843 = vmul.f32 %v5424, %v5842
  %vm5844 = vcmp.eq.f32.partialorder %v5424, inf
  %v5845 = vsel %vm5844, %v5424, %v5843
  %vm5846 = vcmp.eq.f32.partialorder %v5424, 0.0
  %v5847 = vand.u32 %v5424, 2147483648
  %v5848 = vsel %vm5846, %v5847, %v5845
  %v5849 = vrsqrt.pop %v5427
  %v5850 = vmul.f32 %v5427, %v5849
  %vm5851 = vcmp.eq.f32.partialorder %v5427, inf
  %v5852 = vsel %vm5851, %v5427, %v5850
  %vm5853 = vcmp.eq.f32.partialorder %v5427, 0.0
  %v5854 = vand.u32 %v5427, 2147483648
  %v5855 = vsel %vm5853, %v5854, %v5852
  %v5856 = vrsqrt.pop %v5430
  %v5857 = vmul.f32 %v5430, %v5856
  %vm5858 = vcmp.eq.f32.partialorder %v5430, inf
  %v5859 = vsel %vm5858, %v5430, %v5857
  %vm5860 = vcmp.eq.f32.partialorder %v5430, 0.0
  %v5861 = vand.u32 %v5430, 2147483648
  %v5862 = vsel %vm5860, %v5861, %v5859
  %v5863 = vrsqrt.pop %v5433
  %v5864 = vmul.f32 %v5433, %v5863
  %vm5865 = vcmp.eq.f32.partialorder %v5433, inf
  %v5866 = vsel %vm5865, %v5433, %v5864
  %vm5867 = vcmp.eq.f32.partialorder %v5433, 0.0
  %v5868 = vand.u32 %v5433, 2147483648
  %v5869 = vsel %vm5867, %v5868, %v5866
  %v5870 = vrsqrt.pop %v5436
  %v5871 = vmul.f32 %v5436, %v5870
  %vm5872 = vcmp.eq.f32.partialorder %v5436, inf
  %v5873 = vsel %vm5872, %v5436, %v5871
  %vm5874 = vcmp.eq.f32.partialorder %v5436, 0.0
  %v5875 = vand.u32 %v5436, 2147483648
  %v5876 = vsel %vm5874, %v5875, %v5873
  %v5877 = vrsqrt.pop %v5439
  %v5878 = vmul.f32 %v5439, %v5877
  %vm5879 = vcmp.eq.f32.partialorder %v5439, inf
  %v5880 = vsel %vm5879, %v5439, %v5878
  %vm5881 = vcmp.eq.f32.partialorder %v5439, 0.0
  %v5882 = vand.u32 %v5439, 2147483648
  %v5883 = vsel %vm5881, %v5882, %v5880
  %v5884 = vrsqrt.pop %v5442
  %v5885 = vmul.f32 %v5442, %v5884
  %vm5886 = vcmp.eq.f32.partialorder %v5442, inf
  %v5887 = vsel %vm5886, %v5442, %v5885
  %vm5888 = vcmp.eq.f32.partialorder %v5442, 0.0
  %v5889 = vand.u32 %v5442, 2147483648
  %v5890 = vsel %vm5888, %v5889, %v5887
  %v5891 = vadd.f32 %v5449, 1e-10
  %v5892 = vadd.f32 %v5456, 1e-10
  %v5893 = vadd.f32 %v5463, 1e-10
  %v5894 = vadd.f32 %v5470, 1e-10
  %v5895 = vadd.f32 %v5477, 1e-10
  %v5896 = vadd.f32 %v5484, 1e-10
  %v5897 = vadd.f32 %v5491, 1e-10
  %v5898 = vadd.f32 %v5498, 1e-10
  %v5899 = vadd.f32 %v5505, 1e-10
  %v5900 = vadd.f32 %v5512, 1e-10
  %v5901 = vadd.f32 %v5519, 1e-10
  %v5902 = vadd.f32 %v5526, 1e-10
  %v5903 = vadd.f32 %v5533, 1e-10
  %v5904 = vadd.f32 %v5540, 1e-10
  %v5905 = vadd.f32 %v5547, 1e-10
  %v5906 = vadd.f32 %v5554, 1e-10
  %v5907 = vadd.f32 %v5561, 1e-10
  %v5908 = vadd.f32 %v5568, 1e-10
  %v5909 = vadd.f32 %v5575, 1e-10
  %v5910 = vadd.f32 %v5582, 1e-10
  %v5911 = vadd.f32 %v5589, 1e-10
  %v5912 = vadd.f32 %v5596, 1e-10
  %v5913 = vadd.f32 %v5603, 1e-10
  %v5914 = vadd.f32 %v5610, 1e-10
  %v5915 = vadd.f32 %v5617, 1e-10
  %v5916 = vadd.f32 %v5624, 1e-10
  %v5917 = vadd.f32 %v5631, 1e-10
  %v5918 = vadd.f32 %v5638, 1e-10
  %v5919 = vadd.f32 %v5645, 1e-10
  %v5920 = vadd.f32 %v5652, 1e-10
  %v5921 = vadd.f32 %v5659, 1e-10
  %v5922 = vadd.f32 %v5666, 1e-10
  %v5923 = vadd.f32 %v5673, 1e-10
  %v5924 = vadd.f32 %v5680, 1e-10
  %v5925 = vadd.f32 %v5687, 1e-10
  %v5926 = vadd.f32 %v5694, 1e-10
  %v5927 = vadd.f32 %v5701, 1e-10
  %v5928 = vadd.f32 %v5708, 1e-10
  %v5929 = vadd.f32 %v5715, 1e-10
  %v5930 = vadd.f32 %v5722, 1e-10
  %v5931 = vadd.f32 %v5729, 1e-10
  %v5932 = vadd.f32 %v5736, 1e-10
  %v5933 = vadd.f32 %v5743, 1e-10
  %v5934 = vadd.f32 %v5750, 1e-10
  %v5935 = vadd.f32 %v5757, 1e-10
  %v5936 = vadd.f32 %v5764, 1e-10
  %v5937 = vadd.f32 %v5771, 1e-10
  %v5938 = vadd.f32 %v5778, 1e-10
  %v5939 = vadd.f32 %v5785, 1e-10
  %v5940 = vadd.f32 %v5792, 1e-10
  %v5941 = vadd.f32 %v5799, 1e-10
  %v5942 = vadd.f32 %v5806, 1e-10
  %v5943 = vadd.f32 %v5813, 1e-10
  %v5944 = vadd.f32 %v5820, 1e-10
  %v5945 = vadd.f32 %v5827, 1e-10
  %v5946 = vadd.f32 %v5834, 1e-10
  %v5947 = vadd.f32 %v5841, 1e-10
  %v5948 = vadd.f32 %v5848, 1e-10
  %v5949 = vadd.f32 %v5855, 1e-10
  %v5950 = vadd.f32 %v5862, 1e-10
  %v5951 = vadd.f32 %v5869, 1e-10
  %v5952 = vadd.f32 %v5876, 1e-10
  %v5953 = vadd.f32 %v5883, 1e-10
  %v5954 = vadd.f32 %v5890, 1e-10
  %v5955 = vrcp.pop %v5891
  %v5956 = vrcp.pop %v5892
  %v5957 = vrcp.pop %v5893
  %v5958 = vrcp.pop %v5894
  %v5959 = vrcp.pop %v5895
  %v5960 = vrcp.pop %v5896
  %v5961 = vrcp.pop %v5897
  %v5962 = vrcp.pop %v5898
  %v5963 = vrcp.pop %v5899
  %v5964 = vrcp.pop %v5900
  %v5965 = vrcp.pop %v5901
  %v5966 = vrcp.pop %v5902
  %v5967 = vrcp.pop %v5903
  %v5968 = vrcp.pop %v5904
  %v5969 = vrcp.pop %v5905
  %v5970 = vrcp.pop %v5906
  %v5971 = vrcp.pop %v5907
  %v5972 = vrcp.pop %v5908
  %v5973 = vrcp.pop %v5909
  %v5974 = vrcp.pop %v5910
  %v5975 = vrcp.pop %v5911
  %v5976 = vrcp.pop %v5912
  %v5977 = vrcp.pop %v5913
  %v5978 = vrcp.pop %v5914
  %v5979 = vrcp.pop %v5915
  %v5980 = vrcp.pop %v5916
  %v5981 = vrcp.pop %v5917
  %v5982 = vrcp.pop %v5918
  %v5983 = vrcp.pop %v5919
  %v5984 = vrcp.pop %v5920
  %v5985 = vrcp.pop %v5921
  %v5986 = vrcp.pop %v5922
  %v5987 = vrcp.pop %v5923
  %v5988 = vrcp.pop %v5924
  %v5989 = vrcp.pop %v5925
  %v5990 = vrcp.pop %v5926
  %v5991 = vrcp.pop %v5927
  %v5992 = vrcp.pop %v5928
  %v5993 = vrcp.pop %v5929
  %v5994 = vrcp.pop %v5930
  %v5995 = vrcp.pop %v5931
  %v5996 = vrcp.pop %v5932
  %v5997 = vrcp.pop %v5933
  %v5998 = vrcp.pop %v5934
  %v5999 = vrcp.pop %v5935
  %v6000 = vrcp.pop %v5936
  %v6001 = vrcp.pop %v5937
  %v6002 = vrcp.pop %v5938
  %v6003 = vrcp.pop %v5939
  %v6004 = vrcp.pop %v5940
  %v6005 = vrcp.pop %v5941
  %v6006 = vrcp.pop %v5942
  %v6007 = vrcp.pop %v5943
  %v6008 = vrcp.pop %v5944
  %v6009 = vrcp.pop %v5945
  %v6010 = vrcp.pop %v5946
  %v6011 = vrcp.pop %v5947
  %v6012 = vrcp.pop %v5948
  %v6013 = vrcp.pop %v5949
  %v6014 = vrcp.pop %v5950
  %v6015 = vrcp.pop %v5951
  %v6016 = vrcp.pop %v5952
  %v6017 = vrcp.pop %v5953
  %v6018 = vrcp.pop %v5954
  %v6019 = vmul.f32 %v2272, %v5123
  %v6020 = vmul.f32 %v2273, %v5124
  %v6021 = vmul.f32 %v2274, %v5125
  %v6022 = vmul.f32 %v2275, %v5126
  %v6023 = vmul.f32 %v2276, %v5127
  %v6024 = vmul.f32 %v2277, %v5128
  %v6025 = vmul.f32 %v2278, %v5129
  %v6026 = vmul.f32 %v2279, %v5130
  %v6027 = vmul.f32 %v2280, %v5131
  %v6028 = vmul.f32 %v2281, %v5132
  %v6029 = vmul.f32 %v2282, %v5133
  %v6030 = vmul.f32 %v2283, %v5134
  %v6031 = vmul.f32 %v2284, %v5135
  %v6032 = vmul.f32 %v2285, %v5136
  %v6033 = vmul.f32 %v2286, %v5137
  %v6034 = vmul.f32 %v2287, %v5138
  %v6035 = vmul.f32 %v2288, %v5139
  %v6036 = vmul.f32 %v2289, %v5140
  %v6037 = vmul.f32 %v2290, %v5141
  %v6038 = vmul.f32 %v2291, %v5142
  %v6039 = vmul.f32 %v2292, %v5143
  %v6040 = vmul.f32 %v2293, %v5144
  %v6041 = vmul.f32 %v2294, %v5145
  %v6042 = vmul.f32 %v2295, %v5146
  %v6043 = vmul.f32 %v2296, %v5147
  %v6044 = vmul.f32 %v2297, %v5148
  %v6045 = vmul.f32 %v2298, %v5149
  %v6046 = vmul.f32 %v2299, %v5150
  %v6047 = vmul.f32 %v2300, %v5151
  %v6048 = vmul.f32 %v2301, %v5152
  %v6049 = vmul.f32 %v2302, %v5153
  %v6050 = vmul.f32 %v2303, %v5154
  %v6051 = vmul.f32 %v2304, %v5155
  %v6052 = vmul.f32 %v2305, %v5156
  %v6053 = vmul.f32 %v2306, %v5157
  %v6054 = vmul.f32 %v2307, %v5158
  %v6055 = vmul.f32 %v2308, %v5159
  %v6056 = vmul.f32 %v2309, %v5160
  %v6057 = vmul.f32 %v2310, %v5161
  %v6058 = vmul.f32 %v2311, %v5162
  %v6059 = vmul.f32 %v2312, %v5163
  %v6060 = vmul.f32 %v2313, %v5164
  %v6061 = vmul.f32 %v2314, %v5165
  %v6062 = vmul.f32 %v2315, %v5166
  %v6063 = vmul.f32 %v2316, %v5167
  %v6064 = vmul.f32 %v2317, %v5168
  %v6065 = vmul.f32 %v2318, %v5169
  %v6066 = vmul.f32 %v2319, %v5170
  %v6067 = vmul.f32 %v2320, %v5171
  %v6068 = vmul.f32 %v2321, %v5172
  %v6069 = vmul.f32 %v2322, %v5173
  %v6070 = vmul.f32 %v2323, %v5174
  %v6071 = vmul.f32 %v2324, %v5175
  %v6072 = vmul.f32 %v2325, %v5176
  %v6073 = vmul.f32 %v2326, %v5177
  %v6074 = vmul.f32 %v2327, %v5178
  %v6075 = vmul.f32 %v2328, %v5179
  %v6076 = vmul.f32 %v2329, %v5180
  %v6077 = vmul.f32 %v2330, %v5181
  %v6078 = vmul.f32 %v2331, %v5182
  %v6079 = vmul.f32 %v2332, %v5183
  %v6080 = vmul.f32 %v2333, %v5184
  %v6081 = vmul.f32 %v2334, %v5185
  %v6082 = vmul.f32 %v2335, %v5186
  %v6083 = vmul.f32 %v4291, %v5955
  %v6084 = vmul.f32 %v4292, %v5956
  %v6085 = vmul.f32 %v4293, %v5957
  %v6086 = vmul.f32 %v4294, %v5958
  %v6087 = vmul.f32 %v4295, %v5959
  %v6088 = vmul.f32 %v4296, %v5960
  %v6089 = vmul.f32 %v4297, %v5961
  %v6090 = vmul.f32 %v4298, %v5962
  %v6091 = vmul.f32 %v4299, %v5963
  %v6092 = vmul.f32 %v4300, %v5964
  %v6093 = vmul.f32 %v4301, %v5965
  %v6094 = vmul.f32 %v4302, %v5966
  %v6095 = vmul.f32 %v4303, %v5967
  %v6096 = vmul.f32 %v4304, %v5968
  %v6097 = vmul.f32 %v4305, %v5969
  %v6098 = vmul.f32 %v4306, %v5970
  %v6099 = vmul.f32 %v4307, %v5971
  %v6100 = vmul.f32 %v4308, %v5972
  %v6101 = vmul.f32 %v4309, %v5973
  %v6102 = vmul.f32 %v4310, %v5974
  %v6103 = vmul.f32 %v4311, %v5975
  %v6104 = vmul.f32 %v4312, %v5976
  %v6105 = vmul.f32 %v4313, %v5977
  %v6106 = vmul.f32 %v4314, %v5978
  %v6107 = vmul.f32 %v4315, %v5979
  %v6108 = vmul.f32 %v4316, %v5980
  %v6109 = vmul.f32 %v4317, %v5981
  %v6110 = vmul.f32 %v4318, %v5982
  %v6111 = vmul.f32 %v4319, %v5983
  %v6112 = vmul.f32 %v4320, %v5984
  %v6113 = vmul.f32 %v4321, %v5985
  %v6114 = vmul.f32 %v4322, %v5986
  %v6115 = vmul.f32 %v4323, %v5987
  %v6116 = vmul.f32 %v4324, %v5988
  %v6117 = vmul.f32 %v4325, %v5989
  %v6118 = vmul.f32 %v4326, %v5990
  %v6119 = vmul.f32 %v4327, %v5991
  %v6120 = vmul.f32 %v4328, %v5992
  %v6121 = vmul.f32 %v4329, %v5993
  %v6122 = vmul.f32 %v4330, %v5994
  %v6123 = vmul.f32 %v4331, %v5995
  %v6124 = vmul.f32 %v4332, %v5996
  %v6125 = vmul.f32 %v4333, %v5997
  %v6126 = vmul.f32 %v4334, %v5998
  %v6127 = vmul.f32 %v4335, %v5999
  %v6128 = vmul.f32 %v4336, %v6000
  %v6129 = vmul.f32 %v4337, %v6001
  %v6130 = vmul.f32 %v4338, %v6002
  %v6131 = vmul.f32 %v4339, %v6003
  %v6132 = vmul.f32 %v4340, %v6004
  %v6133 = vmul.f32 %v4341, %v6005
  %v6134 = vmul.f32 %v4342, %v6006
  %v6135 = vmul.f32 %v4343, %v6007
  %v6136 = vmul.f32 %v4344, %v6008
  %v6137 = vmul.f32 %v4345, %v6009
  %v6138 = vmul.f32 %v4346, %v6010
  %v6139 = vmul.f32 %v4347, %v6011
  %v6140 = vmul.f32 %v4348, %v6012
  %v6141 = vmul.f32 %v4349, %v6013
  %v6142 = vmul.f32 %v4350, %v6014
  %v6143 = vmul.f32 %v4351, %v6015
  %v6144 = vmul.f32 %v4352, %v6016
  %v6145 = vmul.f32 %v4353, %v6017
  %v6146 = vmul.f32 %v4354, %v6018
  %v6147 = vsub.f32 %v6019, %v6083
  %v6148 = vsub.f32 %v6020, %v6084
  %v6149 = vsub.f32 %v6021, %v6085
  %v6150 = vsub.f32 %v6022, %v6086
  %v6151 = vsub.f32 %v6023, %v6087
  %v6152 = vsub.f32 %v6024, %v6088
  %v6153 = vsub.f32 %v6025, %v6089
  %v6154 = vsub.f32 %v6026, %v6090
  %v6155 = vsub.f32 %v6027, %v6091
  %v6156 = vsub.f32 %v6028, %v6092
  %v6157 = vsub.f32 %v6029, %v6093
  %v6158 = vsub.f32 %v6030, %v6094
  %v6159 = vsub.f32 %v6031, %v6095
  %v6160 = vsub.f32 %v6032, %v6096
  %v6161 = vsub.f32 %v6033, %v6097
  %v6162 = vsub.f32 %v6034, %v6098
  %v6163 = vsub.f32 %v6035, %v6099
  %v6164 = vsub.f32 %v6036, %v6100
  %v6165 = vsub.f32 %v6037, %v6101
  %v6166 = vsub.f32 %v6038, %v6102
  %v6167 = vsub.f32 %v6039, %v6103
  %v6168 = vsub.f32 %v6040, %v6104
  %v6169 = vsub.f32 %v6041, %v6105
  %v6170 = vsub.f32 %v6042, %v6106
  %v6171 = vsub.f32 %v6043, %v6107
  %v6172 = vsub.f32 %v6044, %v6108
  %v6173 = vsub.f32 %v6045, %v6109
  %v6174 = vsub.f32 %v6046, %v6110
  %v6175 = vsub.f32 %v6047, %v6111
  %v6176 = vsub.f32 %v6048, %v6112
  %v6177 = vsub.f32 %v6049, %v6113
  %v6178 = vsub.f32 %v6050, %v6114
  %v6179 = vsub.f32 %v6051, %v6115
  %v6180 = vsub.f32 %v6052, %v6116
  %v6181 = vsub.f32 %v6053, %v6117
  %v6182 = vsub.f32 %v6054, %v6118
  %v6183 = vsub.f32 %v6055, %v6119
  %v6184 = vsub.f32 %v6056, %v6120
  %v6185 = vsub.f32 %v6057, %v6121
  %v6186 = vsub.f32 %v6058, %v6122
  %v6187 = vsub.f32 %v6059, %v6123
  %v6188 = vsub.f32 %v6060, %v6124
  %v6189 = vsub.f32 %v6061, %v6125
  %v6190 = vsub.f32 %v6062, %v6126
  %v6191 = vsub.f32 %v6063, %v6127
  %v6192 = vsub.f32 %v6064, %v6128
  %v6193 = vsub.f32 %v6065, %v6129
  %v6194 = vsub.f32 %v6066, %v6130
  %v6195 = vsub.f32 %v6067, %v6131
  %v6196 = vsub.f32 %v6068, %v6132
  %v6197 = vsub.f32 %v6069, %v6133
  %v6198 = vsub.f32 %v6070, %v6134
  %v6199 = vsub.f32 %v6071, %v6135
  %v6200 = vsub.f32 %v6072, %v6136
  %v6201 = vsub.f32 %v6073, %v6137
  %v6202 = vsub.f32 %v6074, %v6138
  %v6203 = vsub.f32 %v6075, %v6139
  %v6204 = vsub.f32 %v6076, %v6140
  %v6205 = vsub.f32 %v6077, %v6141
  %v6206 = vsub.f32 %v6078, %v6142
  %v6207 = vsub.f32 %v6079, %v6143
  %v6208 = vsub.f32 %v6080, %v6144
  %v6209 = vsub.f32 %v6081, %v6145
  %v6210 = vsub.f32 %v6082, %v6146
  %v6211 = vmul.f32 %v6147, %v6147
  %v6212 = vmul.f32 %v6148, %v6148
  %v6213 = vmul.f32 %v6149, %v6149
  %v6214 = vmul.f32 %v6150, %v6150
  %v6215 = vmul.f32 %v6151, %v6151
  %v6216 = vmul.f32 %v6152, %v6152
  %v6217 = vmul.f32 %v6153, %v6153
  %v6218 = vmul.f32 %v6154, %v6154
  %v6219 = vmul.f32 %v6155, %v6155
  %v6220 = vmul.f32 %v6156, %v6156
  %v6221 = vmul.f32 %v6157, %v6157
  %v6222 = vmul.f32 %v6158, %v6158
  %v6223 = vmul.f32 %v6159, %v6159
  %v6224 = vmul.f32 %v6160, %v6160
  %v6225 = vmul.f32 %v6161, %v6161
  %v6226 = vmul.f32 %v6162, %v6162
  %v6227 = vmul.f32 %v6163, %v6163
  %v6228 = vmul.f32 %v6164, %v6164
  %v6229 = vmul.f32 %v6165, %v6165
  %v6230 = vmul.f32 %v6166, %v6166
  %v6231 = vmul.f32 %v6167, %v6167
  %v6232 = vmul.f32 %v6168, %v6168
  %v6233 = vmul.f32 %v6169, %v6169
  %v6234 = vmul.f32 %v6170, %v6170
  %v6235 = vmul.f32 %v6171, %v6171
  %v6236 = vmul.f32 %v6172, %v6172
  %v6237 = vmul.f32 %v6173, %v6173
  %v6238 = vmul.f32 %v6174, %v6174
  %v6239 = vmul.f32 %v6175, %v6175
  %v6240 = vmul.f32 %v6176, %v6176
  %v6241 = vmul.f32 %v6177, %v6177
  %v6242 = vmul.f32 %v6178, %v6178
  %v6243 = vmul.f32 %v6179, %v6179
  %v6244 = vmul.f32 %v6180, %v6180
  %v6245 = vmul.f32 %v6181, %v6181
  %v6246 = vmul.f32 %v6182, %v6182
  %v6247 = vmul.f32 %v6183, %v6183
  %v6248 = vmul.f32 %v6184, %v6184
  %v6249 = vmul.f32 %v6185, %v6185
  %v6250 = vmul.f32 %v6186, %v6186
  %v6251 = vmul.f32 %v6187, %v6187
  %v6252 = vmul.f32 %v6188, %v6188
  %v6253 = vmul.f32 %v6189, %v6189
  %v6254 = vmul.f32 %v6190, %v6190
  %v6255 = vmul.f32 %v6191, %v6191
  %v6256 = vmul.f32 %v6192, %v6192
  %v6257 = vmul.f32 %v6193, %v6193
  %v6258 = vmul.f32 %v6194, %v6194
  %v6259 = vmul.f32 %v6195, %v6195
  %v6260 = vmul.f32 %v6196, %v6196
  %v6261 = vmul.f32 %v6197, %v6197
  %v6262 = vmul.f32 %v6198, %v6198
  %v6263 = vmul.f32 %v6199, %v6199
  %v6264 = vmul.f32 %v6200, %v6200
  %v6265 = vmul.f32 %v6201, %v6201
  %v6266 = vmul.f32 %v6202, %v6202
  %v6267 = vmul.f32 %v6203, %v6203
  %v6268 = vmul.f32 %v6204, %v6204
  %v6269 = vmul.f32 %v6205, %v6205
  %v6270 = vmul.f32 %v6206, %v6206
  %v6271 = vmul.f32 %v6207, %v6207
  %v6272 = vmul.f32 %v6208, %v6208
  %v6273 = vmul.f32 %v6209, %v6209
  %v6274 = vmul.f32 %v6210, %v6210
  %v6275 = vld [vmem:[%s4] sm:$0x1]
  %v6277 = vlaneseq
  %v6278 = vshrl.u32 %v6277, 7
  %v6279 = vsub.s32 0, %v6278
  %v6280 = vrot.slane %v6275, %v6279
  %v6282 = vmul.f32 %v6211, %v6280
  %v6283 = vmul.f32 %v6212, %v6280
  %v6284 = vmul.f32 %v6213, %v6280
  %v6285 = vmul.f32 %v6214, %v6280
  %v6286 = vmul.f32 %v6215, %v6280
  %v6287 = vmul.f32 %v6216, %v6280
  %v6288 = vmul.f32 %v6217, %v6280
  %v6289 = vmul.f32 %v6218, %v6280
  %v6290 = vmul.f32 %v6219, %v6280
  %v6291 = vmul.f32 %v6220, %v6280
  %v6292 = vmul.f32 %v6221, %v6280
  %v6293 = vmul.f32 %v6222, %v6280
  %v6294 = vmul.f32 %v6223, %v6280
  %v6295 = vmul.f32 %v6224, %v6280
  %v6296 = vmul.f32 %v6225, %v6280
  %v6297 = vmul.f32 %v6226, %v6280
  %v6298 = vmul.f32 %v6227, %v6280
  %v6299 = vmul.f32 %v6228, %v6280
  %v6300 = vmul.f32 %v6229, %v6280
  %v6301 = vmul.f32 %v6230, %v6280
  %v6302 = vmul.f32 %v6231, %v6280
  %v6303 = vmul.f32 %v6232, %v6280
  %v6304 = vmul.f32 %v6233, %v6280
  %v6305 = vmul.f32 %v6234, %v6280
  %v6306 = vmul.f32 %v6235, %v6280
  %v6307 = vmul.f32 %v6236, %v6280
  %v6308 = vmul.f32 %v6237, %v6280
  %v6309 = vmul.f32 %v6238, %v6280
  %v6310 = vmul.f32 %v6239, %v6280
  %v6311 = vmul.f32 %v6240, %v6280
  %v6312 = vmul.f32 %v6241, %v6280
  %v6313 = vmul.f32 %v6242, %v6280
  %v6314 = vmul.f32 %v6243, %v6280
  %v6315 = vmul.f32 %v6244, %v6280
  %v6316 = vmul.f32 %v6245, %v6280
  %v6317 = vmul.f32 %v6246, %v6280
  %v6318 = vmul.f32 %v6247, %v6280
  %v6319 = vmul.f32 %v6248, %v6280
  %v6320 = vmul.f32 %v6249, %v6280
  %v6321 = vmul.f32 %v6250, %v6280
  %v6322 = vmul.f32 %v6251, %v6280
  %v6323 = vmul.f32 %v6252, %v6280
  %v6324 = vmul.f32 %v6253, %v6280
  %v6325 = vmul.f32 %v6254, %v6280
  %v6326 = vmul.f32 %v6255, %v6280
  %v6327 = vmul.f32 %v6256, %v6280
  %v6328 = vmul.f32 %v6257, %v6280
  %v6329 = vmul.f32 %v6258, %v6280
  %v6330 = vmul.f32 %v6259, %v6280
  %v6331 = vmul.f32 %v6260, %v6280
  %v6332 = vmul.f32 %v6261, %v6280
  %v6333 = vmul.f32 %v6262, %v6280
  %v6334 = vmul.f32 %v6263, %v6280
  %v6335 = vmul.f32 %v6264, %v6280
  %v6336 = vmul.f32 %v6265, %v6280
  %v6337 = vmul.f32 %v6266, %v6280
  %v6338 = vmul.f32 %v6267, %v6280
  %v6339 = vmul.f32 %v6268, %v6280
  %v6340 = vmul.f32 %v6269, %v6280
  %v6341 = vmul.f32 %v6270, %v6280
  %v6342 = vmul.f32 %v6271, %v6280
  %v6343 = vmul.f32 %v6272, %v6280
  %v6344 = vmul.f32 %v6273, %v6280
  %v6345 = vmul.f32 %v6274, %v6280
  %v6346 = vsel %vm1308, %v6282, 0.0
  %v6347 = vsel %vm1308, %v6283, 0.0
  %v6348 = vadd.f32 %v6346, %v6347
  %v6349 = vsel %vm1308, %v6284, 0.0
  %v6350 = vadd.f32 %v6348, %v6349
  %v6351 = vsel %vm1308, %v6285, 0.0
  %v6352 = vadd.f32 %v6350, %v6351
  %v6353 = vsel %vm1308, %v6286, 0.0
  %v6354 = vadd.f32 %v6352, %v6353
  %v6355 = vsel %vm1308, %v6287, 0.0
  %v6356 = vadd.f32 %v6354, %v6355
  %v6357 = vsel %vm1308, %v6288, 0.0
  %v6358 = vadd.f32 %v6356, %v6357
  %v6359 = vsel %vm1308, %v6289, 0.0
  %v6360 = vadd.f32 %v6358, %v6359
  %v6361 = vsel %vm1308, %v6290, 0.0
  %v6362 = vadd.f32 %v6360, %v6361
  %v6363 = vsel %vm1308, %v6291, 0.0
  %v6364 = vadd.f32 %v6362, %v6363
  %v6365 = vsel %vm1308, %v6292, 0.0
  %v6366 = vadd.f32 %v6364, %v6365
  %v6367 = vsel %vm1308, %v6293, 0.0
  %v6368 = vadd.f32 %v6366, %v6367
  %v6369 = vsel %vm1308, %v6294, 0.0
  %v6370 = vadd.f32 %v6368, %v6369
  %v6371 = vsel %vm1308, %v6295, 0.0
  %v6372 = vadd.f32 %v6370, %v6371
  %v6373 = vsel %vm1308, %v6296, 0.0
  %v6374 = vadd.f32 %v6372, %v6373
  %v6375 = vsel %vm1308, %v6297, 0.0
  %v6376 = vadd.f32 %v6374, %v6375
  %v6377 = vsel %vm1308, %v6298, 0.0
  %v6378 = vadd.f32 %v6376, %v6377
  %v6379 = vsel %vm1308, %v6299, 0.0
  %v6380 = vadd.f32 %v6378, %v6379
  %v6381 = vsel %vm1308, %v6300, 0.0
  %v6382 = vadd.f32 %v6380, %v6381
  %v6383 = vsel %vm1308, %v6301, 0.0
  %v6384 = vadd.f32 %v6382, %v6383
  %v6385 = vsel %vm1308, %v6302, 0.0
  %v6386 = vadd.f32 %v6384, %v6385
  %v6387 = vsel %vm1308, %v6303, 0.0
  %v6388 = vadd.f32 %v6386, %v6387
  %v6389 = vsel %vm1308, %v6304, 0.0
  %v6390 = vadd.f32 %v6388, %v6389
  %v6391 = vsel %vm1308, %v6305, 0.0
  %v6392 = vadd.f32 %v6390, %v6391
  %v6393 = vsel %vm1308, %v6306, 0.0
  %v6394 = vadd.f32 %v6392, %v6393
  %v6395 = vsel %vm1308, %v6307, 0.0
  %v6396 = vadd.f32 %v6394, %v6395
  %v6397 = vsel %vm1308, %v6308, 0.0
  %v6398 = vadd.f32 %v6396, %v6397
  %v6399 = vsel %vm1308, %v6309, 0.0
  %v6400 = vadd.f32 %v6398, %v6399
  %v6401 = vsel %vm1308, %v6310, 0.0
  %v6402 = vadd.f32 %v6400, %v6401
  %v6403 = vsel %vm1308, %v6311, 0.0
  %v6404 = vadd.f32 %v6402, %v6403
  %v6405 = vsel %vm1308, %v6312, 0.0
  %v6406 = vadd.f32 %v6404, %v6405
  %v6407 = vsel %vm1308, %v6313, 0.0
  %v6408 = vadd.f32 %v6406, %v6407
  %v6409 = vsel %vm1308, %v6314, 0.0
  %v6410 = vadd.f32 %v6408, %v6409
  %v6411 = vsel %vm1308, %v6315, 0.0
  %v6412 = vadd.f32 %v6410, %v6411
  %v6413 = vsel %vm1308, %v6316, 0.0
  %v6414 = vadd.f32 %v6412, %v6413
  %v6415 = vsel %vm1308, %v6317, 0.0
  %v6416 = vadd.f32 %v6414, %v6415
  %v6417 = vsel %vm1308, %v6318, 0.0
  %v6418 = vadd.f32 %v6416, %v6417
  %v6419 = vsel %vm1308, %v6319, 0.0
  %v6420 = vadd.f32 %v6418, %v6419
  %v6421 = vsel %vm1308, %v6320, 0.0
  %v6422 = vadd.f32 %v6420, %v6421
  %v6423 = vsel %vm1308, %v6321, 0.0
  %v6424 = vadd.f32 %v6422, %v6423
  %v6425 = vsel %vm1308, %v6322, 0.0
  %v6426 = vadd.f32 %v6424, %v6425
  %v6427 = vsel %vm1308, %v6323, 0.0
  %v6428 = vadd.f32 %v6426, %v6427
  %v6429 = vsel %vm1308, %v6324, 0.0
  %v6430 = vadd.f32 %v6428, %v6429
  %v6431 = vsel %vm1308, %v6325, 0.0
  %v6432 = vadd.f32 %v6430, %v6431
  %v6433 = vsel %vm1308, %v6326, 0.0
  %v6434 = vadd.f32 %v6432, %v6433
  %v6435 = vsel %vm1308, %v6327, 0.0
  %v6436 = vadd.f32 %v6434, %v6435
  %v6437 = vsel %vm1308, %v6328, 0.0
  %v6438 = vadd.f32 %v6436, %v6437
  %v6439 = vsel %vm1308, %v6329, 0.0
  %v6440 = vadd.f32 %v6438, %v6439
  %v6441 = vsel %vm1308, %v6330, 0.0
  %v6442 = vadd.f32 %v6440, %v6441
  %v6443 = vsel %vm1308, %v6331, 0.0
  %v6444 = vadd.f32 %v6442, %v6443
  %v6445 = vsel %vm1308, %v6332, 0.0
  %v6446 = vadd.f32 %v6444, %v6445
  %v6447 = vsel %vm1308, %v6333, 0.0
  %v6448 = vadd.f32 %v6446, %v6447
  %v6449 = vsel %vm1308, %v6334, 0.0
  %v6450 = vadd.f32 %v6448, %v6449
  %v6451 = vsel %vm1308, %v6335, 0.0
  %v6452 = vadd.f32 %v6450, %v6451
  %v6453 = vsel %vm1308, %v6336, 0.0
  %v6454 = vadd.f32 %v6452, %v6453
  %v6455 = vsel %vm1308, %v6337, 0.0
  %v6456 = vadd.f32 %v6454, %v6455
  %v6457 = vsel %vm1308, %v6338, 0.0
  %v6458 = vadd.f32 %v6456, %v6457
  %v6459 = vsel %vm1308, %v6339, 0.0
  %v6460 = vadd.f32 %v6458, %v6459
  %v6461 = vsel %vm1308, %v6340, 0.0
  %v6462 = vadd.f32 %v6460, %v6461
  %v6463 = vsel %vm1308, %v6341, 0.0
  %v6464 = vadd.f32 %v6462, %v6463
  %v6465 = vsel %vm1308, %v6342, 0.0
  %v6466 = vadd.f32 %v6464, %v6465
  %v6467 = vsel %vm1308, %v6343, 0.0
  %v6468 = vadd.f32 %v6466, %v6467
  %v6469 = vsel %vm1308, %v6344, 0.0
  %v6470 = vadd.f32 %v6468, %v6469
  %v6471 = vsel %vm1308, %v6345, 0.0
  %v6472 = vadd.f32 %v6470, %v6471
  %v6473 = vrot.slane %v6472, 4
  %v6474 = vadd.f32 %v6472, %v6473
  %v6475 = vrot.slane %v6474, 2
  %v6476 = vadd.f32 %v6474, %v6475
  %v6477 = vrot.slane %v6476, 1
  %v6478 = vadd.f32 %v6476, %v6477
  %vm6479 = vcmask 516096
  %6480 = vst.msk [vmem:[%s5] sm:$0x1] %vm6479, %v6478
  // Predicated region
  $region22: #{_lambda_.7} parent=0 // pred_check
    _
  $region23: #{_lambda_.7} parent=0 // pred_check_branch
    %6482 = sbr.rel (0) target = $region25
  $region24: #{_lambda_.7} parent=0 // pred_region
    _
  $region25: #{_lambda_.7} parent=0 // pred_fallthru
    _
  // Predicated region
  $region26: #{_lambda_.7} parent=0 // pred_check
    _
  $region27: #{_lambda_.7} parent=0 // pred_check_branch
    %6484 = sbr.rel (0) target = $region29
  $region28: #{_lambda_.7} parent=0 // pred_region
    _
  $region29: #{_lambda_.7} parent=0 // pred_fallthru
    _

// kernel: _lambda_.9
$region0: #{_lambda_.9}
  #allocation0 [shape = 'u32[]', space=smem, size = 0x4, offset = 0x4, fixed_abs, tag = 'smem constant byte address 0x4 - core index']
  #allocation1 [shape = 'u32[144,128]{1,0:T(1,128)}', space=vmem, size = 0x12000, scoped, tag = 'internal scratch']
  %s0 = inlined_call_operand.vmem [shape: bf16[128,576], index: 0, kind: input, shape index: {}]
  %s1 = inlined_call_operand.vmem [shape: bf16[128,576], index: 1, kind: input, shape index: {}]
  %s2 = inlined_call_operand.vmem [shape: bf16[576,64], index: 2, kind: input, shape index: {}]
  %s3 = inlined_call_operand.vmem [shape: f32[1,64], index: 3, kind: input, shape index: {}]
  %s4 = inlined_call_operand.vmem [shape: f32[1,64], index: 4, kind: input, shape index: {}]
  %s5 = inlined_call_operand.vmem [shape: f32[1,1,64], index: 5, kind: output, shape index: {}]
  %s6 = sld [smem:[#allocation0]]
  $region30: #{_lambda_.9} parent=0
    _
  %s8 = ssub.s32 1, %s6
  %s9 = scalar_select 0, %s8, %s6
  // Predicated region
  $region2: #{_lambda_.9} parent=0 // pred_check
    _
  $region3: #{_lambda_.9} parent=0 // pred_check_branch
    %11 = sbr.rel (0) target = $region5
  $region4: #{_lambda_.9} parent=0 // pred_region
    _
  $region5: #{_lambda_.9} parent=0 // pred_fallthru
    _
  // Predicated region
  $region6: #{_lambda_.9} parent=0 // pred_check
    _
  $region7: #{_lambda_.9} parent=0 // pred_check_branch
    %13 = sbr.rel (0) target = $region9
  $region8: #{_lambda_.9} parent=0 // pred_region
    _
  $region9: #{_lambda_.9} parent=0 // pred_fallthru
    _
  // Predicated region
  $region10: #{_lambda_.9} parent=0 // pred_check
    _
  $region11: #{_lambda_.9} parent=0 // pred_check_branch
    %15 = sbr.rel (0) target = $region13
  $region12: #{_lambda_.9} parent=0 // pred_region
    _
  $region13: #{_lambda_.9} parent=0 // pred_fallthru
    _
  // Predicated region
  $region14: #{_lambda_.9} parent=0 // pred_check
    _
  $region15: #{_lambda_.9} parent=0 // pred_check_branch
    %17 = sbr.rel (0) target = $region17
  $region16: #{_lambda_.9} parent=0 // pred_region
    _
  $region17: #{_lambda_.9} parent=0 // pred_fallthru
    _
  // Predicated region
  $region18: #{_lambda_.9} parent=0 // pred_check
    _
  $region19: #{_lambda_.9} parent=0 // pred_check_branch
    %19 = sbr.rel (0) target = $region21
  $region20: #{_lambda_.9} parent=0 // pred_region
    _
  $region21: #{_lambda_.9} parent=0 // pred_fallthru
    _
  %v21 = vld [vmem:[%s0] sm:$0xff]
  %v22 = vld [vmem:[%s0 + $0x8] sm:$0xff]
  %v23 = vld [vmem:[%s0 + $0x10] sm:$0xf]
  %v24 = vld [vmem:[%s0 + $0x14] sm:$0xff]
  %v25 = vld [vmem:[%s0 + $0x1c] sm:$0xff]
  %v26 = vld [vmem:[%s0 + $0x24] sm:$0xf]
  %v27 = vld [vmem:[%s0 + $0x28] sm:$0xff]
  %v28 = vld [vmem:[%s0 + $0x30] sm:$0xff]
  %v29 = vld [vmem:[%s0 + $0x38] sm:$0xf]
  %v30 = vld [vmem:[%s0 + $0x3c] sm:$0xff]
  %v31 = vld [vmem:[%s0 + $0x44] sm:$0xff]
  %v32 = vld [vmem:[%s0 + $0x4c] sm:$0xf]
  %v33 = vld [vmem:[%s0 + $0x50] sm:$0xff]
  %v34 = vld [vmem:[%s0 + $0x58] sm:$0xff]
  %v35 = vld [vmem:[%s0 + $0x60] sm:$0xf]
  %v36 = vld [vmem:[%s0 + $0x64] sm:$0xff]
  %v37 = vld [vmem:[%s0 + $0x6c] sm:$0xff]
  %v38 = vld [vmem:[%s0 + $0x74] sm:$0xf]
  %v39 = vld [vmem:[%s0 + $0x78] sm:$0xff]
  %v40 = vld [vmem:[%s0 + $0x80] sm:$0xff]
  %v41 = vld [vmem:[%s0 + $0x88] sm:$0xf]
  %v42 = vld [vmem:[%s0 + $0x8c] sm:$0xff]
  %v43 = vld [vmem:[%s0 + $0x94] sm:$0xff]
  %v44 = vld [vmem:[%s0 + $0x9c] sm:$0xf]
  %v45 = vld [vmem:[%s0 + $0xa0] sm:$0xff]
  %v46 = vld [vmem:[%s0 + $0xa8] sm:$0xff]
  %v47 = vld [vmem:[%s0 + $0xb0] sm:$0xf]
  %v48 = vld [vmem:[%s0 + $0xb4] sm:$0xff]
  %v49 = vld [vmem:[%s0 + $0xbc] sm:$0xff]
  %v50 = vld [vmem:[%s0 + $0xc4] sm:$0xf]
  %v51 = vld [vmem:[%s0 + $0xc8] sm:$0xff]
  %v52 = vld [vmem:[%s0 + $0xd0] sm:$0xff]
  %v53 = vld [vmem:[%s0 + $0xd8] sm:$0xf]
  %v54 = vld [vmem:[%s0 + $0xdc] sm:$0xff]
  %v55 = vld [vmem:[%s0 + $0xe4] sm:$0xff]
  %v56 = vld [vmem:[%s0 + $0xec] sm:$0xf]
  %v57 = vld [vmem:[%s0 + $0xf0] sm:$0xff]
  %v58 = vld [vmem:[%s0 + $0xf8] sm:$0xff]
  %v59 = vld [vmem:[%s0 + $0x100] sm:$0xf]
  %v60 = vld [vmem:[%s0 + $0x104] sm:$0xff]
  %v61 = vld [vmem:[%s0 + $0x10c] sm:$0xff]
  %v62 = vld [vmem:[%s0 + $0x114] sm:$0xf]
  %v63 = vld [vmem:[%s0 + $0x118] sm:$0xff]
  %v64 = vld [vmem:[%s0 + $0x120] sm:$0xff]
  %v65 = vld [vmem:[%s0 + $0x128] sm:$0xf]
  %v66 = vld [vmem:[%s0 + $0x12c] sm:$0xff]
  %v67 = vld [vmem:[%s0 + $0x134] sm:$0xff]
  %v68 = vld [vmem:[%s0 + $0x13c] sm:$0xf]
  %v69 = vld [vmem:[%s2] sm:$0xf]
  %v70 = vld [vmem:[%s2 + $0x4] sm:$0xf]
  %v71 = vld [vmem:[%s2 + $0x8] sm:$0xf]
  %v72 = vld [vmem:[%s2 + $0xc] sm:$0xf]
  %v73 = vld [vmem:[%s2 + $0x10] sm:$0xf]
  %v74 = vld [vmem:[%s2 + $0x14] sm:$0xf]
  %v75 = vld [vmem:[%s2 + $0x18] sm:$0xf]
  %v76 = vld [vmem:[%s2 + $0x1c] sm:$0xf]
  %v77 = vld [vmem:[%s2 + $0x20] sm:$0xf]
  %v78 = vld [vmem:[%s2 + $0x24] sm:$0xf]
  %v79 = vld [vmem:[%s2 + $0x28] sm:$0xf]
  %v80 = vld [vmem:[%s2 + $0x2c] sm:$0xf]
  %v81 = vld [vmem:[%s2 + $0x30] sm:$0xf]
  %v82 = vld [vmem:[%s2 + $0x34] sm:$0xf]
  %v83 = vld [vmem:[%s2 + $0x38] sm:$0xf]
  %v84 = vld [vmem:[%s2 + $0x3c] sm:$0xf]
  %v85 = vld [vmem:[%s2 + $0x40] sm:$0xf]
  %v86 = vld [vmem:[%s2 + $0x44] sm:$0xf]
  %v87 = vld [vmem:[%s2 + $0x48] sm:$0xf]
  %v88 = vld [vmem:[%s2 + $0x4c] sm:$0xf]
  %v89 = vld [vmem:[%s2 + $0x50] sm:$0xf]
  %v90 = vld [vmem:[%s2 + $0x54] sm:$0xf]
  %v91 = vld [vmem:[%s2 + $0x58] sm:$0xf]
  %v92 = vld [vmem:[%s2 + $0x5c] sm:$0xf]
  %v93 = vld [vmem:[%s2 + $0x60] sm:$0xf]
  %v94 = vld [vmem:[%s2 + $0x64] sm:$0xf]
  %v95 = vld [vmem:[%s2 + $0x68] sm:$0xf]
  %v96 = vld [vmem:[%s2 + $0x6c] sm:$0xf]
  %v97 = vld [vmem:[%s2 + $0x70] sm:$0xf]
  %v98 = vld [vmem:[%s2 + $0x74] sm:$0xf]
  %v99 = vld [vmem:[%s2 + $0x78] sm:$0xf]
  %v100 = vld [vmem:[%s2 + $0x7c] sm:$0xf]
  %v101 = vld [vmem:[%s2 + $0x80] sm:$0xf]
  %v102 = vld [vmem:[%s2 + $0x84] sm:$0xf]
  %v103 = vld [vmem:[%s2 + $0x88] sm:$0xf]
  %v104 = vld [vmem:[%s2 + $0x8c] sm:$0xf]
  %v105 = vld [vmem:[%s2 + $0x90] sm:$0xf]
  %v106 = vld [vmem:[%s2 + $0x94] sm:$0xf]
  %v107 = vld [vmem:[%s2 + $0x98] sm:$0xf]
  %v108 = vld [vmem:[%s2 + $0x9c] sm:$0xf]
  %v109 = vld [vmem:[%s2 + $0xa0] sm:$0xf]
  %v110 = vld [vmem:[%s2 + $0xa4] sm:$0xf]
  %v111 = vld [vmem:[%s2 + $0xa8] sm:$0xf]
  %v112 = vld [vmem:[%s2 + $0xac] sm:$0xf]
  %v113 = vld [vmem:[%s2 + $0xb0] sm:$0xf]
  %v114 = vld [vmem:[%s2 + $0xb4] sm:$0xf]
  %v115 = vld [vmem:[%s2 + $0xb8] sm:$0xf]
  %v116 = vld [vmem:[%s2 + $0xbc] sm:$0xf]
  %v117 = vld [vmem:[%s2 + $0xc0] sm:$0xf]
  %v118 = vld [vmem:[%s2 + $0xc4] sm:$0xf]
  %v119 = vld [vmem:[%s2 + $0xc8] sm:$0xf]
  %v120 = vld [vmem:[%s2 + $0xcc] sm:$0xf]
  %v121 = vld [vmem:[%s2 + $0xd0] sm:$0xf]
  %v122 = vld [vmem:[%s2 + $0xd4] sm:$0xf]
  %v123 = vld [vmem:[%s2 + $0xd8] sm:$0xf]
  %v124 = vld [vmem:[%s2 + $0xdc] sm:$0xf]
  %v125 = vld [vmem:[%s2 + $0xe0] sm:$0xf]
  %v126 = vld [vmem:[%s2 + $0xe4] sm:$0xf]
  %v127 = vld [vmem:[%s2 + $0xe8] sm:$0xf]
  %v128 = vld [vmem:[%s2 + $0xec] sm:$0xf]
  %v129 = vld [vmem:[%s2 + $0xf0] sm:$0xf]
  %v130 = vld [vmem:[%s2 + $0xf4] sm:$0xf]
  %v131 = vld [vmem:[%s2 + $0xf8] sm:$0xf]
  %v132 = vld [vmem:[%s2 + $0xfc] sm:$0xf]
  %v133 = vld [vmem:[%s2 + $0x100] sm:$0xf]
  %v134 = vld [vmem:[%s2 + $0x104] sm:$0xf]
  %v135 = vld [vmem:[%s2 + $0x108] sm:$0xf]
  %v136 = vld [vmem:[%s2 + $0x10c] sm:$0xf]
  %v137 = vld [vmem:[%s2 + $0x110] sm:$0xf]
  %v138 = vld [vmem:[%s2 + $0x114] sm:$0xf]
  %v139 = vld [vmem:[%s2 + $0x118] sm:$0xf]
  %v140 = vld [vmem:[%s2 + $0x11c] sm:$0xf]
  %v141 = vld [vmem:[%s3] sm:$0x1]
  %v143 = vlaneseq
  %v144 = vshrl.u32 %v143, 7
  %v145 = vsub.s32 0, %v144
  %v146 = vrot.slane %v141, %v145
  %v196 = vunpack.c.l.b16 %v21
  %v197 = vunpack.c.h.b16 %v21
  %v198 = vunpack.c.l.b16 %v22
  %v199 = vunpack.c.h.b16 %v22
  %v200 = vunpack.c.l.b16 %v23
  %v201 = vunpack.c.l.b16 %v24
  %v202 = vunpack.c.h.b16 %v24
  %v203 = vunpack.c.l.b16 %v25
  %v204 = vunpack.c.h.b16 %v25
  %v205 = vunpack.c.l.b16 %v26
  %v206 = vunpack.c.l.b16 %v27
  %v207 = vunpack.c.h.b16 %v27
  %v208 = vunpack.c.l.b16 %v28
  %v209 = vunpack.c.h.b16 %v28
  %v210 = vunpack.c.l.b16 %v29
  %v211 = vunpack.c.l.b16 %v30
  %v212 = vunpack.c.h.b16 %v30
  %v213 = vunpack.c.l.b16 %v31
  %v214 = vunpack.c.h.b16 %v31
  %v215 = vunpack.c.l.b16 %v32
  %v216 = vunpack.c.l.b16 %v33
  %v217 = vunpack.c.h.b16 %v33
  %v218 = vunpack.c.l.b16 %v34
  %v219 = vunpack.c.h.b16 %v34
  %v220 = vunpack.c.l.b16 %v35
  %v221 = vunpack.c.l.b16 %v36
  %v222 = vunpack.c.h.b16 %v36
  %v223 = vunpack.c.l.b16 %v37
  %v224 = vunpack.c.h.b16 %v37
  %v225 = vunpack.c.l.b16 %v38
  %v226 = vunpack.c.l.b16 %v39
  %v227 = vunpack.c.h.b16 %v39
  %v228 = vunpack.c.l.b16 %v40
  %v229 = vunpack.c.h.b16 %v40
  %v230 = vunpack.c.l.b16 %v41
  %v231 = vunpack.c.l.b16 %v42
  %v232 = vunpack.c.h.b16 %v42
  %v233 = vunpack.c.l.b16 %v43
  %v234 = vunpack.c.h.b16 %v43
  %v235 = vunpack.c.l.b16 %v44
  %v236 = vunpack.c.l.b16 %v45
  %v237 = vunpack.c.h.b16 %v45
  %v238 = vunpack.c.l.b16 %v46
  %v239 = vunpack.c.h.b16 %v46
  %v240 = vunpack.c.l.b16 %v47
  %v241 = vunpack.c.l.b16 %v48
  %v242 = vunpack.c.h.b16 %v48
  %v243 = vunpack.c.l.b16 %v49
  %v244 = vunpack.c.h.b16 %v49
  %v245 = vunpack.c.l.b16 %v50
  %v246 = vunpack.c.l.b16 %v51
  %v247 = vunpack.c.h.b16 %v51
  %v248 = vunpack.c.l.b16 %v52
  %v249 = vunpack.c.h.b16 %v52
  %v250 = vunpack.c.l.b16 %v53
  %v251 = vunpack.c.l.b16 %v54
  %v252 = vunpack.c.h.b16 %v54
  %v253 = vunpack.c.l.b16 %v55
  %v254 = vunpack.c.h.b16 %v55
  %v255 = vunpack.c.l.b16 %v56
  %v256 = vunpack.c.l.b16 %v57
  %v257 = vunpack.c.h.b16 %v57
  %v258 = vunpack.c.l.b16 %v58
  %v259 = vunpack.c.h.b16 %v58
  %v260 = vunpack.c.l.b16 %v59
  %v261 = vunpack.c.l.b16 %v60
  %v262 = vunpack.c.h.b16 %v60
  %v263 = vunpack.c.l.b16 %v61
  %v264 = vunpack.c.h.b16 %v61
  %v265 = vunpack.c.l.b16 %v62
  %v266 = vunpack.c.l.b16 %v63
  %v267 = vunpack.c.h.b16 %v63
  %v268 = vunpack.c.l.b16 %v64
  %v269 = vunpack.c.h.b16 %v64
  %v270 = vunpack.c.l.b16 %v65
  %v271 = vunpack.c.l.b16 %v66
  %v272 = vunpack.c.h.b16 %v66
  %v273 = vunpack.c.l.b16 %v67
  %v274 = vunpack.c.h.b16 %v67
  %v275 = vunpack.c.l.b16 %v68
  %v276 = vpack.c.b16 %v201, %v196
  %v277 = vpack.c.b16 %v202, %v197
  %v278 = vpack.c.b16 %v203, %v198
  %v279 = vpack.c.b16 %v204, %v199
  %v280 = vpack.c.b16 %v205, %v200
  %v281 = vpack.c.b16 %v211, %v206
  %v282 = vpack.c.b16 %v212, %v207
  %v283 = vpack.c.b16 %v213, %v208
  %v284 = vpack.c.b16 %v214, %v209
  %v285 = vpack.c.b16 %v215, %v210
  %v286 = vpack.c.b16 %v221, %v216
  %v287 = vpack.c.b16 %v222, %v217
  %v288 = vpack.c.b16 %v223, %v218
  %v289 = vpack.c.b16 %v224, %v219
  %v290 = vpack.c.b16 %v225, %v220
  %v291 = vpack.c.b16 %v231, %v226
  %v292 = vpack.c.b16 %v232, %v227
  %v293 = vpack.c.b16 %v233, %v228
  %v294 = vpack.c.b16 %v234, %v229
  %v295 = vpack.c.b16 %v235, %v230
  %v296 = vpack.c.b16 %v241, %v236
  %v297 = vpack.c.b16 %v242, %v237
  %v298 = vpack.c.b16 %v243, %v238
  %v299 = vpack.c.b16 %v244, %v239
  %v300 = vpack.c.b16 %v245, %v240
  %v301 = vpack.c.b16 %v251, %v246
  %v302 = vpack.c.b16 %v252, %v247
  %v303 = vpack.c.b16 %v253, %v248
  %v304 = vpack.c.b16 %v254, %v249
  %v305 = vpack.c.b16 %v255, %v250
  %v306 = vpack.c.b16 %v261, %v256
  %v307 = vpack.c.b16 %v262, %v257
  %v308 = vpack.c.b16 %v263, %v258
  %v309 = vpack.c.b16 %v264, %v259
  %v310 = vpack.c.b16 %v265, %v260
  %v311 = vpack.c.b16 %v271, %v266
  %v312 = vpack.c.b16 %v272, %v267
  %v313 = vpack.c.b16 %v273, %v268
  %v314 = vpack.c.b16 %v274, %v269
  %v315 = vpack.c.b16 %v275, %v270
  %v420 = vunpack.c.l.b16 %v69
  %v421 = vunpack.c.l.b16 %v70
  %v422 = vunpack.c.l.b16 %v71
  %v423 = vunpack.c.l.b16 %v72
  %v424 = vunpack.c.l.b16 %v73
  %v425 = vunpack.c.l.b16 %v74
  %v426 = vunpack.c.l.b16 %v75
  %v427 = vunpack.c.l.b16 %v76
  %v428 = vunpack.c.l.b16 %v77
  %v429 = vunpack.c.l.b16 %v78
  %v430 = vunpack.c.l.b16 %v79
  %v431 = vunpack.c.l.b16 %v80
  %v432 = vunpack.c.l.b16 %v81
  %v433 = vunpack.c.l.b16 %v82
  %v434 = vunpack.c.l.b16 %v83
  %v435 = vunpack.c.l.b16 %v84
  %v436 = vunpack.c.l.b16 %v85
  %v437 = vunpack.c.l.b16 %v86
  %v438 = vunpack.c.l.b16 %v87
  %v439 = vunpack.c.l.b16 %v88
  %v440 = vunpack.c.l.b16 %v89
  %v441 = vunpack.c.l.b16 %v90
  %v442 = vunpack.c.l.b16 %v91
  %v443 = vunpack.c.l.b16 %v92
  %v444 = vunpack.c.l.b16 %v93
  %v445 = vunpack.c.l.b16 %v94
  %v446 = vunpack.c.l.b16 %v95
  %v447 = vunpack.c.l.b16 %v96
  %v448 = vunpack.c.l.b16 %v97
  %v449 = vunpack.c.l.b16 %v98
  %v450 = vunpack.c.l.b16 %v99
  %v451 = vunpack.c.l.b16 %v100
  %v452 = vunpack.c.l.b16 %v101
  %v453 = vunpack.c.l.b16 %v102
  %v454 = vunpack.c.l.b16 %v103
  %v455 = vunpack.c.l.b16 %v104
  %v456 = vunpack.c.l.b16 %v105
  %v457 = vunpack.c.l.b16 %v106
  %v458 = vunpack.c.l.b16 %v107
  %v459 = vunpack.c.l.b16 %v108
  %v460 = vunpack.c.l.b16 %v109
  %v461 = vunpack.c.l.b16 %v110
  %v462 = vunpack.c.l.b16 %v111
  %v463 = vunpack.c.l.b16 %v112
  %v464 = vunpack.c.l.b16 %v113
  %v465 = vunpack.c.l.b16 %v114
  %v466 = vunpack.c.l.b16 %v115
  %v467 = vunpack.c.l.b16 %v116
  %v468 = vunpack.c.l.b16 %v117
  %v469 = vunpack.c.l.b16 %v118
  %v470 = vunpack.c.l.b16 %v119
  %v471 = vunpack.c.l.b16 %v120
  %v472 = vunpack.c.l.b16 %v121
  %v473 = vunpack.c.l.b16 %v122
  %v474 = vunpack.c.l.b16 %v123
  %v475 = vunpack.c.l.b16 %v124
  %v476 = vunpack.c.l.b16 %v125
  %v477 = vunpack.c.l.b16 %v126
  %v478 = vunpack.c.l.b16 %v127
  %v479 = vunpack.c.l.b16 %v128
  %v480 = vunpack.c.l.b16 %v129
  %v481 = vunpack.c.l.b16 %v130
  %v482 = vunpack.c.l.b16 %v131
  %v483 = vunpack.c.l.b16 %v132
  %v484 = vunpack.c.l.b16 %v133
  %v485 = vunpack.c.l.b16 %v134
  %v486 = vunpack.c.l.b16 %v135
  %v487 = vunpack.c.l.b16 %v136
  %v488 = vunpack.c.l.b16 %v137
  %v489 = vunpack.c.l.b16 %v138
  %v490 = vunpack.c.l.b16 %v139
  %v491 = vunpack.c.l.b16 %v140
  %v492 = vpack.c.b16 %v421, %v420
  %v493 = vpack.c.b16 %v423, %v422
  %v494 = vpack.c.b16 %v425, %v424
  %v495 = vpack.c.b16 %v427, %v426
  %v496 = vpack.c.b16 %v429, %v428
  %v497 = vpack.c.b16 %v431, %v430
  %v498 = vpack.c.b16 %v433, %v432
  %v499 = vpack.c.b16 %v435, %v434
  %v500 = vpack.c.b16 %v437, %v436
  %v501 = vpack.c.b16 %v439, %v438
  %v502 = vpack.c.b16 %v441, %v440
  %v503 = vpack.c.b16 %v443, %v442
  %v504 = vpack.c.b16 %v445, %v444
  %v505 = vpack.c.b16 %v447, %v446
  %v506 = vpack.c.b16 %v449, %v448
  %v507 = vpack.c.b16 %v451, %v450
  %v508 = vpack.c.b16 %v453, %v452
  %v509 = vpack.c.b16 %v455, %v454
  %v510 = vpack.c.b16 %v457, %v456
  %v511 = vpack.c.b16 %v459, %v458
  %v512 = vpack.c.b16 %v461, %v460
  %v513 = vpack.c.b16 %v463, %v462
  %v514 = vpack.c.b16 %v465, %v464
  %v515 = vpack.c.b16 %v467, %v466
  %v516 = vpack.c.b16 %v469, %v468
  %v517 = vpack.c.b16 %v471, %v470
  %v518 = vpack.c.b16 %v473, %v472
  %v519 = vpack.c.b16 %v475, %v474
  %v520 = vpack.c.b16 %v477, %v476
  %v521 = vpack.c.b16 %v479, %v478
  %v522 = vpack.c.b16 %v481, %v480
  %v523 = vpack.c.b16 %v483, %v482
  %v524 = vpack.c.b16 %v485, %v484
  %v525 = vpack.c.b16 %v487, %v486
  %v526 = vpack.c.b16 %v489, %v488
  %v527 = vpack.c.b16 %v491, %v490
  %vm564 = vcmask 523264
  %v566 = vsel %vm564, %v280, 0
  %v569 = vsel %vm564, %v285, 0
  %v572 = vsel %vm564, %v290, 0
  %v575 = vsel %vm564, %v295, 0
  %v578 = vsel %vm564, %v300, 0
  %v581 = vsel %vm564, %v305, 0
  %v584 = vsel %vm564, %v310, 0
  %v587 = vsel %vm564, %v315, 0
  %589 = vmatprep.subr.bf16.mxu0 0
  %590 = vmatpush1.bf16.msra.mxu0 %v492
  %591 = vmatprep.subr.bf16.mxu0 0
  %592 = vmatpush1.bf16.msra.mxu0 %v493
  %593 = vmatprep.subr.bf16.mxu0 0
  %594 = vmatpush1.bf16.msra.mxu0 %v494
  %595 = vmatprep.subr.bf16.mxu0 0
  %596 = vmatpush1.bf16.msra.mxu0 %v495
  %597 = vmatprep.subr.bf16.mxu0 0
  %598 = vmatpush1.bf16.msra.mxu0 %v496
  %599 = vmatprep.subr.bf16.mxu0 0
  %600 = vmatpush1.bf16.msra.mxu0 %v497
  %601 = vmatprep.subr.bf16.mxu0 0
  %602 = vmatpush1.bf16.msra.mxu0 %v498
  %603 = vmatprep.subr.bf16.mxu0 0
  %604 = vmatpush1.bf16.msra.mxu0 %v499
  %605 = vmatprep.subr.bf16.mxu0 0
  %606 = vmatpush1.bf16.msra.mxu0 %v500
  %607 = vmatprep.subr.bf16.mxu0 0
  %608 = vmatpush1.bf16.msra.mxu0 %v501
  %609 = vmatprep.subr.bf16.mxu0 0
  %610 = vmatpush1.bf16.msra.mxu0 %v502
  %611 = vmatprep.subr.bf16.mxu0 0
  %612 = vmatpush1.bf16.msra.mxu0 %v503
  %613 = vmatprep.subr.bf16.mxu0 0
  %614 = vmatpush1.bf16.msra.mxu0 %v504
  %615 = vmatprep.subr.bf16.mxu0 0
  %616 = vmatpush1.bf16.msra.mxu0 %v505
  %617 = vmatprep.subr.bf16.mxu0 0
  %618 = vmatpush1.bf16.msra.mxu0 %v506
  %619 = vmatprep.subr.bf16.mxu0 0
  %620 = vmatpush1.bf16.msra.mxu0 %v507
  %621 = vmatprep.mubr.bf16.mxu0 %v277
  %622 = vmatmul.mubr.bf16.gmra.mrb[0].mxu0 %v276
  %v623 = vpop.f32.mrb[0].mxu0
  %v624 = vadd.f32 %v146, %v623
  %v625 = vpop.f32.mrb[0].mxu0
  %v626 = vpop.f32.mrb[0].mxu0
  %v627 = vadd.f32 %v146, %v626
  %v628 = vpop.f32.mrb[0].mxu0
  %629 = vmatprep.mubr.bf16.mxu0 %v282
  %630 = vmatmul.mubr.bf16.gmra.mrb[0].mxu0 %v281
  %v631 = vpop.f32.mrb[0].mxu0
  %v632 = vadd.f32 %v146, %v631
  %v633 = vpop.f32.mrb[0].mxu0
  %v634 = vpop.f32.mrb[0].mxu0
  %v635 = vadd.f32 %v146, %v634
  %v636 = vpop.f32.mrb[0].mxu0
  %637 = vmatprep.mubr.bf16.mxu0 %v287
  %638 = vmatmul.mubr.bf16.gmra.mrb[0].mxu0 %v286
  %v639 = vpop.f32.mrb[0].mxu0
  %v640 = vadd.f32 %v146, %v639
  %v641 = vpop.f32.mrb[0].mxu0
  %v642 = vpop.f32.mrb[0].mxu0
  %v643 = vadd.f32 %v146, %v642
  %v644 = vpop.f32.mrb[0].mxu0
  %645 = vmatprep.mubr.bf16.mxu0 %v292
  %646 = vmatmul.mubr.bf16.gmra.mrb[0].mxu0 %v291
  %v647 = vpop.f32.mrb[0].mxu0
  %v648 = vadd.f32 %v146, %v647
  %v649 = vpop.f32.mrb[0].mxu0
  %v650 = vpop.f32.mrb[0].mxu0
  %v651 = vadd.f32 %v146, %v650
  %v652 = vpop.f32.mrb[0].mxu0
  %653 = vmatprep.mubr.bf16.mxu0 %v297
  %654 = vmatmul.mubr.bf16.gmra.mrb[0].mxu0 %v296
  %v655 = vpop.f32.mrb[0].mxu0
  %v656 = vadd.f32 %v146, %v655
  %v657 = vpop.f32.mrb[0].mxu0
  %v658 = vpop.f32.mrb[0].mxu0
  %v659 = vadd.f32 %v146, %v658
  %v660 = vpop.f32.mrb[0].mxu0
  %661 = vmatprep.mubr.bf16.mxu0 %v302
  %662 = vmatmul.mubr.bf16.gmra.mrb[0].mxu0 %v301
  %v663 = vpop.f32.mrb[0].mxu0
  %v664 = vadd.f32 %v146, %v663
  %v665 = vpop.f32.mrb[0].mxu0
  %v666 = vpop.f32.mrb[0].mxu0
  %v667 = vadd.f32 %v146, %v666
  %v668 = vpop.f32.mrb[0].mxu0
  %669 = vmatprep.mubr.bf16.mxu0 %v307
  %670 = vmatmul.mubr.bf16.gmra.mrb[0].mxu0 %v306
  %v671 = vpop.f32.mrb[0].mxu0
  %v672 = vadd.f32 %v146, %v671
  %v673 = vpop.f32.mrb[0].mxu0
  %v674 = vpop.f32.mrb[0].mxu0
  %v675 = vadd.f32 %v146, %v674
  %v676 = vpop.f32.mrb[0].mxu0
  %677 = vmatprep.mubr.bf16.mxu0 %v312
  %678 = vmatmul.mubr.bf16.gmra.mrb[0].mxu0 %v311
  %v679 = vpop.f32.mrb[0].mxu0
  %v680 = vadd.f32 %v146, %v679
  %v681 = vpop.f32.mrb[0].mxu0
  %v682 = vpop.f32.mrb[0].mxu0
  %v683 = vadd.f32 %v146, %v682
  %v684 = vpop.f32.mrb[0].mxu0
  %685 = vdwg.mxu0
  %686 = vmatprep.subr.bf16.mxu0 0
  %687 = vmatpush1.bf16.msra.mxu0 %v508
  %688 = vmatprep.subr.bf16.mxu0 0
  %689 = vmatpush1.bf16.msra.mxu0 %v509
  %690 = vmatprep.subr.bf16.mxu0 0
  %691 = vmatpush1.bf16.msra.mxu0 %v510
  %692 = vmatprep.subr.bf16.mxu0 0
  %693 = vmatpush1.bf16.msra.mxu0 %v511
  %694 = vmatprep.subr.bf16.mxu0 0
  %695 = vmatpush1.bf16.msra.mxu0 %v512
  %696 = vmatprep.subr.bf16.mxu0 0
  %697 = vmatpush1.bf16.msra.mxu0 %v513
  %698 = vmatprep.subr.bf16.mxu0 0
  %699 = vmatpush1.bf16.msra.mxu0 %v514
  %700 = vmatprep.subr.bf16.mxu0 0
  %701 = vmatpush1.bf16.msra.mxu0 %v515
  %702 = vmatprep.subr.bf16.mxu0 0
  %703 = vmatpush1.bf16.msra.mxu0 %v516
  %704 = vmatprep.subr.bf16.mxu0 0
  %705 = vmatpush1.bf16.msra.mxu0 %v517
  %706 = vmatprep.subr.bf16.mxu0 0
  %707 = vmatpush1.bf16.msra.mxu0 %v518
  %708 = vmatprep.subr.bf16.mxu0 0
  %709 = vmatpush1.bf16.msra.mxu0 %v519
  %710 = vmatprep.subr.bf16.mxu0 0
  %711 = vmatpush1.bf16.msra.mxu0 %v520
  %712 = vmatprep.subr.bf16.mxu0 0
  %713 = vmatpush1.bf16.msra.mxu0 %v521
  %714 = vmatprep.subr.bf16.mxu0 0
  %715 = vmatpush1.bf16.msra.mxu0 %v522
  %716 = vmatprep.subr.bf16.mxu0 0
  %717 = vmatpush1.bf16.msra.mxu0 %v523
  %718 = vmatprep.mubr.bf16.mxu0 %v279
  %719 = vmatmul.mubr.bf16.gmra.mrb[0].mxu0 %v278
  %v720 = vpop.f32.mrb[0].mxu0
  %v721 = vadd.f32 %v624, %v720
  %v722 = vpop.f32.mrb[0].mxu0
  %v723 = vpop.f32.mrb[0].mxu0
  %v724 = vadd.f32 %v627, %v723
  %v725 = vpop.f32.mrb[0].mxu0
  %726 = vmatprep.mubr.bf16.mxu0 %v284
  %727 = vmatmul.mubr.bf16.gmra.mrb[0].mxu0 %v283
  %v728 = vpop.f32.mrb[0].mxu0
  %v729 = vadd.f32 %v632, %v728
  %v730 = vpop.f32.mrb[0].mxu0
  %v731 = vpop.f32.mrb[0].mxu0
  %v732 = vadd.f32 %v635, %v731
  %v733 = vpop.f32.mrb[0].mxu0
  %734 = vmatprep.mubr.bf16.mxu0 %v289
  %735 = vmatmul.mubr.bf16.gmra.mrb[0].mxu0 %v288
  %v736 = vpop.f32.mrb[0].mxu0
  %v737 = vadd.f32 %v640, %v736
  %v738 = vpop.f32.mrb[0].mxu0
  %v739 = vpop.f32.mrb[0].mxu0
  %v740 = vadd.f32 %v643, %v739
  %v741 = vpop.f32.mrb[0].mxu0
  %742 = vmatprep.mubr.bf16.mxu0 %v294
  %743 = vmatmul.mubr.bf16.gmra.mrb[0].mxu0 %v293
  %v744 = vpop.f32.mrb[0].mxu0
  %v745 = vadd.f32 %v648, %v744
  %v746 = vpop.f32.mrb[0].mxu0
  %v747 = vpop.f32.mrb[0].mxu0
  %v748 = vadd.f32 %v651, %v747
  %v749 = vpop.f32.mrb[0].mxu0
  %750 = vmatprep.mubr.bf16.mxu0 %v299
  %751 = vmatmul.mubr.bf16.gmra.mrb[0].mxu0 %v298
  %v752 = vpop.f32.mrb[0].mxu0
  %v753 = vadd.f32 %v656, %v752
  %v754 = vpop.f32.mrb[0].mxu0
  %v755 = vpop.f32.mrb[0].mxu0
  %v756 = vadd.f32 %v659, %v755
  %v757 = vpop.f32.mrb[0].mxu0
  %758 = vmatprep.mubr.bf16.mxu0 %v304
  %759 = vmatmul.mubr.bf16.gmra.mrb[0].mxu0 %v303
  %v760 = vpop.f32.mrb[0].mxu0
  %v761 = vadd.f32 %v664, %v760
  %v762 = vpop.f32.mrb[0].mxu0
  %v763 = vpop.f32.mrb[0].mxu0
  %v764 = vadd.f32 %v667, %v763
  %v765 = vpop.f32.mrb[0].mxu0
  %766 = vmatprep.mubr.bf16.mxu0 %v309
  %767 = vmatmul.mubr.bf16.gmra.mrb[0].mxu0 %v308
  %v768 = vpop.f32.mrb[0].mxu0
  %v769 = vadd.f32 %v672, %v768
  %v770 = vpop.f32.mrb[0].mxu0
  %v771 = vpop.f32.mrb[0].mxu0
  %v772 = vadd.f32 %v675, %v771
  %v773 = vpop.f32.mrb[0].mxu0
  %774 = vmatprep.mubr.bf16.mxu0 %v314
  %775 = vmatmul.mubr.bf16.gmra.mrb[0].mxu0 %v313
  %v776 = vpop.f32.mrb[0].mxu0
  %v777 = vadd.f32 %v680, %v776
  %v778 = vpop.f32.mrb[0].mxu0
  %v779 = vpop.f32.mrb[0].mxu0
  %v780 = vadd.f32 %v683, %v779
  %v781 = vpop.f32.mrb[0].mxu0
  %782 = vdwg.mxu0
  %783 = vmatprep.subr.bf16.mxu0 0
  %784 = vmatpush1.bf16.msra.mxu0 %v524
  %785 = vmatprep.subr.bf16.mxu0 0
  %786 = vmatpush1.bf16.msra.mxu0 %v525
  %787 = vmatprep.subr.bf16.mxu0 0
  %788 = vmatpush1.bf16.msra.mxu0 %v526
  %789 = vmatprep.subr.bf16.mxu0 0
  %790 = vmatpush1.bf16.msra.mxu0 %v527
  %791 = vmatprep.subr.bf16.mxu0 0
  %792 = vmatpush1.bf16.msra.mxu0 0
  %793 = vmatprep.subr.bf16.mxu0 0
  %794 = vmatpush1.bf16.msra.mxu0 0
  %795 = vmatprep.subr.bf16.mxu0 0
  %796 = vmatpush1.bf16.msra.mxu0 0
  %797 = vmatprep.subr.bf16.mxu0 0
  %798 = vmatpush1.bf16.msra.mxu0 0
  %799 = vmatprep.subr.bf16.mxu0 0
  %800 = vmatpush1.bf16.msra.mxu0 0
  %801 = vmatprep.subr.bf16.mxu0 0
  %802 = vmatpush1.bf16.msra.mxu0 0
  %803 = vmatprep.subr.bf16.mxu0 0
  %804 = vmatpush1.bf16.msra.mxu0 0
  %805 = vmatprep.subr.bf16.mxu0 0
  %806 = vmatpush1.bf16.msra.mxu0 0
  %807 = vmatprep.subr.bf16.mxu0 0
  %808 = vmatpush1.bf16.msra.mxu0 0
  %809 = vmatprep.subr.bf16.mxu0 0
  %810 = vmatpush1.bf16.msra.mxu0 0
  %811 = vmatprep.subr.bf16.mxu0 0
  %812 = vmatpush1.bf16.msra.mxu0 0
  %813 = vmatprep.subr.bf16.mxu0 0
  %814 = vmatpush1.bf16.msra.mxu0 0
  %815 = vmatprep.mubr.bf16.mxu0 0
  %816 = vmatmul.mubr.bf16.gmra.mrb[0].mxu0 %v566
  %v817 = vpop.f32.mrb[0].mxu0
  %v818 = vadd.f32 %v721, %v817
  %v819 = vpop.f32.mrb[0].mxu0
  %v820 = vpop.f32.mrb[0].mxu0
  %v821 = vadd.f32 %v724, %v820
  %v822 = vpop.f32.mrb[0].mxu0
  %823 = vmatprep.mubr.bf16.mxu0 0
  %824 = vmatmul.mubr.bf16.gmra.mrb[0].mxu0 %v569
  %v825 = vpop.f32.mrb[0].mxu0
  %v826 = vadd.f32 %v729, %v825
  %v827 = vpop.f32.mrb[0].mxu0
  %v828 = vpop.f32.mrb[0].mxu0
  %v829 = vadd.f32 %v732, %v828
  %v830 = vpop.f32.mrb[0].mxu0
  %831 = vmatprep.mubr.bf16.mxu0 0
  %832 = vmatmul.mubr.bf16.gmra.mrb[0].mxu0 %v572
  %v833 = vpop.f32.mrb[0].mxu0
  %v834 = vadd.f32 %v737, %v833
  %v835 = vpop.f32.mrb[0].mxu0
  %v836 = vpop.f32.mrb[0].mxu0
  %v837 = vadd.f32 %v740, %v836
  %v838 = vpop.f32.mrb[0].mxu0
  %839 = vmatprep.mubr.bf16.mxu0 0
  %840 = vmatmul.mubr.bf16.gmra.mrb[0].mxu0 %v575
  %v841 = vpop.f32.mrb[0].mxu0
  %v842 = vadd.f32 %v745, %v841
  %v843 = vpop.f32.mrb[0].mxu0
  %v844 = vpop.f32.mrb[0].mxu0
  %v845 = vadd.f32 %v748, %v844
  %v846 = vpop.f32.mrb[0].mxu0
  %847 = vmatprep.mubr.bf16.mxu0 0
  %848 = vmatmul.mubr.bf16.gmra.mrb[0].mxu0 %v578
  %v849 = vpop.f32.mrb[0].mxu0
  %v850 = vadd.f32 %v753, %v849
  %v851 = vpop.f32.mrb[0].mxu0
  %v852 = vpop.f32.mrb[0].mxu0
  %v853 = vadd.f32 %v756, %v852
  %v854 = vpop.f32.mrb[0].mxu0
  %855 = vmatprep.mubr.bf16.mxu0 0
  %856 = vmatmul.mubr.bf16.gmra.mrb[0].mxu0 %v581
  %v857 = vpop.f32.mrb[0].mxu0
  %v858 = vadd.f32 %v761, %v857
  %v859 = vpop.f32.mrb[0].mxu0
  %v860 = vpop.f32.mrb[0].mxu0
  %v861 = vadd.f32 %v764, %v860
  %v862 = vpop.f32.mrb[0].mxu0
  %863 = vmatprep.mubr.bf16.mxu0 0
  %864 = vmatmul.mubr.bf16.gmra.mrb[0].mxu0 %v584
  %v865 = vpop.f32.mrb[0].mxu0
  %v866 = vadd.f32 %v769, %v865
  %v867 = vpop.f32.mrb[0].mxu0
  %v868 = vpop.f32.mrb[0].mxu0
  %v869 = vadd.f32 %v772, %v868
  %v870 = vpop.f32.mrb[0].mxu0
  %871 = vmatprep.mubr.bf16.mxu0 0
  %872 = vmatmul.mubr.bf16.gmra.mrb[0].mxu0 %v587
  %v873 = vpop.f32.mrb[0].mxu0
  %v874 = vadd.f32 %v777, %v873
  %v875 = vpop.f32.mrb[0].mxu0
  %v876 = vpop.f32.mrb[0].mxu0
  %v877 = vadd.f32 %v780, %v876
  %v878 = vpop.f32.mrb[0].mxu0
  %879 = vdwg.mxu0
  %v880 = vmax.f32 %v818, 0.0
  %v881 = vmax.f32 %v821, 0.0
  %v882 = vmax.f32 %v826, 0.0
  %v883 = vmax.f32 %v829, 0.0
  %v884 = vmax.f32 %v834, 0.0
  %v885 = vmax.f32 %v837, 0.0
  %v886 = vmax.f32 %v842, 0.0
  %v887 = vmax.f32 %v845, 0.0
  %v888 = vmax.f32 %v850, 0.0
  %v889 = vmax.f32 %v853, 0.0
  %v890 = vmax.f32 %v858, 0.0
  %v891 = vmax.f32 %v861, 0.0
  %v892 = vmax.f32 %v866, 0.0
  %v893 = vmax.f32 %v869, 0.0
  %v894 = vmax.f32 %v874, 0.0
  %v895 = vmax.f32 %v877, 0.0
  %v896 = vld [vmem:[%s1] sm:$0xff]
  %v897 = vld [vmem:[%s1 + $0x8] sm:$0xff]
  %v898 = vld [vmem:[%s1 + $0x10] sm:$0xf]
  %v899 = vld [vmem:[%s1 + $0x14] sm:$0xff]
  %v900 = vld [vmem:[%s1 + $0x1c] sm:$0xff]
  %v901 = vld [vmem:[%s1 + $0x24] sm:$0xf]
  %v902 = vld [vmem:[%s1 + $0x28] sm:$0xff]
  %v903 = vld [vmem:[%s1 + $0x30] sm:$0xff]
  %v904 = vld [vmem:[%s1 + $0x38] sm:$0xf]
  %v905 = vld [vmem:[%s1 + $0x3c] sm:$0xff]
  %v906 = vld [vmem:[%s1 + $0x44] sm:$0xff]
  %v907 = vld [vmem:[%s1 + $0x4c] sm:$0xf]
  %v908 = vld [vmem:[%s1 + $0x50] sm:$0xff]
  %v909 = vld [vmem:[%s1 + $0x58] sm:$0xff]
  %v910 = vld [vmem:[%s1 + $0x60] sm:$0xf]
  %v911 = vld [vmem:[%s1 + $0x64] sm:$0xff]
  %v912 = vld [vmem:[%s1 + $0x6c] sm:$0xff]
  %v913 = vld [vmem:[%s1 + $0x74] sm:$0xf]
  %v914 = vld [vmem:[%s1 + $0x78] sm:$0xff]
  %v915 = vld [vmem:[%s1 + $0x80] sm:$0xff]
  %v916 = vld [vmem:[%s1 + $0x88] sm:$0xf]
  %v917 = vld [vmem:[%s1 + $0x8c] sm:$0xff]
  %v918 = vld [vmem:[%s1 + $0x94] sm:$0xff]
  %v919 = vld [vmem:[%s1 + $0x9c] sm:$0xf]
  %v920 = vld [vmem:[%s1 + $0xa0] sm:$0xff]
  %v921 = vld [vmem:[%s1 + $0xa8] sm:$0xff]
  %v922 = vld [vmem:[%s1 + $0xb0] sm:$0xf]
  %v923 = vld [vmem:[%s1 + $0xb4] sm:$0xff]
  %v924 = vld [vmem:[%s1 + $0xbc] sm:$0xff]
  %v925 = vld [vmem:[%s1 + $0xc4] sm:$0xf]
  %v926 = vld [vmem:[%s1 + $0xc8] sm:$0xff]
  %v927 = vld [vmem:[%s1 + $0xd0] sm:$0xff]
  %v928 = vld [vmem:[%s1 + $0xd8] sm:$0xf]
  %v929 = vld [vmem:[%s1 + $0xdc] sm:$0xff]
  %v930 = vld [vmem:[%s1 + $0xe4] sm:$0xff]
  %v931 = vld [vmem:[%s1 + $0xec] sm:$0xf]
  %v932 = vld [vmem:[%s1 + $0xf0] sm:$0xff]
  %v933 = vld [vmem:[%s1 + $0xf8] sm:$0xff]
  %v934 = vld [vmem:[%s1 + $0x100] sm:$0xf]
  %v935 = vld [vmem:[%s1 + $0x104] sm:$0xff]
  %v936 = vld [vmem:[%s1 + $0x10c] sm:$0xff]
  %v937 = vld [vmem:[%s1 + $0x114] sm:$0xf]
  %v938 = vld [vmem:[%s1 + $0x118] sm:$0xff]
  %v939 = vld [vmem:[%s1 + $0x120] sm:$0xff]
  %v940 = vld [vmem:[%s1 + $0x128] sm:$0xf]
  %v941 = vld [vmem:[%s1 + $0x12c] sm:$0xff]
  %v942 = vld [vmem:[%s1 + $0x134] sm:$0xff]
  %v943 = vld [vmem:[%s1 + $0x13c] sm:$0xf]
  %v992 = vunpack.c.l.b16 %v896
  %v993 = vunpack.c.h.b16 %v896
  %v994 = vunpack.c.l.b16 %v897
  %v995 = vunpack.c.h.b16 %v897
  %v996 = vunpack.c.l.b16 %v898
  %v997 = vunpack.c.l.b16 %v899
  %v998 = vunpack.c.h.b16 %v899
  %v999 = vunpack.c.l.b16 %v900
  %v1000 = vunpack.c.h.b16 %v900
  %v1001 = vunpack.c.l.b16 %v901
  %v1002 = vunpack.c.l.b16 %v902
  %v1003 = vunpack.c.h.b16 %v902
  %v1004 = vunpack.c.l.b16 %v903
  %v1005 = vunpack.c.h.b16 %v903
  %v1006 = vunpack.c.l.b16 %v904
  %v1007 = vunpack.c.l.b16 %v905
  %v1008 = vunpack.c.h.b16 %v905
  %v1009 = vunpack.c.l.b16 %v906
  %v1010 = vunpack.c.h.b16 %v906
  %v1011 = vunpack.c.l.b16 %v907
  %v1012 = vunpack.c.l.b16 %v908
  %v1013 = vunpack.c.h.b16 %v908
  %v1014 = vunpack.c.l.b16 %v909
  %v1015 = vunpack.c.h.b16 %v909
  %v1016 = vunpack.c.l.b16 %v910
  %v1017 = vunpack.c.l.b16 %v911
  %v1018 = vunpack.c.h.b16 %v911
  %v1019 = vunpack.c.l.b16 %v912
  %v1020 = vunpack.c.h.b16 %v912
  %v1021 = vunpack.c.l.b16 %v913
  %v1022 = vunpack.c.l.b16 %v914
  %v1023 = vunpack.c.h.b16 %v914
  %v1024 = vunpack.c.l.b16 %v915
  %v1025 = vunpack.c.h.b16 %v915
  %v1026 = vunpack.c.l.b16 %v916
  %v1027 = vunpack.c.l.b16 %v917
  %v1028 = vunpack.c.h.b16 %v917
  %v1029 = vunpack.c.l.b16 %v918
  %v1030 = vunpack.c.h.b16 %v918
  %v1031 = vunpack.c.l.b16 %v919
  %v1032 = vunpack.c.l.b16 %v920
  %v1033 = vunpack.c.h.b16 %v920
  %v1034 = vunpack.c.l.b16 %v921
  %v1035 = vunpack.c.h.b16 %v921
  %v1036 = vunpack.c.l.b16 %v922
  %v1037 = vunpack.c.l.b16 %v923
  %v1038 = vunpack.c.h.b16 %v923
  %v1039 = vunpack.c.l.b16 %v924
  %v1040 = vunpack.c.h.b16 %v924
  %v1041 = vunpack.c.l.b16 %v925
  %v1042 = vunpack.c.l.b16 %v926
  %v1043 = vunpack.c.h.b16 %v926
  %v1044 = vunpack.c.l.b16 %v927
  %v1045 = vunpack.c.h.b16 %v927
  %v1046 = vunpack.c.l.b16 %v928
  %v1047 = vunpack.c.l.b16 %v929
  %v1048 = vunpack.c.h.b16 %v929
  %v1049 = vunpack.c.l.b16 %v930
  %v1050 = vunpack.c.h.b16 %v930
  %v1051 = vunpack.c.l.b16 %v931
  %v1052 = vunpack.c.l.b16 %v932
  %v1053 = vunpack.c.h.b16 %v932
  %v1054 = vunpack.c.l.b16 %v933
  %v1055 = vunpack.c.h.b16 %v933
  %v1056 = vunpack.c.l.b16 %v934
  %v1057 = vunpack.c.l.b16 %v935
  %v1058 = vunpack.c.h.b16 %v935
  %v1059 = vunpack.c.l.b16 %v936
  %v1060 = vunpack.c.h.b16 %v936
  %v1061 = vunpack.c.l.b16 %v937
  %v1062 = vunpack.c.l.b16 %v938
  %v1063 = vunpack.c.h.b16 %v938
  %v1064 = vunpack.c.l.b16 %v939
  %v1065 = vunpack.c.h.b16 %v939
  %v1066 = vunpack.c.l.b16 %v940
  %v1067 = vunpack.c.l.b16 %v941
  %v1068 = vunpack.c.h.b16 %v941
  %v1069 = vunpack.c.l.b16 %v942
  %v1070 = vunpack.c.h.b16 %v942
  %v1071 = vunpack.c.l.b16 %v943
  %v1072 = vpack.c.b16 %v997, %v992
  %v1073 = vpack.c.b16 %v998, %v993
  %v1074 = vpack.c.b16 %v999, %v994
  %v1075 = vpack.c.b16 %v1000, %v995
  %v1076 = vpack.c.b16 %v1001, %v996
  %v1077 = vpack.c.b16 %v1007, %v1002
  %v1078 = vpack.c.b16 %v1008, %v1003
  %v1079 = vpack.c.b16 %v1009, %v1004
  %v1080 = vpack.c.b16 %v1010, %v1005
  %v1081 = vpack.c.b16 %v1011, %v1006
  %v1082 = vpack.c.b16 %v1017, %v1012
  %v1083 = vpack.c.b16 %v1018, %v1013
  %v1084 = vpack.c.b16 %v1019, %v1014
  %v1085 = vpack.c.b16 %v1020, %v1015
  %v1086 = vpack.c.b16 %v1021, %v1016
  %v1087 = vpack.c.b16 %v1027, %v1022
  %v1088 = vpack.c.b16 %v1028, %v1023
  %v1089 = vpack.c.b16 %v1029, %v1024
  %v1090 = vpack.c.b16 %v1030, %v1025
  %v1091 = vpack.c.b16 %v1031, %v1026
  %v1092 = vpack.c.b16 %v1037, %v1032
  %v1093 = vpack.c.b16 %v1038, %v1033
  %v1094 = vpack.c.b16 %v1039, %v1034
  %v1095 = vpack.c.b16 %v1040, %v1035
  %v1096 = vpack.c.b16 %v1041, %v1036
  %v1097 = vpack.c.b16 %v1047, %v1042
  %v1098 = vpack.c.b16 %v1048, %v1043
  %v1099 = vpack.c.b16 %v1049, %v1044
  %v1100 = vpack.c.b16 %v1050, %v1045
  %v1101 = vpack.c.b16 %v1051, %v1046
  %v1102 = vpack.c.b16 %v1057, %v1052
  %v1103 = vpack.c.b16 %v1058, %v1053
  %v1104 = vpack.c.b16 %v1059, %v1054
  %v1105 = vpack.c.b16 %v1060, %v1055
  %v1106 = vpack.c.b16 %v1061, %v1056
  %v1107 = vpack.c.b16 %v1067, %v1062
  %v1108 = vpack.c.b16 %v1068, %v1063
  %v1109 = vpack.c.b16 %v1069, %v1064
  %v1110 = vpack.c.b16 %v1070, %v1065
  %v1111 = vpack.c.b16 %v1071, %v1066
  %v1145 = vsel %vm564, %v1076, 0
  %v1148 = vsel %vm564, %v1081, 0
  %v1151 = vsel %vm564, %v1086, 0
  %v1154 = vsel %vm564, %v1091, 0
  %v1157 = vsel %vm564, %v1096, 0
  %v1160 = vsel %vm564, %v1101, 0
  %v1163 = vsel %vm564, %v1106, 0
  %v1166 = vsel %vm564, %v1111, 0
  %1168 = vmatprep.subr.bf16.mxu0 0
  %1169 = vmatpush1.bf16.msra.mxu0 %v492
  %1170 = vmatprep.subr.bf16.mxu0 0
  %1171 = vmatpush1.bf16.msra.mxu0 %v493
  %1172 = vmatprep.subr.bf16.mxu0 0
  %1173 = vmatpush1.bf16.msra.mxu0 %v494
  %1174 = vmatprep.subr.bf16.mxu0 0
  %1175 = vmatpush1.bf16.msra.mxu0 %v495
  %1176 = vmatprep.subr.bf16.mxu0 0
  %1177 = vmatpush1.bf16.msra.mxu0 %v496
  %1178 = vmatprep.subr.bf16.mxu0 0
  %1179 = vmatpush1.bf16.msra.mxu0 %v497
  %1180 = vmatprep.subr.bf16.mxu0 0
  %1181 = vmatpush1.bf16.msra.mxu0 %v498
  %1182 = vmatprep.subr.bf16.mxu0 0
  %1183 = vmatpush1.bf16.msra.mxu0 %v499
  %1184 = vmatprep.subr.bf16.mxu0 0
  %1185 = vmatpush1.bf16.msra.mxu0 %v500
  %1186 = vmatprep.subr.bf16.mxu0 0
  %1187 = vmatpush1.bf16.msra.mxu0 %v501
  %1188 = vmatprep.subr.bf16.mxu0 0
  %1189 = vmatpush1.bf16.msra.mxu0 %v502
  %1190 = vmatprep.subr.bf16.mxu0 0
  %1191 = vmatpush1.bf16.msra.mxu0 %v503
  %1192 = vmatprep.subr.bf16.mxu0 0
  %1193 = vmatpush1.bf16.msra.mxu0 %v504
  %1194 = vmatprep.subr.bf16.mxu0 0
  %1195 = vmatpush1.bf16.msra.mxu0 %v505
  %1196 = vmatprep.subr.bf16.mxu0 0
  %1197 = vmatpush1.bf16.msra.mxu0 %v506
  %1198 = vmatprep.subr.bf16.mxu0 0
  %1199 = vmatpush1.bf16.msra.mxu0 %v507
  %1200 = vmatprep.mubr.bf16.mxu0 %v1073
  %1201 = vmatmul.mubr.bf16.gmra.mrb[0].mxu0 %v1072
  %v1202 = vpop.f32.mrb[0].mxu0
  %v1203 = vadd.f32 %v146, %v1202
  %v1204 = vpop.f32.mrb[0].mxu0
  %v1205 = vpop.f32.mrb[0].mxu0
  %v1206 = vadd.f32 %v146, %v1205
  %v1207 = vpop.f32.mrb[0].mxu0
  %1208 = vmatprep.mubr.bf16.mxu0 %v1078
  %1209 = vmatmul.mubr.bf16.gmra.mrb[0].mxu0 %v1077
  %v1210 = vpop.f32.mrb[0].mxu0
  %v1211 = vadd.f32 %v146, %v1210
  %v1212 = vpop.f32.mrb[0].mxu0
  %v1213 = vpop.f32.mrb[0].mxu0
  %v1214 = vadd.f32 %v146, %v1213
  %v1215 = vpop.f32.mrb[0].mxu0
  %1216 = vmatprep.mubr.bf16.mxu0 %v1083
  %1217 = vmatmul.mubr.bf16.gmra.mrb[0].mxu0 %v1082
  %v1218 = vpop.f32.mrb[0].mxu0
  %v1219 = vadd.f32 %v146, %v1218
  %v1220 = vpop.f32.mrb[0].mxu0
  %v1221 = vpop.f32.mrb[0].mxu0
  %v1222 = vadd.f32 %v146, %v1221
  %v1223 = vpop.f32.mrb[0].mxu0
  %1224 = vmatprep.mubr.bf16.mxu0 %v1088
  %1225 = vmatmul.mubr.bf16.gmra.mrb[0].mxu0 %v1087
  %v1226 = vpop.f32.mrb[0].mxu0
  %v1227 = vadd.f32 %v146, %v1226
  %v1228 = vpop.f32.mrb[0].mxu0
  %v1229 = vpop.f32.mrb[0].mxu0
  %v1230 = vadd.f32 %v146, %v1229
  %v1231 = vpop.f32.mrb[0].mxu0
  %1232 = vmatprep.mubr.bf16.mxu0 %v1093
  %1233 = vmatmul.mubr.bf16.gmra.mrb[0].mxu0 %v1092
  %v1234 = vpop.f32.mrb[0].mxu0
  %v1235 = vadd.f32 %v146, %v1234
  %v1236 = vpop.f32.mrb[0].mxu0
  %v1237 = vpop.f32.mrb[0].mxu0
  %v1238 = vadd.f32 %v146, %v1237
  %v1239 = vpop.f32.mrb[0].mxu0
  %1240 = vmatprep.mubr.bf16.mxu0 %v1098
  %1241 = vmatmul.mubr.bf16.gmra.mrb[0].mxu0 %v1097
  %v1242 = vpop.f32.mrb[0].mxu0
  %v1243 = vadd.f32 %v146, %v1242
  %v1244 = vpop.f32.mrb[0].mxu0
  %v1245 = vpop.f32.mrb[0].mxu0
  %v1246 = vadd.f32 %v146, %v1245
  %v1247 = vpop.f32.mrb[0].mxu0
  %1248 = vmatprep.mubr.bf16.mxu0 %v1103
  %1249 = vmatmul.mubr.bf16.gmra.mrb[0].mxu0 %v1102
  %v1250 = vpop.f32.mrb[0].mxu0
  %v1251 = vadd.f32 %v146, %v1250
  %v1252 = vpop.f32.mrb[0].mxu0
  %v1253 = vpop.f32.mrb[0].mxu0
  %v1254 = vadd.f32 %v146, %v1253
  %v1255 = vpop.f32.mrb[0].mxu0
  %1256 = vmatprep.mubr.bf16.mxu0 %v1108
  %1257 = vmatmul.mubr.bf16.gmra.mrb[0].mxu0 %v1107
  %v1258 = vpop.f32.mrb[0].mxu0
  %v1259 = vadd.f32 %v146, %v1258
  %v1260 = vpop.f32.mrb[0].mxu0
  %v1261 = vpop.f32.mrb[0].mxu0
  %v1262 = vadd.f32 %v146, %v1261
  %v1263 = vpop.f32.mrb[0].mxu0
  %1264 = vdwg.mxu0
  %1265 = vmatprep.subr.bf16.mxu0 0
  %1266 = vmatpush1.bf16.msra.mxu0 %v508
  %1267 = vmatprep.subr.bf16.mxu0 0
  %1268 = vmatpush1.bf16.msra.mxu0 %v509
  %1269 = vmatprep.subr.bf16.mxu0 0
  %1270 = vmatpush1.bf16.msra.mxu0 %v510
  %1271 = vmatprep.subr.bf16.mxu0 0
  %1272 = vmatpush1.bf16.msra.mxu0 %v511
  %1273 = vmatprep.subr.bf16.mxu0 0
  %1274 = vmatpush1.bf16.msra.mxu0 %v512
  %1275 = vmatprep.subr.bf16.mxu0 0
  %1276 = vmatpush1.bf16.msra.mxu0 %v513
  %1277 = vmatprep.subr.bf16.mxu0 0
  %1278 = vmatpush1.bf16.msra.mxu0 %v514
  %1279 = vmatprep.subr.bf16.mxu0 0
  %1280 = vmatpush1.bf16.msra.mxu0 %v515
  %1281 = vmatprep.subr.bf16.mxu0 0
  %1282 = vmatpush1.bf16.msra.mxu0 %v516
  %1283 = vmatprep.subr.bf16.mxu0 0
  %1284 = vmatpush1.bf16.msra.mxu0 %v517
  %1285 = vmatprep.subr.bf16.mxu0 0
  %1286 = vmatpush1.bf16.msra.mxu0 %v518
  %1287 = vmatprep.subr.bf16.mxu0 0
  %1288 = vmatpush1.bf16.msra.mxu0 %v519
  %1289 = vmatprep.subr.bf16.mxu0 0
  %1290 = vmatpush1.bf16.msra.mxu0 %v520
  %1291 = vmatprep.subr.bf16.mxu0 0
  %1292 = vmatpush1.bf16.msra.mxu0 %v521
  %1293 = vmatprep.subr.bf16.mxu0 0
  %1294 = vmatpush1.bf16.msra.mxu0 %v522
  %1295 = vmatprep.subr.bf16.mxu0 0
  %1296 = vmatpush1.bf16.msra.mxu0 %v523
  %1297 = vmatprep.mubr.bf16.mxu0 %v1075
  %1298 = vmatmul.mubr.bf16.gmra.mrb[0].mxu0 %v1074
  %v1299 = vpop.f32.mrb[0].mxu0
  %v1300 = vadd.f32 %v1203, %v1299
  %v1301 = vpop.f32.mrb[0].mxu0
  %v1302 = vpop.f32.mrb[0].mxu0
  %v1303 = vadd.f32 %v1206, %v1302
  %v1304 = vpop.f32.mrb[0].mxu0
  %1305 = vmatprep.mubr.bf16.mxu0 %v1080
  %1306 = vmatmul.mubr.bf16.gmra.mrb[0].mxu0 %v1079
  %v1307 = vpop.f32.mrb[0].mxu0
  %v1308 = vadd.f32 %v1211, %v1307
  %v1309 = vpop.f32.mrb[0].mxu0
  %v1310 = vpop.f32.mrb[0].mxu0
  %v1311 = vadd.f32 %v1214, %v1310
  %v1312 = vpop.f32.mrb[0].mxu0
  %1313 = vmatprep.mubr.bf16.mxu0 %v1085
  %1314 = vmatmul.mubr.bf16.gmra.mrb[0].mxu0 %v1084
  %v1315 = vpop.f32.mrb[0].mxu0
  %v1316 = vadd.f32 %v1219, %v1315
  %v1317 = vpop.f32.mrb[0].mxu0
  %v1318 = vpop.f32.mrb[0].mxu0
  %v1319 = vadd.f32 %v1222, %v1318
  %v1320 = vpop.f32.mrb[0].mxu0
  %1321 = vmatprep.mubr.bf16.mxu0 %v1090
  %1322 = vmatmul.mubr.bf16.gmra.mrb[0].mxu0 %v1089
  %v1323 = vpop.f32.mrb[0].mxu0
  %v1324 = vadd.f32 %v1227, %v1323
  %v1325 = vpop.f32.mrb[0].mxu0
  %v1326 = vpop.f32.mrb[0].mxu0
  %v1327 = vadd.f32 %v1230, %v1326
  %v1328 = vpop.f32.mrb[0].mxu0
  %1329 = vmatprep.mubr.bf16.mxu0 %v1095
  %1330 = vmatmul.mubr.bf16.gmra.mrb[0].mxu0 %v1094
  %v1331 = vpop.f32.mrb[0].mxu0
  %v1332 = vadd.f32 %v1235, %v1331
  %v1333 = vpop.f32.mrb[0].mxu0
  %v1334 = vpop.f32.mrb[0].mxu0
  %v1335 = vadd.f32 %v1238, %v1334
  %v1336 = vpop.f32.mrb[0].mxu0
  %1337 = vmatprep.mubr.bf16.mxu0 %v1100
  %1338 = vmatmul.mubr.bf16.gmra.mrb[0].mxu0 %v1099
  %v1339 = vpop.f32.mrb[0].mxu0
  %v1340 = vadd.f32 %v1243, %v1339
  %v1341 = vpop.f32.mrb[0].mxu0
  %v1342 = vpop.f32.mrb[0].mxu0
  %v1343 = vadd.f32 %v1246, %v1342
  %v1344 = vpop.f32.mrb[0].mxu0
  %1345 = vmatprep.mubr.bf16.mxu0 %v1105
  %1346 = vmatmul.mubr.bf16.gmra.mrb[0].mxu0 %v1104
  %v1347 = vpop.f32.mrb[0].mxu0
  %v1348 = vadd.f32 %v1251, %v1347
  %v1349 = vpop.f32.mrb[0].mxu0
  %v1350 = vpop.f32.mrb[0].mxu0
  %v1351 = vadd.f32 %v1254, %v1350
  %v1352 = vpop.f32.mrb[0].mxu0
  %1353 = vmatprep.mubr.bf16.mxu0 %v1110
  %1354 = vmatmul.mubr.bf16.gmra.mrb[0].mxu0 %v1109
  %v1355 = vpop.f32.mrb[0].mxu0
  %v1356 = vadd.f32 %v1259, %v1355
  %v1357 = vpop.f32.mrb[0].mxu0
  %v1358 = vpop.f32.mrb[0].mxu0
  %v1359 = vadd.f32 %v1262, %v1358
  %v1360 = vpop.f32.mrb[0].mxu0
  %1361 = vdwg.mxu0
  %1362 = vmatprep.subr.bf16.mxu0 0
  %1363 = vmatpush1.bf16.msra.mxu0 %v524
  %1364 = vmatprep.subr.bf16.mxu0 0
  %1365 = vmatpush1.bf16.msra.mxu0 %v525
  %1366 = vmatprep.subr.bf16.mxu0 0
  %1367 = vmatpush1.bf16.msra.mxu0 %v526
  %1368 = vmatprep.subr.bf16.mxu0 0
  %1369 = vmatpush1.bf16.msra.mxu0 %v527
  %1370 = vmatprep.subr.bf16.mxu0 0
  %1371 = vmatpush1.bf16.msra.mxu0 0
  %1372 = vmatprep.subr.bf16.mxu0 0
  %1373 = vmatpush1.bf16.msra.mxu0 0
  %1374 = vmatprep.subr.bf16.mxu0 0
  %1375 = vmatpush1.bf16.msra.mxu0 0
  %1376 = vmatprep.subr.bf16.mxu0 0
  %1377 = vmatpush1.bf16.msra.mxu0 0
  %1378 = vmatprep.subr.bf16.mxu0 0
  %1379 = vmatpush1.bf16.msra.mxu0 0
  %1380 = vmatprep.subr.bf16.mxu0 0
  %1381 = vmatpush1.bf16.msra.mxu0 0
  %1382 = vmatprep.subr.bf16.mxu0 0
  %1383 = vmatpush1.bf16.msra.mxu0 0
  %1384 = vmatprep.subr.bf16.mxu0 0
  %1385 = vmatpush1.bf16.msra.mxu0 0
  %1386 = vmatprep.subr.bf16.mxu0 0
  %1387 = vmatpush1.bf16.msra.mxu0 0
  %1388 = vmatprep.subr.bf16.mxu0 0
  %1389 = vmatpush1.bf16.msra.mxu0 0
  %1390 = vmatprep.subr.bf16.mxu0 0
  %1391 = vmatpush1.bf16.msra.mxu0 0
  %1392 = vmatprep.subr.bf16.mxu0 0
  %1393 = vmatpush1.bf16.msra.mxu0 0
  %1394 = vmatprep.mubr.bf16.mxu0 0
  %1395 = vmatmul.mubr.bf16.gmra.mrb[0].mxu0 %v1145
  %v1396 = vpop.f32.mrb[0].mxu0
  %v1397 = vadd.f32 %v1300, %v1396
  %v1398 = vpop.f32.mrb[0].mxu0
  %v1399 = vpop.f32.mrb[0].mxu0
  %v1400 = vadd.f32 %v1303, %v1399
  %v1401 = vpop.f32.mrb[0].mxu0
  %1402 = vmatprep.mubr.bf16.mxu0 0
  %1403 = vmatmul.mubr.bf16.gmra.mrb[0].mxu0 %v1148
  %v1404 = vpop.f32.mrb[0].mxu0
  %v1405 = vadd.f32 %v1308, %v1404
  %v1406 = vpop.f32.mrb[0].mxu0
  %v1407 = vpop.f32.mrb[0].mxu0
  %v1408 = vadd.f32 %v1311, %v1407
  %v1409 = vpop.f32.mrb[0].mxu0
  %1410 = vmatprep.mubr.bf16.mxu0 0
  %1411 = vmatmul.mubr.bf16.gmra.mrb[0].mxu0 %v1151
  %v1412 = vpop.f32.mrb[0].mxu0
  %v1413 = vadd.f32 %v1316, %v1412
  %v1414 = vpop.f32.mrb[0].mxu0
  %v1415 = vpop.f32.mrb[0].mxu0
  %v1416 = vadd.f32 %v1319, %v1415
  %v1417 = vpop.f32.mrb[0].mxu0
  %1418 = vmatprep.mubr.bf16.mxu0 0
  %1419 = vmatmul.mubr.bf16.gmra.mrb[0].mxu0 %v1154
  %v1420 = vpop.f32.mrb[0].mxu0
  %v1421 = vadd.f32 %v1324, %v1420
  %v1422 = vpop.f32.mrb[0].mxu0
  %v1423 = vpop.f32.mrb[0].mxu0
  %v1424 = vadd.f32 %v1327, %v1423
  %v1425 = vpop.f32.mrb[0].mxu0
  %1426 = vmatprep.mubr.bf16.mxu0 0
  %1427 = vmatmul.mubr.bf16.gmra.mrb[0].mxu0 %v1157
  %v1428 = vpop.f32.mrb[0].mxu0
  %v1429 = vadd.f32 %v1332, %v1428
  %v1430 = vpop.f32.mrb[0].mxu0
  %v1431 = vpop.f32.mrb[0].mxu0
  %v1432 = vadd.f32 %v1335, %v1431
  %v1433 = vpop.f32.mrb[0].mxu0
  %1434 = vmatprep.mubr.bf16.mxu0 0
  %1435 = vmatmul.mubr.bf16.gmra.mrb[0].mxu0 %v1160
  %v1436 = vpop.f32.mrb[0].mxu0
  %v1437 = vadd.f32 %v1340, %v1436
  %v1438 = vpop.f32.mrb[0].mxu0
  %v1439 = vpop.f32.mrb[0].mxu0
  %v1440 = vadd.f32 %v1343, %v1439
  %v1441 = vpop.f32.mrb[0].mxu0
  %1442 = vmatprep.mubr.bf16.mxu0 0
  %1443 = vmatmul.mubr.bf16.gmra.mrb[0].mxu0 %v1163
  %v1444 = vpop.f32.mrb[0].mxu0
  %v1445 = vadd.f32 %v1348, %v1444
  %v1446 = vpop.f32.mrb[0].mxu0
  %v1447 = vpop.f32.mrb[0].mxu0
  %v1448 = vadd.f32 %v1351, %v1447
  %v1449 = vpop.f32.mrb[0].mxu0
  %1450 = vmatprep.mubr.bf16.mxu0 0
  %1451 = vmatmul.mubr.bf16.gmra.mrb[0].mxu0 %v1166
  %v1452 = vpop.f32.mrb[0].mxu0
  %v1453 = vadd.f32 %v1356, %v1452
  %v1454 = vpop.f32.mrb[0].mxu0
  %v1455 = vpop.f32.mrb[0].mxu0
  %v1456 = vadd.f32 %v1359, %v1455
  %v1457 = vpop.f32.mrb[0].mxu0
  %1458 = vdwg.mxu0
  %v1459 = vmax.f32 %v1397, 0.0
  %v1460 = vmax.f32 %v1400, 0.0
  %v1461 = vmax.f32 %v1405, 0.0
  %v1462 = vmax.f32 %v1408, 0.0
  %v1463 = vmax.f32 %v1413, 0.0
  %v1464 = vmax.f32 %v1416, 0.0
  %v1465 = vmax.f32 %v1421, 0.0
  %v1466 = vmax.f32 %v1424, 0.0
  %v1467 = vmax.f32 %v1429, 0.0
  %v1468 = vmax.f32 %v1432, 0.0
  %v1469 = vmax.f32 %v1437, 0.0
  %v1470 = vmax.f32 %v1440, 0.0
  %v1471 = vmax.f32 %v1445, 0.0
  %v1472 = vmax.f32 %v1448, 0.0
  %v1473 = vmax.f32 %v1453, 0.0
  %v1474 = vmax.f32 %v1456, 0.0
  %v1475 = vmul.f32 %v880, %v880
  %v1476 = vmul.f32 %v881, %v881
  %v1477 = vmul.f32 %v882, %v882
  %v1478 = vmul.f32 %v883, %v883
  %v1479 = vmul.f32 %v884, %v884
  %v1480 = vmul.f32 %v885, %v885
  %v1481 = vmul.f32 %v886, %v886
  %v1482 = vmul.f32 %v887, %v887
  %v1483 = vmul.f32 %v888, %v888
  %v1484 = vmul.f32 %v889, %v889
  %v1485 = vmul.f32 %v890, %v890
  %v1486 = vmul.f32 %v891, %v891
  %v1487 = vmul.f32 %v892, %v892
  %v1488 = vmul.f32 %v893, %v893
  %v1489 = vmul.f32 %v894, %v894
  %v1490 = vmul.f32 %v895, %v895
  %v1491 = vsel %vm564, %v1475, 0.0
  %1492 = vadd.xlane.f32.xlu0 %v1491
  %v1493 = vpop.xlane.xlu0 %1492
  %v1494 = vsel %vm564, %v1476, 0.0
  %1495 = vadd.xlane.f32.xlu0 %v1494
  %v1496 = vpop.xlane.xlu0 %1495
  %v1497 = vsel %vm564, %v1477, 0.0
  %1498 = vadd.xlane.f32.xlu0 %v1497
  %v1499 = vpop.xlane.xlu0 %1498
  %v1500 = vsel %vm564, %v1478, 0.0
  %1501 = vadd.xlane.f32.xlu0 %v1500
  %v1502 = vpop.xlane.xlu0 %1501
  %v1503 = vsel %vm564, %v1479, 0.0
  %1504 = vadd.xlane.f32.xlu0 %v1503
  %v1505 = vpop.xlane.xlu0 %1504
  %v1506 = vsel %vm564, %v1480, 0.0
  %1507 = vadd.xlane.f32.xlu0 %v1506
  %v1508 = vpop.xlane.xlu0 %1507
  %v1509 = vsel %vm564, %v1481, 0.0
  %1510 = vadd.xlane.f32.xlu0 %v1509
  %v1511 = vpop.xlane.xlu0 %1510
  %v1512 = vsel %vm564, %v1482, 0.0
  %1513 = vadd.xlane.f32.xlu0 %v1512
  %v1514 = vpop.xlane.xlu0 %1513
  %v1515 = vsel %vm564, %v1483, 0.0
  %1516 = vadd.xlane.f32.xlu0 %v1515
  %v1517 = vpop.xlane.xlu0 %1516
  %v1518 = vsel %vm564, %v1484, 0.0
  %1519 = vadd.xlane.f32.xlu0 %v1518
  %v1520 = vpop.xlane.xlu0 %1519
  %v1521 = vsel %vm564, %v1485, 0.0
  %1522 = vadd.xlane.f32.xlu0 %v1521
  %v1523 = vpop.xlane.xlu0 %1522
  %v1524 = vsel %vm564, %v1486, 0.0
  %1525 = vadd.xlane.f32.xlu0 %v1524
  %v1526 = vpop.xlane.xlu0 %1525
  %v1527 = vsel %vm564, %v1487, 0.0
  %1528 = vadd.xlane.f32.xlu0 %v1527
  %v1529 = vpop.xlane.xlu0 %1528
  %v1530 = vsel %vm564, %v1488, 0.0
  %1531 = vadd.xlane.f32.xlu0 %v1530
  %v1532 = vpop.xlane.xlu0 %1531
  %v1533 = vsel %vm564, %v1489, 0.0
  %1534 = vadd.xlane.f32.xlu0 %v1533
  %v1535 = vpop.xlane.xlu0 %1534
  %v1536 = vsel %vm564, %v1490, 0.0
  %1537 = vadd.xlane.f32.xlu0 %v1536
  %v1538 = vpop.xlane.xlu0 %1537
  %v1539 = vrsqrt.pop %v1493
  %v1540 = vmul.f32 %v1493, %v1539
  %vm1541 = vcmp.eq.f32.partialorder %v1493, inf
  %v1542 = vsel %vm1541, %v1493, %v1540
  %vm1543 = vcmp.eq.f32.partialorder %v1493, 0.0
  %v1544 = vand.u32 %v1493, 2147483648
  %v1545 = vsel %vm1543, %v1544, %v1542
  %v1546 = vrsqrt.pop %v1496
  %v1547 = vmul.f32 %v1496, %v1546
  %vm1548 = vcmp.eq.f32.partialorder %v1496, inf
  %v1549 = vsel %vm1548, %v1496, %v1547
  %vm1550 = vcmp.eq.f32.partialorder %v1496, 0.0
  %v1551 = vand.u32 %v1496, 2147483648
  %v1552 = vsel %vm1550, %v1551, %v1549
  %v1553 = vrsqrt.pop %v1499
  %v1554 = vmul.f32 %v1499, %v1553
  %vm1555 = vcmp.eq.f32.partialorder %v1499, inf
  %v1556 = vsel %vm1555, %v1499, %v1554
  %vm1557 = vcmp.eq.f32.partialorder %v1499, 0.0
  %v1558 = vand.u32 %v1499, 2147483648
  %v1559 = vsel %vm1557, %v1558, %v1556
  %v1560 = vrsqrt.pop %v1502
  %v1561 = vmul.f32 %v1502, %v1560
  %vm1562 = vcmp.eq.f32.partialorder %v1502, inf
  %v1563 = vsel %vm1562, %v1502, %v1561
  %vm1564 = vcmp.eq.f32.partialorder %v1502, 0.0
  %v1565 = vand.u32 %v1502, 2147483648
  %v1566 = vsel %vm1564, %v1565, %v1563
  %v1567 = vrsqrt.pop %v1505
  %v1568 = vmul.f32 %v1505, %v1567
  %vm1569 = vcmp.eq.f32.partialorder %v1505, inf
  %v1570 = vsel %vm1569, %v1505, %v1568
  %vm1571 = vcmp.eq.f32.partialorder %v1505, 0.0
  %v1572 = vand.u32 %v1505, 2147483648
  %v1573 = vsel %vm1571, %v1572, %v1570
  %v1574 = vrsqrt.pop %v1508
  %v1575 = vmul.f32 %v1508, %v1574
  %vm1576 = vcmp.eq.f32.partialorder %v1508, inf
  %v1577 = vsel %vm1576, %v1508, %v1575
  %vm1578 = vcmp.eq.f32.partialorder %v1508, 0.0
  %v1579 = vand.u32 %v1508, 2147483648
  %v1580 = vsel %vm1578, %v1579, %v1577
  %v1581 = vrsqrt.pop %v1511
  %v1582 = vmul.f32 %v1511, %v1581
  %vm1583 = vcmp.eq.f32.partialorder %v1511, inf
  %v1584 = vsel %vm1583, %v1511, %v1582
  %vm1585 = vcmp.eq.f32.partialorder %v1511, 0.0
  %v1586 = vand.u32 %v1511, 2147483648
  %v1587 = vsel %vm1585, %v1586, %v1584
  %v1588 = vrsqrt.pop %v1514
  %v1589 = vmul.f32 %v1514, %v1588
  %vm1590 = vcmp.eq.f32.partialorder %v1514, inf
  %v1591 = vsel %vm1590, %v1514, %v1589
  %vm1592 = vcmp.eq.f32.partialorder %v1514, 0.0
  %v1593 = vand.u32 %v1514, 2147483648
  %v1594 = vsel %vm1592, %v1593, %v1591
  %v1595 = vrsqrt.pop %v1517
  %v1596 = vmul.f32 %v1517, %v1595
  %vm1597 = vcmp.eq.f32.partialorder %v1517, inf
  %v1598 = vsel %vm1597, %v1517, %v1596
  %vm1599 = vcmp.eq.f32.partialorder %v1517, 0.0
  %v1600 = vand.u32 %v1517, 2147483648
  %v1601 = vsel %vm1599, %v1600, %v1598
  %v1602 = vrsqrt.pop %v1520
  %v1603 = vmul.f32 %v1520, %v1602
  %vm1604 = vcmp.eq.f32.partialorder %v1520, inf
  %v1605 = vsel %vm1604, %v1520, %v1603
  %vm1606 = vcmp.eq.f32.partialorder %v1520, 0.0
  %v1607 = vand.u32 %v1520, 2147483648
  %v1608 = vsel %vm1606, %v1607, %v1605
  %v1609 = vrsqrt.pop %v1523
  %v1610 = vmul.f32 %v1523, %v1609
  %vm1611 = vcmp.eq.f32.partialorder %v1523, inf
  %v1612 = vsel %vm1611, %v1523, %v1610
  %vm1613 = vcmp.eq.f32.partialorder %v1523, 0.0
  %v1614 = vand.u32 %v1523, 2147483648
  %v1615 = vsel %vm1613, %v1614, %v1612
  %v1616 = vrsqrt.pop %v1526
  %v1617 = vmul.f32 %v1526, %v1616
  %vm1618 = vcmp.eq.f32.partialorder %v1526, inf
  %v1619 = vsel %vm1618, %v1526, %v1617
  %vm1620 = vcmp.eq.f32.partialorder %v1526, 0.0
  %v1621 = vand.u32 %v1526, 2147483648
  %v1622 = vsel %vm1620, %v1621, %v1619
  %v1623 = vrsqrt.pop %v1529
  %v1624 = vmul.f32 %v1529, %v1623
  %vm1625 = vcmp.eq.f32.partialorder %v1529, inf
  %v1626 = vsel %vm1625, %v1529, %v1624
  %vm1627 = vcmp.eq.f32.partialorder %v1529, 0.0
  %v1628 = vand.u32 %v1529, 2147483648
  %v1629 = vsel %vm1627, %v1628, %v1626
  %v1630 = vrsqrt.pop %v1532
  %v1631 = vmul.f32 %v1532, %v1630
  %vm1632 = vcmp.eq.f32.partialorder %v1532, inf
  %v1633 = vsel %vm1632, %v1532, %v1631
  %vm1634 = vcmp.eq.f32.partialorder %v1532, 0.0
  %v1635 = vand.u32 %v1532, 2147483648
  %v1636 = vsel %vm1634, %v1635, %v1633
  %v1637 = vrsqrt.pop %v1535
  %v1638 = vmul.f32 %v1535, %v1637
  %vm1639 = vcmp.eq.f32.partialorder %v1535, inf
  %v1640 = vsel %vm1639, %v1535, %v1638
  %vm1641 = vcmp.eq.f32.partialorder %v1535, 0.0
  %v1642 = vand.u32 %v1535, 2147483648
  %v1643 = vsel %vm1641, %v1642, %v1640
  %v1644 = vrsqrt.pop %v1538
  %v1645 = vmul.f32 %v1538, %v1644
  %vm1646 = vcmp.eq.f32.partialorder %v1538, inf
  %v1647 = vsel %vm1646, %v1538, %v1645
  %vm1648 = vcmp.eq.f32.partialorder %v1538, 0.0
  %v1649 = vand.u32 %v1538, 2147483648
  %v1650 = vsel %vm1648, %v1649, %v1647
  %v1651 = vadd.f32 %v1545, 1e-10
  %v1652 = vadd.f32 %v1552, 1e-10
  %v1653 = vadd.f32 %v1559, 1e-10
  %v1654 = vadd.f32 %v1566, 1e-10
  %v1655 = vadd.f32 %v1573, 1e-10
  %v1656 = vadd.f32 %v1580, 1e-10
  %v1657 = vadd.f32 %v1587, 1e-10
  %v1658 = vadd.f32 %v1594, 1e-10
  %v1659 = vadd.f32 %v1601, 1e-10
  %v1660 = vadd.f32 %v1608, 1e-10
  %v1661 = vadd.f32 %v1615, 1e-10
  %v1662 = vadd.f32 %v1622, 1e-10
  %v1663 = vadd.f32 %v1629, 1e-10
  %v1664 = vadd.f32 %v1636, 1e-10
  %v1665 = vadd.f32 %v1643, 1e-10
  %v1666 = vadd.f32 %v1650, 1e-10
  %v1667 = vrcp.pop %v1651
  %v1668 = vrcp.pop %v1652
  %v1669 = vrcp.pop %v1653
  %v1670 = vrcp.pop %v1654
  %v1671 = vrcp.pop %v1655
  %v1672 = vrcp.pop %v1656
  %v1673 = vrcp.pop %v1657
  %v1674 = vrcp.pop %v1658
  %v1675 = vrcp.pop %v1659
  %v1676 = vrcp.pop %v1660
  %v1677 = vrcp.pop %v1661
  %v1678 = vrcp.pop %v1662
  %v1679 = vrcp.pop %v1663
  %v1680 = vrcp.pop %v1664
  %v1681 = vrcp.pop %v1665
  %v1682 = vrcp.pop %v1666
  %v1683 = vmul.f32 %v1459, %v1459
  %v1684 = vmul.f32 %v1460, %v1460
  %v1685 = vmul.f32 %v1461, %v1461
  %v1686 = vmul.f32 %v1462, %v1462
  %v1687 = vmul.f32 %v1463, %v1463
  %v1688 = vmul.f32 %v1464, %v1464
  %v1689 = vmul.f32 %v1465, %v1465
  %v1690 = vmul.f32 %v1466, %v1466
  %v1691 = vmul.f32 %v1467, %v1467
  %v1692 = vmul.f32 %v1468, %v1468
  %v1693 = vmul.f32 %v1469, %v1469
  %v1694 = vmul.f32 %v1470, %v1470
  %v1695 = vmul.f32 %v1471, %v1471
  %v1696 = vmul.f32 %v1472, %v1472
  %v1697 = vmul.f32 %v1473, %v1473
  %v1698 = vmul.f32 %v1474, %v1474
  %v1699 = vsel %vm564, %v1683, 0.0
  %1700 = vadd.xlane.f32.xlu0 %v1699
  %v1701 = vpop.xlane.xlu0 %1700
  %v1702 = vsel %vm564, %v1684, 0.0
  %1703 = vadd.xlane.f32.xlu0 %v1702
  %v1704 = vpop.xlane.xlu0 %1703
  %v1705 = vsel %vm564, %v1685, 0.0
  %1706 = vadd.xlane.f32.xlu0 %v1705
  %v1707 = vpop.xlane.xlu0 %1706
  %v1708 = vsel %vm564, %v1686, 0.0
  %1709 = vadd.xlane.f32.xlu0 %v1708
  %v1710 = vpop.xlane.xlu0 %1709
  %v1711 = vsel %vm564, %v1687, 0.0
  %1712 = vadd.xlane.f32.xlu0 %v1711
  %v1713 = vpop.xlane.xlu0 %1712
  %v1714 = vsel %vm564, %v1688, 0.0
  %1715 = vadd.xlane.f32.xlu0 %v1714
  %v1716 = vpop.xlane.xlu0 %1715
  %v1717 = vsel %vm564, %v1689, 0.0
  %1718 = vadd.xlane.f32.xlu0 %v1717
  %v1719 = vpop.xlane.xlu0 %1718
  %v1720 = vsel %vm564, %v1690, 0.0
  %1721 = vadd.xlane.f32.xlu0 %v1720
  %v1722 = vpop.xlane.xlu0 %1721
  %v1723 = vsel %vm564, %v1691, 0.0
  %1724 = vadd.xlane.f32.xlu0 %v1723
  %v1725 = vpop.xlane.xlu0 %1724
  %v1726 = vsel %vm564, %v1692, 0.0
  %1727 = vadd.xlane.f32.xlu0 %v1726
  %v1728 = vpop.xlane.xlu0 %1727
  %v1729 = vsel %vm564, %v1693, 0.0
  %1730 = vadd.xlane.f32.xlu0 %v1729
  %v1731 = vpop.xlane.xlu0 %1730
  %v1732 = vsel %vm564, %v1694, 0.0
  %1733 = vadd.xlane.f32.xlu0 %v1732
  %v1734 = vpop.xlane.xlu0 %1733
  %v1735 = vsel %vm564, %v1695, 0.0
  %1736 = vadd.xlane.f32.xlu0 %v1735
  %v1737 = vpop.xlane.xlu0 %1736
  %v1738 = vsel %vm564, %v1696, 0.0
  %1739 = vadd.xlane.f32.xlu0 %v1738
  %v1740 = vpop.xlane.xlu0 %1739
  %v1741 = vsel %vm564, %v1697, 0.0
  %1742 = vadd.xlane.f32.xlu0 %v1741
  %v1743 = vpop.xlane.xlu0 %1742
  %v1744 = vsel %vm564, %v1698, 0.0
  %1745 = vadd.xlane.f32.xlu0 %v1744
  %v1746 = vpop.xlane.xlu0 %1745
  %v1747 = vrsqrt.pop %v1701
  %v1748 = vmul.f32 %v1701, %v1747
  %vm1749 = vcmp.eq.f32.partialorder %v1701, inf
  %v1750 = vsel %vm1749, %v1701, %v1748
  %vm1751 = vcmp.eq.f32.partialorder %v1701, 0.0
  %v1752 = vand.u32 %v1701, 2147483648
  %v1753 = vsel %vm1751, %v1752, %v1750
  %v1754 = vrsqrt.pop %v1704
  %v1755 = vmul.f32 %v1704, %v1754
  %vm1756 = vcmp.eq.f32.partialorder %v1704, inf
  %v1757 = vsel %vm1756, %v1704, %v1755
  %vm1758 = vcmp.eq.f32.partialorder %v1704, 0.0
  %v1759 = vand.u32 %v1704, 2147483648
  %v1760 = vsel %vm1758, %v1759, %v1757
  %v1761 = vrsqrt.pop %v1707
  %v1762 = vmul.f32 %v1707, %v1761
  %vm1763 = vcmp.eq.f32.partialorder %v1707, inf
  %v1764 = vsel %vm1763, %v1707, %v1762
  %vm1765 = vcmp.eq.f32.partialorder %v1707, 0.0
  %v1766 = vand.u32 %v1707, 2147483648
  %v1767 = vsel %vm1765, %v1766, %v1764
  %v1768 = vrsqrt.pop %v1710
  %v1769 = vmul.f32 %v1710, %v1768
  %vm1770 = vcmp.eq.f32.partialorder %v1710, inf
  %v1771 = vsel %vm1770, %v1710, %v1769
  %vm1772 = vcmp.eq.f32.partialorder %v1710, 0.0
  %v1773 = vand.u32 %v1710, 2147483648
  %v1774 = vsel %vm1772, %v1773, %v1771
  %v1775 = vrsqrt.pop %v1713
  %v1776 = vmul.f32 %v1713, %v1775
  %vm1777 = vcmp.eq.f32.partialorder %v1713, inf
  %v1778 = vsel %vm1777, %v1713, %v1776
  %vm1779 = vcmp.eq.f32.partialorder %v1713, 0.0
  %v1780 = vand.u32 %v1713, 2147483648
  %v1781 = vsel %vm1779, %v1780, %v1778
  %v1782 = vrsqrt.pop %v1716
  %v1783 = vmul.f32 %v1716, %v1782
  %vm1784 = vcmp.eq.f32.partialorder %v1716, inf
  %v1785 = vsel %vm1784, %v1716, %v1783
  %vm1786 = vcmp.eq.f32.partialorder %v1716, 0.0
  %v1787 = vand.u32 %v1716, 2147483648
  %v1788 = vsel %vm1786, %v1787, %v1785
  %v1789 = vrsqrt.pop %v1719
  %v1790 = vmul.f32 %v1719, %v1789
  %vm1791 = vcmp.eq.f32.partialorder %v1719, inf
  %v1792 = vsel %vm1791, %v1719, %v1790
  %vm1793 = vcmp.eq.f32.partialorder %v1719, 0.0
  %v1794 = vand.u32 %v1719, 2147483648
  %v1795 = vsel %vm1793, %v1794, %v1792
  %v1796 = vrsqrt.pop %v1722
  %v1797 = vmul.f32 %v1722, %v1796
  %vm1798 = vcmp.eq.f32.partialorder %v1722, inf
  %v1799 = vsel %vm1798, %v1722, %v1797
  %vm1800 = vcmp.eq.f32.partialorder %v1722, 0.0
  %v1801 = vand.u32 %v1722, 2147483648
  %v1802 = vsel %vm1800, %v1801, %v1799
  %v1803 = vrsqrt.pop %v1725
  %v1804 = vmul.f32 %v1725, %v1803
  %vm1805 = vcmp.eq.f32.partialorder %v1725, inf
  %v1806 = vsel %vm1805, %v1725, %v1804
  %vm1807 = vcmp.eq.f32.partialorder %v1725, 0.0
  %v1808 = vand.u32 %v1725, 2147483648
  %v1809 = vsel %vm1807, %v1808, %v1806
  %v1810 = vrsqrt.pop %v1728
  %v1811 = vmul.f32 %v1728, %v1810
  %vm1812 = vcmp.eq.f32.partialorder %v1728, inf
  %v1813 = vsel %vm1812, %v1728, %v1811
  %vm1814 = vcmp.eq.f32.partialorder %v1728, 0.0
  %v1815 = vand.u32 %v1728, 2147483648
  %v1816 = vsel %vm1814, %v1815, %v1813
  %v1817 = vrsqrt.pop %v1731
  %v1818 = vmul.f32 %v1731, %v1817
  %vm1819 = vcmp.eq.f32.partialorder %v1731, inf
  %v1820 = vsel %vm1819, %v1731, %v1818
  %vm1821 = vcmp.eq.f32.partialorder %v1731, 0.0
  %v1822 = vand.u32 %v1731, 2147483648
  %v1823 = vsel %vm1821, %v1822, %v1820
  %v1824 = vrsqrt.pop %v1734
  %v1825 = vmul.f32 %v1734, %v1824
  %vm1826 = vcmp.eq.f32.partialorder %v1734, inf
  %v1827 = vsel %vm1826, %v1734, %v1825
  %vm1828 = vcmp.eq.f32.partialorder %v1734, 0.0
  %v1829 = vand.u32 %v1734, 2147483648
  %v1830 = vsel %vm1828, %v1829, %v1827
  %v1831 = vrsqrt.pop %v1737
  %v1832 = vmul.f32 %v1737, %v1831
  %vm1833 = vcmp.eq.f32.partialorder %v1737, inf
  %v1834 = vsel %vm1833, %v1737, %v1832
  %vm1835 = vcmp.eq.f32.partialorder %v1737, 0.0
  %v1836 = vand.u32 %v1737, 2147483648
  %v1837 = vsel %vm1835, %v1836, %v1834
  %v1838 = vrsqrt.pop %v1740
  %v1839 = vmul.f32 %v1740, %v1838
  %vm1840 = vcmp.eq.f32.partialorder %v1740, inf
  %v1841 = vsel %vm1840, %v1740, %v1839
  %vm1842 = vcmp.eq.f32.partialorder %v1740, 0.0
  %v1843 = vand.u32 %v1740, 2147483648
  %v1844 = vsel %vm1842, %v1843, %v1841
  %v1845 = vrsqrt.pop %v1743
  %v1846 = vmul.f32 %v1743, %v1845
  %vm1847 = vcmp.eq.f32.partialorder %v1743, inf
  %v1848 = vsel %vm1847, %v1743, %v1846
  %vm1849 = vcmp.eq.f32.partialorder %v1743, 0.0
  %v1850 = vand.u32 %v1743, 2147483648
  %v1851 = vsel %vm1849, %v1850, %v1848
  %v1852 = vrsqrt.pop %v1746
  %v1853 = vmul.f32 %v1746, %v1852
  %vm1854 = vcmp.eq.f32.partialorder %v1746, inf
  %v1855 = vsel %vm1854, %v1746, %v1853
  %vm1856 = vcmp.eq.f32.partialorder %v1746, 0.0
  %v1857 = vand.u32 %v1746, 2147483648
  %v1858 = vsel %vm1856, %v1857, %v1855
  %v1859 = vadd.f32 %v1753, 1e-10
  %v1860 = vadd.f32 %v1760, 1e-10
  %v1861 = vadd.f32 %v1767, 1e-10
  %v1862 = vadd.f32 %v1774, 1e-10
  %v1863 = vadd.f32 %v1781, 1e-10
  %v1864 = vadd.f32 %v1788, 1e-10
  %v1865 = vadd.f32 %v1795, 1e-10
  %v1866 = vadd.f32 %v1802, 1e-10
  %v1867 = vadd.f32 %v1809, 1e-10
  %v1868 = vadd.f32 %v1816, 1e-10
  %v1869 = vadd.f32 %v1823, 1e-10
  %v1870 = vadd.f32 %v1830, 1e-10
  %v1871 = vadd.f32 %v1837, 1e-10
  %v1872 = vadd.f32 %v1844, 1e-10
  %v1873 = vadd.f32 %v1851, 1e-10
  %v1874 = vadd.f32 %v1858, 1e-10
  %v1875 = vrcp.pop %v1859
  %v1876 = vrcp.pop %v1860
  %v1877 = vrcp.pop %v1861
  %v1878 = vrcp.pop %v1862
  %v1879 = vrcp.pop %v1863
  %v1880 = vrcp.pop %v1864
  %v1881 = vrcp.pop %v1865
  %v1882 = vrcp.pop %v1866
  %v1883 = vrcp.pop %v1867
  %v1884 = vrcp.pop %v1868
  %v1885 = vrcp.pop %v1869
  %v1886 = vrcp.pop %v1870
  %v1887 = vrcp.pop %v1871
  %v1888 = vrcp.pop %v1872
  %v1889 = vrcp.pop %v1873
  %v1890 = vrcp.pop %v1874
  %v1891 = vmul.f32 %v880, %v1667
  %v1892 = vmul.f32 %v881, %v1668
  %v1893 = vmul.f32 %v882, %v1669
  %v1894 = vmul.f32 %v883, %v1670
  %v1895 = vmul.f32 %v884, %v1671
  %v1896 = vmul.f32 %v885, %v1672
  %v1897 = vmul.f32 %v886, %v1673
  %v1898 = vmul.f32 %v887, %v1674
  %v1899 = vmul.f32 %v888, %v1675
  %v1900 = vmul.f32 %v889, %v1676
  %v1901 = vmul.f32 %v890, %v1677
  %v1902 = vmul.f32 %v891, %v1678
  %v1903 = vmul.f32 %v892, %v1679
  %v1904 = vmul.f32 %v893, %v1680
  %v1905 = vmul.f32 %v894, %v1681
  %v1906 = vmul.f32 %v895, %v1682
  %v1907 = vmul.f32 %v1459, %v1875
  %v1908 = vmul.f32 %v1460, %v1876
  %v1909 = vmul.f32 %v1461, %v1877
  %v1910 = vmul.f32 %v1462, %v1878
  %v1911 = vmul.f32 %v1463, %v1879
  %v1912 = vmul.f32 %v1464, %v1880
  %v1913 = vmul.f32 %v1465, %v1881
  %v1914 = vmul.f32 %v1466, %v1882
  %v1915 = vmul.f32 %v1467, %v1883
  %v1916 = vmul.f32 %v1468, %v1884
  %v1917 = vmul.f32 %v1469, %v1885
  %v1918 = vmul.f32 %v1470, %v1886
  %v1919 = vmul.f32 %v1471, %v1887
  %v1920 = vmul.f32 %v1472, %v1888
  %v1921 = vmul.f32 %v1473, %v1889
  %v1922 = vmul.f32 %v1474, %v1890
  %v1923 = vsub.f32 %v1891, %v1907
  %v1924 = vsub.f32 %v1892, %v1908
  %v1925 = vsub.f32 %v1893, %v1909
  %v1926 = vsub.f32 %v1894, %v1910
  %v1927 = vsub.f32 %v1895, %v1911
  %v1928 = vsub.f32 %v1896, %v1912
  %v1929 = vsub.f32 %v1897, %v1913
  %v1930 = vsub.f32 %v1898, %v1914
  %v1931 = vsub.f32 %v1899, %v1915
  %v1932 = vsub.f32 %v1900, %v1916
  %v1933 = vsub.f32 %v1901, %v1917
  %v1934 = vsub.f32 %v1902, %v1918
  %v1935 = vsub.f32 %v1903, %v1919
  %v1936 = vsub.f32 %v1904, %v1920
  %v1937 = vsub.f32 %v1905, %v1921
  %v1938 = vsub.f32 %v1906, %v1922
  %v1939 = vmul.f32 %v1923, %v1923
  %v1940 = vmul.f32 %v1924, %v1924
  %v1941 = vmul.f32 %v1925, %v1925
  %v1942 = vmul.f32 %v1926, %v1926
  %v1943 = vmul.f32 %v1927, %v1927
  %v1944 = vmul.f32 %v1928, %v1928
  %v1945 = vmul.f32 %v1929, %v1929
  %v1946 = vmul.f32 %v1930, %v1930
  %v1947 = vmul.f32 %v1931, %v1931
  %v1948 = vmul.f32 %v1932, %v1932
  %v1949 = vmul.f32 %v1933, %v1933
  %v1950 = vmul.f32 %v1934, %v1934
  %v1951 = vmul.f32 %v1935, %v1935
  %v1952 = vmul.f32 %v1936, %v1936
  %v1953 = vmul.f32 %v1937, %v1937
  %v1954 = vmul.f32 %v1938, %v1938
  %v1955 = vld [vmem:[%s4] sm:$0x1]
  %v1957 = vlaneseq
  %v1958 = vshrl.u32 %v1957, 7
  %v1959 = vsub.s32 0, %v1958
  %v1960 = vrot.slane %v1955, %v1959
  %v1962 = vmul.f32 %v1939, %v1960
  %v1963 = vmul.f32 %v1940, %v1960
  %v1964 = vmul.f32 %v1941, %v1960
  %v1965 = vmul.f32 %v1942, %v1960
  %v1966 = vmul.f32 %v1943, %v1960
  %v1967 = vmul.f32 %v1944, %v1960
  %v1968 = vmul.f32 %v1945, %v1960
  %v1969 = vmul.f32 %v1946, %v1960
  %v1970 = vmul.f32 %v1947, %v1960
  %v1971 = vmul.f32 %v1948, %v1960
  %v1972 = vmul.f32 %v1949, %v1960
  %v1973 = vmul.f32 %v1950, %v1960
  %v1974 = vmul.f32 %v1951, %v1960
  %v1975 = vmul.f32 %v1952, %v1960
  %v1976 = vmul.f32 %v1953, %v1960
  %v1977 = vmul.f32 %v1954, %v1960
  %v1978 = vsel %vm564, %v1962, 0.0
  %v1979 = vsel %vm564, %v1963, 0.0
  %v1980 = vadd.f32 %v1978, %v1979
  %v1981 = vsel %vm564, %v1964, 0.0
  %v1982 = vadd.f32 %v1980, %v1981
  %v1983 = vsel %vm564, %v1965, 0.0
  %v1984 = vadd.f32 %v1982, %v1983
  %v1985 = vsel %vm564, %v1966, 0.0
  %v1986 = vadd.f32 %v1984, %v1985
  %v1987 = vsel %vm564, %v1967, 0.0
  %v1988 = vadd.f32 %v1986, %v1987
  %v1989 = vsel %vm564, %v1968, 0.0
  %v1990 = vadd.f32 %v1988, %v1989
  %v1991 = vsel %vm564, %v1969, 0.0
  %v1992 = vadd.f32 %v1990, %v1991
  %v1993 = vsel %vm564, %v1970, 0.0
  %v1994 = vadd.f32 %v1992, %v1993
  %v1995 = vsel %vm564, %v1971, 0.0
  %v1996 = vadd.f32 %v1994, %v1995
  %v1997 = vsel %vm564, %v1972, 0.0
  %v1998 = vadd.f32 %v1996, %v1997
  %v1999 = vsel %vm564, %v1973, 0.0
  %v2000 = vadd.f32 %v1998, %v1999
  %v2001 = vsel %vm564, %v1974, 0.0
  %v2002 = vadd.f32 %v2000, %v2001
  %v2003 = vsel %vm564, %v1975, 0.0
  %v2004 = vadd.f32 %v2002, %v2003
  %v2005 = vsel %vm564, %v1976, 0.0
  %v2006 = vadd.f32 %v2004, %v2005
  %v2007 = vsel %vm564, %v1977, 0.0
  %v2008 = vadd.f32 %v2006, %v2007
  %v2009 = vrot.slane %v2008, 4
  %v2010 = vadd.f32 %v2008, %v2009
  %v2011 = vrot.slane %v2010, 2
  %v2012 = vadd.f32 %v2010, %v2011
  %v2013 = vrot.slane %v2012, 1
  %v2014 = vadd.f32 %v2012, %v2013
  %vm2015 = vcmask 516096
  %2016 = vst.msk [vmem:[%s5] sm:$0x1] %vm2015, %v2014
  // Predicated region
  $region22: #{_lambda_.9} parent=0 // pred_check
    _
  $region23: #{_lambda_.9} parent=0 // pred_check_branch
    %2018 = sbr.rel (0) target = $region25
  $region24: #{_lambda_.9} parent=0 // pred_region
    _
  $region25: #{_lambda_.9} parent=0 // pred_fallthru
    _
  // Predicated region
  $region26: #{_lambda_.9} parent=0 // pred_check
    _
  $region27: #{_lambda_.9} parent=0 // pred_check_branch
    %2020 = sbr.rel (0) target = $region29
  $region28: #{_lambda_.9} parent=0 // pred_region
    _
  $region29: #{_lambda_.9} parent=0 // pred_fallthru
    _

// kernel: _lambda_.10
$region0: #{_lambda_.10}
  #allocation0 [shape = 'u32[]', space=smem, size = 0x4, offset = 0x4, fixed_abs, tag = 'smem constant byte address 0x4 - core index']
  #allocation1 [shape = 'u32[144,128]{1,0:T(1,128)}', space=vmem, size = 0x12000, scoped, tag = 'internal scratch']
  %s0 = inlined_call_operand.vmem [shape: f32[64,27], index: 0, kind: input, shape index: {}]
  %s1 = inlined_call_operand.vmem [shape: f32[27,64], index: 1, kind: input, shape index: {}]
  %s2 = inlined_call_operand.vmem [shape: f32[1,64], index: 2, kind: input, shape index: {}]
  %s3 = inlined_call_operand.vmem [shape: bf16[64,64], index: 3, kind: output, shape index: {}]
  %s4 = sld [smem:[#allocation0]]
  $region22: #{_lambda_.10} parent=0
    _
  %s6 = ssub.s32 1, %s4
  %s7 = scalar_select 0, %s6, %s4
  // Predicated region
  $region2: #{_lambda_.10} parent=0 // pred_check
    _
  $region3: #{_lambda_.10} parent=0 // pred_check_branch
    %9 = sbr.rel (0) target = $region5
  $region4: #{_lambda_.10} parent=0 // pred_region
    _
  $region5: #{_lambda_.10} parent=0 // pred_fallthru
    _
  // Predicated region
  $region6: #{_lambda_.10} parent=0 // pred_check
    _
  $region7: #{_lambda_.10} parent=0 // pred_check_branch
    %11 = sbr.rel (0) target = $region9
  $region8: #{_lambda_.10} parent=0 // pred_region
    _
  $region9: #{_lambda_.10} parent=0 // pred_fallthru
    _
  // Predicated region
  $region10: #{_lambda_.10} parent=0 // pred_check
    _
  $region11: #{_lambda_.10} parent=0 // pred_check_branch
    %13 = sbr.rel (0) target = $region13
  $region12: #{_lambda_.10} parent=0 // pred_region
    _
  $region13: #{_lambda_.10} parent=0 // pred_fallthru
    _
  %v14 = vld [vmem:[%s0] sm:$0xff]
  %v15 = vld [vmem:[%s0 + $0x8] sm:$0xff]
  %v16 = vld [vmem:[%s0 + $0x10] sm:$0xff]
  %v17 = vld [vmem:[%s0 + $0x18] sm:$0xff]
  %v18 = vld [vmem:[%s0 + $0x20] sm:$0xff]
  %v19 = vld [vmem:[%s0 + $0x28] sm:$0xff]
  %v20 = vld [vmem:[%s0 + $0x30] sm:$0xff]
  %v21 = vld [vmem:[%s0 + $0x38] sm:$0xff]
  %v22 = vld [vmem:[%s1] sm:$0xff]
  %v23 = vld [vmem:[%s1 + $0x8] sm:$0xff]
  %v24 = vld [vmem:[%s1 + $0x10] sm:$0xff]
  %v25 = vld [vmem:[%s1 + $0x18] sm:$0x7]
  %v26 = vld [vmem:[%s2] sm:$0x1]
  %v28 = vlaneseq
  %v29 = vshrl.u32 %v28, 7
  %v30 = vsub.s32 0, %v29
  %v31 = vrot.slane %v26, %v30
  %vm33 = vcmask 220160
  %v35 = vsel %vm33, %v14, 0
  %v38 = vsel %vm33, %v15, 0
  %v41 = vsel %vm33, %v16, 0
  %v44 = vsel %vm33, %v17, 0
  %v47 = vsel %vm33, %v18, 0
  %v50 = vsel %vm33, %v19, 0
  %v53 = vsel %vm33, %v20, 0
  %v56 = vsel %vm33, %v21, 0
  %vm58 = vcmask 1042432
  %v60 = vsel %vm58, %v25, 0
  %62 = vmatprep.subr.mxu0 0.0
  %63 = vmatpush1.msra.mxu0 %v22
  %64 = vmatprep.subr.mxu0 0.0
  %65 = vmatpush1.msra.mxu0 %v23
  %66 = vmatprep.subr.mxu0 0.0
  %67 = vmatpush1.msra.mxu0 %v24
  %68 = vmatprep.subr.mxu0 0.0
  %69 = vmatpush1.msra.mxu0 %v60
  %70 = vmatprep.subr.mxu0 0.0
  %71 = vmatpush1.msra.mxu0 0.0
  %72 = vmatprep.subr.mxu0 0.0
  %73 = vmatpush1.msra.mxu0 0.0
  %74 = vmatprep.subr.mxu0 0.0
  %75 = vmatpush1.msra.mxu0 0.0
  %76 = vmatprep.subr.mxu0 0.0
  %77 = vmatpush1.msra.mxu0 0.0
  %78 = vmatprep.subr.mxu0 0.0
  %79 = vmatpush1.msra.mxu0 0.0
  %80 = vmatprep.subr.mxu0 0.0
  %81 = vmatpush1.msra.mxu0 0.0
  %82 = vmatprep.subr.mxu0 0.0
  %83 = vmatpush1.msra.mxu0 0.0
  %84 = vmatprep.subr.mxu0 0.0
  %85 = vmatpush1.msra.mxu0 0.0
  %86 = vmatprep.subr.mxu0 0.0
  %87 = vmatpush1.msra.mxu0 0.0
  %88 = vmatprep.subr.mxu0 0.0
  %89 = vmatpush1.msra.mxu0 0.0
  %90 = vmatprep.subr.mxu0 0.0
  %91 = vmatpush1.msra.mxu0 0.0
  %92 = vmatprep.subr.mxu0 0.0
  %93 = vmatpush1.msra.mxu0 0.0
  %94 = vmatprep.subr.mxu0 0.0
  %95 = vmatpush1.msra.mxu0 0.0
  %96 = vmatprep.subr.mxu0 0.0
  %97 = vmatpush1.msra.mxu0 0.0
  %98 = vmatprep.subr.mxu0 0.0
  %99 = vmatpush1.msra.mxu0 0.0
  %100 = vmatprep.subr.mxu0 0.0
  %101 = vmatpush1.msra.mxu0 0.0
  %102 = vmatprep.subr.mxu0 0.0
  %103 = vmatpush1.msra.mxu0 0.0
  %104 = vmatprep.subr.mxu0 0.0
  %105 = vmatpush1.msra.mxu0 0.0
  %106 = vmatprep.subr.mxu0 0.0
  %107 = vmatpush1.msra.mxu0 0.0
  %108 = vmatprep.subr.mxu0 0.0
  %109 = vmatpush1.msra.mxu0 0.0
  %110 = vmatprep.subr.mxu0 0.0
  %111 = vmatpush1.msra.mxu0 0.0
  %112 = vmatprep.subr.mxu0 0.0
  %113 = vmatpush1.msra.mxu0 0.0
  %114 = vmatprep.subr.mxu0 0.0
  %115 = vmatpush1.msra.mxu0 0.0
  %116 = vmatprep.subr.mxu0 0.0
  %117 = vmatpush1.msra.mxu0 0.0
  %118 = vmatprep.subr.mxu0 0.0
  %119 = vmatpush1.msra.mxu0 0.0
  %120 = vmatprep.subr.mxu0 0.0
  %121 = vmatpush1.msra.mxu0 0.0
  %122 = vmatprep.subr.mxu0 0.0
  %123 = vmatpush1.msra.mxu0 0.0
  %124 = vmatprep.subr.mxu0 0.0
  %125 = vmatpush1.msra.mxu0 0.0
  %126 = vmatprep.mubr.f32.mxu0 0.0
  %127 = vmatmul.mubr.f32.gmra.mrb[0].mxu0 %v35
  %v128 = vpop.f32.mrb[0].mxu0
  %v129 = vadd.f32 %v31, %v128
  %v130 = vpop.f32.mrb[0].mxu0
  %131 = vmatprep.mubr.f32.mxu0 0.0
  %132 = vmatmul.mubr.f32.gmra.mrb[0].mxu0 %v38
  %v133 = vpop.f32.mrb[0].mxu0
  %v134 = vadd.f32 %v31, %v133
  %v135 = vpop.f32.mrb[0].mxu0
  %136 = vmatprep.mubr.f32.mxu0 0.0
  %137 = vmatmul.mubr.f32.gmra.mrb[0].mxu0 %v41
  %v138 = vpop.f32.mrb[0].mxu0
  %v139 = vadd.f32 %v31, %v138
  %v140 = vpop.f32.mrb[0].mxu0
  %141 = vmatprep.mubr.f32.mxu0 0.0
  %142 = vmatmul.mubr.f32.gmra.mrb[0].mxu0 %v44
  %v143 = vpop.f32.mrb[0].mxu0
  %v144 = vadd.f32 %v31, %v143
  %v145 = vpop.f32.mrb[0].mxu0
  %146 = vmatprep.mubr.f32.mxu0 0.0
  %147 = vmatmul.mubr.f32.gmra.mrb[0].mxu0 %v47
  %v148 = vpop.f32.mrb[0].mxu0
  %v149 = vadd.f32 %v31, %v148
  %v150 = vpop.f32.mrb[0].mxu0
  %151 = vmatprep.mubr.f32.mxu0 0.0
  %152 = vmatmul.mubr.f32.gmra.mrb[0].mxu0 %v50
  %v153 = vpop.f32.mrb[0].mxu0
  %v154 = vadd.f32 %v31, %v153
  %v155 = vpop.f32.mrb[0].mxu0
  %156 = vmatprep.mubr.f32.mxu0 0.0
  %157 = vmatmul.mubr.f32.gmra.mrb[0].mxu0 %v53
  %v158 = vpop.f32.mrb[0].mxu0
  %v159 = vadd.f32 %v31, %v158
  %v160 = vpop.f32.mrb[0].mxu0
  %161 = vmatprep.mubr.f32.mxu0 0.0
  %162 = vmatmul.mubr.f32.gmra.mrb[0].mxu0 %v56
  %v163 = vpop.f32.mrb[0].mxu0
  %v164 = vadd.f32 %v31, %v163
  %v165 = vpop.f32.mrb[0].mxu0
  %166 = vdwg.mxu0
  %v167 = vmax.f32 %v129, 0.0
  %v168 = vmax.f32 %v134, 0.0
  %v169 = vmax.f32 %v139, 0.0
  %v170 = vmax.f32 %v144, 0.0
  %v171 = vmax.f32 %v149, 0.0
  %v172 = vmax.f32 %v154, 0.0
  %v173 = vmax.f32 %v159, 0.0
  %v174 = vmax.f32 %v164, 0.0
  %v175 = vpack.c.bf16 %v168, %v167
  %v176 = vpack.c.bf16 %v170, %v169
  %v177 = vpack.c.bf16 %v172, %v171
  %v178 = vpack.c.bf16 %v174, %v173
  %v183 = vunpack.c.l.b16 %v175
  %v184 = vunpack.c.h.b16 %v175
  %v185 = vunpack.c.l.b16 %v176
  %v186 = vunpack.c.h.b16 %v176
  %v187 = vunpack.c.l.b16 %v177
  %v188 = vunpack.c.h.b16 %v177
  %v189 = vunpack.c.l.b16 %v178
  %v190 = vunpack.c.h.b16 %v178
  %v191 = vpack.c.b16 %v183, %v183
  %v192 = vpack.c.b16 %v184, %v184
  %v193 = vpack.c.b16 %v185, %v185
  %v194 = vpack.c.b16 %v186, %v186
  %v195 = vpack.c.b16 %v187, %v187
  %v196 = vpack.c.b16 %v188, %v188
  %v197 = vpack.c.b16 %v189, %v189
  %v198 = vpack.c.b16 %v190, %v190
  %vm207 = vcmask 519168
  %208 = vst.msk [vmem:[%s3] sm:$0xf] %vm207, %v191
  %209 = vst.msk [vmem:[%s3 + $0x4] sm:$0xf] %vm207, %v192
  %210 = vst.msk [vmem:[%s3 + $0x8] sm:$0xf] %vm207, %v193
  %211 = vst.msk [vmem:[%s3 + $0xc] sm:$0xf] %vm207, %v194
  %212 = vst.msk [vmem:[%s3 + $0x10] sm:$0xf] %vm207, %v195
  %213 = vst.msk [vmem:[%s3 + $0x14] sm:$0xf] %vm207, %v196
  %214 = vst.msk [vmem:[%s3 + $0x18] sm:$0xf] %vm207, %v197
  %215 = vst.msk [vmem:[%s3 + $0x1c] sm:$0xf] %vm207, %v198
  // Predicated region
  $region14: #{_lambda_.10} parent=0 // pred_check
    _
  $region15: #{_lambda_.10} parent=0 // pred_check_branch
    %217 = sbr.rel (0) target = $region17
  $region16: #{_lambda_.10} parent=0 // pred_region
    _
  $region17: #{_lambda_.10} parent=0 // pred_fallthru
    _
  // Predicated region
  $region18: #{_lambda_.10} parent=0 // pred_check
    _
  $region19: #{_lambda_.10} parent=0 // pred_check_branch
    %219 = sbr.rel (0) target = $region21
  $region20: #{_lambda_.10} parent=0 // pred_region
    _
  $region21: #{_lambda_.10} parent=0 // pred_fallthru
    _

// kernel: _lambda_.11
$region0: #{_lambda_.11}
  #allocation0 [shape = 'u32[]', space=smem, size = 0x4, offset = 0x4, fixed_abs, tag = 'smem constant byte address 0x4 - core index']
  #allocation1 [shape = 'u32[144,128]{1,0:T(1,128)}', space=vmem, size = 0x12000, scoped, tag = 'internal scratch']
  %s0 = inlined_call_operand.vmem [shape: bf16[32,576], index: 0, kind: input, shape index: {}]
  %s1 = inlined_call_operand.vmem [shape: bf16[32,576], index: 1, kind: input, shape index: {}]
  %s2 = inlined_call_operand.vmem [shape: bf16[576,64], index: 2, kind: input, shape index: {}]
  %s3 = inlined_call_operand.vmem [shape: f32[1,64], index: 3, kind: input, shape index: {}]
  %s4 = inlined_call_operand.vmem [shape: f32[1,64], index: 4, kind: input, shape index: {}]
  %s5 = inlined_call_operand.vmem [shape: f32[1,1,64], index: 5, kind: output, shape index: {}]
  %s6 = sld [smem:[#allocation0]]
  $region30: #{_lambda_.11} parent=0
    _
  %s8 = ssub.s32 1, %s6
  %s9 = scalar_select 0, %s8, %s6
  // Predicated region
  $region2: #{_lambda_.11} parent=0 // pred_check
    _
  $region3: #{_lambda_.11} parent=0 // pred_check_branch
    %11 = sbr.rel (0) target = $region5
  $region4: #{_lambda_.11} parent=0 // pred_region
    _
  $region5: #{_lambda_.11} parent=0 // pred_fallthru
    _
  // Predicated region
  $region6: #{_lambda_.11} parent=0 // pred_check
    _
  $region7: #{_lambda_.11} parent=0 // pred_check_branch
    %13 = sbr.rel (0) target = $region9
  $region8: #{_lambda_.11} parent=0 // pred_region
    _
  $region9: #{_lambda_.11} parent=0 // pred_fallthru
    _
  // Predicated region
  $region10: #{_lambda_.11} parent=0 // pred_check
    _
  $region11: #{_lambda_.11} parent=0 // pred_check_branch
    %15 = sbr.rel (0) target = $region13
  $region12: #{_lambda_.11} parent=0 // pred_region
    _
  $region13: #{_lambda_.11} parent=0 // pred_fallthru
    _
  // Predicated region
  $region14: #{_lambda_.11} parent=0 // pred_check
    _
  $region15: #{_lambda_.11} parent=0 // pred_check_branch
    %17 = sbr.rel (0) target = $region17
  $region16: #{_lambda_.11} parent=0 // pred_region
    _
  $region17: #{_lambda_.11} parent=0 // pred_fallthru
    _
  // Predicated region
  $region18: #{_lambda_.11} parent=0 // pred_check
    _
  $region19: #{_lambda_.11} parent=0 // pred_check_branch
    %19 = sbr.rel (0) target = $region21
  $region20: #{_lambda_.11} parent=0 // pred_region
    _
  $region21: #{_lambda_.11} parent=0 // pred_fallthru
    _
  %v21 = vld [vmem:[%s0] sm:$0xff]
  %v22 = vld [vmem:[%s0 + $0x8] sm:$0xff]
  %v23 = vld [vmem:[%s0 + $0x10] sm:$0xf]
  %v24 = vld [vmem:[%s0 + $0x14] sm:$0xff]
  %v25 = vld [vmem:[%s0 + $0x1c] sm:$0xff]
  %v26 = vld [vmem:[%s0 + $0x24] sm:$0xf]
  %v27 = vld [vmem:[%s0 + $0x28] sm:$0xff]
  %v28 = vld [vmem:[%s0 + $0x30] sm:$0xff]
  %v29 = vld [vmem:[%s0 + $0x38] sm:$0xf]
  %v30 = vld [vmem:[%s0 + $0x3c] sm:$0xff]
  %v31 = vld [vmem:[%s0 + $0x44] sm:$0xff]
  %v32 = vld [vmem:[%s0 + $0x4c] sm:$0xf]
  %v33 = vld [vmem:[%s2] sm:$0xf]
  %v34 = vld [vmem:[%s2 + $0x4] sm:$0xf]
  %v35 = vld [vmem:[%s2 + $0x8] sm:$0xf]
  %v36 = vld [vmem:[%s2 + $0xc] sm:$0xf]
  %v37 = vld [vmem:[%s2 + $0x10] sm:$0xf]
  %v38 = vld [vmem:[%s2 + $0x14] sm:$0xf]
  %v39 = vld [vmem:[%s2 + $0x18] sm:$0xf]
  %v40 = vld [vmem:[%s2 + $0x1c] sm:$0xf]
  %v41 = vld [vmem:[%s2 + $0x20] sm:$0xf]
  %v42 = vld [vmem:[%s2 + $0x24] sm:$0xf]
  %v43 = vld [vmem:[%s2 + $0x28] sm:$0xf]
  %v44 = vld [vmem:[%s2 + $0x2c] sm:$0xf]
  %v45 = vld [vmem:[%s2 + $0x30] sm:$0xf]
  %v46 = vld [vmem:[%s2 + $0x34] sm:$0xf]
  %v47 = vld [vmem:[%s2 + $0x38] sm:$0xf]
  %v48 = vld [vmem:[%s2 + $0x3c] sm:$0xf]
  %v49 = vld [vmem:[%s2 + $0x40] sm:$0xf]
  %v50 = vld [vmem:[%s2 + $0x44] sm:$0xf]
  %v51 = vld [vmem:[%s2 + $0x48] sm:$0xf]
  %v52 = vld [vmem:[%s2 + $0x4c] sm:$0xf]
  %v53 = vld [vmem:[%s2 + $0x50] sm:$0xf]
  %v54 = vld [vmem:[%s2 + $0x54] sm:$0xf]
  %v55 = vld [vmem:[%s2 + $0x58] sm:$0xf]
  %v56 = vld [vmem:[%s2 + $0x5c] sm:$0xf]
  %v57 = vld [vmem:[%s2 + $0x60] sm:$0xf]
  %v58 = vld [vmem:[%s2 + $0x64] sm:$0xf]
  %v59 = vld [vmem:[%s2 + $0x68] sm:$0xf]
  %v60 = vld [vmem:[%s2 + $0x6c] sm:$0xf]
  %v61 = vld [vmem:[%s2 + $0x70] sm:$0xf]
  %v62 = vld [vmem:[%s2 + $0x74] sm:$0xf]
  %v63 = vld [vmem:[%s2 + $0x78] sm:$0xf]
  %v64 = vld [vmem:[%s2 + $0x7c] sm:$0xf]
  %v65 = vld [vmem:[%s2 + $0x80] sm:$0xf]
  %v66 = vld [vmem:[%s2 + $0x84] sm:$0xf]
  %v67 = vld [vmem:[%s2 + $0x88] sm:$0xf]
  %v68 = vld [vmem:[%s2 + $0x8c] sm:$0xf]
  %v69 = vld [vmem:[%s2 + $0x90] sm:$0xf]
  %v70 = vld [vmem:[%s2 + $0x94] sm:$0xf]
  %v71 = vld [vmem:[%s2 + $0x98] sm:$0xf]
  %v72 = vld [vmem:[%s2 + $0x9c] sm:$0xf]
  %v73 = vld [vmem:[%s2 + $0xa0] sm:$0xf]
  %v74 = vld [vmem:[%s2 + $0xa4] sm:$0xf]
  %v75 = vld [vmem:[%s2 + $0xa8] sm:$0xf]
  %v76 = vld [vmem:[%s2 + $0xac] sm:$0xf]
  %v77 = vld [vmem:[%s2 + $0xb0] sm:$0xf]
  %v78 = vld [vmem:[%s2 + $0xb4] sm:$0xf]
  %v79 = vld [vmem:[%s2 + $0xb8] sm:$0xf]
  %v80 = vld [vmem:[%s2 + $0xbc] sm:$0xf]
  %v81 = vld [vmem:[%s2 + $0xc0] sm:$0xf]
  %v82 = vld [vmem:[%s2 + $0xc4] sm:$0xf]
  %v83 = vld [vmem:[%s2 + $0xc8] sm:$0xf]
  %v84 = vld [vmem:[%s2 + $0xcc] sm:$0xf]
  %v85 = vld [vmem:[%s2 + $0xd0] sm:$0xf]
  %v86 = vld [vmem:[%s2 + $0xd4] sm:$0xf]
  %v87 = vld [vmem:[%s2 + $0xd8] sm:$0xf]
  %v88 = vld [vmem:[%s2 + $0xdc] sm:$0xf]
  %v89 = vld [vmem:[%s2 + $0xe0] sm:$0xf]
  %v90 = vld [vmem:[%s2 + $0xe4] sm:$0xf]
  %v91 = vld [vmem:[%s2 + $0xe8] sm:$0xf]
  %v92 = vld [vmem:[%s2 + $0xec] sm:$0xf]
  %v93 = vld [vmem:[%s2 + $0xf0] sm:$0xf]
  %v94 = vld [vmem:[%s2 + $0xf4] sm:$0xf]
  %v95 = vld [vmem:[%s2 + $0xf8] sm:$0xf]
  %v96 = vld [vmem:[%s2 + $0xfc] sm:$0xf]
  %v97 = vld [vmem:[%s2 + $0x100] sm:$0xf]
  %v98 = vld [vmem:[%s2 + $0x104] sm:$0xf]
  %v99 = vld [vmem:[%s2 + $0x108] sm:$0xf]
  %v100 = vld [vmem:[%s2 + $0x10c] sm:$0xf]
  %v101 = vld [vmem:[%s2 + $0x110] sm:$0xf]
  %v102 = vld [vmem:[%s2 + $0x114] sm:$0xf]
  %v103 = vld [vmem:[%s2 + $0x118] sm:$0xf]
  %v104 = vld [vmem:[%s2 + $0x11c] sm:$0xf]
  %v105 = vld [vmem:[%s3] sm:$0x1]
  %v107 = vlaneseq
  %v108 = vshrl.u32 %v107, 7
  %v109 = vsub.s32 0, %v108
  %v110 = vrot.slane %v105, %v109
  %v124 = vunpack.c.l.b16 %v21
  %v125 = vunpack.c.h.b16 %v21
  %v126 = vunpack.c.l.b16 %v22
  %v127 = vunpack.c.h.b16 %v22
  %v128 = vunpack.c.l.b16 %v23
  %v129 = vunpack.c.l.b16 %v24
  %v130 = vunpack.c.h.b16 %v24
  %v131 = vunpack.c.l.b16 %v25
  %v132 = vunpack.c.h.b16 %v25
  %v133 = vunpack.c.l.b16 %v26
  %v134 = vunpack.c.l.b16 %v27
  %v135 = vunpack.c.h.b16 %v27
  %v136 = vunpack.c.l.b16 %v28
  %v137 = vunpack.c.h.b16 %v28
  %v138 = vunpack.c.l.b16 %v29
  %v139 = vunpack.c.l.b16 %v30
  %v140 = vunpack.c.h.b16 %v30
  %v141 = vunpack.c.l.b16 %v31
  %v142 = vunpack.c.h.b16 %v31
  %v143 = vunpack.c.l.b16 %v32
  %v144 = vpack.c.b16 %v129, %v124
  %v145 = vpack.c.b16 %v130, %v125
  %v146 = vpack.c.b16 %v131, %v126
  %v147 = vpack.c.b16 %v132, %v127
  %v148 = vpack.c.b16 %v133, %v128
  %v149 = vpack.c.b16 %v139, %v134
  %v150 = vpack.c.b16 %v140, %v135
  %v151 = vpack.c.b16 %v141, %v136
  %v152 = vpack.c.b16 %v142, %v137
  %v153 = vpack.c.b16 %v143, %v138
  %v234 = vunpack.c.l.b16 %v33
  %v235 = vunpack.c.l.b16 %v34
  %v236 = vunpack.c.l.b16 %v35
  %v237 = vunpack.c.l.b16 %v36
  %v238 = vunpack.c.l.b16 %v37
  %v239 = vunpack.c.l.b16 %v38
  %v240 = vunpack.c.l.b16 %v39
  %v241 = vunpack.c.l.b16 %v40
  %v242 = vunpack.c.l.b16 %v41
  %v243 = vunpack.c.l.b16 %v42
  %v244 = vunpack.c.l.b16 %v43
  %v245 = vunpack.c.l.b16 %v44
  %v246 = vunpack.c.l.b16 %v45
  %v247 = vunpack.c.l.b16 %v46
  %v248 = vunpack.c.l.b16 %v47
  %v249 = vunpack.c.l.b16 %v48
  %v250 = vunpack.c.l.b16 %v49
  %v251 = vunpack.c.l.b16 %v50
  %v252 = vunpack.c.l.b16 %v51
  %v253 = vunpack.c.l.b16 %v52
  %v254 = vunpack.c.l.b16 %v53
  %v255 = vunpack.c.l.b16 %v54
  %v256 = vunpack.c.l.b16 %v55
  %v257 = vunpack.c.l.b16 %v56
  %v258 = vunpack.c.l.b16 %v57
  %v259 = vunpack.c.l.b16 %v58
  %v260 = vunpack.c.l.b16 %v59
  %v261 = vunpack.c.l.b16 %v60
  %v262 = vunpack.c.l.b16 %v61
  %v263 = vunpack.c.l.b16 %v62
  %v264 = vunpack.c.l.b16 %v63
  %v265 = vunpack.c.l.b16 %v64
  %v266 = vunpack.c.l.b16 %v65
  %v267 = vunpack.c.l.b16 %v66
  %v268 = vunpack.c.l.b16 %v67
  %v269 = vunpack.c.l.b16 %v68
  %v270 = vunpack.c.l.b16 %v69
  %v271 = vunpack.c.l.b16 %v70
  %v272 = vunpack.c.l.b16 %v71
  %v273 = vunpack.c.l.b16 %v72
  %v274 = vunpack.c.l.b16 %v73
  %v275 = vunpack.c.l.b16 %v74
  %v276 = vunpack.c.l.b16 %v75
  %v277 = vunpack.c.l.b16 %v76
  %v278 = vunpack.c.l.b16 %v77
  %v279 = vunpack.c.l.b16 %v78
  %v280 = vunpack.c.l.b16 %v79
  %v281 = vunpack.c.l.b16 %v80
  %v282 = vunpack.c.l.b16 %v81
  %v283 = vunpack.c.l.b16 %v82
  %v284 = vunpack.c.l.b16 %v83
  %v285 = vunpack.c.l.b16 %v84
  %v286 = vunpack.c.l.b16 %v85
  %v287 = vunpack.c.l.b16 %v86
  %v288 = vunpack.c.l.b16 %v87
  %v289 = vunpack.c.l.b16 %v88
  %v290 = vunpack.c.l.b16 %v89
  %v291 = vunpack.c.l.b16 %v90
  %v292 = vunpack.c.l.b16 %v91
  %v293 = vunpack.c.l.b16 %v92
  %v294 = vunpack.c.l.b16 %v93
  %v295 = vunpack.c.l.b16 %v94
  %v296 = vunpack.c.l.b16 %v95
  %v297 = vunpack.c.l.b16 %v96
  %v298 = vunpack.c.l.b16 %v97
  %v299 = vunpack.c.l.b16 %v98
  %v300 = vunpack.c.l.b16 %v99
  %v301 = vunpack.c.l.b16 %v100
  %v302 = vunpack.c.l.b16 %v101
  %v303 = vunpack.c.l.b16 %v102
  %v304 = vunpack.c.l.b16 %v103
  %v305 = vunpack.c.l.b16 %v104
  %v306 = vpack.c.b16 %v235, %v234
  %v307 = vpack.c.b16 %v237, %v236
  %v308 = vpack.c.b16 %v239, %v238
  %v309 = vpack.c.b16 %v241, %v240
  %v310 = vpack.c.b16 %v243, %v242
  %v311 = vpack.c.b16 %v245, %v244
  %v312 = vpack.c.b16 %v247, %v246
  %v313 = vpack.c.b16 %v249, %v248
  %v314 = vpack.c.b16 %v251, %v250
  %v315 = vpack.c.b16 %v253, %v252
  %v316 = vpack.c.b16 %v255, %v254
  %v317 = vpack.c.b16 %v257, %v256
  %v318 = vpack.c.b16 %v259, %v258
  %v319 = vpack.c.b16 %v261, %v260
  %v320 = vpack.c.b16 %v263, %v262
  %v321 = vpack.c.b16 %v265, %v264
  %v322 = vpack.c.b16 %v267, %v266
  %v323 = vpack.c.b16 %v269, %v268
  %v324 = vpack.c.b16 %v271, %v270
  %v325 = vpack.c.b16 %v273, %v272
  %v326 = vpack.c.b16 %v275, %v274
  %v327 = vpack.c.b16 %v277, %v276
  %v328 = vpack.c.b16 %v279, %v278
  %v329 = vpack.c.b16 %v281, %v280
  %v330 = vpack.c.b16 %v283, %v282
  %v331 = vpack.c.b16 %v285, %v284
  %v332 = vpack.c.b16 %v287, %v286
  %v333 = vpack.c.b16 %v289, %v288
  %v334 = vpack.c.b16 %v291, %v290
  %v335 = vpack.c.b16 %v293, %v292
  %v336 = vpack.c.b16 %v295, %v294
  %v337 = vpack.c.b16 %v297, %v296
  %v338 = vpack.c.b16 %v299, %v298
  %v339 = vpack.c.b16 %v301, %v300
  %v340 = vpack.c.b16 %v303, %v302
  %v341 = vpack.c.b16 %v305, %v304
  %vm378 = vcmask 523264
  %v380 = vsel %vm378, %v148, 0
  %v383 = vsel %vm378, %v153, 0
  %385 = vmatprep.subr.bf16.mxu0 0
  %386 = vmatpush1.bf16.msra.mxu0 %v306
  %387 = vmatprep.subr.bf16.mxu0 0
  %388 = vmatpush1.bf16.msra.mxu0 %v307
  %389 = vmatprep.subr.bf16.mxu0 0
  %390 = vmatpush1.bf16.msra.mxu0 %v308
  %391 = vmatprep.subr.bf16.mxu0 0
  %392 = vmatpush1.bf16.msra.mxu0 %v309
  %393 = vmatprep.subr.bf16.mxu0 0
  %394 = vmatpush1.bf16.msra.mxu0 %v310
  %395 = vmatprep.subr.bf16.mxu0 0
  %396 = vmatpush1.bf16.msra.mxu0 %v311
  %397 = vmatprep.subr.bf16.mxu0 0
  %398 = vmatpush1.bf16.msra.mxu0 %v312
  %399 = vmatprep.subr.bf16.mxu0 0
  %400 = vmatpush1.bf16.msra.mxu0 %v313
  %401 = vmatprep.subr.bf16.mxu0 0
  %402 = vmatpush1.bf16.msra.mxu0 %v314
  %403 = vmatprep.subr.bf16.mxu0 0
  %404 = vmatpush1.bf16.msra.mxu0 %v315
  %405 = vmatprep.subr.bf16.mxu0 0
  %406 = vmatpush1.bf16.msra.mxu0 %v316
  %407 = vmatprep.subr.bf16.mxu0 0
  %408 = vmatpush1.bf16.msra.mxu0 %v317
  %409 = vmatprep.subr.bf16.mxu0 0
  %410 = vmatpush1.bf16.msra.mxu0 %v318
  %411 = vmatprep.subr.bf16.mxu0 0
  %412 = vmatpush1.bf16.msra.mxu0 %v319
  %413 = vmatprep.subr.bf16.mxu0 0
  %414 = vmatpush1.bf16.msra.mxu0 %v320
  %415 = vmatprep.subr.bf16.mxu0 0
  %416 = vmatpush1.bf16.msra.mxu0 %v321
  %417 = vmatprep.mubr.bf16.mxu0 %v145
  %418 = vmatmul.mubr.bf16.gmra.mrb[0].mxu0 %v144
  %v419 = vpop.f32.mrb[0].mxu0
  %v420 = vadd.f32 %v110, %v419
  %v421 = vpop.f32.mrb[0].mxu0
  %v422 = vpop.f32.mrb[0].mxu0
  %v423 = vadd.f32 %v110, %v422
  %v424 = vpop.f32.mrb[0].mxu0
  %425 = vmatprep.mubr.bf16.mxu0 %v150
  %426 = vmatmul.mubr.bf16.gmra.mrb[0].mxu0 %v149
  %v427 = vpop.f32.mrb[0].mxu0
  %v428 = vadd.f32 %v110, %v427
  %v429 = vpop.f32.mrb[0].mxu0
  %v430 = vpop.f32.mrb[0].mxu0
  %v431 = vadd.f32 %v110, %v430
  %v432 = vpop.f32.mrb[0].mxu0
  %433 = vdwg.mxu0
  %434 = vmatprep.subr.bf16.mxu0 0
  %435 = vmatpush1.bf16.msra.mxu0 %v322
  %436 = vmatprep.subr.bf16.mxu0 0
  %437 = vmatpush1.bf16.msra.mxu0 %v323
  %438 = vmatprep.subr.bf16.mxu0 0
  %439 = vmatpush1.bf16.msra.mxu0 %v324
  %440 = vmatprep.subr.bf16.mxu0 0
  %441 = vmatpush1.bf16.msra.mxu0 %v325
  %442 = vmatprep.subr.bf16.mxu0 0
  %443 = vmatpush1.bf16.msra.mxu0 %v326
  %444 = vmatprep.subr.bf16.mxu0 0
  %445 = vmatpush1.bf16.msra.mxu0 %v327
  %446 = vmatprep.subr.bf16.mxu0 0
  %447 = vmatpush1.bf16.msra.mxu0 %v328
  %448 = vmatprep.subr.bf16.mxu0 0
  %449 = vmatpush1.bf16.msra.mxu0 %v329
  %450 = vmatprep.subr.bf16.mxu0 0
  %451 = vmatpush1.bf16.msra.mxu0 %v330
  %452 = vmatprep.subr.bf16.mxu0 0
  %453 = vmatpush1.bf16.msra.mxu0 %v331
  %454 = vmatprep.subr.bf16.mxu0 0
  %455 = vmatpush1.bf16.msra.mxu0 %v332
  %456 = vmatprep.subr.bf16.mxu0 0
  %457 = vmatpush1.bf16.msra.mxu0 %v333
  %458 = vmatprep.subr.bf16.mxu0 0
  %459 = vmatpush1.bf16.msra.mxu0 %v334
  %460 = vmatprep.subr.bf16.mxu0 0
  %461 = vmatpush1.bf16.msra.mxu0 %v335
  %462 = vmatprep.subr.bf16.mxu0 0
  %463 = vmatpush1.bf16.msra.mxu0 %v336
  %464 = vmatprep.subr.bf16.mxu0 0
  %465 = vmatpush1.bf16.msra.mxu0 %v337
  %466 = vmatprep.mubr.bf16.mxu0 %v147
  %467 = vmatmul.mubr.bf16.gmra.mrb[0].mxu0 %v146
  %v468 = vpop.f32.mrb[0].mxu0
  %v469 = vadd.f32 %v420, %v468
  %v470 = vpop.f32.mrb[0].mxu0
  %v471 = vpop.f32.mrb[0].mxu0
  %v472 = vadd.f32 %v423, %v471
  %v473 = vpop.f32.mrb[0].mxu0
  %474 = vmatprep.mubr.bf16.mxu0 %v152
  %475 = vmatmul.mubr.bf16.gmra.mrb[0].mxu0 %v151
  %v476 = vpop.f32.mrb[0].mxu0
  %v477 = vadd.f32 %v428, %v476
  %v478 = vpop.f32.mrb[0].mxu0
  %v479 = vpop.f32.mrb[0].mxu0
  %v480 = vadd.f32 %v431, %v479
  %v481 = vpop.f32.mrb[0].mxu0
  %482 = vdwg.mxu0
  %483 = vmatprep.subr.bf16.mxu0 0
  %484 = vmatpush1.bf16.msra.mxu0 %v338
  %485 = vmatprep.subr.bf16.mxu0 0
  %486 = vmatpush1.bf16.msra.mxu0 %v339
  %487 = vmatprep.subr.bf16.mxu0 0
  %488 = vmatpush1.bf16.msra.mxu0 %v340
  %489 = vmatprep.subr.bf16.mxu0 0
  %490 = vmatpush1.bf16.msra.mxu0 %v341
  %491 = vmatprep.subr.bf16.mxu0 0
  %492 = vmatpush1.bf16.msra.mxu0 0
  %493 = vmatprep.subr.bf16.mxu0 0
  %494 = vmatpush1.bf16.msra.mxu0 0
  %495 = vmatprep.subr.bf16.mxu0 0
  %496 = vmatpush1.bf16.msra.mxu0 0
  %497 = vmatprep.subr.bf16.mxu0 0
  %498 = vmatpush1.bf16.msra.mxu0 0
  %499 = vmatprep.subr.bf16.mxu0 0
  %500 = vmatpush1.bf16.msra.mxu0 0
  %501 = vmatprep.subr.bf16.mxu0 0
  %502 = vmatpush1.bf16.msra.mxu0 0
  %503 = vmatprep.subr.bf16.mxu0 0
  %504 = vmatpush1.bf16.msra.mxu0 0
  %505 = vmatprep.subr.bf16.mxu0 0
  %506 = vmatpush1.bf16.msra.mxu0 0
  %507 = vmatprep.subr.bf16.mxu0 0
  %508 = vmatpush1.bf16.msra.mxu0 0
  %509 = vmatprep.subr.bf16.mxu0 0
  %510 = vmatpush1.bf16.msra.mxu0 0
  %511 = vmatprep.subr.bf16.mxu0 0
  %512 = vmatpush1.bf16.msra.mxu0 0
  %513 = vmatprep.subr.bf16.mxu0 0
  %514 = vmatpush1.bf16.msra.mxu0 0
  %515 = vmatprep.mubr.bf16.mxu0 0
  %516 = vmatmul.mubr.bf16.gmra.mrb[0].mxu0 %v380
  %v517 = vpop.f32.mrb[0].mxu0
  %v518 = vadd.f32 %v469, %v517
  %v519 = vpop.f32.mrb[0].mxu0
  %v520 = vpop.f32.mrb[0].mxu0
  %v521 = vadd.f32 %v472, %v520
  %v522 = vpop.f32.mrb[0].mxu0
  %523 = vmatprep.mubr.bf16.mxu0 0
  %524 = vmatmul.mubr.bf16.gmra.mrb[0].mxu0 %v383
  %v525 = vpop.f32.mrb[0].mxu0
  %v526 = vadd.f32 %v477, %v525
  %v527 = vpop.f32.mrb[0].mxu0
  %v528 = vpop.f32.mrb[0].mxu0
  %v529 = vadd.f32 %v480, %v528
  %v530 = vpop.f32.mrb[0].mxu0
  %531 = vdwg.mxu0
  %v532 = vmax.f32 %v518, 0.0
  %v533 = vmax.f32 %v521, 0.0
  %v534 = vmax.f32 %v526, 0.0
  %v535 = vmax.f32 %v529, 0.0
  %v536 = vld [vmem:[%s1] sm:$0xff]
  %v537 = vld [vmem:[%s1 + $0x8] sm:$0xff]
  %v538 = vld [vmem:[%s1 + $0x10] sm:$0xf]
  %v539 = vld [vmem:[%s1 + $0x14] sm:$0xff]
  %v540 = vld [vmem:[%s1 + $0x1c] sm:$0xff]
  %v541 = vld [vmem:[%s1 + $0x24] sm:$0xf]
  %v542 = vld [vmem:[%s1 + $0x28] sm:$0xff]
  %v543 = vld [vmem:[%s1 + $0x30] sm:$0xff]
  %v544 = vld [vmem:[%s1 + $0x38] sm:$0xf]
  %v545 = vld [vmem:[%s1 + $0x3c] sm:$0xff]
  %v546 = vld [vmem:[%s1 + $0x44] sm:$0xff]
  %v547 = vld [vmem:[%s1 + $0x4c] sm:$0xf]
  %v560 = vunpack.c.l.b16 %v536
  %v561 = vunpack.c.h.b16 %v536
  %v562 = vunpack.c.l.b16 %v537
  %v563 = vunpack.c.h.b16 %v537
  %v564 = vunpack.c.l.b16 %v538
  %v565 = vunpack.c.l.b16 %v539
  %v566 = vunpack.c.h.b16 %v539
  %v567 = vunpack.c.l.b16 %v540
  %v568 = vunpack.c.h.b16 %v540
  %v569 = vunpack.c.l.b16 %v541
  %v570 = vunpack.c.l.b16 %v542
  %v571 = vunpack.c.h.b16 %v542
  %v572 = vunpack.c.l.b16 %v543
  %v573 = vunpack.c.h.b16 %v543
  %v574 = vunpack.c.l.b16 %v544
  %v575 = vunpack.c.l.b16 %v545
  %v576 = vunpack.c.h.b16 %v545
  %v577 = vunpack.c.l.b16 %v546
  %v578 = vunpack.c.h.b16 %v546
  %v579 = vunpack.c.l.b16 %v547
  %v580 = vpack.c.b16 %v565, %v560
  %v581 = vpack.c.b16 %v566, %v561
  %v582 = vpack.c.b16 %v567, %v562
  %v583 = vpack.c.b16 %v568, %v563
  %v584 = vpack.c.b16 %v569, %v564
  %v585 = vpack.c.b16 %v575, %v570
  %v586 = vpack.c.b16 %v576, %v571
  %v587 = vpack.c.b16 %v577, %v572
  %v588 = vpack.c.b16 %v578, %v573
  %v589 = vpack.c.b16 %v579, %v574
  %v599 = vsel %vm378, %v584, 0
  %v602 = vsel %vm378, %v589, 0
  %604 = vmatprep.subr.bf16.mxu0 0
  %605 = vmatpush1.bf16.msra.mxu0 %v306
  %606 = vmatprep.subr.bf16.mxu0 0
  %607 = vmatpush1.bf16.msra.mxu0 %v307
  %608 = vmatprep.subr.bf16.mxu0 0
  %609 = vmatpush1.bf16.msra.mxu0 %v308
  %610 = vmatprep.subr.bf16.mxu0 0
  %611 = vmatpush1.bf16.msra.mxu0 %v309
  %612 = vmatprep.subr.bf16.mxu0 0
  %613 = vmatpush1.bf16.msra.mxu0 %v310
  %614 = vmatprep.subr.bf16.mxu0 0
  %615 = vmatpush1.bf16.msra.mxu0 %v311
  %616 = vmatprep.subr.bf16.mxu0 0
  %617 = vmatpush1.bf16.msra.mxu0 %v312
  %618 = vmatprep.subr.bf16.mxu0 0
  %619 = vmatpush1.bf16.msra.mxu0 %v313
  %620 = vmatprep.subr.bf16.mxu0 0
  %621 = vmatpush1.bf16.msra.mxu0 %v314
  %622 = vmatprep.subr.bf16.mxu0 0
  %623 = vmatpush1.bf16.msra.mxu0 %v315
  %624 = vmatprep.subr.bf16.mxu0 0
  %625 = vmatpush1.bf16.msra.mxu0 %v316
  %626 = vmatprep.subr.bf16.mxu0 0
  %627 = vmatpush1.bf16.msra.mxu0 %v317
  %628 = vmatprep.subr.bf16.mxu0 0
  %629 = vmatpush1.bf16.msra.mxu0 %v318
  %630 = vmatprep.subr.bf16.mxu0 0
  %631 = vmatpush1.bf16.msra.mxu0 %v319
  %632 = vmatprep.subr.bf16.mxu0 0
  %633 = vmatpush1.bf16.msra.mxu0 %v320
  %634 = vmatprep.subr.bf16.mxu0 0
  %635 = vmatpush1.bf16.msra.mxu0 %v321
  %636 = vmatprep.mubr.bf16.mxu0 %v581
  %637 = vmatmul.mubr.bf16.gmra.mrb[0].mxu0 %v580
  %v638 = vpop.f32.mrb[0].mxu0
  %v639 = vadd.f32 %v110, %v638
  %v640 = vpop.f32.mrb[0].mxu0
  %v641 = vpop.f32.mrb[0].mxu0
  %v642 = vadd.f32 %v110, %v641
  %v643 = vpop.f32.mrb[0].mxu0
  %644 = vmatprep.mubr.bf16.mxu0 %v586
  %645 = vmatmul.mubr.bf16.gmra.mrb[0].mxu0 %v585
  %v646 = vpop.f32.mrb[0].mxu0
  %v647 = vadd.f32 %v110, %v646
  %v648 = vpop.f32.mrb[0].mxu0
  %v649 = vpop.f32.mrb[0].mxu0
  %v650 = vadd.f32 %v110, %v649
  %v651 = vpop.f32.mrb[0].mxu0
  %652 = vdwg.mxu0
  %653 = vmatprep.subr.bf16.mxu0 0
  %654 = vmatpush1.bf16.msra.mxu0 %v322
  %655 = vmatprep.subr.bf16.mxu0 0
  %656 = vmatpush1.bf16.msra.mxu0 %v323
  %657 = vmatprep.subr.bf16.mxu0 0
  %658 = vmatpush1.bf16.msra.mxu0 %v324
  %659 = vmatprep.subr.bf16.mxu0 0
  %660 = vmatpush1.bf16.msra.mxu0 %v325
  %661 = vmatprep.subr.bf16.mxu0 0
  %662 = vmatpush1.bf16.msra.mxu0 %v326
  %663 = vmatprep.subr.bf16.mxu0 0
  %664 = vmatpush1.bf16.msra.mxu0 %v327
  %665 = vmatprep.subr.bf16.mxu0 0
  %666 = vmatpush1.bf16.msra.mxu0 %v328
  %667 = vmatprep.subr.bf16.mxu0 0
  %668 = vmatpush1.bf16.msra.mxu0 %v329
  %669 = vmatprep.subr.bf16.mxu0 0
  %670 = vmatpush1.bf16.msra.mxu0 %v330
  %671 = vmatprep.subr.bf16.mxu0 0
  %672 = vmatpush1.bf16.msra.mxu0 %v331
  %673 = vmatprep.subr.bf16.mxu0 0
  %674 = vmatpush1.bf16.msra.mxu0 %v332
  %675 = vmatprep.subr.bf16.mxu0 0
  %676 = vmatpush1.bf16.msra.mxu0 %v333
  %677 = vmatprep.subr.bf16.mxu0 0
  %678 = vmatpush1.bf16.msra.mxu0 %v334
  %679 = vmatprep.subr.bf16.mxu0 0
  %680 = vmatpush1.bf16.msra.mxu0 %v335
  %681 = vmatprep.subr.bf16.mxu0 0
  %682 = vmatpush1.bf16.msra.mxu0 %v336
  %683 = vmatprep.subr.bf16.mxu0 0
  %684 = vmatpush1.bf16.msra.mxu0 %v337
  %685 = vmatprep.mubr.bf16.mxu0 %v583
  %686 = vmatmul.mubr.bf16.gmra.mrb[0].mxu0 %v582
  %v687 = vpop.f32.mrb[0].mxu0
  %v688 = vadd.f32 %v639, %v687
  %v689 = vpop.f32.mrb[0].mxu0
  %v690 = vpop.f32.mrb[0].mxu0
  %v691 = vadd.f32 %v642, %v690
  %v692 = vpop.f32.mrb[0].mxu0
  %693 = vmatprep.mubr.bf16.mxu0 %v588
  %694 = vmatmul.mubr.bf16.gmra.mrb[0].mxu0 %v587
  %v695 = vpop.f32.mrb[0].mxu0
  %v696 = vadd.f32 %v647, %v695
  %v697 = vpop.f32.mrb[0].mxu0
  %v698 = vpop.f32.mrb[0].mxu0
  %v699 = vadd.f32 %v650, %v698
  %v700 = vpop.f32.mrb[0].mxu0
  %701 = vdwg.mxu0
  %702 = vmatprep.subr.bf16.mxu0 0
  %703 = vmatpush1.bf16.msra.mxu0 %v338
  %704 = vmatprep.subr.bf16.mxu0 0
  %705 = vmatpush1.bf16.msra.mxu0 %v339
  %706 = vmatprep.subr.bf16.mxu0 0
  %707 = vmatpush1.bf16.msra.mxu0 %v340
  %708 = vmatprep.subr.bf16.mxu0 0
  %709 = vmatpush1.bf16.msra.mxu0 %v341
  %710 = vmatprep.subr.bf16.mxu0 0
  %711 = vmatpush1.bf16.msra.mxu0 0
  %712 = vmatprep.subr.bf16.mxu0 0
  %713 = vmatpush1.bf16.msra.mxu0 0
  %714 = vmatprep.subr.bf16.mxu0 0
  %715 = vmatpush1.bf16.msra.mxu0 0
  %716 = vmatprep.subr.bf16.mxu0 0
  %717 = vmatpush1.bf16.msra.mxu0 0
  %718 = vmatprep.subr.bf16.mxu0 0
  %719 = vmatpush1.bf16.msra.mxu0 0
  %720 = vmatprep.subr.bf16.mxu0 0
  %721 = vmatpush1.bf16.msra.mxu0 0
  %722 = vmatprep.subr.bf16.mxu0 0
  %723 = vmatpush1.bf16.msra.mxu0 0
  %724 = vmatprep.subr.bf16.mxu0 0
  %725 = vmatpush1.bf16.msra.mxu0 0
  %726 = vmatprep.subr.bf16.mxu0 0
  %727 = vmatpush1.bf16.msra.mxu0 0
  %728 = vmatprep.subr.bf16.mxu0 0
  %729 = vmatpush1.bf16.msra.mxu0 0
  %730 = vmatprep.subr.bf16.mxu0 0
  %731 = vmatpush1.bf16.msra.mxu0 0
  %732 = vmatprep.subr.bf16.mxu0 0
  %733 = vmatpush1.bf16.msra.mxu0 0
  %734 = vmatprep.mubr.bf16.mxu0 0
  %735 = vmatmul.mubr.bf16.gmra.mrb[0].mxu0 %v599
  %v736 = vpop.f32.mrb[0].mxu0
  %v737 = vadd.f32 %v688, %v736
  %v738 = vpop.f32.mrb[0].mxu0
  %v739 = vpop.f32.mrb[0].mxu0
  %v740 = vadd.f32 %v691, %v739
  %v741 = vpop.f32.mrb[0].mxu0
  %742 = vmatprep.mubr.bf16.mxu0 0
  %743 = vmatmul.mubr.bf16.gmra.mrb[0].mxu0 %v602
  %v744 = vpop.f32.mrb[0].mxu0
  %v745 = vadd.f32 %v696, %v744
  %v746 = vpop.f32.mrb[0].mxu0
  %v747 = vpop.f32.mrb[0].mxu0
  %v748 = vadd.f32 %v699, %v747
  %v749 = vpop.f32.mrb[0].mxu0
  %750 = vdwg.mxu0
  %v751 = vmax.f32 %v737, 0.0
  %v752 = vmax.f32 %v740, 0.0
  %v753 = vmax.f32 %v745, 0.0
  %v754 = vmax.f32 %v748, 0.0
  %v755 = vmul.f32 %v532, %v532
  %v756 = vmul.f32 %v533, %v533
  %v757 = vmul.f32 %v534, %v534
  %v758 = vmul.f32 %v535, %v535
  %v759 = vsel %vm378, %v755, 0.0
  %760 = vadd.xlane.f32.xlu0 %v759
  %v761 = vpop.xlane.xlu0 %760
  %v762 = vsel %vm378, %v756, 0.0
  %763 = vadd.xlane.f32.xlu0 %v762
  %v764 = vpop.xlane.xlu0 %763
  %v765 = vsel %vm378, %v757, 0.0
  %766 = vadd.xlane.f32.xlu0 %v765
  %v767 = vpop.xlane.xlu0 %766
  %v768 = vsel %vm378, %v758, 0.0
  %769 = vadd.xlane.f32.xlu0 %v768
  %v770 = vpop.xlane.xlu0 %769
  %v771 = vrsqrt.pop %v761
  %v772 = vmul.f32 %v761, %v771
  %vm773 = vcmp.eq.f32.partialorder %v761, inf
  %v774 = vsel %vm773, %v761, %v772
  %vm775 = vcmp.eq.f32.partialorder %v761, 0.0
  %v776 = vand.u32 %v761, 2147483648
  %v777 = vsel %vm775, %v776, %v774
  %v778 = vrsqrt.pop %v764
  %v779 = vmul.f32 %v764, %v778
  %vm780 = vcmp.eq.f32.partialorder %v764, inf
  %v781 = vsel %vm780, %v764, %v779
  %vm782 = vcmp.eq.f32.partialorder %v764, 0.0
  %v783 = vand.u32 %v764, 2147483648
  %v784 = vsel %vm782, %v783, %v781
  %v785 = vrsqrt.pop %v767
  %v786 = vmul.f32 %v767, %v785
  %vm787 = vcmp.eq.f32.partialorder %v767, inf
  %v788 = vsel %vm787, %v767, %v786
  %vm789 = vcmp.eq.f32.partialorder %v767, 0.0
  %v790 = vand.u32 %v767, 2147483648
  %v791 = vsel %vm789, %v790, %v788
  %v792 = vrsqrt.pop %v770
  %v793 = vmul.f32 %v770, %v792
  %vm794 = vcmp.eq.f32.partialorder %v770, inf
  %v795 = vsel %vm794, %v770, %v793
  %vm796 = vcmp.eq.f32.partialorder %v770, 0.0
  %v797 = vand.u32 %v770, 2147483648
  %v798 = vsel %vm796, %v797, %v795
  %v799 = vadd.f32 %v777, 1e-10
  %v800 = vadd.f32 %v784, 1e-10
  %v801 = vadd.f32 %v791, 1e-10
  %v802 = vadd.f32 %v798, 1e-10
  %v803 = vrcp.pop %v799
  %v804 = vrcp.pop %v800
  %v805 = vrcp.pop %v801
  %v806 = vrcp.pop %v802
  %v807 = vmul.f32 %v751, %v751
  %v808 = vmul.f32 %v752, %v752
  %v809 = vmul.f32 %v753, %v753
  %v810 = vmul.f32 %v754, %v754
  %v811 = vsel %vm378, %v807, 0.0
  %812 = vadd.xlane.f32.xlu0 %v811
  %v813 = vpop.xlane.xlu0 %812
  %v814 = vsel %vm378, %v808, 0.0
  %815 = vadd.xlane.f32.xlu0 %v814
  %v816 = vpop.xlane.xlu0 %815
  %v817 = vsel %vm378, %v809, 0.0
  %818 = vadd.xlane.f32.xlu0 %v817
  %v819 = vpop.xlane.xlu0 %818
  %v820 = vsel %vm378, %v810, 0.0
  %821 = vadd.xlane.f32.xlu0 %v820
  %v822 = vpop.xlane.xlu0 %821
  %v823 = vrsqrt.pop %v813
  %v824 = vmul.f32 %v813, %v823
  %vm825 = vcmp.eq.f32.partialorder %v813, inf
  %v826 = vsel %vm825, %v813, %v824
  %vm827 = vcmp.eq.f32.partialorder %v813, 0.0
  %v828 = vand.u32 %v813, 2147483648
  %v829 = vsel %vm827, %v828, %v826
  %v830 = vrsqrt.pop %v816
  %v831 = vmul.f32 %v816, %v830
  %vm832 = vcmp.eq.f32.partialorder %v816, inf
  %v833 = vsel %vm832, %v816, %v831
  %vm834 = vcmp.eq.f32.partialorder %v816, 0.0
  %v835 = vand.u32 %v816, 2147483648
  %v836 = vsel %vm834, %v835, %v833
  %v837 = vrsqrt.pop %v819
  %v838 = vmul.f32 %v819, %v837
  %vm839 = vcmp.eq.f32.partialorder %v819, inf
  %v840 = vsel %vm839, %v819, %v838
  %vm841 = vcmp.eq.f32.partialorder %v819, 0.0
  %v842 = vand.u32 %v819, 2147483648
  %v843 = vsel %vm841, %v842, %v840
  %v844 = vrsqrt.pop %v822
  %v845 = vmul.f32 %v822, %v844
  %vm846 = vcmp.eq.f32.partialorder %v822, inf
  %v847 = vsel %vm846, %v822, %v845
  %vm848 = vcmp.eq.f32.partialorder %v822, 0.0
  %v849 = vand.u32 %v822, 2147483648
  %v850 = vsel %vm848, %v849, %v847
  %v851 = vadd.f32 %v829, 1e-10
  %v852 = vadd.f32 %v836, 1e-10
  %v853 = vadd.f32 %v843, 1e-10
  %v854 = vadd.f32 %v850, 1e-10
  %v855 = vrcp.pop %v851
  %v856 = vrcp.pop %v852
  %v857 = vrcp.pop %v853
  %v858 = vrcp.pop %v854
  %v859 = vmul.f32 %v532, %v803
  %v860 = vmul.f32 %v533, %v804
  %v861 = vmul.f32 %v534, %v805
  %v862 = vmul.f32 %v535, %v806
  %v863 = vmul.f32 %v751, %v855
  %v864 = vmul.f32 %v752, %v856
  %v865 = vmul.f32 %v753, %v857
  %v866 = vmul.f32 %v754, %v858
  %v867 = vsub.f32 %v859, %v863
  %v868 = vsub.f32 %v860, %v864
  %v869 = vsub.f32 %v861, %v865
  %v870 = vsub.f32 %v862, %v866
  %v871 = vmul.f32 %v867, %v867
  %v872 = vmul.f32 %v868, %v868
  %v873 = vmul.f32 %v869, %v869
  %v874 = vmul.f32 %v870, %v870
  %v875 = vld [vmem:[%s4] sm:$0x1]
  %v877 = vlaneseq
  %v878 = vshrl.u32 %v877, 7
  %v879 = vsub.s32 0, %v878
  %v880 = vrot.slane %v875, %v879
  %v882 = vmul.f32 %v871, %v880
  %v883 = vmul.f32 %v872, %v880
  %v884 = vmul.f32 %v873, %v880
  %v885 = vmul.f32 %v874, %v880
  %v886 = vsel %vm378, %v882, 0.0
  %v887 = vsel %vm378, %v883, 0.0
  %v888 = vadd.f32 %v886, %v887
  %v889 = vsel %vm378, %v884, 0.0
  %v890 = vadd.f32 %v888, %v889
  %v891 = vsel %vm378, %v885, 0.0
  %v892 = vadd.f32 %v890, %v891
  %v893 = vrot.slane %v892, 4
  %v894 = vadd.f32 %v892, %v893
  %v895 = vrot.slane %v894, 2
  %v896 = vadd.f32 %v894, %v895
  %v897 = vrot.slane %v896, 1
  %v898 = vadd.f32 %v896, %v897
  %vm899 = vcmask 516096
  %900 = vst.msk [vmem:[%s5] sm:$0x1] %vm899, %v898
  // Predicated region
  $region22: #{_lambda_.11} parent=0 // pred_check
    _
  $region23: #{_lambda_.11} parent=0 // pred_check_branch
    %902 = sbr.rel (0) target = $region25
  $region24: #{_lambda_.11} parent=0 // pred_region
    _
  $region25: #{_lambda_.11} parent=0 // pred_fallthru
    _
  // Predicated region
  $region26: #{_lambda_.11} parent=0 // pred_check
    _
  $region27: #{_lambda_.11} parent=0 // pred_check_branch
    %904 = sbr.rel (0) target = $region29
  $region28: #{_lambda_.11} parent=0 // pred_region
    _
  $region29: #{_lambda_.11} parent=0 // pred_fallthru
    _

</llo_original>
